<compile_context>
chip_gen: v7x
topology: tpu7x:2x2x1
jax: 0.10.0
libtpu: 0.0.40
codegen_flags: <defaults>
</compile_context>

<pallas_src>
import jax
import jax.numpy as jnp
from jax.experimental import pallas as pl
from jax.experimental.pallas import tpu as pltpu

K = 3            # kernel size of every layer
N_LAYERS = 6
C = 30           # real channel width
CP = 32          # channel width padded to the sublane granule
TAPS = K * K
KDIM = TAPS * CP  # 288: stacked im2col contraction width


def _make_decoder_kernel(h, w, rstride, rows):
    """Fused per-image kernel.

    Activations live in (CP, rows*rstride) lane-dense buffers: a (rows x rstride)
    spatial grid flattened row-major, real data at grid offset (K-1, K-1), zeros
    around it (the transpose-conv "full" padding).  Because rstride >= padded
    width, tap (kh, kw) is the contiguous flat slice starting at kh*rstride + kw.
    """
    flat = rows * rstride
    o0 = (K - 1) * rstride + (K - 1)          # flat offset of the data origin
    ho_out = h + N_LAYERS * (K - 1)
    l_max = ho_out * rstride                  # widest per-layer output slab

    def kernel(x_ref, w_ref, b_ref, o_ref, buf_a, buf_b, cols):
        # Hoisted constants (JAX does not CSE iota/broadcast in the unrolled loop).
        col_in_row = jax.lax.broadcasted_iota(jnp.int32, (1, l_max), 1) & (rstride - 1)
        zero_head = jnp.zeros((CP, o0), jnp.float32)
        zero_gap = jnp.zeros((CP, 2 * rstride), jnp.float32)

        # Head band [0, o0) is never written by any layer; clearing it (2 small
        # stores) guarantees the top/left implicit zero padding regardless of
        # stale data left in scratch by the previous grid step.
        buf_a[:, 0:o0] = zero_head
        buf_b[:, 0:o0] = zero_head

        hi, wi = h, w
        for layer in range(N_LAYERS):
            ho, wo = hi + K - 1, wi + K - 1
            L = ho * rstride

            # Build the (9*CP, L) im2col slab: one aligned store per tap.
            for kh in range(K):
                for kw in range(K):
                    t = kh * K + kw
                    start = kh * rstride + kw
                    if layer == 0:
                        tap = x_ref[0, :, start:start + L]
                    elif layer % 2 == 1:
                        tap = buf_b[:, start:start + L]
                    else:
                        tap = buf_a[:, start:start + L]
                    cols[t * CP:(t + 1) * CP, 0:L] = tap

            if layer + 1 < N_LAYERS:
                # Single stacked-K matmul: (CP, 288) x (288, L) -> (CP, L).
                acc = jax.lax.dot_general(
                    w_ref[layer], cols[:, 0:L],
                    dimension_numbers=(((1,), (0,)), ((), ())),
                    preferred_element_type=jnp.float32)
                y = jnp.maximum(acc + b_ref[layer], 0.0)
                # Zero garbage grid columns (>= wo): they are the next layer's
                # left/right zero padding.
                y = jnp.where(col_in_row[:, 0:L] < wo, y, 0.0)
                dst = buf_b if layer % 2 == 0 else buf_a
                dst[:, o0:o0 + L] = y
                # Clear the 2-row band just below this output: the next layer
                # reads it as bottom padding and it may hold stale data from a
                # previous (larger) layer of the previous image.
                dst[:, o0 + L:o0 + L + 2 * rstride] = zero_gap
            else:
                # Final layer: only channel 0 is real -> use one sublane granule
                # of weight/bias so the matmul M and epilogue are (8, L), not (32, L).
                acc = jax.lax.dot_general(
                    w_ref[layer, 0:8, :], cols[:, 0:L],
                    dimension_numbers=(((1,), (0,)), ((), ())),
                    preferred_element_type=jnp.float32)
                y = jnp.maximum(acc + b_ref[layer, 0:8, :], 0.0)
                y = jnp.where(col_in_row[:, 0:L] < wo, y, 0.0)
                o_ref[0] = y[0:1, :]

            hi, wi = ho, wo

    return kernel


def decoder_pallas(x_nchw, w_all, b_all):
    """Fused Decoder forward. x_nchw: (N, 30, H, W) f32 -> (N, 1, H+12, W+12) f32."""
    n, cin, h, w = x_nchw.shape
    assert cin == C
    ho_out = h + N_LAYERS * (K - 1)
    wo_out = w + N_LAYERS * (K - 1)
    # Row stride of the flattened spatial grid: power of two (mask uses bitwise AND),
    # large enough to hold the widest padded activation.
    rstride = max(32, pl.next_power_of_2(wo_out + 2 * (K - 1)))
    assert rstride & (rstride - 1) == 0, "rstride must be a power of two"
    rows = (ho_out + 2 * (K - 1) + 7) // 8 * 8       # tallest padded activation
    flat = rows * rstride
    l_out = ho_out * rstride

    # Pre-padded, channel-padded, lane-dense input slab: data at grid offset
    # (K-1, K-1), zeros elsewhere.  Done once by XLA in HBM; the pipeline DMA
    # overlaps it, and the kernel needs no placement loop / input zeroing.
    x_slab = jnp.pad(
        x_nchw,
        ((0, 0), (0, CP - cin),
         (K - 1, rows - h - (K - 1)),
         (K - 1, rstride - w - (K - 1))),
    ).reshape(n, CP, flat)

    kernel = _make_decoder_kernel(h, w, rstride, rows)

    out_slab = pl.pallas_call(
        kernel,
        out_shape=jax.ShapeDtypeStruct((n, 1, l_out), jnp.float32),
        grid_spec=pltpu.PrefetchScalarGridSpec(
            num_scalar_prefetch=0,
            grid=(n,),
            in_specs=[
                pl.BlockSpec((1, CP, flat), lambda i: (i, 0, 0)),
                pl.BlockSpec(w_all.shape, lambda i: (0, 0, 0)),
                pl.BlockSpec(b_all.shape, lambda i: (0, 0, 0)),
            ],
            out_specs=pl.BlockSpec((1, 1, l_out), lambda i: (i, 0, 0)),
            scratch_shapes=[
                pltpu.VMEM((CP, flat), jnp.float32),      # ping
                pltpu.VMEM((CP, flat), jnp.float32),      # pong
                pltpu.VMEM((KDIM, l_out), jnp.float32),   # im2col slab
            ],
        ),
        compiler_params=pltpu.CompilerParams(
            dimension_semantics=("parallel",)),
    )(x_slab, w_all, b_all)

    # Lane-dense slab -> (N, 1, Ho, Wo): free reshape + tiny slice in the wrapper.
    return out_slab.reshape(n, 1, ho_out, rstride)[:, :, :, :wo_out]


def init_decoder_params(key):
    """Deterministic params matching the PyTorch module's layer shapes."""
    chans = [(30, 30)] * 5 + [(30, 1)]
    params = []
    for i, (cin, cout) in enumerate(chans):
        k_w, k_b = jax.random.split(jax.random.fold_in(key, i))
        fan = cin * K * K
        bound = 1.0 / jnp.sqrt(fan)
        wgt = jax.random.uniform(k_w, (cin, cout, K, K), jnp.float32, -bound, bound)
        b = jax.random.uniform(k_b, (cout,), jnp.float32, -bound, bound)
        params.append((wgt, b))
    return params


def prepare_params(params):
    """One-time parameter prep (hoisted out of the forward path).

    ConvTranspose2d(stride=1) weight (Cin, Cout, K, K) is flipped + transposed to
    its conv equivalent, channel-padded to CP, and laid out matmul-ready as
    (CP, 9*CP): column block t = kh*K + kw holds tap (kh, kw), matching the
    im2col row layout.  Biases are padded to (CP, 1).
    """
    ws, bs = [], []
    for (wgt, b) in params:
        cout = wgt.shape[1]
        w_conv = jnp.transpose(wgt[:, :, ::-1, ::-1], (1, 0, 2, 3))     # (Cout, Cin, K, K)
        w_conv = jnp.pad(w_conv, ((0, CP - cout), (0, CP - C), (0, 0), (0, 0)))
        w2 = jnp.transpose(w_conv, (0, 2, 3, 1)).reshape(CP, KDIM)      # (CP, 9*CP)
        ws.append(w2)
        bs.append(jnp.pad(b, (0, CP - cout)).reshape(CP, 1))
    return jnp.stack(ws), jnp.stack(bs)          # (6, CP, 288), (6, CP, 1)


def _reference_forward(x_nchw, params):
    """Pure-JAX reference (same math, no Pallas) for a correctness check."""
    x = jnp.transpose(x_nchw, (0, 2, 3, 1))
    for (w_deconv, b) in params:
        w_conv = jnp.transpose(w_deconv[:, :, ::-1, ::-1], (2, 3, 0, 1))
        x = jnp.pad(x, ((0, 0), (K - 1, K - 1), (K - 1, K - 1), (0, 0)))
        y = jax.lax.conv_general_dilated(
            x, w_conv, window_strides=(1, 1), padding="VALID",
            dimension_numbers=("NHWC", "HWIO", "NHWC"))
        x = jnp.maximum(y + b[None, None, None, :], 0.0)
    return jnp.transpose(x, (0, 3, 1, 2))


if __name__ == "__main__":
    key = jax.random.PRNGKey(0)
    params = init_decoder_params(key)
    w_all, b_all = prepare_params(params)            # one-time parameter prep

    # Small latent input consistent with the module: NCHW, 30 channels.
    x = jax.random.normal(jax.random.fold_in(key, 100), (2, 30, 8, 8), jnp.float32)

    decoder_forward = jax.jit(decoder_pallas)
    out = jax.block_until_ready(decoder_forward(x, w_all, b_all))
    assert out.shape == (2, 1, 20, 20), out.shape

    ref = jax.block_until_ready(_reference_forward(x, params))
    assert jnp.allclose(out, ref, rtol=1e-4, atol=1e-4), "mismatch vs reference"

    print("KERNEL_OK")
</pallas_src>

<mosaic_0001>
module attributes {stable_mosaic.version = 11 : i64} {
  func.func @kernel(%arg0: i32, %arg1: memref<1x32x768xf32, #tpu.memory_space<vmem>>, %arg2: memref<6x32x288xf32, #tpu.memory_space<vmem>>, %arg3: memref<6x32x1xf32, #tpu.memory_space<vmem>>, %arg4: memref<1x1x640xf32, #tpu.memory_space<vmem>>, %arg5: memref<32x768xf32, #tpu.memory_space<vmem>>, %arg6: memref<32x768xf32, #tpu.memory_space<vmem>>, %arg7: memref<288x640xf32, #tpu.memory_space<vmem>>) attributes {dimension_semantics = [#tpu.dimension_semantics<parallel>], iteration_bounds = array<i64: 2>, scalar_prefetch = 0 : i64, scratch_operands = 3 : i64, tpu.core_type = #tpu.core_type<tc>, window_params = [{transform_indices = @transform_0, window_bounds = array<i64: 1, 32, 768>}, {pipeline_mode = #tpu.pipeline_mode<synchronous>, transform_indices = @transform_1, window_bounds = array<i64: 6, 32, 288>}, {pipeline_mode = #tpu.pipeline_mode<synchronous>, transform_indices = @transform_2, window_bounds = array<i64: 6, 32, 1>}, {transform_indices = @transform_3, window_bounds = array<i64: 1, 1, 640>}]} {
    %0 = tpu.iota {dimensions = array<i32: 1>} : vector<1x640xi32>
    %c31_i32 = arith.constant 31 : i32
    %1 = vector.broadcast %c31_i32 : i32 to vector<1x640xi32>
    %2 = arith.andi %0, %1 : vector<1x640xi32>
    %cst = arith.constant 0.000000e+00 : f32
    %3 = vector.broadcast %cst : f32 to vector<32x66xf32>
    %cst_0 = arith.constant 0.000000e+00 : f32
    %4 = vector.broadcast %cst_0 : f32 to vector<32x64xf32>
    %c0 = arith.constant 0 : index
    %c0_1 = arith.constant 0 : index
    %5 = vector.load %arg5[%c0, %c0_1] : memref<32x768xf32, #tpu.memory_space<vmem>>, vector<32x66xf32>
    tpu.vector_store %arg5[%c0, %c0_1], %3 {strides = array<i32>} : memref<32x768xf32, #tpu.memory_space<vmem>>, vector<32x66xf32>,
    %c0_2 = arith.constant 0 : index
    %c0_3 = arith.constant 0 : index
    %6 = vector.load %arg6[%c0_2, %c0_3] : memref<32x768xf32, #tpu.memory_space<vmem>>, vector<32x66xf32>
    tpu.vector_store %arg6[%c0_2, %c0_3], %3 {strides = array<i32>} : memref<32x768xf32, #tpu.memory_space<vmem>>, vector<32x66xf32>,
    %c0_4 = arith.constant 0 : index
    %c0_5 = arith.constant 0 : index
    %c0_6 = arith.constant 0 : index
    %7 = vector.load %arg1[%c0_4, %c0_5, %c0_6] : memref<1x32x768xf32, #tpu.memory_space<vmem>>, vector<1x32x320xf32>
    %8 = vector.shape_cast %7 : vector<1x32x320xf32> to vector<32x320xf32>
    %c0_7 = arith.constant 0 : index
    %c0_8 = arith.constant 0 : index
    %9 = vector.load %arg7[%c0_7, %c0_8] : memref<288x640xf32, #tpu.memory_space<vmem>>, vector<32x320xf32>
    tpu.vector_store %arg7[%c0_7, %c0_8], %8 {strides = array<i32>} : memref<288x640xf32, #tpu.memory_space<vmem>>, vector<32x320xf32>,
    %c0_9 = arith.constant 0 : index
    %c0_10 = arith.constant 0 : index
    %c1 = arith.constant 1 : index
    %10 = vector.load %arg1[%c0_9, %c0_10, %c1] : memref<1x32x768xf32, #tpu.memory_space<vmem>>, vector<1x32x320xf32>
    %11 = vector.shape_cast %10 : vector<1x32x320xf32> to vector<32x320xf32>
    %c32 = arith.constant 32 : index
    %c0_11 = arith.constant 0 : index
    %12 = vector.load %arg7[%c32, %c0_11] : memref<288x640xf32, #tpu.memory_space<vmem>>, vector<32x320xf32>
    tpu.vector_store %arg7[%c32, %c0_11], %11 {strides = array<i32>} : memref<288x640xf32, #tpu.memory_space<vmem>>, vector<32x320xf32>,
    %c0_12 = arith.constant 0 : index
    %c0_13 = arith.constant 0 : index
    %c2 = arith.constant 2 : index
    %13 = vector.load %arg1[%c0_12, %c0_13, %c2] : memref<1x32x768xf32, #tpu.memory_space<vmem>>, vector<1x32x320xf32>
    %14 = vector.shape_cast %13 : vector<1x32x320xf32> to vector<32x320xf32>
    %c64 = arith.constant 64 : index
    %c0_14 = arith.constant 0 : index
    %15 = vector.load %arg7[%c64, %c0_14] : memref<288x640xf32, #tpu.memory_space<vmem>>, vector<32x320xf32>
    tpu.vector_store %arg7[%c64, %c0_14], %14 {strides = array<i32>} : memref<288x640xf32, #tpu.memory_space<vmem>>, vector<32x320xf32>,
    %c0_15 = arith.constant 0 : index
    %c0_16 = arith.constant 0 : index
    %c32_17 = arith.constant 32 : index
    %16 = vector.load %arg1[%c0_15, %c0_16, %c32_17] : memref<1x32x768xf32, #tpu.memory_space<vmem>>, vector<1x32x320xf32>
    %17 = vector.shape_cast %16 : vector<1x32x320xf32> to vector<32x320xf32>
    %c96 = arith.constant 96 : index
    %c0_18 = arith.constant 0 : index
    %18 = vector.load %arg7[%c96, %c0_18] : memref<288x640xf32, #tpu.memory_space<vmem>>, vector<32x320xf32>
    tpu.vector_store %arg7[%c96, %c0_18], %17 {strides = array<i32>} : memref<288x640xf32, #tpu.memory_space<vmem>>, vector<32x320xf32>,
    %c0_19 = arith.constant 0 : index
    %c0_20 = arith.constant 0 : index
    %c33 = arith.constant 33 : index
    %19 = vector.load %arg1[%c0_19, %c0_20, %c33] : memref<1x32x768xf32, #tpu.memory_space<vmem>>, vector<1x32x320xf32>
    %20 = vector.shape_cast %19 : vector<1x32x320xf32> to vector<32x320xf32>
    %c128 = arith.constant 128 : index
    %c0_21 = arith.constant 0 : index
    %21 = vector.load %arg7[%c128, %c0_21] : memref<288x640xf32, #tpu.memory_space<vmem>>, vector<32x320xf32>
    tpu.vector_store %arg7[%c128, %c0_21], %20 {strides = array<i32>} : memref<288x640xf32, #tpu.memory_space<vmem>>, vector<32x320xf32>,
    %c0_22 = arith.constant 0 : index
    %c0_23 = arith.constant 0 : index
    %c34 = arith.constant 34 : index
    %22 = vector.load %arg1[%c0_22, %c0_23, %c34] : memref<1x32x768xf32, #tpu.memory_space<vmem>>, vector<1x32x320xf32>
    %23 = vector.shape_cast %22 : vector<1x32x320xf32> to vector<32x320xf32>
    %c160 = arith.constant 160 : index
    %c0_24 = arith.constant 0 : index
    %24 = vector.load %arg7[%c160, %c0_24] : memref<288x640xf32, #tpu.memory_space<vmem>>, vector<32x320xf32>
    tpu.vector_store %arg7[%c160, %c0_24], %23 {strides = array<i32>} : memref<288x640xf32, #tpu.memory_space<vmem>>, vector<32x320xf32>,
    %c0_25 = arith.constant 0 : index
    %c0_26 = arith.constant 0 : index
    %c64_27 = arith.constant 64 : index
    %25 = vector.load %arg1[%c0_25, %c0_26, %c64_27] : memref<1x32x768xf32, #tpu.memory_space<vmem>>, vector<1x32x320xf32>
    %26 = vector.shape_cast %25 : vector<1x32x320xf32> to vector<32x320xf32>
    %c192 = arith.constant 192 : index
    %c0_28 = arith.constant 0 : index
    %27 = vector.load %arg7[%c192, %c0_28] : memref<288x640xf32, #tpu.memory_space<vmem>>, vector<32x320xf32>
    tpu.vector_store %arg7[%c192, %c0_28], %26 {strides = array<i32>} : memref<288x640xf32, #tpu.memory_space<vmem>>, vector<32x320xf32>,
    %c0_29 = arith.constant 0 : index
    %c0_30 = arith.constant 0 : index
    %c65 = arith.constant 65 : index
    %28 = vector.load %arg1[%c0_29, %c0_30, %c65] : memref<1x32x768xf32, #tpu.memory_space<vmem>>, vector<1x32x320xf32>
    %29 = vector.shape_cast %28 : vector<1x32x320xf32> to vector<32x320xf32>
    %c224 = arith.constant 224 : index
    %c0_31 = arith.constant 0 : index
    %30 = vector.load %arg7[%c224, %c0_31] : memref<288x640xf32, #tpu.memory_space<vmem>>, vector<32x320xf32>
    tpu.vector_store %arg7[%c224, %c0_31], %29 {strides = array<i32>} : memref<288x640xf32, #tpu.memory_space<vmem>>, vector<32x320xf32>,
    %c0_32 = arith.constant 0 : index
    %c0_33 = arith.constant 0 : index
    %c66 = arith.constant 66 : index
    %31 = vector.load %arg1[%c0_32, %c0_33, %c66] : memref<1x32x768xf32, #tpu.memory_space<vmem>>, vector<1x32x320xf32>
    %32 = vector.shape_cast %31 : vector<1x32x320xf32> to vector<32x320xf32>
    %c256 = arith.constant 256 : index
    %c0_34 = arith.constant 0 : index
    %33 = vector.load %arg7[%c256, %c0_34] : memref<288x640xf32, #tpu.memory_space<vmem>>, vector<32x320xf32>
    tpu.vector_store %arg7[%c256, %c0_34], %32 {strides = array<i32>} : memref<288x640xf32, #tpu.memory_space<vmem>>, vector<32x320xf32>,
    %c0_35 = arith.constant 0 : index
    %c0_36 = arith.constant 0 : index
    %c0_37 = arith.constant 0 : index
    %34 = vector.load %arg2[%c0_35, %c0_36, %c0_37] : memref<6x32x288xf32, #tpu.memory_space<vmem>>, vector<1x32x288xf32>
    %35 = vector.shape_cast %34 : vector<1x32x288xf32> to vector<32x288xf32>
    %c0_38 = arith.constant 0 : index
    %c0_39 = arith.constant 0 : index
    %36 = vector.load %arg7[%c0_38, %c0_39] : memref<288x640xf32, #tpu.memory_space<vmem>>, vector<288x320xf32>
    %cst_40 = arith.constant dense<0.000000e+00> : vector<32x320xf32>
    %37 = tpu.matmul %35, %36, %cst_40 {dimension_numbers = #tpu.dot_dimension_numbers<[1], [0], [0], [1], [0, 0, 1, 1], [], []>} : vector<32x288xf32>, vector<288x320xf32>, vector<32x320xf32> -> vector<32x320xf32>
    %c0_41 = arith.constant 0 : index
    %c0_42 = arith.constant 0 : index
    %c0_43 = arith.constant 0 : index
    %38 = vector.load %arg3[%c0_41, %c0_42, %c0_43] : memref<6x32x1xf32, #tpu.memory_space<vmem>>, vector<1x32x1xf32>
    %39 = vector.shape_cast %38 : vector<1x32x1xf32> to vector<32x1xf32>
    %40 = vector.broadcast %39 : vector<32x1xf32> to vector<32x320xf32>
    %41 = arith.addf %37, %40 : vector<32x320xf32>
    %cst_44 = arith.constant 0.000000e+00 : f32
    %42 = vector.broadcast %cst_44 : f32 to vector<32x320xf32>
    %43 = arith.maximumf %41, %42 : vector<32x320xf32>
    %44 = vector.extract_strided_slice %2 {offsets = [0, 0], sizes = [1, 320], strides = [1, 1]} : vector<1x640xi32> to vector<1x320xi32>
    %c10_i32 = arith.constant 10 : i32
    %45 = vector.broadcast %c10_i32 : i32 to vector<1x320xi32>
    %46 = arith.cmpi slt, %44, %45 : vector<1x320xi32>
    %cst_45 = arith.constant 0.000000e+00 : f32
    %47 = vector.shape_cast %46 : vector<1x320xi1> to vector<1x320xi1>
    %48 = vector.broadcast %47 : vector<1x320xi1> to vector<32x320xi1>
    %49 = vector.broadcast %cst_45 : f32 to vector<32x320xf32>
    %50 = arith.select %48, %43, %49 : vector<32x320xi1>, vector<32x320xf32>
    %c0_46 = arith.constant 0 : index
    %c66_47 = arith.constant 66 : index
    %51 = vector.load %arg6[%c0_46, %c66_47] : memref<32x768xf32, #tpu.memory_space<vmem>>, vector<32x320xf32>
    tpu.vector_store %arg6[%c0_46, %c66_47], %50 {strides = array<i32>} : memref<32x768xf32, #tpu.memory_space<vmem>>, vector<32x320xf32>,
    %c0_48 = arith.constant 0 : index
    %c386 = arith.constant 386 : index
    %52 = vector.load %arg6[%c0_48, %c386] : memref<32x768xf32, #tpu.memory_space<vmem>>, vector<32x64xf32>
    tpu.vector_store %arg6[%c0_48, %c386], %4 {strides = array<i32>} : memref<32x768xf32, #tpu.memory_space<vmem>>, vector<32x64xf32>,
    %c0_49 = arith.constant 0 : index
    %c0_50 = arith.constant 0 : index
    %53 = vector.load %arg6[%c0_49, %c0_50] : memref<32x768xf32, #tpu.memory_space<vmem>>, vector<32x384xf32>
    %c0_51 = arith.constant 0 : index
    %c0_52 = arith.constant 0 : index
    %54 = vector.load %arg7[%c0_51, %c0_52] : memref<288x640xf32, #tpu.memory_space<vmem>>, vector<32x384xf32>
    tpu.vector_store %arg7[%c0_51, %c0_52], %53 {strides = array<i32>} : memref<288x640xf32, #tpu.memory_space<vmem>>, vector<32x384xf32>,
    %c0_53 = arith.constant 0 : index
    %c1_54 = arith.constant 1 : index
    %55 = vector.load %arg6[%c0_53, %c1_54] : memref<32x768xf32, #tpu.memory_space<vmem>>, vector<32x384xf32>
    %c32_55 = arith.constant 32 : index
    %c0_56 = arith.constant 0 : index
    %56 = vector.load %arg7[%c32_55, %c0_56] : memref<288x640xf32, #tpu.memory_space<vmem>>, vector<32x384xf32>
    tpu.vector_store %arg7[%c32_55, %c0_56], %55 {strides = array<i32>} : memref<288x640xf32, #tpu.memory_space<vmem>>, vector<32x384xf32>,
    %c0_57 = arith.constant 0 : index
    %c2_58 = arith.constant 2 : index
    %57 = vector.load %arg6[%c0_57, %c2_58] : memref<32x768xf32, #tpu.memory_space<vmem>>, vector<32x384xf32>
    %c64_59 = arith.constant 64 : index
    %c0_60 = arith.constant 0 : index
    %58 = vector.load %arg7[%c64_59, %c0_60] : memref<288x640xf32, #tpu.memory_space<vmem>>, vector<32x384xf32>
    tpu.vector_store %arg7[%c64_59, %c0_60], %57 {strides = array<i32>} : memref<288x640xf32, #tpu.memory_space<vmem>>, vector<32x384xf32>,
    %c0_61 = arith.constant 0 : index
    %c32_62 = arith.constant 32 : index
    %59 = vector.load %arg6[%c0_61, %c32_62] : memref<32x768xf32, #tpu.memory_space<vmem>>, vector<32x384xf32>
    %c96_63 = arith.constant 96 : index
    %c0_64 = arith.constant 0 : index
    %60 = vector.load %arg7[%c96_63, %c0_64] : memref<288x640xf32, #tpu.memory_space<vmem>>, vector<32x384xf32>
    tpu.vector_store %arg7[%c96_63, %c0_64], %59 {strides = array<i32>} : memref<288x640xf32, #tpu.memory_space<vmem>>, vector<32x384xf32>,
    %c0_65 = arith.constant 0 : index
    %c33_66 = arith.constant 33 : index
    %61 = vector.load %arg6[%c0_65, %c33_66] : memref<32x768xf32, #tpu.memory_space<vmem>>, vector<32x384xf32>
    %c128_67 = arith.constant 128 : index
    %c0_68 = arith.constant 0 : index
    %62 = vector.load %arg7[%c128_67, %c0_68] : memref<288x640xf32, #tpu.memory_space<vmem>>, vector<32x384xf32>
    tpu.vector_store %arg7[%c128_67, %c0_68], %61 {strides = array<i32>} : memref<288x640xf32, #tpu.memory_space<vmem>>, vector<32x384xf32>,
    %c0_69 = arith.constant 0 : index
    %c34_70 = arith.constant 34 : index
    %63 = vector.load %arg6[%c0_69, %c34_70] : memref<32x768xf32, #tpu.memory_space<vmem>>, vector<32x384xf32>
    %c160_71 = arith.constant 160 : index
    %c0_72 = arith.constant 0 : index
    %64 = vector.load %arg7[%c160_71, %c0_72] : memref<288x640xf32, #tpu.memory_space<vmem>>, vector<32x384xf32>
    tpu.vector_store %arg7[%c160_71, %c0_72], %63 {strides = array<i32>} : memref<288x640xf32, #tpu.memory_space<vmem>>, vector<32x384xf32>,
    %c0_73 = arith.constant 0 : index
    %c64_74 = arith.constant 64 : index
    %65 = vector.load %arg6[%c0_73, %c64_74] : memref<32x768xf32, #tpu.memory_space<vmem>>, vector<32x384xf32>
    %c192_75 = arith.constant 192 : index
    %c0_76 = arith.constant 0 : index
    %66 = vector.load %arg7[%c192_75, %c0_76] : memref<288x640xf32, #tpu.memory_space<vmem>>, vector<32x384xf32>
    tpu.vector_store %arg7[%c192_75, %c0_76], %65 {strides = array<i32>} : memref<288x640xf32, #tpu.memory_space<vmem>>, vector<32x384xf32>,
    %c0_77 = arith.constant 0 : index
    %c65_78 = arith.constant 65 : index
    %67 = vector.load %arg6[%c0_77, %c65_78] : memref<32x768xf32, #tpu.memory_space<vmem>>, vector<32x384xf32>
    %c224_79 = arith.constant 224 : index
    %c0_80 = arith.constant 0 : index
    %68 = vector.load %arg7[%c224_79, %c0_80] : memref<288x640xf32, #tpu.memory_space<vmem>>, vector<32x384xf32>
    tpu.vector_store %arg7[%c224_79, %c0_80], %67 {strides = array<i32>} : memref<288x640xf32, #tpu.memory_space<vmem>>, vector<32x384xf32>,
    %c0_81 = arith.constant 0 : index
    %c66_82 = arith.constant 66 : index
    %69 = vector.load %arg6[%c0_81, %c66_82] : memref<32x768xf32, #tpu.memory_space<vmem>>, vector<32x384xf32>
    %c256_83 = arith.constant 256 : index
    %c0_84 = arith.constant 0 : index
    %70 = vector.load %arg7[%c256_83, %c0_84] : memref<288x640xf32, #tpu.memory_space<vmem>>, vector<32x384xf32>
    tpu.vector_store %arg7[%c256_83, %c0_84], %69 {strides = array<i32>} : memref<288x640xf32, #tpu.memory_space<vmem>>, vector<32x384xf32>,
    %c1_85 = arith.constant 1 : index
    %c0_86 = arith.constant 0 : index
    %c0_87 = arith.constant 0 : index
    %71 = vector.load %arg2[%c1_85, %c0_86, %c0_87] : memref<6x32x288xf32, #tpu.memory_space<vmem>>, vector<1x32x288xf32>
    %72 = vector.shape_cast %71 : vector<1x32x288xf32> to vector<32x288xf32>
    %c0_88 = arith.constant 0 : index
    %c0_89 = arith.constant 0 : index
    %73 = vector.load %arg7[%c0_88, %c0_89] : memref<288x640xf32, #tpu.memory_space<vmem>>, vector<288x384xf32>
    %cst_90 = arith.constant dense<0.000000e+00> : vector<32x384xf32>
    %74 = tpu.matmul %72, %73, %cst_90 {dimension_numbers = #tpu.dot_dimension_numbers<[1], [0], [0], [1], [0, 0, 1, 1], [], []>} : vector<32x288xf32>, vector<288x384xf32>, vector<32x384xf32> -> vector<32x384xf32>
    %c1_91 = arith.constant 1 : index
    %c0_92 = arith.constant 0 : index
    %c0_93 = arith.constant 0 : index
    %75 = vector.load %arg3[%c1_91, %c0_92, %c0_93] : memref<6x32x1xf32, #tpu.memory_space<vmem>>, vector<1x32x1xf32>
    %76 = vector.shape_cast %75 : vector<1x32x1xf32> to vector<32x1xf32>
    %77 = vector.broadcast %76 : vector<32x1xf32> to vector<32x384xf32>
    %78 = arith.addf %74, %77 : vector<32x384xf32>
    %cst_94 = arith.constant 0.000000e+00 : f32
    %79 = vector.broadcast %cst_94 : f32 to vector<32x384xf32>
    %80 = arith.maximumf %78, %79 : vector<32x384xf32>
    %81 = vector.extract_strided_slice %2 {offsets = [0, 0], sizes = [1, 384], strides = [1, 1]} : vector<1x640xi32> to vector<1x384xi32>
    %c12_i32 = arith.constant 12 : i32
    %82 = vector.broadcast %c12_i32 : i32 to vector<1x384xi32>
    %83 = arith.cmpi slt, %81, %82 : vector<1x384xi32>
    %cst_95 = arith.constant 0.000000e+00 : f32
    %84 = vector.shape_cast %83 : vector<1x384xi1> to vector<1x384xi1>
    %85 = vector.broadcast %84 : vector<1x384xi1> to vector<32x384xi1>
    %86 = vector.broadcast %cst_95 : f32 to vector<32x384xf32>
    %87 = arith.select %85, %80, %86 : vector<32x384xi1>, vector<32x384xf32>
    %c0_96 = arith.constant 0 : index
    %c66_97 = arith.constant 66 : index
    %88 = vector.load %arg5[%c0_96, %c66_97] : memref<32x768xf32, #tpu.memory_space<vmem>>, vector<32x384xf32>
    tpu.vector_store %arg5[%c0_96, %c66_97], %87 {strides = array<i32>} : memref<32x768xf32, #tpu.memory_space<vmem>>, vector<32x384xf32>,
    %c0_98 = arith.constant 0 : index
    %c450 = arith.constant 450 : index
    %89 = vector.load %arg5[%c0_98, %c450] : memref<32x768xf32, #tpu.memory_space<vmem>>, vector<32x64xf32>
    tpu.vector_store %arg5[%c0_98, %c450], %4 {strides = array<i32>} : memref<32x768xf32, #tpu.memory_space<vmem>>, vector<32x64xf32>,
    %c0_99 = arith.constant 0 : index
    %c0_100 = arith.constant 0 : index
    %90 = vector.load %arg5[%c0_99, %c0_100] : memref<32x768xf32, #tpu.memory_space<vmem>>, vector<32x448xf32>
    %c0_101 = arith.constant 0 : index
    %c0_102 = arith.constant 0 : index
    %91 = vector.load %arg7[%c0_101, %c0_102] : memref<288x640xf32, #tpu.memory_space<vmem>>, vector<32x448xf32>
    tpu.vector_store %arg7[%c0_101, %c0_102], %90 {strides = array<i32>} : memref<288x640xf32, #tpu.memory_space<vmem>>, vector<32x448xf32>,
    %c0_103 = arith.constant 0 : index
    %c1_104 = arith.constant 1 : index
    %92 = vector.load %arg5[%c0_103, %c1_104] : memref<32x768xf32, #tpu.memory_space<vmem>>, vector<32x448xf32>
    %c32_105 = arith.constant 32 : index
    %c0_106 = arith.constant 0 : index
    %93 = vector.load %arg7[%c32_105, %c0_106] : memref<288x640xf32, #tpu.memory_space<vmem>>, vector<32x448xf32>
    tpu.vector_store %arg7[%c32_105, %c0_106], %92 {strides = array<i32>} : memref<288x640xf32, #tpu.memory_space<vmem>>, vector<32x448xf32>,
    %c0_107 = arith.constant 0 : index
    %c2_108 = arith.constant 2 : index
    %94 = vector.load %arg5[%c0_107, %c2_108] : memref<32x768xf32, #tpu.memory_space<vmem>>, vector<32x448xf32>
    %c64_109 = arith.constant 64 : index
    %c0_110 = arith.constant 0 : index
    %95 = vector.load %arg7[%c64_109, %c0_110] : memref<288x640xf32, #tpu.memory_space<vmem>>, vector<32x448xf32>
    tpu.vector_store %arg7[%c64_109, %c0_110], %94 {strides = array<i32>} : memref<288x640xf32, #tpu.memory_space<vmem>>, vector<32x448xf32>,
    %c0_111 = arith.constant 0 : index
    %c32_112 = arith.constant 32 : index
    %96 = vector.load %arg5[%c0_111, %c32_112] : memref<32x768xf32, #tpu.memory_space<vmem>>, vector<32x448xf32>
    %c96_113 = arith.constant 96 : index
    %c0_114 = arith.constant 0 : index
    %97 = vector.load %arg7[%c96_113, %c0_114] : memref<288x640xf32, #tpu.memory_space<vmem>>, vector<32x448xf32>
    tpu.vector_store %arg7[%c96_113, %c0_114], %96 {strides = array<i32>} : memref<288x640xf32, #tpu.memory_space<vmem>>, vector<32x448xf32>,
    %c0_115 = arith.constant 0 : index
    %c33_116 = arith.constant 33 : index
    %98 = vector.load %arg5[%c0_115, %c33_116] : memref<32x768xf32, #tpu.memory_space<vmem>>, vector<32x448xf32>
    %c128_117 = arith.constant 128 : index
    %c0_118 = arith.constant 0 : index
    %99 = vector.load %arg7[%c128_117, %c0_118] : memref<288x640xf32, #tpu.memory_space<vmem>>, vector<32x448xf32>
    tpu.vector_store %arg7[%c128_117, %c0_118], %98 {strides = array<i32>} : memref<288x640xf32, #tpu.memory_space<vmem>>, vector<32x448xf32>,
    %c0_119 = arith.constant 0 : index
    %c34_120 = arith.constant 34 : index
    %100 = vector.load %arg5[%c0_119, %c34_120] : memref<32x768xf32, #tpu.memory_space<vmem>>, vector<32x448xf32>
    %c160_121 = arith.constant 160 : index
    %c0_122 = arith.constant 0 : index
    %101 = vector.load %arg7[%c160_121, %c0_122] : memref<288x640xf32, #tpu.memory_space<vmem>>, vector<32x448xf32>
    tpu.vector_store %arg7[%c160_121, %c0_122], %100 {strides = array<i32>} : memref<288x640xf32, #tpu.memory_space<vmem>>, vector<32x448xf32>,
    %c0_123 = arith.constant 0 : index
    %c64_124 = arith.constant 64 : index
    %102 = vector.load %arg5[%c0_123, %c64_124] : memref<32x768xf32, #tpu.memory_space<vmem>>, vector<32x448xf32>
    %c192_125 = arith.constant 192 : index
    %c0_126 = arith.constant 0 : index
    %103 = vector.load %arg7[%c192_125, %c0_126] : memref<288x640xf32, #tpu.memory_space<vmem>>, vector<32x448xf32>
    tpu.vector_store %arg7[%c192_125, %c0_126], %102 {strides = array<i32>} : memref<288x640xf32, #tpu.memory_space<vmem>>, vector<32x448xf32>,
    %c0_127 = arith.constant 0 : index
    %c65_128 = arith.constant 65 : index
    %104 = vector.load %arg5[%c0_127, %c65_128] : memref<32x768xf32, #tpu.memory_space<vmem>>, vector<32x448xf32>
    %c224_129 = arith.constant 224 : index
    %c0_130 = arith.constant 0 : index
    %105 = vector.load %arg7[%c224_129, %c0_130] : memref<288x640xf32, #tpu.memory_space<vmem>>, vector<32x448xf32>
    tpu.vector_store %arg7[%c224_129, %c0_130], %104 {strides = array<i32>} : memref<288x640xf32, #tpu.memory_space<vmem>>, vector<32x448xf32>,
    %c0_131 = arith.constant 0 : index
    %c66_132 = arith.constant 66 : index
    %106 = vector.load %arg5[%c0_131, %c66_132] : memref<32x768xf32, #tpu.memory_space<vmem>>, vector<32x448xf32>
    %c256_133 = arith.constant 256 : index
    %c0_134 = arith.constant 0 : index
    %107 = vector.load %arg7[%c256_133, %c0_134] : memref<288x640xf32, #tpu.memory_space<vmem>>, vector<32x448xf32>
    tpu.vector_store %arg7[%c256_133, %c0_134], %106 {strides = array<i32>} : memref<288x640xf32, #tpu.memory_space<vmem>>, vector<32x448xf32>,
    %c2_135 = arith.constant 2 : index
    %c0_136 = arith.constant 0 : index
    %c0_137 = arith.constant 0 : index
    %108 = vector.load %arg2[%c2_135, %c0_136, %c0_137] : memref<6x32x288xf32, #tpu.memory_space<vmem>>, vector<1x32x288xf32>
    %109 = vector.shape_cast %108 : vector<1x32x288xf32> to vector<32x288xf32>
    %c0_138 = arith.constant 0 : index
    %c0_139 = arith.constant 0 : index
    %110 = vector.load %arg7[%c0_138, %c0_139] : memref<288x640xf32, #tpu.memory_space<vmem>>, vector<288x448xf32>
    %cst_140 = arith.constant dense<0.000000e+00> : vector<32x448xf32>
    %111 = tpu.matmul %109, %110, %cst_140 {dimension_numbers = #tpu.dot_dimension_numbers<[1], [0], [0], [1], [0, 0, 1, 1], [], []>} : vector<32x288xf32>, vector<288x448xf32>, vector<32x448xf32> -> vector<32x448xf32>
    %c2_141 = arith.constant 2 : index
    %c0_142 = arith.constant 0 : index
    %c0_143 = arith.constant 0 : index
    %112 = vector.load %arg3[%c2_141, %c0_142, %c0_143] : memref<6x32x1xf32, #tpu.memory_space<vmem>>, vector<1x32x1xf32>
    %113 = vector.shape_cast %112 : vector<1x32x1xf32> to vector<32x1xf32>
    %114 = vector.broadcast %113 : vector<32x1xf32> to vector<32x448xf32>
    %115 = arith.addf %111, %114 : vector<32x448xf32>
    %cst_144 = arith.constant 0.000000e+00 : f32
    %116 = vector.broadcast %cst_144 : f32 to vector<32x448xf32>
    %117 = arith.maximumf %115, %116 : vector<32x448xf32>
    %118 = vector.extract_strided_slice %2 {offsets = [0, 0], sizes = [1, 448], strides = [1, 1]} : vector<1x640xi32> to vector<1x448xi32>
    %c14_i32 = arith.constant 14 : i32
    %119 = vector.broadcast %c14_i32 : i32 to vector<1x448xi32>
    %120 = arith.cmpi slt, %118, %119 : vector<1x448xi32>
    %cst_145 = arith.constant 0.000000e+00 : f32
    %121 = vector.shape_cast %120 : vector<1x448xi1> to vector<1x448xi1>
    %122 = vector.broadcast %121 : vector<1x448xi1> to vector<32x448xi1>
    %123 = vector.broadcast %cst_145 : f32 to vector<32x448xf32>
    %124 = arith.select %122, %117, %123 : vector<32x448xi1>, vector<32x448xf32>
    %c0_146 = arith.constant 0 : index
    %c66_147 = arith.constant 66 : index
    %125 = vector.load %arg6[%c0_146, %c66_147] : memref<32x768xf32, #tpu.memory_space<vmem>>, vector<32x448xf32>
    tpu.vector_store %arg6[%c0_146, %c66_147], %124 {strides = array<i32>} : memref<32x768xf32, #tpu.memory_space<vmem>>, vector<32x448xf32>,
    %c0_148 = arith.constant 0 : index
    %c514 = arith.constant 514 : index
    %126 = vector.load %arg6[%c0_148, %c514] : memref<32x768xf32, #tpu.memory_space<vmem>>, vector<32x64xf32>
    tpu.vector_store %arg6[%c0_148, %c514], %4 {strides = array<i32>} : memref<32x768xf32, #tpu.memory_space<vmem>>, vector<32x64xf32>,
    %c0_149 = arith.constant 0 : index
    %c0_150 = arith.constant 0 : index
    %127 = vector.load %arg6[%c0_149, %c0_150] : memref<32x768xf32, #tpu.memory_space<vmem>>, vector<32x512xf32>
    %c0_151 = arith.constant 0 : index
    %c0_152 = arith.constant 0 : index
    %128 = vector.load %arg7[%c0_151, %c0_152] : memref<288x640xf32, #tpu.memory_space<vmem>>, vector<32x512xf32>
    tpu.vector_store %arg7[%c0_151, %c0_152], %127 {strides = array<i32>} : memref<288x640xf32, #tpu.memory_space<vmem>>, vector<32x512xf32>,
    %c0_153 = arith.constant 0 : index
    %c1_154 = arith.constant 1 : index
    %129 = vector.load %arg6[%c0_153, %c1_154] : memref<32x768xf32, #tpu.memory_space<vmem>>, vector<32x512xf32>
    %c32_155 = arith.constant 32 : index
    %c0_156 = arith.constant 0 : index
    %130 = vector.load %arg7[%c32_155, %c0_156] : memref<288x640xf32, #tpu.memory_space<vmem>>, vector<32x512xf32>
    tpu.vector_store %arg7[%c32_155, %c0_156], %129 {strides = array<i32>} : memref<288x640xf32, #tpu.memory_space<vmem>>, vector<32x512xf32>,
    %c0_157 = arith.constant 0 : index
    %c2_158 = arith.constant 2 : index
    %131 = vector.load %arg6[%c0_157, %c2_158] : memref<32x768xf32, #tpu.memory_space<vmem>>, vector<32x512xf32>
    %c64_159 = arith.constant 64 : index
    %c0_160 = arith.constant 0 : index
    %132 = vector.load %arg7[%c64_159, %c0_160] : memref<288x640xf32, #tpu.memory_space<vmem>>, vector<32x512xf32>
    tpu.vector_store %arg7[%c64_159, %c0_160], %131 {strides = array<i32>} : memref<288x640xf32, #tpu.memory_space<vmem>>, vector<32x512xf32>,
    %c0_161 = arith.constant 0 : index
    %c32_162 = arith.constant 32 : index
    %133 = vector.load %arg6[%c0_161, %c32_162] : memref<32x768xf32, #tpu.memory_space<vmem>>, vector<32x512xf32>
    %c96_163 = arith.constant 96 : index
    %c0_164 = arith.constant 0 : index
    %134 = vector.load %arg7[%c96_163, %c0_164] : memref<288x640xf32, #tpu.memory_space<vmem>>, vector<32x512xf32>
    tpu.vector_store %arg7[%c96_163, %c0_164], %133 {strides = array<i32>} : memref<288x640xf32, #tpu.memory_space<vmem>>, vector<32x512xf32>,
    %c0_165 = arith.constant 0 : index
    %c33_166 = arith.constant 33 : index
    %135 = vector.load %arg6[%c0_165, %c33_166] : memref<32x768xf32, #tpu.memory_space<vmem>>, vector<32x512xf32>
    %c128_167 = arith.constant 128 : index
    %c0_168 = arith.constant 0 : index
    %136 = vector.load %arg7[%c128_167, %c0_168] : memref<288x640xf32, #tpu.memory_space<vmem>>, vector<32x512xf32>
    tpu.vector_store %arg7[%c128_167, %c0_168], %135 {strides = array<i32>} : memref<288x640xf32, #tpu.memory_space<vmem>>, vector<32x512xf32>,
    %c0_169 = arith.constant 0 : index
    %c34_170 = arith.constant 34 : index
    %137 = vector.load %arg6[%c0_169, %c34_170] : memref<32x768xf32, #tpu.memory_space<vmem>>, vector<32x512xf32>
    %c160_171 = arith.constant 160 : index
    %c0_172 = arith.constant 0 : index
    %138 = vector.load %arg7[%c160_171, %c0_172] : memref<288x640xf32, #tpu.memory_space<vmem>>, vector<32x512xf32>
    tpu.vector_store %arg7[%c160_171, %c0_172], %137 {strides = array<i32>} : memref<288x640xf32, #tpu.memory_space<vmem>>, vector<32x512xf32>,
    %c0_173 = arith.constant 0 : index
    %c64_174 = arith.constant 64 : index
    %139 = vector.load %arg6[%c0_173, %c64_174] : memref<32x768xf32, #tpu.memory_space<vmem>>, vector<32x512xf32>
    %c192_175 = arith.constant 192 : index
    %c0_176 = arith.constant 0 : index
    %140 = vector.load %arg7[%c192_175, %c0_176] : memref<288x640xf32, #tpu.memory_space<vmem>>, vector<32x512xf32>
    tpu.vector_store %arg7[%c192_175, %c0_176], %139 {strides = array<i32>} : memref<288x640xf32, #tpu.memory_space<vmem>>, vector<32x512xf32>,
    %c0_177 = arith.constant 0 : index
    %c65_178 = arith.constant 65 : index
    %141 = vector.load %arg6[%c0_177, %c65_178] : memref<32x768xf32, #tpu.memory_space<vmem>>, vector<32x512xf32>
    %c224_179 = arith.constant 224 : index
    %c0_180 = arith.constant 0 : index
    %142 = vector.load %arg7[%c224_179, %c0_180] : memref<288x640xf32, #tpu.memory_space<vmem>>, vector<32x512xf32>
    tpu.vector_store %arg7[%c224_179, %c0_180], %141 {strides = array<i32>} : memref<288x640xf32, #tpu.memory_space<vmem>>, vector<32x512xf32>,
    %c0_181 = arith.constant 0 : index
    %c66_182 = arith.constant 66 : index
    %143 = vector.load %arg6[%c0_181, %c66_182] : memref<32x768xf32, #tpu.memory_space<vmem>>, vector<32x512xf32>
    %c256_183 = arith.constant 256 : index
    %c0_184 = arith.constant 0 : index
    %144 = vector.load %arg7[%c256_183, %c0_184] : memref<288x640xf32, #tpu.memory_space<vmem>>, vector<32x512xf32>
    tpu.vector_store %arg7[%c256_183, %c0_184], %143 {strides = array<i32>} : memref<288x640xf32, #tpu.memory_space<vmem>>, vector<32x512xf32>,
    %c3 = arith.constant 3 : index
    %c0_185 = arith.constant 0 : index
    %c0_186 = arith.constant 0 : index
    %145 = vector.load %arg2[%c3, %c0_185, %c0_186] : memref<6x32x288xf32, #tpu.memory_space<vmem>>, vector<1x32x288xf32>
    %146 = vector.shape_cast %145 : vector<1x32x288xf32> to vector<32x288xf32>
    %c0_187 = arith.constant 0 : index
    %c0_188 = arith.constant 0 : index
    %147 = vector.load %arg7[%c0_187, %c0_188] : memref<288x640xf32, #tpu.memory_space<vmem>>, vector<288x512xf32>
    %cst_189 = arith.constant dense<0.000000e+00> : vector<32x512xf32>
    %148 = tpu.matmul %146, %147, %cst_189 {dimension_numbers = #tpu.dot_dimension_numbers<[1], [0], [0], [1], [0, 0, 1, 1], [], []>} : vector<32x288xf32>, vector<288x512xf32>, vector<32x512xf32> -> vector<32x512xf32>
    %c3_190 = arith.constant 3 : index
    %c0_191 = arith.constant 0 : index
    %c0_192 = arith.constant 0 : index
    %149 = vector.load %arg3[%c3_190, %c0_191, %c0_192] : memref<6x32x1xf32, #tpu.memory_space<vmem>>, vector<1x32x1xf32>
    %150 = vector.shape_cast %149 : vector<1x32x1xf32> to vector<32x1xf32>
    %151 = vector.broadcast %150 : vector<32x1xf32> to vector<32x512xf32>
    %152 = arith.addf %148, %151 : vector<32x512xf32>
    %cst_193 = arith.constant 0.000000e+00 : f32
    %153 = vector.broadcast %cst_193 : f32 to vector<32x512xf32>
    %154 = arith.maximumf %152, %153 : vector<32x512xf32>
    %155 = vector.extract_strided_slice %2 {offsets = [0, 0], sizes = [1, 512], strides = [1, 1]} : vector<1x640xi32> to vector<1x512xi32>
    %c16_i32 = arith.constant 16 : i32
    %156 = vector.broadcast %c16_i32 : i32 to vector<1x512xi32>
    %157 = arith.cmpi slt, %155, %156 : vector<1x512xi32>
    %cst_194 = arith.constant 0.000000e+00 : f32
    %158 = vector.shape_cast %157 : vector<1x512xi1> to vector<1x512xi1>
    %159 = vector.broadcast %158 : vector<1x512xi1> to vector<32x512xi1>
    %160 = vector.broadcast %cst_194 : f32 to vector<32x512xf32>
    %161 = arith.select %159, %154, %160 : vector<32x512xi1>, vector<32x512xf32>
    %c0_195 = arith.constant 0 : index
    %c66_196 = arith.constant 66 : index
    %162 = vector.load %arg5[%c0_195, %c66_196] : memref<32x768xf32, #tpu.memory_space<vmem>>, vector<32x512xf32>
    tpu.vector_store %arg5[%c0_195, %c66_196], %161 {strides = array<i32>} : memref<32x768xf32, #tpu.memory_space<vmem>>, vector<32x512xf32>,
    %c0_197 = arith.constant 0 : index
    %c578 = arith.constant 578 : index
    %163 = vector.load %arg5[%c0_197, %c578] : memref<32x768xf32, #tpu.memory_space<vmem>>, vector<32x64xf32>
    tpu.vector_store %arg5[%c0_197, %c578], %4 {strides = array<i32>} : memref<32x768xf32, #tpu.memory_space<vmem>>, vector<32x64xf32>,
    %c0_198 = arith.constant 0 : index
    %c0_199 = arith.constant 0 : index
    %164 = vector.load %arg5[%c0_198, %c0_199] : memref<32x768xf32, #tpu.memory_space<vmem>>, vector<32x576xf32>
    %c0_200 = arith.constant 0 : index
    %c0_201 = arith.constant 0 : index
    %165 = vector.load %arg7[%c0_200, %c0_201] : memref<288x640xf32, #tpu.memory_space<vmem>>, vector<32x576xf32>
    tpu.vector_store %arg7[%c0_200, %c0_201], %164 {strides = array<i32>} : memref<288x640xf32, #tpu.memory_space<vmem>>, vector<32x576xf32>,
    %c0_202 = arith.constant 0 : index
    %c1_203 = arith.constant 1 : index
    %166 = vector.load %arg5[%c0_202, %c1_203] : memref<32x768xf32, #tpu.memory_space<vmem>>, vector<32x576xf32>
    %c32_204 = arith.constant 32 : index
    %c0_205 = arith.constant 0 : index
    %167 = vector.load %arg7[%c32_204, %c0_205] : memref<288x640xf32, #tpu.memory_space<vmem>>, vector<32x576xf32>
    tpu.vector_store %arg7[%c32_204, %c0_205], %166 {strides = array<i32>} : memref<288x640xf32, #tpu.memory_space<vmem>>, vector<32x576xf32>,
    %c0_206 = arith.constant 0 : index
    %c2_207 = arith.constant 2 : index
    %168 = vector.load %arg5[%c0_206, %c2_207] : memref<32x768xf32, #tpu.memory_space<vmem>>, vector<32x576xf32>
    %c64_208 = arith.constant 64 : index
    %c0_209 = arith.constant 0 : index
    %169 = vector.load %arg7[%c64_208, %c0_209] : memref<288x640xf32, #tpu.memory_space<vmem>>, vector<32x576xf32>
    tpu.vector_store %arg7[%c64_208, %c0_209], %168 {strides = array<i32>} : memref<288x640xf32, #tpu.memory_space<vmem>>, vector<32x576xf32>,
    %c0_210 = arith.constant 0 : index
    %c32_211 = arith.constant 32 : index
    %170 = vector.load %arg5[%c0_210, %c32_211] : memref<32x768xf32, #tpu.memory_space<vmem>>, vector<32x576xf32>
    %c96_212 = arith.constant 96 : index
    %c0_213 = arith.constant 0 : index
    %171 = vector.load %arg7[%c96_212, %c0_213] : memref<288x640xf32, #tpu.memory_space<vmem>>, vector<32x576xf32>
    tpu.vector_store %arg7[%c96_212, %c0_213], %170 {strides = array<i32>} : memref<288x640xf32, #tpu.memory_space<vmem>>, vector<32x576xf32>,
    %c0_214 = arith.constant 0 : index
    %c33_215 = arith.constant 33 : index
    %172 = vector.load %arg5[%c0_214, %c33_215] : memref<32x768xf32, #tpu.memory_space<vmem>>, vector<32x576xf32>
    %c128_216 = arith.constant 128 : index
    %c0_217 = arith.constant 0 : index
    %173 = vector.load %arg7[%c128_216, %c0_217] : memref<288x640xf32, #tpu.memory_space<vmem>>, vector<32x576xf32>
    tpu.vector_store %arg7[%c128_216, %c0_217], %172 {strides = array<i32>} : memref<288x640xf32, #tpu.memory_space<vmem>>, vector<32x576xf32>,
    %c0_218 = arith.constant 0 : index
    %c34_219 = arith.constant 34 : index
    %174 = vector.load %arg5[%c0_218, %c34_219] : memref<32x768xf32, #tpu.memory_space<vmem>>, vector<32x576xf32>
    %c160_220 = arith.constant 160 : index
    %c0_221 = arith.constant 0 : index
    %175 = vector.load %arg7[%c160_220, %c0_221] : memref<288x640xf32, #tpu.memory_space<vmem>>, vector<32x576xf32>
    tpu.vector_store %arg7[%c160_220, %c0_221], %174 {strides = array<i32>} : memref<288x640xf32, #tpu.memory_space<vmem>>, vector<32x576xf32>,
    %c0_222 = arith.constant 0 : index
    %c64_223 = arith.constant 64 : index
    %176 = vector.load %arg5[%c0_222, %c64_223] : memref<32x768xf32, #tpu.memory_space<vmem>>, vector<32x576xf32>
    %c192_224 = arith.constant 192 : index
    %c0_225 = arith.constant 0 : index
    %177 = vector.load %arg7[%c192_224, %c0_225] : memref<288x640xf32, #tpu.memory_space<vmem>>, vector<32x576xf32>
    tpu.vector_store %arg7[%c192_224, %c0_225], %176 {strides = array<i32>} : memref<288x640xf32, #tpu.memory_space<vmem>>, vector<32x576xf32>,
    %c0_226 = arith.constant 0 : index
    %c65_227 = arith.constant 65 : index
    %178 = vector.load %arg5[%c0_226, %c65_227] : memref<32x768xf32, #tpu.memory_space<vmem>>, vector<32x576xf32>
    %c224_228 = arith.constant 224 : index
    %c0_229 = arith.constant 0 : index
    %179 = vector.load %arg7[%c224_228, %c0_229] : memref<288x640xf32, #tpu.memory_space<vmem>>, vector<32x576xf32>
    tpu.vector_store %arg7[%c224_228, %c0_229], %178 {strides = array<i32>} : memref<288x640xf32, #tpu.memory_space<vmem>>, vector<32x576xf32>,
    %c0_230 = arith.constant 0 : index
    %c66_231 = arith.constant 66 : index
    %180 = vector.load %arg5[%c0_230, %c66_231] : memref<32x768xf32, #tpu.memory_space<vmem>>, vector<32x576xf32>
    %c256_232 = arith.constant 256 : index
    %c0_233 = arith.constant 0 : index
    %181 = vector.load %arg7[%c256_232, %c0_233] : memref<288x640xf32, #tpu.memory_space<vmem>>, vector<32x576xf32>
    tpu.vector_store %arg7[%c256_232, %c0_233], %180 {strides = array<i32>} : memref<288x640xf32, #tpu.memory_space<vmem>>, vector<32x576xf32>,
    %c4 = arith.constant 4 : index
    %c0_234 = arith.constant 0 : index
    %c0_235 = arith.constant 0 : index
    %182 = vector.load %arg2[%c4, %c0_234, %c0_235] : memref<6x32x288xf32, #tpu.memory_space<vmem>>, vector<1x32x288xf32>
    %183 = vector.shape_cast %182 : vector<1x32x288xf32> to vector<32x288xf32>
    %c0_236 = arith.constant 0 : index
    %c0_237 = arith.constant 0 : index
    %184 = vector.load %arg7[%c0_236, %c0_237] : memref<288x640xf32, #tpu.memory_space<vmem>>, vector<288x576xf32>
    %cst_238 = arith.constant dense<0.000000e+00> : vector<32x576xf32>
    %185 = tpu.matmul %183, %184, %cst_238 {dimension_numbers = #tpu.dot_dimension_numbers<[1], [0], [0], [1], [0, 0, 1, 1], [], []>} : vector<32x288xf32>, vector<288x576xf32>, vector<32x576xf32> -> vector<32x576xf32>
    %c4_239 = arith.constant 4 : index
    %c0_240 = arith.constant 0 : index
    %c0_241 = arith.constant 0 : index
    %186 = vector.load %arg3[%c4_239, %c0_240, %c0_241] : memref<6x32x1xf32, #tpu.memory_space<vmem>>, vector<1x32x1xf32>
    %187 = vector.shape_cast %186 : vector<1x32x1xf32> to vector<32x1xf32>
    %188 = vector.broadcast %187 : vector<32x1xf32> to vector<32x576xf32>
    %189 = arith.addf %185, %188 : vector<32x576xf32>
    %cst_242 = arith.constant 0.000000e+00 : f32
    %190 = vector.broadcast %cst_242 : f32 to vector<32x576xf32>
    %191 = arith.maximumf %189, %190 : vector<32x576xf32>
    %192 = vector.extract_strided_slice %2 {offsets = [0, 0], sizes = [1, 576], strides = [1, 1]} : vector<1x640xi32> to vector<1x576xi32>
    %c18_i32 = arith.constant 18 : i32
    %193 = vector.broadcast %c18_i32 : i32 to vector<1x576xi32>
    %194 = arith.cmpi slt, %192, %193 : vector<1x576xi32>
    %cst_243 = arith.constant 0.000000e+00 : f32
    %195 = vector.shape_cast %194 : vector<1x576xi1> to vector<1x576xi1>
    %196 = vector.broadcast %195 : vector<1x576xi1> to vector<32x576xi1>
    %197 = vector.broadcast %cst_243 : f32 to vector<32x576xf32>
    %198 = arith.select %196, %191, %197 : vector<32x576xi1>, vector<32x576xf32>
    %c0_244 = arith.constant 0 : index
    %c66_245 = arith.constant 66 : index
    %199 = vector.load %arg6[%c0_244, %c66_245] : memref<32x768xf32, #tpu.memory_space<vmem>>, vector<32x576xf32>
    tpu.vector_store %arg6[%c0_244, %c66_245], %198 {strides = array<i32>} : memref<32x768xf32, #tpu.memory_space<vmem>>, vector<32x576xf32>,
    %c0_246 = arith.constant 0 : index
    %c642 = arith.constant 642 : index
    %200 = vector.load %arg6[%c0_246, %c642] : memref<32x768xf32, #tpu.memory_space<vmem>>, vector<32x64xf32>
    tpu.vector_store %arg6[%c0_246, %c642], %4 {strides = array<i32>} : memref<32x768xf32, #tpu.memory_space<vmem>>, vector<32x64xf32>,
    %c0_247 = arith.constant 0 : index
    %c0_248 = arith.constant 0 : index
    %201 = vector.load %arg6[%c0_247, %c0_248] : memref<32x768xf32, #tpu.memory_space<vmem>>, vector<32x640xf32>
    %c0_249 = arith.constant 0 : index
    %c0_250 = arith.constant 0 : index
    %202 = vector.load %arg7[%c0_249, %c0_250] : memref<288x640xf32, #tpu.memory_space<vmem>>, vector<32x640xf32>
    tpu.vector_store %arg7[%c0_249, %c0_250], %201 {strides = array<i32>} : memref<288x640xf32, #tpu.memory_space<vmem>>, vector<32x640xf32>,
    %c0_251 = arith.constant 0 : index
    %c1_252 = arith.constant 1 : index
    %203 = vector.load %arg6[%c0_251, %c1_252] : memref<32x768xf32, #tpu.memory_space<vmem>>, vector<32x640xf32>
    %c32_253 = arith.constant 32 : index
    %c0_254 = arith.constant 0 : index
    %204 = vector.load %arg7[%c32_253, %c0_254] : memref<288x640xf32, #tpu.memory_space<vmem>>, vector<32x640xf32>
    tpu.vector_store %arg7[%c32_253, %c0_254], %203 {strides = array<i32>} : memref<288x640xf32, #tpu.memory_space<vmem>>, vector<32x640xf32>,
    %c0_255 = arith.constant 0 : index
    %c2_256 = arith.constant 2 : index
    %205 = vector.load %arg6[%c0_255, %c2_256] : memref<32x768xf32, #tpu.memory_space<vmem>>, vector<32x640xf32>
    %c64_257 = arith.constant 64 : index
    %c0_258 = arith.constant 0 : index
    %206 = vector.load %arg7[%c64_257, %c0_258] : memref<288x640xf32, #tpu.memory_space<vmem>>, vector<32x640xf32>
    tpu.vector_store %arg7[%c64_257, %c0_258], %205 {strides = array<i32>} : memref<288x640xf32, #tpu.memory_space<vmem>>, vector<32x640xf32>,
    %c0_259 = arith.constant 0 : index
    %c32_260 = arith.constant 32 : index
    %207 = vector.load %arg6[%c0_259, %c32_260] : memref<32x768xf32, #tpu.memory_space<vmem>>, vector<32x640xf32>
    %c96_261 = arith.constant 96 : index
    %c0_262 = arith.constant 0 : index
    %208 = vector.load %arg7[%c96_261, %c0_262] : memref<288x640xf32, #tpu.memory_space<vmem>>, vector<32x640xf32>
    tpu.vector_store %arg7[%c96_261, %c0_262], %207 {strides = array<i32>} : memref<288x640xf32, #tpu.memory_space<vmem>>, vector<32x640xf32>,
    %c0_263 = arith.constant 0 : index
    %c33_264 = arith.constant 33 : index
    %209 = vector.load %arg6[%c0_263, %c33_264] : memref<32x768xf32, #tpu.memory_space<vmem>>, vector<32x640xf32>
    %c128_265 = arith.constant 128 : index
    %c0_266 = arith.constant 0 : index
    %210 = vector.load %arg7[%c128_265, %c0_266] : memref<288x640xf32, #tpu.memory_space<vmem>>, vector<32x640xf32>
    tpu.vector_store %arg7[%c128_265, %c0_266], %209 {strides = array<i32>} : memref<288x640xf32, #tpu.memory_space<vmem>>, vector<32x640xf32>,
    %c0_267 = arith.constant 0 : index
    %c34_268 = arith.constant 34 : index
    %211 = vector.load %arg6[%c0_267, %c34_268] : memref<32x768xf32, #tpu.memory_space<vmem>>, vector<32x640xf32>
    %c160_269 = arith.constant 160 : index
    %c0_270 = arith.constant 0 : index
    %212 = vector.load %arg7[%c160_269, %c0_270] : memref<288x640xf32, #tpu.memory_space<vmem>>, vector<32x640xf32>
    tpu.vector_store %arg7[%c160_269, %c0_270], %211 {strides = array<i32>} : memref<288x640xf32, #tpu.memory_space<vmem>>, vector<32x640xf32>,
    %c0_271 = arith.constant 0 : index
    %c64_272 = arith.constant 64 : index
    %213 = vector.load %arg6[%c0_271, %c64_272] : memref<32x768xf32, #tpu.memory_space<vmem>>, vector<32x640xf32>
    %c192_273 = arith.constant 192 : index
    %c0_274 = arith.constant 0 : index
    %214 = vector.load %arg7[%c192_273, %c0_274] : memref<288x640xf32, #tpu.memory_space<vmem>>, vector<32x640xf32>
    tpu.vector_store %arg7[%c192_273, %c0_274], %213 {strides = array<i32>} : memref<288x640xf32, #tpu.memory_space<vmem>>, vector<32x640xf32>,
    %c0_275 = arith.constant 0 : index
    %c65_276 = arith.constant 65 : index
    %215 = vector.load %arg6[%c0_275, %c65_276] : memref<32x768xf32, #tpu.memory_space<vmem>>, vector<32x640xf32>
    %c224_277 = arith.constant 224 : index
    %c0_278 = arith.constant 0 : index
    %216 = vector.load %arg7[%c224_277, %c0_278] : memref<288x640xf32, #tpu.memory_space<vmem>>, vector<32x640xf32>
    tpu.vector_store %arg7[%c224_277, %c0_278], %215 {strides = array<i32>} : memref<288x640xf32, #tpu.memory_space<vmem>>, vector<32x640xf32>,
    %c0_279 = arith.constant 0 : index
    %c66_280 = arith.constant 66 : index
    %217 = vector.load %arg6[%c0_279, %c66_280] : memref<32x768xf32, #tpu.memory_space<vmem>>, vector<32x640xf32>
    %c256_281 = arith.constant 256 : index
    %c0_282 = arith.constant 0 : index
    %218 = vector.load %arg7[%c256_281, %c0_282] : memref<288x640xf32, #tpu.memory_space<vmem>>, vector<32x640xf32>
    tpu.vector_store %arg7[%c256_281, %c0_282], %217 {strides = array<i32>} : memref<288x640xf32, #tpu.memory_space<vmem>>, vector<32x640xf32>,
    %c5 = arith.constant 5 : index
    %c0_283 = arith.constant 0 : index
    %c0_284 = arith.constant 0 : index
    %219 = vector.load %arg2[%c5, %c0_283, %c0_284] : memref<6x32x288xf32, #tpu.memory_space<vmem>>, vector<1x8x288xf32>
    %220 = vector.shape_cast %219 : vector<1x8x288xf32> to vector<8x288xf32>
    %c0_285 = arith.constant 0 : index
    %c0_286 = arith.constant 0 : index
    %221 = vector.load %arg7[%c0_285, %c0_286] : memref<288x640xf32, #tpu.memory_space<vmem>>, vector<288x640xf32>
    %cst_287 = arith.constant dense<0.000000e+00> : vector<8x640xf32>
    %222 = tpu.matmul %220, %221, %cst_287 {dimension_numbers = #tpu.dot_dimension_numbers<[1], [0], [0], [1], [0, 0, 1, 1], [], []>} : vector<8x288xf32>, vector<288x640xf32>, vector<8x640xf32> -> vector<8x640xf32>
    %c5_288 = arith.constant 5 : index
    %c0_289 = arith.constant 0 : index
    %c0_290 = arith.constant 0 : index
    %223 = vector.load %arg3[%c5_288, %c0_289, %c0_290] : memref<6x32x1xf32, #tpu.memory_space<vmem>>, vector<1x8x1xf32>
    %224 = vector.shape_cast %223 : vector<1x8x1xf32> to vector<8x1xf32>
    %225 = vector.broadcast %224 : vector<8x1xf32> to vector<8x640xf32>
    %226 = arith.addf %222, %225 : vector<8x640xf32>
    %cst_291 = arith.constant 0.000000e+00 : f32
    %227 = vector.broadcast %cst_291 : f32 to vector<8x640xf32>
    %228 = arith.maximumf %226, %227 : vector<8x640xf32>
    %c20_i32 = arith.constant 20 : i32
    %229 = vector.broadcast %c20_i32 : i32 to vector<1x640xi32>
    %230 = arith.cmpi slt, %2, %229 : vector<1x640xi32>
    %cst_292 = arith.constant 0.000000e+00 : f32
    %231 = vector.shape_cast %230 : vector<1x640xi1> to vector<1x640xi1>
    %232 = vector.broadcast %231 : vector<1x640xi1> to vector<8x640xi1>
    %233 = vector.broadcast %cst_292 : f32 to vector<8x640xf32>
    %234 = arith.select %232, %228, %233 : vector<8x640xi1>, vector<8x640xf32>
    %235 = vector.extract_strided_slice %234 {offsets = [0, 0], sizes = [1, 640], strides = [1, 1]} : vector<8x640xf32> to vector<1x640xf32>
    %c0_293 = arith.constant 0 : index
    %c0_294 = arith.constant 0 : index
    %c0_295 = arith.constant 0 : index
    %236 = vector.load %arg4[%c0_293, %c0_294, %c0_295] : memref<1x1x640xf32, #tpu.memory_space<vmem>>, vector<1x1x640xf32>
    %237 = vector.shape_cast %236 : vector<1x1x640xf32> to vector<1x640xf32>
    %238 = vector.shape_cast %235 : vector<1x640xf32> to vector<1x1x640xf32>
    tpu.vector_store %arg4[%c0_293, %c0_294, %c0_295], %238 {strides = array<i32>} : memref<1x1x640xf32, #tpu.memory_space<vmem>>, vector<1x1x640xf32>,
    return
  }
  func.func @transform_0(%arg0: i32) -> (i32, i32, i32) {
    %c0_i32 = arith.constant 0 : i32
    %c0_i32_0 = arith.constant 0 : i32
    %c0_i32_1 = arith.constant 0 : i32
    return %arg0, %c0_i32, %c0_i32_0 : i32, i32, i32
  }
  func.func @transform_1(%arg0: i32) -> (i32, i32, i32) {
    %c0_i32 = arith.constant 0 : i32
    %c0_i32_0 = arith.constant 0 : i32
    %c0_i32_1 = arith.constant 0 : i32
    %c0_i32_2 = arith.constant 0 : i32
    return %c0_i32, %c0_i32_0, %c0_i32_1 : i32, i32, i32
  }
  func.func @transform_2(%arg0: i32) -> (i32, i32, i32) {
    %c0_i32 = arith.constant 0 : i32
    %c0_i32_0 = arith.constant 0 : i32
    %c0_i32_1 = arith.constant 0 : i32
    %c0_i32_2 = arith.constant 0 : i32
    return %c0_i32, %c0_i32_0, %c0_i32_1 : i32, i32, i32
  }
  func.func @transform_3(%arg0: i32) -> (i32, i32, i32) {
    %c0_i32 = arith.constant 0 : i32
    %c0_i32_0 = arith.constant 0 : i32
    %c0_i32_1 = arith.constant 0 : i32
    return %arg0, %c0_i32, %c0_i32_0 : i32, i32, i32
  }
}

</mosaic_0001>

<llo_original>
// kernel: decoder_pallas.1
$region0: #{decoder_pallas.1}
  #allocation0 [shape = 'u32[]', space=smem, size = 0x4, offset = 0x4, fixed_abs, tag = 'smem constant byte address 0x4 - core index']
  #allocation1 [shape = 'u32[144,128]{1,0:T(1,128)}', space=vmem, size = 0x12000, scoped, tag = 'internal scratch']
  #allocation2 [shape = 'f32[32,768]{1,0:T(8,128)}', space=vmem, size = 0x18000, scoped, tag = 'scratch operand']
  #allocation3 [shape = 'f32[32,768]{1,0:T(8,128)}', space=vmem, size = 0x18000, scoped, tag = 'scratch operand']
  #allocation4 [shape = 'f32[288,640]{1,0:T(8,128)}', space=vmem, size = 0xb4000, scoped, tag = 'scratch operand']
  %s0 = inlined_call_operand.vmem [shape: f32[2,32,768], index: 0, kind: input, shape index: {}]
  %s1 = inlined_call_operand.vmem [shape: f32[6,32,288], index: 1, kind: input, shape index: {}]
  %s2 = inlined_call_operand.vmem [shape: f32[6,32,1], index: 2, kind: input, shape index: {}]
  %s3 = inlined_call_operand.vmem [shape: f32[2,1,640], index: 3, kind: output, shape index: {}]
  %s4 = sld [smem:[#allocation0]]
  $region45: #{decoder_pallas.1} parent=0
    _
  %s6 = ssub.s32 1, %s4
  %s7 = scalar_select 0, %s6, %s4
  loop: start=0, step=1, limit=4
  $region2: #{decoder_pallas.1} parent=0 // loop_pre_header
    _
  $region3: #{decoder_pallas.1} parent=0 // loop_header
    %s9 = sphi 0, %s13
    %p10 = scmp.ge.s32.totalorder %s9, 4
    %s19 = sphi 0, %s21
    %s22 = sphi 0, %s19
    %s23 = sphi 0, %s22
    %s39 = sphi 0, %s23
    %s43 = sphi 0, %s43
    %s45 = sphi 0, %s43
    %s46 = sphi 0, %s45
    %s60 = sphi 0, %s46
    %s64 = sphi 0, %s64
    %s66 = sphi 0, %s64
    %s67 = sphi 0, %s66
    %s81 = sphi 0, %s67
    %s87 = sphi 0, %s89
    %s90 = sphi 0, %s87
    %s91 = sphi 0, %s90
    %s107 = sphi 0, %s91
  $region4: #{decoder_pallas.1} parent=0 // loop_header_branch
    %12 = sbr.rel (%p10) target = $region8
  $region5: #{decoder_pallas.1} parent=0 // loop_body
    %s14 = ssub.s32 %s9, 1
    %s15 = ssub.s32 %s9, 2
    %s16 = sadd.s32 %s9, 1
    %s17 = ssub.s32 %s9, %s16
    %p18 = scmp.eq.s32.totalorder %s17, 0
    %s20 = sadd.s32 %s19, 1
    %s21 = scalar_select %p18, %s19, %s20
    %p24 = pneg %p18
    %p25 = scmp.eq.s32.totalorder %s9, 1
    %p26 = por %p24, %p25
    %p27 = scmp.ne.s32.totalorder %s19, %s22
    %p28 = scmp.eq.s32.totalorder %s9, 0
    %p29 = por %p27, %p28
    %p30 = scmp.ne.s32.totalorder %s19, %s22
    %p31 = scmp.eq.s32.totalorder %s14, 1
    %p32 = por %p30, %p31
    %p33 = scmp.ne.s32.totalorder %s22, %s23
    %p34 = scmp.eq.s32.totalorder %s14, 0
    %p35 = por %p33, %p34
    %p36 = scmp.ne.s32.totalorder %s22, %s23
    %p37 = scmp.eq.s32.totalorder %s15, 1
    %p38 = por %p36, %p37
    %p40 = scmp.ne.s32.totalorder %s23, %s39
    %p41 = scmp.eq.s32.totalorder %s15, 0
    %p42 = por %p40, %p41
    %s44 = sadd.s32 %s43, 1
    %p47 = scmp.eq.s32.totalorder %s9, 1
    %p48 = scmp.ne.s32.totalorder %s43, %s45
    %p49 = scmp.eq.s32.totalorder %s9, 0
    %p50 = por %p48, %p49
    %p51 = scmp.ne.s32.totalorder %s43, %s45
    %p52 = scmp.eq.s32.totalorder %s14, 1
    %p53 = por %p51, %p52
    %p54 = scmp.ne.s32.totalorder %s45, %s46
    %p55 = scmp.eq.s32.totalorder %s14, 0
    %p56 = por %p54, %p55
    %p57 = scmp.ne.s32.totalorder %s45, %s46
    %p58 = scmp.eq.s32.totalorder %s15, 1
    %p59 = por %p57, %p58
    %p61 = scmp.ne.s32.totalorder %s46, %s60
    %p62 = scmp.eq.s32.totalorder %s15, 0
    %p63 = por %p61, %p62
    %s65 = sadd.s32 %s64, 1
    %p68 = scmp.eq.s32.totalorder %s9, 1
    %p69 = scmp.ne.s32.totalorder %s64, %s66
    %p70 = scmp.eq.s32.totalorder %s9, 0
    %p71 = por %p69, %p70
    %p72 = scmp.ne.s32.totalorder %s64, %s66
    %p73 = scmp.eq.s32.totalorder %s14, 1
    %p74 = por %p72, %p73
    %p75 = scmp.ne.s32.totalorder %s66, %s67
    %p76 = scmp.eq.s32.totalorder %s14, 0
    %p77 = por %p75, %p76
    %p78 = scmp.ne.s32.totalorder %s66, %s67
    %p79 = scmp.eq.s32.totalorder %s15, 1
    %p80 = por %p78, %p79
    %p82 = scmp.ne.s32.totalorder %s67, %s81
    %p83 = scmp.eq.s32.totalorder %s15, 0
    %p84 = por %p82, %p83
    %s85 = ssub.s32 %s9, %s16
    %p86 = scmp.eq.s32.totalorder %s85, 0
    %s88 = sadd.s32 %s87, 1
    %s89 = scalar_select %p86, %s87, %s88
    %p92 = pneg %p86
    %p93 = scmp.eq.s32.totalorder %s9, 1
    %p94 = por %p92, %p93
    %p95 = scmp.ne.s32.totalorder %s87, %s90
    %p96 = scmp.eq.s32.totalorder %s9, 0
    %p97 = por %p95, %p96
    %p98 = scmp.ne.s32.totalorder %s87, %s90
    %p99 = scmp.eq.s32.totalorder %s14, 1
    %p100 = por %p98, %p99
    %p101 = scmp.ne.s32.totalorder %s90, %s91
    %p102 = scmp.eq.s32.totalorder %s14, 0
    %p103 = por %p101, %p102
    %p104 = scmp.ne.s32.totalorder %s90, %s91
    %p105 = scmp.eq.s32.totalorder %s15, 1
    %p106 = por %p104, %p105
    %p108 = scmp.ne.s32.totalorder %s91, %s107
    %p109 = scmp.eq.s32.totalorder %s15, 0
    %p110 = por %p108, %p109
    %p111 = scmp.le.s32.totalorder 1, %s9
    %p112 = scmp.lt.s32.totalorder %s9, 3
    %p113 = pnand %p111, %p112
    %p114 = pneg %p113
    // Predicated region
    $region9: #{decoder_pallas.1} parent=5 // pred_check
      _
    $region10: #{decoder_pallas.1} parent=5 // pred_check_branch
      %116 = sbr.rel (%p113) target = $region12
    $region11: #{decoder_pallas.1} parent=5 // pred_region
      %s117 = ssub.s32 %s9, 1
      // Predicated region
      $region13: #{decoder_pallas.1} parent=11 // pred_check
        %p118 = pneg %p56
      $region14: #{decoder_pallas.1} parent=11 // pred_check_branch
        %120 = sbr.rel (%p118) target = $region16
      $region15: #{decoder_pallas.1} parent=11 // pred_region
        _
      $region16: #{decoder_pallas.1} parent=11 // pred_fallthru
        _
      // Predicated region
      $region17: #{decoder_pallas.1} parent=11 // pred_check
        %p121 = pneg %p77
      $region18: #{decoder_pallas.1} parent=11 // pred_check_branch
        %123 = sbr.rel (%p121) target = $region20
      $region19: #{decoder_pallas.1} parent=11 // pred_region
        _
      $region20: #{decoder_pallas.1} parent=11 // pred_fallthru
        _
    $region12: #{decoder_pallas.1} parent=5 // pred_fallthru
      _
    %p124 = scmp.lt.s32.totalorder %s9, 2
    // Predicated region
    $region21: #{decoder_pallas.1} parent=5 // pred_check
      %p125 = pneg %p124
    $region22: #{decoder_pallas.1} parent=5 // pred_check_branch
      %127 = sbr.rel (%p125) target = $region24
    $region23: #{decoder_pallas.1} parent=5 // pred_region
      // Predicated region
      $region25: #{decoder_pallas.1} parent=23 // pred_check
        %p128 = pneg %p29
      $region26: #{decoder_pallas.1} parent=23 // pred_check_branch
        %130 = sbr.rel (%p128) target = $region28
      $region27: #{decoder_pallas.1} parent=23 // pred_region
        %p131 = scmp.lt.s32.totalorder %s9, 1
        %s132 = scalar_select %p131, %s9, 1
        %s133 = smul.addr %s132, 24
        %s134 = smul.addr %s133, 8
        %s135 = scalar_lea.vmem %s0, %s134
      $region28: #{decoder_pallas.1} parent=23 // pred_fallthru
        _
    $region24: #{decoder_pallas.1} parent=5 // pred_fallthru
      _
    %p136 = scmp.le.s32.totalorder 1, %s9
    %p137 = scmp.lt.s32.totalorder %s9, 3
    %p138 = pnand %p136, %p137
    %p139 = pneg %p138
    // Predicated region
    $region29: #{decoder_pallas.1} parent=5 // pred_check
      _
    $region30: #{decoder_pallas.1} parent=5 // pred_check_branch
      %141 = sbr.rel (%p138) target = $region32
    $region31: #{decoder_pallas.1} parent=5 // pred_region
      %s142 = ssub.s32 %s9, 1
      %p143 = scmp.lt.s32.totalorder %s14, 1
      %s144 = scalar_select %p143, %s14, 1
      %s145 = smul.addr %s144, 24
      %s146 = smul.addr %s145, 8
      %s147 = scalar_lea.vmem %s0, %s146
      %p148 = pneg %p35
      %p149 = pneg %p32
      %p150 = pneg %p56
      %p151 = pneg %p53
      %p152 = pneg %p77
      %p153 = pneg %p74
      %p154 = pneg %p103
      %p155 = pneg %p100
      %p156 = scmp.lt.s32.totalorder %s14, 1
      %s157 = scalar_select %p156, %s14, 1
      %s158 = smul.addr %s157, 5
      %s159 = scalar_lea.vmem %s3, %s158
      %p160 = scmp.lt.s32.totalorder %s14, 1
      %s161 = scalar_select %p160, %s14, 1
      %s162 = smul.addr %s161, 24
      %s163 = smul.addr %s162, 8
      %s164 = scalar_lea.vmem %s0, %s163
      %p165 = scmp.lt.s32.totalorder %s14, 1
      %s166 = scalar_select %p165, %s14, 1
      %s167 = smul.addr %s166, 5
      %s168 = scalar_lea.vmem %s3, %s167
      %v169 = vlaneseq
      %v170 = vand.u32 %v169, 127
      %v171 = vadd.s32 %v170, 128
      %v172 = vadd.s32 %v170, 256
      %v173 = vadd.s32 %v170, 384
      %v174 = vadd.s32 %v170, 512
      %v175 = vand.u32 %v170, 31
      %v176 = vand.u32 %v171, 31
      %v177 = vand.u32 %v172, 31
      %v178 = vand.u32 %v173, 31
      %v179 = vand.u32 %v174, 31
      %vm180 = vcmask 539648
      %181 = vst.msk [vmem:[#allocation2] sm:$0xff] %vm180, 0.0
      %182 = vst.msk [vmem:[#allocation2 + $0x30] sm:$0xff] %vm180, 0.0
      %183 = vst.msk [vmem:[#allocation2 + $0x60] sm:$0xff] %vm180, 0.0
      %184 = vst.msk [vmem:[#allocation2 + $0x90] sm:$0xff] %vm180, 0.0
      %185 = vst.msk [vmem:[#allocation3] sm:$0xff] %vm180, 0.0
      %186 = vst.msk [vmem:[#allocation3 + $0x30] sm:$0xff] %vm180, 0.0
      %187 = vst.msk [vmem:[#allocation3 + $0x60] sm:$0xff] %vm180, 0.0
      %188 = vst.msk [vmem:[#allocation3 + $0x90] sm:$0xff] %vm180, 0.0
      %v189 = vld [vmem:[%s164] sm:$0xff]
      %v190 = vld [vmem:[%s164 + $0x8] sm:$0xff]
      %v191 = vld [vmem:[%s164 + $0x10] sm:$0xff]
      %v192 = vld [vmem:[%s164 + $0x30] sm:$0xff]
      %v193 = vld [vmem:[%s164 + $0x38] sm:$0xff]
      %v194 = vld [vmem:[%s164 + $0x40] sm:$0xff]
      %v195 = vld [vmem:[%s164 + $0x60] sm:$0xff]
      %v196 = vld [vmem:[%s164 + $0x68] sm:$0xff]
      %v197 = vld [vmem:[%s164 + $0x70] sm:$0xff]
      %v198 = vld [vmem:[%s164 + $0x90] sm:$0xff]
      %v199 = vld [vmem:[%s164 + $0x98] sm:$0xff]
      %v200 = vld [vmem:[%s164 + $0xa0] sm:$0xff]
      %201 = vst [vmem:[#allocation4] sm:$0xff] %v189
      %202 = vst [vmem:[#allocation4 + $0x8] sm:$0xff] %v190
      %vm203 = vcmask 523264
      %204 = vst.msk [vmem:[#allocation4 + $0x10] sm:$0xff] %vm203, %v191
      %205 = vst [vmem:[#allocation4 + $0x28] sm:$0xff] %v192
      %206 = vst [vmem:[#allocation4 + $0x30] sm:$0xff] %v193
      %207 = vst.msk [vmem:[#allocation4 + $0x38] sm:$0xff] %vm203, %v194
      %208 = vst [vmem:[#allocation4 + $0x50] sm:$0xff] %v195
      %209 = vst [vmem:[#allocation4 + $0x58] sm:$0xff] %v196
      %210 = vst.msk [vmem:[#allocation4 + $0x60] sm:$0xff] %vm203, %v197
      %211 = vst [vmem:[#allocation4 + $0x78] sm:$0xff] %v198
      %212 = vst [vmem:[#allocation4 + $0x80] sm:$0xff] %v199
      %213 = vst.msk [vmem:[#allocation4 + $0x88] sm:$0xff] %vm203, %v200
      %v214 = vld [vmem:[%s164] sm:$0xff]
      %v215 = vld [vmem:[%s164 + $0x8] sm:$0xff]
      %v216 = vld [vmem:[%s164 + $0x10] sm:$0xff]
      %v217 = vld [vmem:[%s164 + $0x30] sm:$0xff]
      %v218 = vld [vmem:[%s164 + $0x38] sm:$0xff]
      %v219 = vld [vmem:[%s164 + $0x40] sm:$0xff]
      %v220 = vld [vmem:[%s164 + $0x60] sm:$0xff]
      %v221 = vld [vmem:[%s164 + $0x68] sm:$0xff]
      %v222 = vld [vmem:[%s164 + $0x70] sm:$0xff]
      %v223 = vld [vmem:[%s164 + $0x90] sm:$0xff]
      %v224 = vld [vmem:[%s164 + $0x98] sm:$0xff]
      %v225 = vld [vmem:[%s164 + $0xa0] sm:$0xff]
      %238 = vrot.lane.b32.xlu0 %v214, 127
      %v239 = vpop.permute.xlu0 %238
      %240 = vrot.lane.b32.xlu0 %v215, 127
      %v241 = vpop.permute.xlu0 %240
      %242 = vrot.lane.b32.xlu0 %v216, 127
      %v243 = vpop.permute.xlu0 %242
      %244 = vrot.lane.b32.xlu0 %v217, 127
      %v245 = vpop.permute.xlu0 %244
      %246 = vrot.lane.b32.xlu0 %v218, 127
      %v247 = vpop.permute.xlu0 %246
      %248 = vrot.lane.b32.xlu0 %v219, 127
      %v249 = vpop.permute.xlu0 %248
      %250 = vrot.lane.b32.xlu0 %v220, 127
      %v251 = vpop.permute.xlu0 %250
      %252 = vrot.lane.b32.xlu0 %v221, 127
      %v253 = vpop.permute.xlu0 %252
      %254 = vrot.lane.b32.xlu0 %v222, 127
      %v255 = vpop.permute.xlu0 %254
      %256 = vrot.lane.b32.xlu0 %v223, 127
      %v257 = vpop.permute.xlu0 %256
      %258 = vrot.lane.b32.xlu0 %v224, 127
      %v259 = vpop.permute.xlu0 %258
      %260 = vrot.lane.b32.xlu0 %v225, 127
      %v261 = vpop.permute.xlu0 %260
      %vm262 = vcmask 1039360
      %v263 = vsel %vm262, %v239, %v241
      %v264 = vsel %vm262, %v241, %v243
      %v265 = vsel %vm262, %v245, %v247
      %v266 = vsel %vm262, %v247, %v249
      %v267 = vsel %vm262, %v251, %v253
      %v268 = vsel %vm262, %v253, %v255
      %v269 = vsel %vm262, %v257, %v259
      %v270 = vsel %vm262, %v259, %v261
      %283 = vst [vmem:[#allocation4 + $0xa0] sm:$0xff] %v263
      %284 = vst [vmem:[#allocation4 + $0xa8] sm:$0xff] %v264
      %285 = vst.msk [vmem:[#allocation4 + $0xb0] sm:$0xff] %vm203, %v243
      %286 = vst [vmem:[#allocation4 + $0xc8] sm:$0xff] %v265
      %287 = vst [vmem:[#allocation4 + $0xd0] sm:$0xff] %v266
      %288 = vst.msk [vmem:[#allocation4 + $0xd8] sm:$0xff] %vm203, %v249
      %289 = vst [vmem:[#allocation4 + $0xf0] sm:$0xff] %v267
      %290 = vst [vmem:[#allocation4 + $0xf8] sm:$0xff] %v268
      %291 = vst.msk [vmem:[#allocation4 + $0x100] sm:$0xff] %vm203, %v255
      %292 = vst [vmem:[#allocation4 + $0x118] sm:$0xff] %v269
      %293 = vst [vmem:[#allocation4 + $0x120] sm:$0xff] %v270
      %294 = vst.msk [vmem:[#allocation4 + $0x128] sm:$0xff] %vm203, %v261
      %v295 = vld [vmem:[%s164] sm:$0xff]
      %v296 = vld [vmem:[%s164 + $0x8] sm:$0xff]
      %v297 = vld [vmem:[%s164 + $0x10] sm:$0xff]
      %v298 = vld [vmem:[%s164 + $0x30] sm:$0xff]
      %v299 = vld [vmem:[%s164 + $0x38] sm:$0xff]
      %v300 = vld [vmem:[%s164 + $0x40] sm:$0xff]
      %v301 = vld [vmem:[%s164 + $0x60] sm:$0xff]
      %v302 = vld [vmem:[%s164 + $0x68] sm:$0xff]
      %v303 = vld [vmem:[%s164 + $0x70] sm:$0xff]
      %v304 = vld [vmem:[%s164 + $0x90] sm:$0xff]
      %v305 = vld [vmem:[%s164 + $0x98] sm:$0xff]
      %v306 = vld [vmem:[%s164 + $0xa0] sm:$0xff]
      %319 = vrot.lane.b32.xlu0 %v295, 126
      %v320 = vpop.permute.xlu0 %319
      %321 = vrot.lane.b32.xlu0 %v296, 126
      %v322 = vpop.permute.xlu0 %321
      %323 = vrot.lane.b32.xlu0 %v297, 126
      %v324 = vpop.permute.xlu0 %323
      %325 = vrot.lane.b32.xlu0 %v298, 126
      %v326 = vpop.permute.xlu0 %325
      %327 = vrot.lane.b32.xlu0 %v299, 126
      %v328 = vpop.permute.xlu0 %327
      %329 = vrot.lane.b32.xlu0 %v300, 126
      %v330 = vpop.permute.xlu0 %329
      %331 = vrot.lane.b32.xlu0 %v301, 126
      %v332 = vpop.permute.xlu0 %331
      %333 = vrot.lane.b32.xlu0 %v302, 126
      %v334 = vpop.permute.xlu0 %333
      %335 = vrot.lane.b32.xlu0 %v303, 126
      %v336 = vpop.permute.xlu0 %335
      %337 = vrot.lane.b32.xlu0 %v304, 126
      %v338 = vpop.permute.xlu0 %337
      %339 = vrot.lane.b32.xlu0 %v305, 126
      %v340 = vpop.permute.xlu0 %339
      %341 = vrot.lane.b32.xlu0 %v306, 126
      %v342 = vpop.permute.xlu0 %341
      %vm343 = vcmask 1031168
      %v344 = vsel %vm343, %v320, %v322
      %v345 = vsel %vm343, %v322, %v324
      %v346 = vsel %vm343, %v326, %v328
      %v347 = vsel %vm343, %v328, %v330
      %v348 = vsel %vm343, %v332, %v334
      %v349 = vsel %vm343, %v334, %v336
      %v350 = vsel %vm343, %v338, %v340
      %v351 = vsel %vm343, %v340, %v342
      %364 = vst [vmem:[#allocation4 + $0x140] sm:$0xff] %v344
      %365 = vst [vmem:[#allocation4 + $0x148] sm:$0xff] %v345
      %366 = vst.msk [vmem:[#allocation4 + $0x150] sm:$0xff] %vm203, %v324
      %367 = vst [vmem:[#allocation4 + $0x168] sm:$0xff] %v346
      %368 = vst [vmem:[#allocation4 + $0x170] sm:$0xff] %v347
      %369 = vst.msk [vmem:[#allocation4 + $0x178] sm:$0xff] %vm203, %v330
      %370 = vst [vmem:[#allocation4 + $0x190] sm:$0xff] %v348
      %371 = vst [vmem:[#allocation4 + $0x198] sm:$0xff] %v349
      %372 = vst.msk [vmem:[#allocation4 + $0x1a0] sm:$0xff] %vm203, %v336
      %373 = vst [vmem:[#allocation4 + $0x1b8] sm:$0xff] %v350
      %374 = vst [vmem:[#allocation4 + $0x1c0] sm:$0xff] %v351
      %375 = vst.msk [vmem:[#allocation4 + $0x1c8] sm:$0xff] %vm203, %v342
      %v376 = vld [vmem:[%s164] sm:$0xff]
      %v377 = vld [vmem:[%s164 + $0x8] sm:$0xff]
      %v378 = vld [vmem:[%s164 + $0x10] sm:$0xff]
      %v379 = vld [vmem:[%s164 + $0x30] sm:$0xff]
      %v380 = vld [vmem:[%s164 + $0x38] sm:$0xff]
      %v381 = vld [vmem:[%s164 + $0x40] sm:$0xff]
      %v382 = vld [vmem:[%s164 + $0x60] sm:$0xff]
      %v383 = vld [vmem:[%s164 + $0x68] sm:$0xff]
      %v384 = vld [vmem:[%s164 + $0x70] sm:$0xff]
      %v385 = vld [vmem:[%s164 + $0x90] sm:$0xff]
      %v386 = vld [vmem:[%s164 + $0x98] sm:$0xff]
      %v387 = vld [vmem:[%s164 + $0xa0] sm:$0xff]
      %400 = vrot.lane.b32.xlu0 %v376, 96
      %v401 = vpop.permute.xlu0 %400
      %402 = vrot.lane.b32.xlu0 %v377, 96
      %v403 = vpop.permute.xlu0 %402
      %404 = vrot.lane.b32.xlu0 %v378, 96
      %v405 = vpop.permute.xlu0 %404
      %406 = vrot.lane.b32.xlu0 %v379, 96
      %v407 = vpop.permute.xlu0 %406
      %408 = vrot.lane.b32.xlu0 %v380, 96
      %v409 = vpop.permute.xlu0 %408
      %410 = vrot.lane.b32.xlu0 %v381, 96
      %v411 = vpop.permute.xlu0 %410
      %412 = vrot.lane.b32.xlu0 %v382, 96
      %v413 = vpop.permute.xlu0 %412
      %414 = vrot.lane.b32.xlu0 %v383, 96
      %v415 = vpop.permute.xlu0 %414
      %416 = vrot.lane.b32.xlu0 %v384, 96
      %v417 = vpop.permute.xlu0 %416
      %418 = vrot.lane.b32.xlu0 %v385, 96
      %v419 = vpop.permute.xlu0 %418
      %420 = vrot.lane.b32.xlu0 %v386, 96
      %v421 = vpop.permute.xlu0 %420
      %422 = vrot.lane.b32.xlu0 %v387, 96
      %v423 = vpop.permute.xlu0 %422
      %vm424 = vcmask 785408
      %v425 = vsel %vm424, %v401, %v403
      %v426 = vsel %vm424, %v403, %v405
      %v427 = vsel %vm424, %v407, %v409
      %v428 = vsel %vm424, %v409, %v411
      %v429 = vsel %vm424, %v413, %v415
      %v430 = vsel %vm424, %v415, %v417
      %v431 = vsel %vm424, %v419, %v421
      %v432 = vsel %vm424, %v421, %v423
      %445 = vst [vmem:[#allocation4 + $0x1e0] sm:$0xff] %v425
      %446 = vst [vmem:[#allocation4 + $0x1e8] sm:$0xff] %v426
      %447 = vst.msk [vmem:[#allocation4 + $0x1f0] sm:$0xff] %vm203, %v405
      %448 = vst [vmem:[#allocation4 + $0x208] sm:$0xff] %v427
      %449 = vst [vmem:[#allocation4 + $0x210] sm:$0xff] %v428
      %450 = vst.msk [vmem:[#allocation4 + $0x218] sm:$0xff] %vm203, %v411
      %451 = vst [vmem:[#allocation4 + $0x230] sm:$0xff] %v429
      %452 = vst [vmem:[#allocation4 + $0x238] sm:$0xff] %v430
      %453 = vst.msk [vmem:[#allocation4 + $0x240] sm:$0xff] %vm203, %v417
      %454 = vst [vmem:[#allocation4 + $0x258] sm:$0xff] %v431
      %455 = vst [vmem:[#allocation4 + $0x260] sm:$0xff] %v432
      %456 = vst.msk [vmem:[#allocation4 + $0x268] sm:$0xff] %vm203, %v423
      %v457 = vld [vmem:[%s164] sm:$0xff]
      %v458 = vld [vmem:[%s164 + $0x8] sm:$0xff]
      %v459 = vld [vmem:[%s164 + $0x10] sm:$0xff]
      %v460 = vld [vmem:[%s164 + $0x30] sm:$0xff]
      %v461 = vld [vmem:[%s164 + $0x38] sm:$0xff]
      %v462 = vld [vmem:[%s164 + $0x40] sm:$0xff]
      %v463 = vld [vmem:[%s164 + $0x60] sm:$0xff]
      %v464 = vld [vmem:[%s164 + $0x68] sm:$0xff]
      %v465 = vld [vmem:[%s164 + $0x70] sm:$0xff]
      %v466 = vld [vmem:[%s164 + $0x90] sm:$0xff]
      %v467 = vld [vmem:[%s164 + $0x98] sm:$0xff]
      %v468 = vld [vmem:[%s164 + $0xa0] sm:$0xff]
      %481 = vrot.lane.b32.xlu0 %v457, 95
      %v482 = vpop.permute.xlu0 %481
      %483 = vrot.lane.b32.xlu0 %v458, 95
      %v484 = vpop.permute.xlu0 %483
      %485 = vrot.lane.b32.xlu0 %v459, 95
      %v486 = vpop.permute.xlu0 %485
      %487 = vrot.lane.b32.xlu0 %v460, 95
      %v488 = vpop.permute.xlu0 %487
      %489 = vrot.lane.b32.xlu0 %v461, 95
      %v490 = vpop.permute.xlu0 %489
      %491 = vrot.lane.b32.xlu0 %v462, 95
      %v492 = vpop.permute.xlu0 %491
      %493 = vrot.lane.b32.xlu0 %v463, 95
      %v494 = vpop.permute.xlu0 %493
      %495 = vrot.lane.b32.xlu0 %v464, 95
      %v496 = vpop.permute.xlu0 %495
      %497 = vrot.lane.b32.xlu0 %v465, 95
      %v498 = vpop.permute.xlu0 %497
      %499 = vrot.lane.b32.xlu0 %v466, 95
      %v500 = vpop.permute.xlu0 %499
      %501 = vrot.lane.b32.xlu0 %v467, 95
      %v502 = vpop.permute.xlu0 %501
      %503 = vrot.lane.b32.xlu0 %v468, 95
      %v504 = vpop.permute.xlu0 %503
      %vm505 = vcmask 777216
      %v506 = vsel %vm505, %v482, %v484
      %v507 = vsel %vm505, %v484, %v486
      %v508 = vsel %vm505, %v488, %v490
      %v509 = vsel %vm505, %v490, %v492
      %v510 = vsel %vm505, %v494, %v496
      %v511 = vsel %vm505, %v496, %v498
      %v512 = vsel %vm505, %v500, %v502
      %v513 = vsel %vm505, %v502, %v504
      %526 = vst [vmem:[#allocation4 + $0x280] sm:$0xff] %v506
      %527 = vst [vmem:[#allocation4 + $0x288] sm:$0xff] %v507
      %528 = vst.msk [vmem:[#allocation4 + $0x290] sm:$0xff] %vm203, %v486
      %529 = vst [vmem:[#allocation4 + $0x2a8] sm:$0xff] %v508
      %530 = vst [vmem:[#allocation4 + $0x2b0] sm:$0xff] %v509
      %531 = vst.msk [vmem:[#allocation4 + $0x2b8] sm:$0xff] %vm203, %v492
      %532 = vst [vmem:[#allocation4 + $0x2d0] sm:$0xff] %v510
      %533 = vst [vmem:[#allocation4 + $0x2d8] sm:$0xff] %v511
      %534 = vst.msk [vmem:[#allocation4 + $0x2e0] sm:$0xff] %vm203, %v498
      %535 = vst [vmem:[#allocation4 + $0x2f8] sm:$0xff] %v512
      %536 = vst [vmem:[#allocation4 + $0x300] sm:$0xff] %v513
      %537 = vst.msk [vmem:[#allocation4 + $0x308] sm:$0xff] %vm203, %v504
      %v538 = vld [vmem:[%s164] sm:$0xff]
      %v539 = vld [vmem:[%s164 + $0x8] sm:$0xff]
      %v540 = vld [vmem:[%s164 + $0x10] sm:$0xff]
      %v541 = vld [vmem:[%s164 + $0x30] sm:$0xff]
      %v542 = vld [vmem:[%s164 + $0x38] sm:$0xff]
      %v543 = vld [vmem:[%s164 + $0x40] sm:$0xff]
      %v544 = vld [vmem:[%s164 + $0x60] sm:$0xff]
      %v545 = vld [vmem:[%s164 + $0x68] sm:$0xff]
      %v546 = vld [vmem:[%s164 + $0x70] sm:$0xff]
      %v547 = vld [vmem:[%s164 + $0x90] sm:$0xff]
      %v548 = vld [vmem:[%s164 + $0x98] sm:$0xff]
      %v549 = vld [vmem:[%s164 + $0xa0] sm:$0xff]
      %562 = vrot.lane.b32.xlu0 %v538, 94
      %v563 = vpop.permute.xlu0 %562
      %564 = vrot.lane.b32.xlu0 %v539, 94
      %v565 = vpop.permute.xlu0 %564
      %566 = vrot.lane.b32.xlu0 %v540, 94
      %v567 = vpop.permute.xlu0 %566
      %568 = vrot.lane.b32.xlu0 %v541, 94
      %v569 = vpop.permute.xlu0 %568
      %570 = vrot.lane.b32.xlu0 %v542, 94
      %v571 = vpop.permute.xlu0 %570
      %572 = vrot.lane.b32.xlu0 %v543, 94
      %v573 = vpop.permute.xlu0 %572
      %574 = vrot.lane.b32.xlu0 %v544, 94
      %v575 = vpop.permute.xlu0 %574
      %576 = vrot.lane.b32.xlu0 %v545, 94
      %v577 = vpop.permute.xlu0 %576
      %578 = vrot.lane.b32.xlu0 %v546, 94
      %v579 = vpop.permute.xlu0 %578
      %580 = vrot.lane.b32.xlu0 %v547, 94
      %v581 = vpop.permute.xlu0 %580
      %582 = vrot.lane.b32.xlu0 %v548, 94
      %v583 = vpop.permute.xlu0 %582
      %584 = vrot.lane.b32.xlu0 %v549, 94
      %v585 = vpop.permute.xlu0 %584
      %vm586 = vcmask 769024
      %v587 = vsel %vm586, %v563, %v565
      %v588 = vsel %vm586, %v565, %v567
      %v589 = vsel %vm586, %v569, %v571
      %v590 = vsel %vm586, %v571, %v573
      %v591 = vsel %vm586, %v575, %v577
      %v592 = vsel %vm586, %v577, %v579
      %v593 = vsel %vm586, %v581, %v583
      %v594 = vsel %vm586, %v583, %v585
      %607 = vst [vmem:[#allocation4 + $0x320] sm:$0xff] %v587
      %608 = vst [vmem:[#allocation4 + $0x328] sm:$0xff] %v588
      %609 = vst.msk [vmem:[#allocation4 + $0x330] sm:$0xff] %vm203, %v567
      %610 = vst [vmem:[#allocation4 + $0x348] sm:$0xff] %v589
      %611 = vst [vmem:[#allocation4 + $0x350] sm:$0xff] %v590
      %612 = vst.msk [vmem:[#allocation4 + $0x358] sm:$0xff] %vm203, %v573
      %613 = vst [vmem:[#allocation4 + $0x370] sm:$0xff] %v591
      %614 = vst [vmem:[#allocation4 + $0x378] sm:$0xff] %v592
      %615 = vst.msk [vmem:[#allocation4 + $0x380] sm:$0xff] %vm203, %v579
      %616 = vst [vmem:[#allocation4 + $0x398] sm:$0xff] %v593
      %617 = vst [vmem:[#allocation4 + $0x3a0] sm:$0xff] %v594
      %618 = vst.msk [vmem:[#allocation4 + $0x3a8] sm:$0xff] %vm203, %v585
      %v619 = vld [vmem:[%s164] sm:$0xff]
      %v620 = vld [vmem:[%s164 + $0x8] sm:$0xff]
      %v621 = vld [vmem:[%s164 + $0x10] sm:$0xff]
      %v622 = vld [vmem:[%s164 + $0x30] sm:$0xff]
      %v623 = vld [vmem:[%s164 + $0x38] sm:$0xff]
      %v624 = vld [vmem:[%s164 + $0x40] sm:$0xff]
      %v625 = vld [vmem:[%s164 + $0x60] sm:$0xff]
      %v626 = vld [vmem:[%s164 + $0x68] sm:$0xff]
      %v627 = vld [vmem:[%s164 + $0x70] sm:$0xff]
      %v628 = vld [vmem:[%s164 + $0x90] sm:$0xff]
      %v629 = vld [vmem:[%s164 + $0x98] sm:$0xff]
      %v630 = vld [vmem:[%s164 + $0xa0] sm:$0xff]
      %643 = vrot.lane.b32.xlu0 %v619, 64
      %v644 = vpop.permute.xlu0 %643
      %645 = vrot.lane.b32.xlu0 %v620, 64
      %v646 = vpop.permute.xlu0 %645
      %647 = vrot.lane.b32.xlu0 %v621, 64
      %v648 = vpop.permute.xlu0 %647
      %649 = vrot.lane.b32.xlu0 %v622, 64
      %v650 = vpop.permute.xlu0 %649
      %651 = vrot.lane.b32.xlu0 %v623, 64
      %v652 = vpop.permute.xlu0 %651
      %653 = vrot.lane.b32.xlu0 %v624, 64
      %v654 = vpop.permute.xlu0 %653
      %655 = vrot.lane.b32.xlu0 %v625, 64
      %v656 = vpop.permute.xlu0 %655
      %657 = vrot.lane.b32.xlu0 %v626, 64
      %v658 = vpop.permute.xlu0 %657
      %659 = vrot.lane.b32.xlu0 %v627, 64
      %v660 = vpop.permute.xlu0 %659
      %661 = vrot.lane.b32.xlu0 %v628, 64
      %v662 = vpop.permute.xlu0 %661
      %663 = vrot.lane.b32.xlu0 %v629, 64
      %v664 = vpop.permute.xlu0 %663
      %665 = vrot.lane.b32.xlu0 %v630, 64
      %v666 = vpop.permute.xlu0 %665
      %v667 = vsel %vm203, %v644, %v646
      %v668 = vsel %vm203, %v646, %v648
      %v669 = vsel %vm203, %v650, %v652
      %v670 = vsel %vm203, %v652, %v654
      %v671 = vsel %vm203, %v656, %v658
      %v672 = vsel %vm203, %v658, %v660
      %v673 = vsel %vm203, %v662, %v664
      %v674 = vsel %vm203, %v664, %v666
      %687 = vst [vmem:[#allocation4 + $0x3c0] sm:$0xff] %v667
      %688 = vst [vmem:[#allocation4 + $0x3c8] sm:$0xff] %v668
      %689 = vst.msk [vmem:[#allocation4 + $0x3d0] sm:$0xff] %vm203, %v648
      %690 = vst [vmem:[#allocation4 + $0x3e8] sm:$0xff] %v669
      %691 = vst [vmem:[#allocation4 + $0x3f0] sm:$0xff] %v670
      %692 = vst.msk [vmem:[#allocation4 + $0x3f8] sm:$0xff] %vm203, %v654
      %693 = vst [vmem:[#allocation4 + $0x410] sm:$0xff] %v671
      %694 = vst [vmem:[#allocation4 + $0x418] sm:$0xff] %v672
      %695 = vst.msk [vmem:[#allocation4 + $0x420] sm:$0xff] %vm203, %v660
      %696 = vst [vmem:[#allocation4 + $0x438] sm:$0xff] %v673
      %697 = vst [vmem:[#allocation4 + $0x440] sm:$0xff] %v674
      %698 = vst.msk [vmem:[#allocation4 + $0x448] sm:$0xff] %vm203, %v666
      %v699 = vld [vmem:[%s164] sm:$0xff]
      %v700 = vld [vmem:[%s164 + $0x8] sm:$0xff]
      %v701 = vld [vmem:[%s164 + $0x10] sm:$0xff]
      %v702 = vld [vmem:[%s164 + $0x18] sm:$0xff]
      %v703 = vld [vmem:[%s164 + $0x30] sm:$0xff]
      %v704 = vld [vmem:[%s164 + $0x38] sm:$0xff]
      %v705 = vld [vmem:[%s164 + $0x40] sm:$0xff]
      %v706 = vld [vmem:[%s164 + $0x48] sm:$0xff]
      %v707 = vld [vmem:[%s164 + $0x60] sm:$0xff]
      %v708 = vld [vmem:[%s164 + $0x68] sm:$0xff]
      %v709 = vld [vmem:[%s164 + $0x70] sm:$0xff]
      %v710 = vld [vmem:[%s164 + $0x78] sm:$0xff]
      %v711 = vld [vmem:[%s164 + $0x90] sm:$0xff]
      %v712 = vld [vmem:[%s164 + $0x98] sm:$0xff]
      %v713 = vld [vmem:[%s164 + $0xa0] sm:$0xff]
      %v714 = vld [vmem:[%s164 + $0xa8] sm:$0xff]
      %731 = vrot.lane.b32.xlu0 %v699, 63
      %v732 = vpop.permute.xlu0 %731
      %733 = vrot.lane.b32.xlu0 %v700, 63
      %v734 = vpop.permute.xlu0 %733
      %735 = vrot.lane.b32.xlu0 %v701, 63
      %v736 = vpop.permute.xlu0 %735
      %737 = vrot.lane.b32.xlu0 %v702, 63
      %v738 = vpop.permute.xlu0 %737
      %739 = vrot.lane.b32.xlu0 %v703, 63
      %v740 = vpop.permute.xlu0 %739
      %741 = vrot.lane.b32.xlu0 %v704, 63
      %v742 = vpop.permute.xlu0 %741
      %743 = vrot.lane.b32.xlu0 %v705, 63
      %v744 = vpop.permute.xlu0 %743
      %745 = vrot.lane.b32.xlu0 %v706, 63
      %v746 = vpop.permute.xlu0 %745
      %747 = vrot.lane.b32.xlu0 %v707, 63
      %v748 = vpop.permute.xlu0 %747
      %749 = vrot.lane.b32.xlu0 %v708, 63
      %v750 = vpop.permute.xlu0 %749
      %751 = vrot.lane.b32.xlu0 %v709, 63
      %v752 = vpop.permute.xlu0 %751
      %753 = vrot.lane.b32.xlu0 %v710, 63
      %v754 = vpop.permute.xlu0 %753
      %755 = vrot.lane.b32.xlu0 %v711, 63
      %v756 = vpop.permute.xlu0 %755
      %757 = vrot.lane.b32.xlu0 %v712, 63
      %v758 = vpop.permute.xlu0 %757
      %759 = vrot.lane.b32.xlu0 %v713, 63
      %v760 = vpop.permute.xlu0 %759
      %761 = vrot.lane.b32.xlu0 %v714, 63
      %v762 = vpop.permute.xlu0 %761
      %vm763 = vcmask 515072
      %v764 = vsel %vm763, %v732, %v734
      %v765 = vsel %vm763, %v734, %v736
      %v766 = vsel %vm763, %v736, %v738
      %v767 = vsel %vm763, %v740, %v742
      %v768 = vsel %vm763, %v742, %v744
      %v769 = vsel %vm763, %v744, %v746
      %v770 = vsel %vm763, %v748, %v750
      %v771 = vsel %vm763, %v750, %v752
      %v772 = vsel %vm763, %v752, %v754
      %v773 = vsel %vm763, %v756, %v758
      %v774 = vsel %vm763, %v758, %v760
      %v775 = vsel %vm763, %v760, %v762
      %788 = vst [vmem:[#allocation4 + $0x460] sm:$0xff] %v764
      %789 = vst [vmem:[#allocation4 + $0x468] sm:$0xff] %v765
      %790 = vst.msk [vmem:[#allocation4 + $0x470] sm:$0xff] %vm203, %v766
      %791 = vst [vmem:[#allocation4 + $0x488] sm:$0xff] %v767
      %792 = vst [vmem:[#allocation4 + $0x490] sm:$0xff] %v768
      %793 = vst.msk [vmem:[#allocation4 + $0x498] sm:$0xff] %vm203, %v769
      %794 = vst [vmem:[#allocation4 + $0x4b0] sm:$0xff] %v770
      %795 = vst [vmem:[#allocation4 + $0x4b8] sm:$0xff] %v771
      %796 = vst.msk [vmem:[#allocation4 + $0x4c0] sm:$0xff] %vm203, %v772
      %797 = vst [vmem:[#allocation4 + $0x4d8] sm:$0xff] %v773
      %798 = vst [vmem:[#allocation4 + $0x4e0] sm:$0xff] %v774
      %799 = vst.msk [vmem:[#allocation4 + $0x4e8] sm:$0xff] %vm203, %v775
      %v800 = vld [vmem:[%s164] sm:$0xff]
      %v801 = vld [vmem:[%s164 + $0x8] sm:$0xff]
      %v802 = vld [vmem:[%s164 + $0x10] sm:$0xff]
      %v803 = vld [vmem:[%s164 + $0x18] sm:$0xff]
      %v804 = vld [vmem:[%s164 + $0x30] sm:$0xff]
      %v805 = vld [vmem:[%s164 + $0x38] sm:$0xff]
      %v806 = vld [vmem:[%s164 + $0x40] sm:$0xff]
      %v807 = vld [vmem:[%s164 + $0x48] sm:$0xff]
      %v808 = vld [vmem:[%s164 + $0x60] sm:$0xff]
      %v809 = vld [vmem:[%s164 + $0x68] sm:$0xff]
      %v810 = vld [vmem:[%s164 + $0x70] sm:$0xff]
      %v811 = vld [vmem:[%s164 + $0x78] sm:$0xff]
      %v812 = vld [vmem:[%s164 + $0x90] sm:$0xff]
      %v813 = vld [vmem:[%s164 + $0x98] sm:$0xff]
      %v814 = vld [vmem:[%s164 + $0xa0] sm:$0xff]
      %v815 = vld [vmem:[%s164 + $0xa8] sm:$0xff]
      %832 = vrot.lane.b32.xlu0 %v800, 62
      %v833 = vpop.permute.xlu0 %832
      %834 = vrot.lane.b32.xlu0 %v801, 62
      %v835 = vpop.permute.xlu0 %834
      %836 = vrot.lane.b32.xlu0 %v802, 62
      %v837 = vpop.permute.xlu0 %836
      %838 = vrot.lane.b32.xlu0 %v803, 62
      %v839 = vpop.permute.xlu0 %838
      %840 = vrot.lane.b32.xlu0 %v804, 62
      %v841 = vpop.permute.xlu0 %840
      %842 = vrot.lane.b32.xlu0 %v805, 62
      %v843 = vpop.permute.xlu0 %842
      %844 = vrot.lane.b32.xlu0 %v806, 62
      %v845 = vpop.permute.xlu0 %844
      %846 = vrot.lane.b32.xlu0 %v807, 62
      %v847 = vpop.permute.xlu0 %846
      %848 = vrot.lane.b32.xlu0 %v808, 62
      %v849 = vpop.permute.xlu0 %848
      %850 = vrot.lane.b32.xlu0 %v809, 62
      %v851 = vpop.permute.xlu0 %850
      %852 = vrot.lane.b32.xlu0 %v810, 62
      %v853 = vpop.permute.xlu0 %852
      %854 = vrot.lane.b32.xlu0 %v811, 62
      %v855 = vpop.permute.xlu0 %854
      %856 = vrot.lane.b32.xlu0 %v812, 62
      %v857 = vpop.permute.xlu0 %856
      %858 = vrot.lane.b32.xlu0 %v813, 62
      %v859 = vpop.permute.xlu0 %858
      %860 = vrot.lane.b32.xlu0 %v814, 62
      %v861 = vpop.permute.xlu0 %860
      %862 = vrot.lane.b32.xlu0 %v815, 62
      %v863 = vpop.permute.xlu0 %862
      %vm864 = vcmask 506880
      %v865 = vsel %vm864, %v833, %v835
      %v866 = vsel %vm864, %v835, %v837
      %v867 = vsel %vm864, %v837, %v839
      %v868 = vsel %vm864, %v841, %v843
      %v869 = vsel %vm864, %v843, %v845
      %v870 = vsel %vm864, %v845, %v847
      %v871 = vsel %vm864, %v849, %v851
      %v872 = vsel %vm864, %v851, %v853
      %v873 = vsel %vm864, %v853, %v855
      %v874 = vsel %vm864, %v857, %v859
      %v875 = vsel %vm864, %v859, %v861
      %v876 = vsel %vm864, %v861, %v863
      %889 = vst [vmem:[#allocation4 + $0x500] sm:$0xff] %v865
      %890 = vst [vmem:[#allocation4 + $0x508] sm:$0xff] %v866
      %891 = vst.msk [vmem:[#allocation4 + $0x510] sm:$0xff] %vm203, %v867
      %892 = vst [vmem:[#allocation4 + $0x528] sm:$0xff] %v868
      %893 = vst [vmem:[#allocation4 + $0x530] sm:$0xff] %v869
      %894 = vst.msk [vmem:[#allocation4 + $0x538] sm:$0xff] %vm203, %v870
      %895 = vst [vmem:[#allocation4 + $0x550] sm:$0xff] %v871
      %896 = vst [vmem:[#allocation4 + $0x558] sm:$0xff] %v872
      %897 = vst.msk [vmem:[#allocation4 + $0x560] sm:$0xff] %vm203, %v873
      %898 = vst [vmem:[#allocation4 + $0x578] sm:$0xff] %v874
      %899 = vst [vmem:[#allocation4 + $0x580] sm:$0xff] %v875
      %900 = vst.msk [vmem:[#allocation4 + $0x588] sm:$0xff] %vm203, %v876
      %v901 = vld [vmem:[%s1] sm:$0xff]
      %v902 = vld [vmem:[%s1 + $0x8] sm:$0xff]
      %v903 = vld [vmem:[%s1 + $0x10] sm:$0xff]
      %v904 = vld [vmem:[%s1 + $0x18] sm:$0xff]
      %v905 = vld [vmem:[%s1 + $0x20] sm:$0xff]
      %v906 = vld [vmem:[%s1 + $0x28] sm:$0xff]
      %v907 = vld [vmem:[%s1 + $0x30] sm:$0xff]
      %v908 = vld [vmem:[%s1 + $0x38] sm:$0xff]
      %v909 = vld [vmem:[%s1 + $0x40] sm:$0xff]
      %v910 = vld [vmem:[%s1 + $0x48] sm:$0xff]
      %v911 = vld [vmem:[%s1 + $0x50] sm:$0xff]
      %v912 = vld [vmem:[%s1 + $0x58] sm:$0xff]
      %v913 = vld [vmem:[#allocation4] sm:$0xff]
      %v914 = vld [vmem:[#allocation4 + $0x8] sm:$0xff]
      %v915 = vld [vmem:[#allocation4 + $0x10] sm:$0xff]
      %v916 = vld [vmem:[#allocation4 + $0x28] sm:$0xff]
      %v917 = vld [vmem:[#allocation4 + $0x30] sm:$0xff]
      %v918 = vld [vmem:[#allocation4 + $0x38] sm:$0xff]
      %v919 = vld [vmem:[#allocation4 + $0x50] sm:$0xff]
      %v920 = vld [vmem:[#allocation4 + $0x58] sm:$0xff]
      %v921 = vld [vmem:[#allocation4 + $0x60] sm:$0xff]
      %v922 = vld [vmem:[#allocation4 + $0x78] sm:$0xff]
      %v923 = vld [vmem:[#allocation4 + $0x80] sm:$0xff]
      %v924 = vld [vmem:[#allocation4 + $0x88] sm:$0xff]
      %v925 = vld [vmem:[#allocation4 + $0xa0] sm:$0xff]
      %v926 = vld [vmem:[#allocation4 + $0xa8] sm:$0xff]
      %v927 = vld [vmem:[#allocation4 + $0xb0] sm:$0xff]
      %v928 = vld [vmem:[#allocation4 + $0xc8] sm:$0xff]
      %v929 = vld [vmem:[#allocation4 + $0xd0] sm:$0xff]
      %v930 = vld [vmem:[#allocation4 + $0xd8] sm:$0xff]
      %v931 = vld [vmem:[#allocation4 + $0xf0] sm:$0xff]
      %v932 = vld [vmem:[#allocation4 + $0xf8] sm:$0xff]
      %v933 = vld [vmem:[#allocation4 + $0x100] sm:$0xff]
      %v934 = vld [vmem:[#allocation4 + $0x118] sm:$0xff]
      %v935 = vld [vmem:[#allocation4 + $0x120] sm:$0xff]
      %v936 = vld [vmem:[#allocation4 + $0x128] sm:$0xff]
      %v937 = vld [vmem:[#allocation4 + $0x140] sm:$0xff]
      %v938 = vld [vmem:[#allocation4 + $0x148] sm:$0xff]
      %v939 = vld [vmem:[#allocation4 + $0x150] sm:$0xff]
      %v940 = vld [vmem:[#allocation4 + $0x168] sm:$0xff]
      %v941 = vld [vmem:[#allocation4 + $0x170] sm:$0xff]
      %v942 = vld [vmem:[#allocation4 + $0x178] sm:$0xff]
      %v943 = vld [vmem:[#allocation4 + $0x190] sm:$0xff]
      %v944 = vld [vmem:[#allocation4 + $0x198] sm:$0xff]
      %v945 = vld [vmem:[#allocation4 + $0x1a0] sm:$0xff]
      %v946 = vld [vmem:[#allocation4 + $0x1b8] sm:$0xff]
      %v947 = vld [vmem:[#allocation4 + $0x1c0] sm:$0xff]
      %v948 = vld [vmem:[#allocation4 + $0x1c8] sm:$0xff]
      %v949 = vld [vmem:[#allocation4 + $0x1e0] sm:$0xff]
      %v950 = vld [vmem:[#allocation4 + $0x1e8] sm:$0xff]
      %v951 = vld [vmem:[#allocation4 + $0x1f0] sm:$0xff]
      %v952 = vld [vmem:[#allocation4 + $0x208] sm:$0xff]
      %v953 = vld [vmem:[#allocation4 + $0x210] sm:$0xff]
      %v954 = vld [vmem:[#allocation4 + $0x218] sm:$0xff]
      %v955 = vld [vmem:[#allocation4 + $0x230] sm:$0xff]
      %v956 = vld [vmem:[#allocation4 + $0x238] sm:$0xff]
      %v957 = vld [vmem:[#allocation4 + $0x240] sm:$0xff]
      %v958 = vld [vmem:[#allocation4 + $0x258] sm:$0xff]
      %v959 = vld [vmem:[#allocation4 + $0x260] sm:$0xff]
      %v960 = vld [vmem:[#allocation4 + $0x268] sm:$0xff]
      %v961 = vld [vmem:[#allocation4 + $0x280] sm:$0xff]
      %v962 = vld [vmem:[#allocation4 + $0x288] sm:$0xff]
      %v963 = vld [vmem:[#allocation4 + $0x290] sm:$0xff]
      %v964 = vld [vmem:[#allocation4 + $0x2a8] sm:$0xff]
      %v965 = vld [vmem:[#allocation4 + $0x2b0] sm:$0xff]
      %v966 = vld [vmem:[#allocation4 + $0x2b8] sm:$0xff]
      %v967 = vld [vmem:[#allocation4 + $0x2d0] sm:$0xff]
      %v968 = vld [vmem:[#allocation4 + $0x2d8] sm:$0xff]
      %v969 = vld [vmem:[#allocation4 + $0x2e0] sm:$0xff]
      %v970 = vld [vmem:[#allocation4 + $0x2f8] sm:$0xff]
      %v971 = vld [vmem:[#allocation4 + $0x300] sm:$0xff]
      %v972 = vld [vmem:[#allocation4 + $0x308] sm:$0xff]
      %v973 = vld [vmem:[#allocation4 + $0x320] sm:$0xff]
      %v974 = vld [vmem:[#allocation4 + $0x328] sm:$0xff]
      %v975 = vld [vmem:[#allocation4 + $0x330] sm:$0xff]
      %v976 = vld [vmem:[#allocation4 + $0x348] sm:$0xff]
      %v977 = vld [vmem:[#allocation4 + $0x350] sm:$0xff]
      %v978 = vld [vmem:[#allocation4 + $0x358] sm:$0xff]
      %v979 = vld [vmem:[#allocation4 + $0x370] sm:$0xff]
      %v980 = vld [vmem:[#allocation4 + $0x378] sm:$0xff]
      %v981 = vld [vmem:[#allocation4 + $0x380] sm:$0xff]
      %v982 = vld [vmem:[#allocation4 + $0x398] sm:$0xff]
      %v983 = vld [vmem:[#allocation4 + $0x3a0] sm:$0xff]
      %v984 = vld [vmem:[#allocation4 + $0x3a8] sm:$0xff]
      %v985 = vld [vmem:[#allocation4 + $0x3c0] sm:$0xff]
      %v986 = vld [vmem:[#allocation4 + $0x3c8] sm:$0xff]
      %v987 = vld [vmem:[#allocation4 + $0x3d0] sm:$0xff]
      %v988 = vld [vmem:[#allocation4 + $0x3e8] sm:$0xff]
      %v989 = vld [vmem:[#allocation4 + $0x3f0] sm:$0xff]
      %v990 = vld [vmem:[#allocation4 + $0x3f8] sm:$0xff]
      %v991 = vld [vmem:[#allocation4 + $0x410] sm:$0xff]
      %v992 = vld [vmem:[#allocation4 + $0x418] sm:$0xff]
      %v993 = vld [vmem:[#allocation4 + $0x420] sm:$0xff]
      %v994 = vld [vmem:[#allocation4 + $0x438] sm:$0xff]
      %v995 = vld [vmem:[#allocation4 + $0x440] sm:$0xff]
      %v996 = vld [vmem:[#allocation4 + $0x448] sm:$0xff]
      %v997 = vld [vmem:[#allocation4 + $0x460] sm:$0xff]
      %v998 = vld [vmem:[#allocation4 + $0x468] sm:$0xff]
      %v999 = vld [vmem:[#allocation4 + $0x470] sm:$0xff]
      %v1000 = vld [vmem:[#allocation4 + $0x488] sm:$0xff]
      %v1001 = vld [vmem:[#allocation4 + $0x490] sm:$0xff]
      %v1002 = vld [vmem:[#allocation4 + $0x498] sm:$0xff]
      %v1003 = vld [vmem:[#allocation4 + $0x4b0] sm:$0xff]
      %v1004 = vld [vmem:[#allocation4 + $0x4b8] sm:$0xff]
      %v1005 = vld [vmem:[#allocation4 + $0x4c0] sm:$0xff]
      %v1006 = vld [vmem:[#allocation4 + $0x4d8] sm:$0xff]
      %v1007 = vld [vmem:[#allocation4 + $0x4e0] sm:$0xff]
      %v1008 = vld [vmem:[#allocation4 + $0x4e8] sm:$0xff]
      %v1009 = vld [vmem:[#allocation4 + $0x500] sm:$0xff]
      %v1010 = vld [vmem:[#allocation4 + $0x508] sm:$0xff]
      %v1011 = vld [vmem:[#allocation4 + $0x510] sm:$0xff]
      %v1012 = vld [vmem:[#allocation4 + $0x528] sm:$0xff]
      %v1013 = vld [vmem:[#allocation4 + $0x530] sm:$0xff]
      %v1014 = vld [vmem:[#allocation4 + $0x538] sm:$0xff]
      %v1015 = vld [vmem:[#allocation4 + $0x550] sm:$0xff]
      %v1016 = vld [vmem:[#allocation4 + $0x558] sm:$0xff]
      %v1017 = vld [vmem:[#allocation4 + $0x560] sm:$0xff]
      %v1018 = vld [vmem:[#allocation4 + $0x578] sm:$0xff]
      %v1019 = vld [vmem:[#allocation4 + $0x580] sm:$0xff]
      %v1020 = vld [vmem:[#allocation4 + $0x588] sm:$0xff]
      %v1021 = vld [vmem:[%s2] sm:$0xff]
      %v1022 = vld [vmem:[%s2 + $0x8] sm:$0xff]
      %v1023 = vld [vmem:[%s2 + $0x10] sm:$0xff]
      %v1024 = vld [vmem:[%s2 + $0x18] sm:$0xff]
      %1026 = vset.pattern.permute.xlu0 0
      %1027 = vperm.xlu0 %1026, %v1021
      %v1028 = vpop.permute.xlu0 %1027
      %1031 = vset.pattern.permute.xlu0 0
      %1032 = vperm.xlu0 %1031, %v1022
      %v1033 = vpop.permute.xlu0 %1032
      %1036 = vset.pattern.permute.xlu0 0
      %1037 = vperm.xlu0 %1036, %v1023
      %v1038 = vpop.permute.xlu0 %1037
      %1041 = vset.pattern.permute.xlu0 0
      %1042 = vperm.xlu0 %1041, %v1024
      %v1043 = vpop.permute.xlu0 %1042
      %vm1045 = vcmask 261120
      %v1047 = vsel %vm1045, %v903, 0
      %v1050 = vsel %vm1045, %v906, 0
      %v1053 = vsel %vm1045, %v909, 0
      %v1056 = vsel %vm1045, %v912, 0
      %1058 = vmatprep.subr.mxu0 %v914
      %1059 = vmatpush1.msra.mxu0 %v913
      %1060 = vmatprep.subr.mxu0 %v917
      %1061 = vmatpush1.msra.mxu0 %v916
      %1062 = vmatprep.subr.mxu0 %v920
      %1063 = vmatpush1.msra.mxu0 %v919
      %1064 = vmatprep.subr.mxu0 %v923
      %1065 = vmatpush1.msra.mxu0 %v922
      %1066 = vmatprep.subr.mxu0 %v926
      %1067 = vmatpush1.msra.mxu0 %v925
      %1068 = vmatprep.subr.mxu0 %v929
      %1069 = vmatpush1.msra.mxu0 %v928
      %1070 = vmatprep.subr.mxu0 %v932
      %1071 = vmatpush1.msra.mxu0 %v931
      %1072 = vmatprep.subr.mxu0 %v935
      %1073 = vmatpush1.msra.mxu0 %v934
      %1074 = vmatprep.subr.mxu0 %v938
      %1075 = vmatpush1.msra.mxu0 %v937
      %1076 = vmatprep.subr.mxu0 %v941
      %1077 = vmatpush1.msra.mxu0 %v940
      %1078 = vmatprep.subr.mxu0 %v944
      %1079 = vmatpush1.msra.mxu0 %v943
      %1080 = vmatprep.subr.mxu0 %v947
      %1081 = vmatpush1.msra.mxu0 %v946
      %1082 = vmatprep.subr.mxu0 %v950
      %1083 = vmatpush1.msra.mxu0 %v949
      %1084 = vmatprep.subr.mxu0 %v953
      %1085 = vmatpush1.msra.mxu0 %v952
      %1086 = vmatprep.subr.mxu0 %v956
      %1087 = vmatpush1.msra.mxu0 %v955
      %1088 = vmatprep.subr.mxu0 %v959
      %1089 = vmatpush1.msra.mxu0 %v958
      %1090 = vmatprep.subr.mxu0 %v962
      %1091 = vmatpush1.msra.mxu0 %v961
      %1092 = vmatprep.subr.mxu0 %v965
      %1093 = vmatpush1.msra.mxu0 %v964
      %1094 = vmatprep.subr.mxu0 %v968
      %1095 = vmatpush1.msra.mxu0 %v967
      %1096 = vmatprep.subr.mxu0 %v971
      %1097 = vmatpush1.msra.mxu0 %v970
      %1098 = vmatprep.subr.mxu0 %v974
      %1099 = vmatpush1.msra.mxu0 %v973
      %1100 = vmatprep.subr.mxu0 %v977
      %1101 = vmatpush1.msra.mxu0 %v976
      %1102 = vmatprep.subr.mxu0 %v980
      %1103 = vmatpush1.msra.mxu0 %v979
      %1104 = vmatprep.subr.mxu0 %v983
      %1105 = vmatpush1.msra.mxu0 %v982
      %1106 = vmatprep.subr.mxu0 %v986
      %1107 = vmatpush1.msra.mxu0 %v985
      %1108 = vmatprep.subr.mxu0 %v989
      %1109 = vmatpush1.msra.mxu0 %v988
      %1110 = vmatprep.subr.mxu0 %v992
      %1111 = vmatpush1.msra.mxu0 %v991
      %1112 = vmatprep.subr.mxu0 %v995
      %1113 = vmatpush1.msra.mxu0 %v994
      %1114 = vmatprep.subr.mxu0 %v998
      %1115 = vmatpush1.msra.mxu0 %v997
      %1116 = vmatprep.subr.mxu0 %v1001
      %1117 = vmatpush1.msra.mxu0 %v1000
      %1118 = vmatprep.subr.mxu0 %v1004
      %1119 = vmatpush1.msra.mxu0 %v1003
      %1120 = vmatprep.subr.mxu0 %v1007
      %1121 = vmatpush1.msra.mxu0 %v1006
      %1122 = vmatprep.mubr.f32.mxu0 %v902
      %1123 = vmatmul.mubr.f32.gmra.mrb[0].mxu0 %v901
      %v1124 = vpop.f32.mrb[0].mxu0
      %v1125 = vadd.f32 %v1028, %v1124
      %v1126 = vpop.f32.mrb[0].mxu0
      %v1127 = vadd.f32 %v1028, %v1126
      %1128 = vmatprep.mubr.f32.mxu0 %v905
      %1129 = vmatmul.mubr.f32.gmra.mrb[0].mxu0 %v904
      %v1130 = vpop.f32.mrb[0].mxu0
      %v1131 = vadd.f32 %v1033, %v1130
      %v1132 = vpop.f32.mrb[0].mxu0
      %v1133 = vadd.f32 %v1033, %v1132
      %1134 = vmatprep.mubr.f32.mxu0 %v908
      %1135 = vmatmul.mubr.f32.gmra.mrb[0].mxu0 %v907
      %v1136 = vpop.f32.mrb[0].mxu0
      %v1137 = vadd.f32 %v1038, %v1136
      %v1138 = vpop.f32.mrb[0].mxu0
      %v1139 = vadd.f32 %v1038, %v1138
      %1140 = vmatprep.mubr.f32.mxu0 %v911
      %1141 = vmatmul.mubr.f32.gmra.mrb[0].mxu0 %v910
      %v1142 = vpop.f32.mrb[0].mxu0
      %v1143 = vadd.f32 %v1043, %v1142
      %v1144 = vpop.f32.mrb[0].mxu0
      %v1145 = vadd.f32 %v1043, %v1144
      %1146 = vdwg.mxu0
      %1147 = vmatprep.subr.mxu0 %v1010
      %1148 = vmatpush1.msra.mxu0 %v1009
      %1149 = vmatprep.subr.mxu0 %v1013
      %1150 = vmatpush1.msra.mxu0 %v1012
      %1151 = vmatprep.subr.mxu0 %v1016
      %1152 = vmatpush1.msra.mxu0 %v1015
      %1153 = vmatprep.subr.mxu0 %v1019
      %1154 = vmatpush1.msra.mxu0 %v1018
      %1155 = vmatprep.subr.mxu0 0.0
      %1156 = vmatpush1.msra.mxu0 0.0
      %1157 = vmatprep.subr.mxu0 0.0
      %1158 = vmatpush1.msra.mxu0 0.0
      %1159 = vmatprep.subr.mxu0 0.0
      %1160 = vmatpush1.msra.mxu0 0.0
      %1161 = vmatprep.subr.mxu0 0.0
      %1162 = vmatpush1.msra.mxu0 0.0
      %1163 = vmatprep.subr.mxu0 0.0
      %1164 = vmatpush1.msra.mxu0 0.0
      %1165 = vmatprep.subr.mxu0 0.0
      %1166 = vmatpush1.msra.mxu0 0.0
      %1167 = vmatprep.subr.mxu0 0.0
      %1168 = vmatpush1.msra.mxu0 0.0
      %1169 = vmatprep.subr.mxu0 0.0
      %1170 = vmatpush1.msra.mxu0 0.0
      %1171 = vmatprep.subr.mxu0 0.0
      %1172 = vmatpush1.msra.mxu0 0.0
      %1173 = vmatprep.subr.mxu0 0.0
      %1174 = vmatpush1.msra.mxu0 0.0
      %1175 = vmatprep.subr.mxu0 0.0
      %1176 = vmatpush1.msra.mxu0 0.0
      %1177 = vmatprep.subr.mxu0 0.0
      %1178 = vmatpush1.msra.mxu0 0.0
      %1179 = vmatprep.subr.mxu0 0.0
      %1180 = vmatpush1.msra.mxu0 0.0
      %1181 = vmatprep.subr.mxu0 0.0
      %1182 = vmatpush1.msra.mxu0 0.0
      %1183 = vmatprep.subr.mxu0 0.0
      %1184 = vmatpush1.msra.mxu0 0.0
      %1185 = vmatprep.subr.mxu0 0.0
      %1186 = vmatpush1.msra.mxu0 0.0
      %1187 = vmatprep.subr.mxu0 0.0
      %1188 = vmatpush1.msra.mxu0 0.0
      %1189 = vmatprep.subr.mxu0 0.0
      %1190 = vmatpush1.msra.mxu0 0.0
      %1191 = vmatprep.subr.mxu0 0.0
      %1192 = vmatpush1.msra.mxu0 0.0
      %1193 = vmatprep.subr.mxu0 0.0
      %1194 = vmatpush1.msra.mxu0 0.0
      %1195 = vmatprep.subr.mxu0 0.0
      %1196 = vmatpush1.msra.mxu0 0.0
      %1197 = vmatprep.subr.mxu0 0.0
      %1198 = vmatpush1.msra.mxu0 0.0
      %1199 = vmatprep.subr.mxu0 0.0
      %1200 = vmatpush1.msra.mxu0 0.0
      %1201 = vmatprep.subr.mxu0 0.0
      %1202 = vmatpush1.msra.mxu0 0.0
      %1203 = vmatprep.subr.mxu0 0.0
      %1204 = vmatpush1.msra.mxu0 0.0
      %1205 = vmatprep.subr.mxu0 0.0
      %1206 = vmatpush1.msra.mxu0 0.0
      %1207 = vmatprep.subr.mxu0 0.0
      %1208 = vmatpush1.msra.mxu0 0.0
      %1209 = vmatprep.subr.mxu0 0.0
      %1210 = vmatpush1.msra.mxu0 0.0
      %1211 = vmatprep.mubr.f32.mxu0 0.0
      %1212 = vmatmul.mubr.f32.gmra.mrb[0].mxu0 %v1047
      %v1213 = vpop.f32.mrb[0].mxu0
      %v1214 = vadd.f32 %v1125, %v1213
      %v1215 = vpop.f32.mrb[0].mxu0
      %v1216 = vadd.f32 %v1127, %v1215
      %1217 = vmatprep.mubr.f32.mxu0 0.0
      %1218 = vmatmul.mubr.f32.gmra.mrb[0].mxu0 %v1050
      %v1219 = vpop.f32.mrb[0].mxu0
      %v1220 = vadd.f32 %v1131, %v1219
      %v1221 = vpop.f32.mrb[0].mxu0
      %v1222 = vadd.f32 %v1133, %v1221
      %1223 = vmatprep.mubr.f32.mxu0 0.0
      %1224 = vmatmul.mubr.f32.gmra.mrb[0].mxu0 %v1053
      %v1225 = vpop.f32.mrb[0].mxu0
      %v1226 = vadd.f32 %v1137, %v1225
      %v1227 = vpop.f32.mrb[0].mxu0
      %v1228 = vadd.f32 %v1139, %v1227
      %1229 = vmatprep.mubr.f32.mxu0 0.0
      %1230 = vmatmul.mubr.f32.gmra.mrb[0].mxu0 %v1056
      %v1231 = vpop.f32.mrb[0].mxu0
      %v1232 = vadd.f32 %v1143, %v1231
      %v1233 = vpop.f32.mrb[0].mxu0
      %v1234 = vadd.f32 %v1145, %v1233
      %1235 = vdwg.mxu0
      %1236 = vmatprep.subr.mxu0 0.0
      %1237 = vmatpush1.msra.mxu0 %v915
      %1238 = vmatprep.subr.mxu0 0.0
      %1239 = vmatpush1.msra.mxu0 %v918
      %1240 = vmatprep.subr.mxu0 0.0
      %1241 = vmatpush1.msra.mxu0 %v921
      %1242 = vmatprep.subr.mxu0 0.0
      %1243 = vmatpush1.msra.mxu0 %v924
      %1244 = vmatprep.subr.mxu0 0.0
      %1245 = vmatpush1.msra.mxu0 %v927
      %1246 = vmatprep.subr.mxu0 0.0
      %1247 = vmatpush1.msra.mxu0 %v930
      %1248 = vmatprep.subr.mxu0 0.0
      %1249 = vmatpush1.msra.mxu0 %v933
      %1250 = vmatprep.subr.mxu0 0.0
      %1251 = vmatpush1.msra.mxu0 %v936
      %1252 = vmatprep.subr.mxu0 0.0
      %1253 = vmatpush1.msra.mxu0 %v939
      %1254 = vmatprep.subr.mxu0 0.0
      %1255 = vmatpush1.msra.mxu0 %v942
      %1256 = vmatprep.subr.mxu0 0.0
      %1257 = vmatpush1.msra.mxu0 %v945
      %1258 = vmatprep.subr.mxu0 0.0
      %1259 = vmatpush1.msra.mxu0 %v948
      %1260 = vmatprep.subr.mxu0 0.0
      %1261 = vmatpush1.msra.mxu0 %v951
      %1262 = vmatprep.subr.mxu0 0.0
      %1263 = vmatpush1.msra.mxu0 %v954
      %1264 = vmatprep.subr.mxu0 0.0
      %1265 = vmatpush1.msra.mxu0 %v957
      %1266 = vmatprep.subr.mxu0 0.0
      %1267 = vmatpush1.msra.mxu0 %v960
      %1268 = vmatprep.subr.mxu0 0.0
      %1269 = vmatpush1.msra.mxu0 %v963
      %1270 = vmatprep.subr.mxu0 0.0
      %1271 = vmatpush1.msra.mxu0 %v966
      %1272 = vmatprep.subr.mxu0 0.0
      %1273 = vmatpush1.msra.mxu0 %v969
      %1274 = vmatprep.subr.mxu0 0.0
      %1275 = vmatpush1.msra.mxu0 %v972
      %1276 = vmatprep.subr.mxu0 0.0
      %1277 = vmatpush1.msra.mxu0 %v975
      %1278 = vmatprep.subr.mxu0 0.0
      %1279 = vmatpush1.msra.mxu0 %v978
      %1280 = vmatprep.subr.mxu0 0.0
      %1281 = vmatpush1.msra.mxu0 %v981
      %1282 = vmatprep.subr.mxu0 0.0
      %1283 = vmatpush1.msra.mxu0 %v984
      %1284 = vmatprep.subr.mxu0 0.0
      %1285 = vmatpush1.msra.mxu0 %v987
      %1286 = vmatprep.subr.mxu0 0.0
      %1287 = vmatpush1.msra.mxu0 %v990
      %1288 = vmatprep.subr.mxu0 0.0
      %1289 = vmatpush1.msra.mxu0 %v993
      %1290 = vmatprep.subr.mxu0 0.0
      %1291 = vmatpush1.msra.mxu0 %v996
      %1292 = vmatprep.subr.mxu0 0.0
      %1293 = vmatpush1.msra.mxu0 %v999
      %1294 = vmatprep.subr.mxu0 0.0
      %1295 = vmatpush1.msra.mxu0 %v1002
      %1296 = vmatprep.subr.mxu0 0.0
      %1297 = vmatpush1.msra.mxu0 %v1005
      %1298 = vmatprep.subr.mxu0 0.0
      %1299 = vmatpush1.msra.mxu0 %v1008
      %1300 = vmatprep.mubr.f32.mxu0 %v902
      %1301 = vmatmul.mubr.f32.gmra.mrb[0].mxu0 %v901
      %v1302 = vpop.f32.mrb[0].mxu0
      %v1303 = vadd.f32 %v1028, %v1302
      %v1304 = vpop.f32.mrb[0].mxu0
      %1305 = vmatprep.mubr.f32.mxu0 %v905
      %1306 = vmatmul.mubr.f32.gmra.mrb[0].mxu0 %v904
      %v1307 = vpop.f32.mrb[0].mxu0
      %v1308 = vadd.f32 %v1033, %v1307
      %v1309 = vpop.f32.mrb[0].mxu0
      %1310 = vmatprep.mubr.f32.mxu0 %v908
      %1311 = vmatmul.mubr.f32.gmra.mrb[0].mxu0 %v907
      %v1312 = vpop.f32.mrb[0].mxu0
      %v1313 = vadd.f32 %v1038, %v1312
      %v1314 = vpop.f32.mrb[0].mxu0
      %1315 = vmatprep.mubr.f32.mxu0 %v911
      %1316 = vmatmul.mubr.f32.gmra.mrb[0].mxu0 %v910
      %v1317 = vpop.f32.mrb[0].mxu0
      %v1318 = vadd.f32 %v1043, %v1317
      %v1319 = vpop.f32.mrb[0].mxu0
      %1320 = vdwg.mxu0
      %1321 = vmatprep.subr.mxu0 0.0
      %1322 = vmatpush1.msra.mxu0 %v1011
      %1323 = vmatprep.subr.mxu0 0.0
      %1324 = vmatpush1.msra.mxu0 %v1014
      %1325 = vmatprep.subr.mxu0 0.0
      %1326 = vmatpush1.msra.mxu0 %v1017
      %1327 = vmatprep.subr.mxu0 0.0
      %1328 = vmatpush1.msra.mxu0 %v1020
      %1329 = vmatprep.subr.mxu0 0.0
      %1330 = vmatpush1.msra.mxu0 0.0
      %1331 = vmatprep.subr.mxu0 0.0
      %1332 = vmatpush1.msra.mxu0 0.0
      %1333 = vmatprep.subr.mxu0 0.0
      %1334 = vmatpush1.msra.mxu0 0.0
      %1335 = vmatprep.subr.mxu0 0.0
      %1336 = vmatpush1.msra.mxu0 0.0
      %1337 = vmatprep.subr.mxu0 0.0
      %1338 = vmatpush1.msra.mxu0 0.0
      %1339 = vmatprep.subr.mxu0 0.0
      %1340 = vmatpush1.msra.mxu0 0.0
      %1341 = vmatprep.subr.mxu0 0.0
      %1342 = vmatpush1.msra.mxu0 0.0
      %1343 = vmatprep.subr.mxu0 0.0
      %1344 = vmatpush1.msra.mxu0 0.0
      %1345 = vmatprep.subr.mxu0 0.0
      %1346 = vmatpush1.msra.mxu0 0.0
      %1347 = vmatprep.subr.mxu0 0.0
      %1348 = vmatpush1.msra.mxu0 0.0
      %1349 = vmatprep.subr.mxu0 0.0
      %1350 = vmatpush1.msra.mxu0 0.0
      %1351 = vmatprep.subr.mxu0 0.0
      %1352 = vmatpush1.msra.mxu0 0.0
      %1353 = vmatprep.subr.mxu0 0.0
      %1354 = vmatpush1.msra.mxu0 0.0
      %1355 = vmatprep.subr.mxu0 0.0
      %1356 = vmatpush1.msra.mxu0 0.0
      %1357 = vmatprep.subr.mxu0 0.0
      %1358 = vmatpush1.msra.mxu0 0.0
      %1359 = vmatprep.subr.mxu0 0.0
      %1360 = vmatpush1.msra.mxu0 0.0
      %1361 = vmatprep.subr.mxu0 0.0
      %1362 = vmatpush1.msra.mxu0 0.0
      %1363 = vmatprep.subr.mxu0 0.0
      %1364 = vmatpush1.msra.mxu0 0.0
      %1365 = vmatprep.subr.mxu0 0.0
      %1366 = vmatpush1.msra.mxu0 0.0
      %1367 = vmatprep.subr.mxu0 0.0
      %1368 = vmatpush1.msra.mxu0 0.0
      %1369 = vmatprep.subr.mxu0 0.0
      %1370 = vmatpush1.msra.mxu0 0.0
      %1371 = vmatprep.subr.mxu0 0.0
      %1372 = vmatpush1.msra.mxu0 0.0
      %1373 = vmatprep.subr.mxu0 0.0
      %1374 = vmatpush1.msra.mxu0 0.0
      %1375 = vmatprep.subr.mxu0 0.0
      %1376 = vmatpush1.msra.mxu0 0.0
      %1377 = vmatprep.subr.mxu0 0.0
      %1378 = vmatpush1.msra.mxu0 0.0
      %1379 = vmatprep.subr.mxu0 0.0
      %1380 = vmatpush1.msra.mxu0 0.0
      %1381 = vmatprep.subr.mxu0 0.0
      %1382 = vmatpush1.msra.mxu0 0.0
      %1383 = vmatprep.subr.mxu0 0.0
      %1384 = vmatpush1.msra.mxu0 0.0
      %1385 = vmatprep.mubr.f32.mxu0 0.0
      %1386 = vmatmul.mubr.f32.gmra.mrb[0].mxu0 %v1047
      %v1387 = vpop.f32.mrb[0].mxu0
      %v1388 = vadd.f32 %v1303, %v1387
      %v1389 = vpop.f32.mrb[0].mxu0
      %1390 = vmatprep.mubr.f32.mxu0 0.0
      %1391 = vmatmul.mubr.f32.gmra.mrb[0].mxu0 %v1050
      %v1392 = vpop.f32.mrb[0].mxu0
      %v1393 = vadd.f32 %v1308, %v1392
      %v1394 = vpop.f32.mrb[0].mxu0
      %1395 = vmatprep.mubr.f32.mxu0 0.0
      %1396 = vmatmul.mubr.f32.gmra.mrb[0].mxu0 %v1053
      %v1397 = vpop.f32.mrb[0].mxu0
      %v1398 = vadd.f32 %v1313, %v1397
      %v1399 = vpop.f32.mrb[0].mxu0
      %1400 = vmatprep.mubr.f32.mxu0 0.0
      %1401 = vmatmul.mubr.f32.gmra.mrb[0].mxu0 %v1056
      %v1402 = vpop.f32.mrb[0].mxu0
      %v1403 = vadd.f32 %v1318, %v1402
      %v1404 = vpop.f32.mrb[0].mxu0
      %1405 = vdwg.mxu0
      %v1406 = vmax.f32 %v1214, 0.0
      %v1407 = vmax.f32 %v1216, 0.0
      %v1408 = vmax.f32 %v1388, 0.0
      %v1409 = vmax.f32 %v1220, 0.0
      %v1410 = vmax.f32 %v1222, 0.0
      %v1411 = vmax.f32 %v1393, 0.0
      %v1412 = vmax.f32 %v1226, 0.0
      %v1413 = vmax.f32 %v1228, 0.0
      %v1414 = vmax.f32 %v1398, 0.0
      %v1415 = vmax.f32 %v1232, 0.0
      %v1416 = vmax.f32 %v1234, 0.0
      %v1417 = vmax.f32 %v1403, 0.0
      %vm1418 = vcmp.lt.s32.totalorder %v175, 10
      %vm1419 = vcmp.lt.s32.totalorder %v176, 10
      %vm1420 = vcmp.lt.s32.totalorder %v177, 10
      %v1421 = vsel %vm1418, 1, 0
      %v1422 = vsel %vm1419, 1, 0
      %v1423 = vsel %vm1420, 1, 0
      %vm1424 = vcmp.eq.s32.totalorder %v1421, 1
      %vm1425 = vcmp.eq.s32.totalorder %v1422, 1
      %vm1426 = vcmp.eq.s32.totalorder %v1423, 1
      %v1427 = vsel %vm1424, %v1406, 0.0
      %v1428 = vsel %vm1425, %v1407, 0.0
      %v1429 = vsel %vm1426, %v1408, 0.0
      %v1430 = vsel %vm1424, %v1409, 0.0
      %v1431 = vsel %vm1425, %v1410, 0.0
      %v1432 = vsel %vm1426, %v1411, 0.0
      %v1433 = vsel %vm1424, %v1412, 0.0
      %v1434 = vsel %vm1425, %v1413, 0.0
      %v1435 = vsel %vm1426, %v1414, 0.0
      %v1436 = vsel %vm1424, %v1415, 0.0
      %v1437 = vsel %vm1425, %v1416, 0.0
      %v1438 = vsel %vm1426, %v1417, 0.0
      %1451 = vrot.lane.b32.xlu0 %v1427, 66
      %v1452 = vpop.permute.xlu0 %1451
      %1453 = vrot.lane.b32.xlu0 %v1428, 66
      %v1454 = vpop.permute.xlu0 %1453
      %1455 = vrot.lane.b32.xlu0 %v1429, 66
      %v1456 = vpop.permute.xlu0 %1455
      %1457 = vrot.lane.b32.xlu0 %v1430, 66
      %v1458 = vpop.permute.xlu0 %1457
      %1459 = vrot.lane.b32.xlu0 %v1431, 66
      %v1460 = vpop.permute.xlu0 %1459
      %1461 = vrot.lane.b32.xlu0 %v1432, 66
      %v1462 = vpop.permute.xlu0 %1461
      %1463 = vrot.lane.b32.xlu0 %v1433, 66
      %v1464 = vpop.permute.xlu0 %1463
      %1465 = vrot.lane.b32.xlu0 %v1434, 66
      %v1466 = vpop.permute.xlu0 %1465
      %1467 = vrot.lane.b32.xlu0 %v1435, 66
      %v1468 = vpop.permute.xlu0 %1467
      %1469 = vrot.lane.b32.xlu0 %v1436, 66
      %v1470 = vpop.permute.xlu0 %1469
      %1471 = vrot.lane.b32.xlu0 %v1437, 66
      %v1472 = vpop.permute.xlu0 %1471
      %1473 = vrot.lane.b32.xlu0 %v1438, 66
      %v1474 = vpop.permute.xlu0 %1473
      %v1475 = vsel %vm180, %v1452, %v1454
      %v1476 = vsel %vm180, %v1454, %v1456
      %v1477 = vsel %vm180, %v1458, %v1460
      %v1478 = vsel %vm180, %v1460, %v1462
      %v1479 = vsel %vm180, %v1464, %v1466
      %v1480 = vsel %vm180, %v1466, %v1468
      %v1481 = vsel %vm180, %v1470, %v1472
      %v1482 = vsel %vm180, %v1472, %v1474
      %vm1499 = vcmask 1048080
      %1500 = vst.msk [vmem:[#allocation3] sm:$0xff] %vm1499, %v1452
      %1501 = vst [vmem:[#allocation3 + $0x8] sm:$0xff] %v1475
      %1502 = vst [vmem:[#allocation3 + $0x10] sm:$0xff] %v1476
      %vm1503 = vcmask 15360
      %1504 = vst.msk [vmem:[#allocation3 + $0x18] sm:$0xff] %vm1503, %v1456
      %1505 = vst.msk [vmem:[#allocation3 + $0x30] sm:$0xff] %vm1499, %v1458
      %1506 = vst [vmem:[#allocation3 + $0x38] sm:$0xff] %v1477
      %1507 = vst [vmem:[#allocation3 + $0x40] sm:$0xff] %v1478
      %1508 = vst.msk [vmem:[#allocation3 + $0x48] sm:$0xff] %vm1503, %v1462
      %1509 = vst.msk [vmem:[#allocation3 + $0x60] sm:$0xff] %vm1499, %v1464
      %1510 = vst [vmem:[#allocation3 + $0x68] sm:$0xff] %v1479
      %1511 = vst [vmem:[#allocation3 + $0x70] sm:$0xff] %v1480
      %1512 = vst.msk [vmem:[#allocation3 + $0x78] sm:$0xff] %vm1503, %v1468
      %1513 = vst.msk [vmem:[#allocation3 + $0x90] sm:$0xff] %vm1499, %v1470
      %1514 = vst [vmem:[#allocation3 + $0x98] sm:$0xff] %v1481
      %1515 = vst [vmem:[#allocation3 + $0xa0] sm:$0xff] %v1482
      %1516 = vst.msk [vmem:[#allocation3 + $0xa8] sm:$0xff] %vm1503, %v1474
      %vm1517 = vcmask 539664
      %1518 = vst.msk [vmem:[#allocation3 + $0x18] sm:$0xff] %vm1517, 0.0
      %1519 = vst.msk [vmem:[#allocation3 + $0x48] sm:$0xff] %vm1517, 0.0
      %1520 = vst.msk [vmem:[#allocation3 + $0x78] sm:$0xff] %vm1517, 0.0
      %1521 = vst.msk [vmem:[#allocation3 + $0xa8] sm:$0xff] %vm1517, 0.0
      %v1522 = vld [vmem:[#allocation3] sm:$0xff]
      %v1523 = vld [vmem:[#allocation3 + $0x8] sm:$0xff]
      %v1524 = vld [vmem:[#allocation3 + $0x10] sm:$0xff]
      %v1525 = vld [vmem:[#allocation3 + $0x30] sm:$0xff]
      %v1526 = vld [vmem:[#allocation3 + $0x38] sm:$0xff]
      %v1527 = vld [vmem:[#allocation3 + $0x40] sm:$0xff]
      %v1528 = vld [vmem:[#allocation3 + $0x60] sm:$0xff]
      %v1529 = vld [vmem:[#allocation3 + $0x68] sm:$0xff]
      %v1530 = vld [vmem:[#allocation3 + $0x70] sm:$0xff]
      %v1531 = vld [vmem:[#allocation3 + $0x90] sm:$0xff]
      %v1532 = vld [vmem:[#allocation3 + $0x98] sm:$0xff]
      %v1533 = vld [vmem:[#allocation3 + $0xa0] sm:$0xff]
      %1534 = vst [vmem:[#allocation4] sm:$0xff] %v1522
      %1535 = vst [vmem:[#allocation4 + $0x8] sm:$0xff] %v1523
      %1536 = vst [vmem:[#allocation4 + $0x10] sm:$0xff] %v1524
      %1537 = vst [vmem:[#allocation4 + $0x28] sm:$0xff] %v1525
      %1538 = vst [vmem:[#allocation4 + $0x30] sm:$0xff] %v1526
      %1539 = vst [vmem:[#allocation4 + $0x38] sm:$0xff] %v1527
      %1540 = vst [vmem:[#allocation4 + $0x50] sm:$0xff] %v1528
      %1541 = vst [vmem:[#allocation4 + $0x58] sm:$0xff] %v1529
      %1542 = vst [vmem:[#allocation4 + $0x60] sm:$0xff] %v1530
      %1543 = vst [vmem:[#allocation4 + $0x78] sm:$0xff] %v1531
      %1544 = vst [vmem:[#allocation4 + $0x80] sm:$0xff] %v1532
      %1545 = vst [vmem:[#allocation4 + $0x88] sm:$0xff] %v1533
      %v1546 = vld [vmem:[#allocation3] sm:$0xff]
      %v1547 = vld [vmem:[#allocation3 + $0x8] sm:$0xff]
      %v1548 = vld [vmem:[#allocation3 + $0x10] sm:$0xff]
      %v1549 = vld [vmem:[#allocation3 + $0x18] sm:$0xff]
      %v1550 = vld [vmem:[#allocation3 + $0x30] sm:$0xff]
      %v1551 = vld [vmem:[#allocation3 + $0x38] sm:$0xff]
      %v1552 = vld [vmem:[#allocation3 + $0x40] sm:$0xff]
      %v1553 = vld [vmem:[#allocation3 + $0x48] sm:$0xff]
      %v1554 = vld [vmem:[#allocation3 + $0x60] sm:$0xff]
      %v1555 = vld [vmem:[#allocation3 + $0x68] sm:$0xff]
      %v1556 = vld [vmem:[#allocation3 + $0x70] sm:$0xff]
      %v1557 = vld [vmem:[#allocation3 + $0x78] sm:$0xff]
      %v1558 = vld [vmem:[#allocation3 + $0x90] sm:$0xff]
      %v1559 = vld [vmem:[#allocation3 + $0x98] sm:$0xff]
      %v1560 = vld [vmem:[#allocation3 + $0xa0] sm:$0xff]
      %v1561 = vld [vmem:[#allocation3 + $0xa8] sm:$0xff]
      %1578 = vrot.lane.b32.xlu0 %v1546, 127
      %v1579 = vpop.permute.xlu0 %1578
      %1580 = vrot.lane.b32.xlu0 %v1547, 127
      %v1581 = vpop.permute.xlu0 %1580
      %1582 = vrot.lane.b32.xlu0 %v1548, 127
      %v1583 = vpop.permute.xlu0 %1582
      %1584 = vrot.lane.b32.xlu0 %v1549, 127
      %v1585 = vpop.permute.xlu0 %1584
      %1586 = vrot.lane.b32.xlu0 %v1550, 127
      %v1587 = vpop.permute.xlu0 %1586
      %1588 = vrot.lane.b32.xlu0 %v1551, 127
      %v1589 = vpop.permute.xlu0 %1588
      %1590 = vrot.lane.b32.xlu0 %v1552, 127
      %v1591 = vpop.permute.xlu0 %1590
      %1592 = vrot.lane.b32.xlu0 %v1553, 127
      %v1593 = vpop.permute.xlu0 %1592
      %1594 = vrot.lane.b32.xlu0 %v1554, 127
      %v1595 = vpop.permute.xlu0 %1594
      %1596 = vrot.lane.b32.xlu0 %v1555, 127
      %v1597 = vpop.permute.xlu0 %1596
      %1598 = vrot.lane.b32.xlu0 %v1556, 127
      %v1599 = vpop.permute.xlu0 %1598
      %1600 = vrot.lane.b32.xlu0 %v1557, 127
      %v1601 = vpop.permute.xlu0 %1600
      %1602 = vrot.lane.b32.xlu0 %v1558, 127
      %v1603 = vpop.permute.xlu0 %1602
      %1604 = vrot.lane.b32.xlu0 %v1559, 127
      %v1605 = vpop.permute.xlu0 %1604
      %1606 = vrot.lane.b32.xlu0 %v1560, 127
      %v1607 = vpop.permute.xlu0 %1606
      %1608 = vrot.lane.b32.xlu0 %v1561, 127
      %v1609 = vpop.permute.xlu0 %1608
      %v1610 = vsel %vm262, %v1579, %v1581
      %v1611 = vsel %vm262, %v1581, %v1583
      %v1612 = vsel %vm262, %v1583, %v1585
      %v1613 = vsel %vm262, %v1587, %v1589
      %v1614 = vsel %vm262, %v1589, %v1591
      %v1615 = vsel %vm262, %v1591, %v1593
      %v1616 = vsel %vm262, %v1595, %v1597
      %v1617 = vsel %vm262, %v1597, %v1599
      %v1618 = vsel %vm262, %v1599, %v1601
      %v1619 = vsel %vm262, %v1603, %v1605
      %v1620 = vsel %vm262, %v1605, %v1607
      %v1621 = vsel %vm262, %v1607, %v1609
      %1634 = vst [vmem:[#allocation4 + $0xa0] sm:$0xff] %v1610
      %1635 = vst [vmem:[#allocation4 + $0xa8] sm:$0xff] %v1611
      %1636 = vst [vmem:[#allocation4 + $0xb0] sm:$0xff] %v1612
      %1637 = vst [vmem:[#allocation4 + $0xc8] sm:$0xff] %v1613
      %1638 = vst [vmem:[#allocation4 + $0xd0] sm:$0xff] %v1614
      %1639 = vst [vmem:[#allocation4 + $0xd8] sm:$0xff] %v1615
      %1640 = vst [vmem:[#allocation4 + $0xf0] sm:$0xff] %v1616
      %1641 = vst [vmem:[#allocation4 + $0xf8] sm:$0xff] %v1617
      %1642 = vst [vmem:[#allocation4 + $0x100] sm:$0xff] %v1618
      %1643 = vst [vmem:[#allocation4 + $0x118] sm:$0xff] %v1619
      %1644 = vst [vmem:[#allocation4 + $0x120] sm:$0xff] %v1620
      %1645 = vst [vmem:[#allocation4 + $0x128] sm:$0xff] %v1621
      %v1646 = vld [vmem:[#allocation3] sm:$0xff]
      %v1647 = vld [vmem:[#allocation3 + $0x8] sm:$0xff]
      %v1648 = vld [vmem:[#allocation3 + $0x10] sm:$0xff]
      %v1649 = vld [vmem:[#allocation3 + $0x18] sm:$0xff]
      %v1650 = vld [vmem:[#allocation3 + $0x30] sm:$0xff]
      %v1651 = vld [vmem:[#allocation3 + $0x38] sm:$0xff]
      %v1652 = vld [vmem:[#allocation3 + $0x40] sm:$0xff]
      %v1653 = vld [vmem:[#allocation3 + $0x48] sm:$0xff]
      %v1654 = vld [vmem:[#allocation3 + $0x60] sm:$0xff]
      %v1655 = vld [vmem:[#allocation3 + $0x68] sm:$0xff]
      %v1656 = vld [vmem:[#allocation3 + $0x70] sm:$0xff]
      %v1657 = vld [vmem:[#allocation3 + $0x78] sm:$0xff]
      %v1658 = vld [vmem:[#allocation3 + $0x90] sm:$0xff]
      %v1659 = vld [vmem:[#allocation3 + $0x98] sm:$0xff]
      %v1660 = vld [vmem:[#allocation3 + $0xa0] sm:$0xff]
      %v1661 = vld [vmem:[#allocation3 + $0xa8] sm:$0xff]
      %1678 = vrot.lane.b32.xlu0 %v1646, 126
      %v1679 = vpop.permute.xlu0 %1678
      %1680 = vrot.lane.b32.xlu0 %v1647, 126
      %v1681 = vpop.permute.xlu0 %1680
      %1682 = vrot.lane.b32.xlu0 %v1648, 126
      %v1683 = vpop.permute.xlu0 %1682
      %1684 = vrot.lane.b32.xlu0 %v1649, 126
      %v1685 = vpop.permute.xlu0 %1684
      %1686 = vrot.lane.b32.xlu0 %v1650, 126
      %v1687 = vpop.permute.xlu0 %1686
      %1688 = vrot.lane.b32.xlu0 %v1651, 126
      %v1689 = vpop.permute.xlu0 %1688
      %1690 = vrot.lane.b32.xlu0 %v1652, 126
      %v1691 = vpop.permute.xlu0 %1690
      %1692 = vrot.lane.b32.xlu0 %v1653, 126
      %v1693 = vpop.permute.xlu0 %1692
      %1694 = vrot.lane.b32.xlu0 %v1654, 126
      %v1695 = vpop.permute.xlu0 %1694
      %1696 = vrot.lane.b32.xlu0 %v1655, 126
      %v1697 = vpop.permute.xlu0 %1696
      %1698 = vrot.lane.b32.xlu0 %v1656, 126
      %v1699 = vpop.permute.xlu0 %1698
      %1700 = vrot.lane.b32.xlu0 %v1657, 126
      %v1701 = vpop.permute.xlu0 %1700
      %1702 = vrot.lane.b32.xlu0 %v1658, 126
      %v1703 = vpop.permute.xlu0 %1702
      %1704 = vrot.lane.b32.xlu0 %v1659, 126
      %v1705 = vpop.permute.xlu0 %1704
      %1706 = vrot.lane.b32.xlu0 %v1660, 126
      %v1707 = vpop.permute.xlu0 %1706
      %1708 = vrot.lane.b32.xlu0 %v1661, 126
      %v1709 = vpop.permute.xlu0 %1708
      %v1710 = vsel %vm343, %v1679, %v1681
      %v1711 = vsel %vm343, %v1681, %v1683
      %v1712 = vsel %vm343, %v1683, %v1685
      %v1713 = vsel %vm343, %v1687, %v1689
      %v1714 = vsel %vm343, %v1689, %v1691
      %v1715 = vsel %vm343, %v1691, %v1693
      %v1716 = vsel %vm343, %v1695, %v1697
      %v1717 = vsel %vm343, %v1697, %v1699
      %v1718 = vsel %vm343, %v1699, %v1701
      %v1719 = vsel %vm343, %v1703, %v1705
      %v1720 = vsel %vm343, %v1705, %v1707
      %v1721 = vsel %vm343, %v1707, %v1709
      %1734 = vst [vmem:[#allocation4 + $0x140] sm:$0xff] %v1710
      %1735 = vst [vmem:[#allocation4 + $0x148] sm:$0xff] %v1711
      %1736 = vst [vmem:[#allocation4 + $0x150] sm:$0xff] %v1712
      %1737 = vst [vmem:[#allocation4 + $0x168] sm:$0xff] %v1713
      %1738 = vst [vmem:[#allocation4 + $0x170] sm:$0xff] %v1714
      %1739 = vst [vmem:[#allocation4 + $0x178] sm:$0xff] %v1715
      %1740 = vst [vmem:[#allocation4 + $0x190] sm:$0xff] %v1716
      %1741 = vst [vmem:[#allocation4 + $0x198] sm:$0xff] %v1717
      %1742 = vst [vmem:[#allocation4 + $0x1a0] sm:$0xff] %v1718
      %1743 = vst [vmem:[#allocation4 + $0x1b8] sm:$0xff] %v1719
      %1744 = vst [vmem:[#allocation4 + $0x1c0] sm:$0xff] %v1720
      %1745 = vst [vmem:[#allocation4 + $0x1c8] sm:$0xff] %v1721
      %v1746 = vld [vmem:[#allocation3] sm:$0xff]
      %v1747 = vld [vmem:[#allocation3 + $0x8] sm:$0xff]
      %v1748 = vld [vmem:[#allocation3 + $0x10] sm:$0xff]
      %v1749 = vld [vmem:[#allocation3 + $0x18] sm:$0xff]
      %v1750 = vld [vmem:[#allocation3 + $0x30] sm:$0xff]
      %v1751 = vld [vmem:[#allocation3 + $0x38] sm:$0xff]
      %v1752 = vld [vmem:[#allocation3 + $0x40] sm:$0xff]
      %v1753 = vld [vmem:[#allocation3 + $0x48] sm:$0xff]
      %v1754 = vld [vmem:[#allocation3 + $0x60] sm:$0xff]
      %v1755 = vld [vmem:[#allocation3 + $0x68] sm:$0xff]
      %v1756 = vld [vmem:[#allocation3 + $0x70] sm:$0xff]
      %v1757 = vld [vmem:[#allocation3 + $0x78] sm:$0xff]
      %v1758 = vld [vmem:[#allocation3 + $0x90] sm:$0xff]
      %v1759 = vld [vmem:[#allocation3 + $0x98] sm:$0xff]
      %v1760 = vld [vmem:[#allocation3 + $0xa0] sm:$0xff]
      %v1761 = vld [vmem:[#allocation3 + $0xa8] sm:$0xff]
      %1778 = vrot.lane.b32.xlu0 %v1746, 96
      %v1779 = vpop.permute.xlu0 %1778
      %1780 = vrot.lane.b32.xlu0 %v1747, 96
      %v1781 = vpop.permute.xlu0 %1780
      %1782 = vrot.lane.b32.xlu0 %v1748, 96
      %v1783 = vpop.permute.xlu0 %1782
      %1784 = vrot.lane.b32.xlu0 %v1749, 96
      %v1785 = vpop.permute.xlu0 %1784
      %1786 = vrot.lane.b32.xlu0 %v1750, 96
      %v1787 = vpop.permute.xlu0 %1786
      %1788 = vrot.lane.b32.xlu0 %v1751, 96
      %v1789 = vpop.permute.xlu0 %1788
      %1790 = vrot.lane.b32.xlu0 %v1752, 96
      %v1791 = vpop.permute.xlu0 %1790
      %1792 = vrot.lane.b32.xlu0 %v1753, 96
      %v1793 = vpop.permute.xlu0 %1792
      %1794 = vrot.lane.b32.xlu0 %v1754, 96
      %v1795 = vpop.permute.xlu0 %1794
      %1796 = vrot.lane.b32.xlu0 %v1755, 96
      %v1797 = vpop.permute.xlu0 %1796
      %1798 = vrot.lane.b32.xlu0 %v1756, 96
      %v1799 = vpop.permute.xlu0 %1798
      %1800 = vrot.lane.b32.xlu0 %v1757, 96
      %v1801 = vpop.permute.xlu0 %1800
      %1802 = vrot.lane.b32.xlu0 %v1758, 96
      %v1803 = vpop.permute.xlu0 %1802
      %1804 = vrot.lane.b32.xlu0 %v1759, 96
      %v1805 = vpop.permute.xlu0 %1804
      %1806 = vrot.lane.b32.xlu0 %v1760, 96
      %v1807 = vpop.permute.xlu0 %1806
      %1808 = vrot.lane.b32.xlu0 %v1761, 96
      %v1809 = vpop.permute.xlu0 %1808
      %v1810 = vsel %vm424, %v1779, %v1781
      %v1811 = vsel %vm424, %v1781, %v1783
      %v1812 = vsel %vm424, %v1783, %v1785
      %v1813 = vsel %vm424, %v1787, %v1789
      %v1814 = vsel %vm424, %v1789, %v1791
      %v1815 = vsel %vm424, %v1791, %v1793
      %v1816 = vsel %vm424, %v1795, %v1797
      %v1817 = vsel %vm424, %v1797, %v1799
      %v1818 = vsel %vm424, %v1799, %v1801
      %v1819 = vsel %vm424, %v1803, %v1805
      %v1820 = vsel %vm424, %v1805, %v1807
      %v1821 = vsel %vm424, %v1807, %v1809
      %1834 = vst [vmem:[#allocation4 + $0x1e0] sm:$0xff] %v1810
      %1835 = vst [vmem:[#allocation4 + $0x1e8] sm:$0xff] %v1811
      %1836 = vst [vmem:[#allocation4 + $0x1f0] sm:$0xff] %v1812
      %1837 = vst [vmem:[#allocation4 + $0x208] sm:$0xff] %v1813
      %1838 = vst [vmem:[#allocation4 + $0x210] sm:$0xff] %v1814
      %1839 = vst [vmem:[#allocation4 + $0x218] sm:$0xff] %v1815
      %1840 = vst [vmem:[#allocation4 + $0x230] sm:$0xff] %v1816
      %1841 = vst [vmem:[#allocation4 + $0x238] sm:$0xff] %v1817
      %1842 = vst [vmem:[#allocation4 + $0x240] sm:$0xff] %v1818
      %1843 = vst [vmem:[#allocation4 + $0x258] sm:$0xff] %v1819
      %1844 = vst [vmem:[#allocation4 + $0x260] sm:$0xff] %v1820
      %1845 = vst [vmem:[#allocation4 + $0x268] sm:$0xff] %v1821
      %v1846 = vld [vmem:[#allocation3] sm:$0xff]
      %v1847 = vld [vmem:[#allocation3 + $0x8] sm:$0xff]
      %v1848 = vld [vmem:[#allocation3 + $0x10] sm:$0xff]
      %v1849 = vld [vmem:[#allocation3 + $0x18] sm:$0xff]
      %v1850 = vld [vmem:[#allocation3 + $0x30] sm:$0xff]
      %v1851 = vld [vmem:[#allocation3 + $0x38] sm:$0xff]
      %v1852 = vld [vmem:[#allocation3 + $0x40] sm:$0xff]
      %v1853 = vld [vmem:[#allocation3 + $0x48] sm:$0xff]
      %v1854 = vld [vmem:[#allocation3 + $0x60] sm:$0xff]
      %v1855 = vld [vmem:[#allocation3 + $0x68] sm:$0xff]
      %v1856 = vld [vmem:[#allocation3 + $0x70] sm:$0xff]
      %v1857 = vld [vmem:[#allocation3 + $0x78] sm:$0xff]
      %v1858 = vld [vmem:[#allocation3 + $0x90] sm:$0xff]
      %v1859 = vld [vmem:[#allocation3 + $0x98] sm:$0xff]
      %v1860 = vld [vmem:[#allocation3 + $0xa0] sm:$0xff]
      %v1861 = vld [vmem:[#allocation3 + $0xa8] sm:$0xff]
      %1878 = vrot.lane.b32.xlu0 %v1846, 95
      %v1879 = vpop.permute.xlu0 %1878
      %1880 = vrot.lane.b32.xlu0 %v1847, 95
      %v1881 = vpop.permute.xlu0 %1880
      %1882 = vrot.lane.b32.xlu0 %v1848, 95
      %v1883 = vpop.permute.xlu0 %1882
      %1884 = vrot.lane.b32.xlu0 %v1849, 95
      %v1885 = vpop.permute.xlu0 %1884
      %1886 = vrot.lane.b32.xlu0 %v1850, 95
      %v1887 = vpop.permute.xlu0 %1886
      %1888 = vrot.lane.b32.xlu0 %v1851, 95
      %v1889 = vpop.permute.xlu0 %1888
      %1890 = vrot.lane.b32.xlu0 %v1852, 95
      %v1891 = vpop.permute.xlu0 %1890
      %1892 = vrot.lane.b32.xlu0 %v1853, 95
      %v1893 = vpop.permute.xlu0 %1892
      %1894 = vrot.lane.b32.xlu0 %v1854, 95
      %v1895 = vpop.permute.xlu0 %1894
      %1896 = vrot.lane.b32.xlu0 %v1855, 95
      %v1897 = vpop.permute.xlu0 %1896
      %1898 = vrot.lane.b32.xlu0 %v1856, 95
      %v1899 = vpop.permute.xlu0 %1898
      %1900 = vrot.lane.b32.xlu0 %v1857, 95
      %v1901 = vpop.permute.xlu0 %1900
      %1902 = vrot.lane.b32.xlu0 %v1858, 95
      %v1903 = vpop.permute.xlu0 %1902
      %1904 = vrot.lane.b32.xlu0 %v1859, 95
      %v1905 = vpop.permute.xlu0 %1904
      %1906 = vrot.lane.b32.xlu0 %v1860, 95
      %v1907 = vpop.permute.xlu0 %1906
      %1908 = vrot.lane.b32.xlu0 %v1861, 95
      %v1909 = vpop.permute.xlu0 %1908
      %v1910 = vsel %vm505, %v1879, %v1881
      %v1911 = vsel %vm505, %v1881, %v1883
      %v1912 = vsel %vm505, %v1883, %v1885
      %v1913 = vsel %vm505, %v1887, %v1889
      %v1914 = vsel %vm505, %v1889, %v1891
      %v1915 = vsel %vm505, %v1891, %v1893
      %v1916 = vsel %vm505, %v1895, %v1897
      %v1917 = vsel %vm505, %v1897, %v1899
      %v1918 = vsel %vm505, %v1899, %v1901
      %v1919 = vsel %vm505, %v1903, %v1905
      %v1920 = vsel %vm505, %v1905, %v1907
      %v1921 = vsel %vm505, %v1907, %v1909
      %1934 = vst [vmem:[#allocation4 + $0x280] sm:$0xff] %v1910
      %1935 = vst [vmem:[#allocation4 + $0x288] sm:$0xff] %v1911
      %1936 = vst [vmem:[#allocation4 + $0x290] sm:$0xff] %v1912
      %1937 = vst [vmem:[#allocation4 + $0x2a8] sm:$0xff] %v1913
      %1938 = vst [vmem:[#allocation4 + $0x2b0] sm:$0xff] %v1914
      %1939 = vst [vmem:[#allocation4 + $0x2b8] sm:$0xff] %v1915
      %1940 = vst [vmem:[#allocation4 + $0x2d0] sm:$0xff] %v1916
      %1941 = vst [vmem:[#allocation4 + $0x2d8] sm:$0xff] %v1917
      %1942 = vst [vmem:[#allocation4 + $0x2e0] sm:$0xff] %v1918
      %1943 = vst [vmem:[#allocation4 + $0x2f8] sm:$0xff] %v1919
      %1944 = vst [vmem:[#allocation4 + $0x300] sm:$0xff] %v1920
      %1945 = vst [vmem:[#allocation4 + $0x308] sm:$0xff] %v1921
      %v1946 = vld [vmem:[#allocation3] sm:$0xff]
      %v1947 = vld [vmem:[#allocation3 + $0x8] sm:$0xff]
      %v1948 = vld [vmem:[#allocation3 + $0x10] sm:$0xff]
      %v1949 = vld [vmem:[#allocation3 + $0x18] sm:$0xff]
      %v1950 = vld [vmem:[#allocation3 + $0x30] sm:$0xff]
      %v1951 = vld [vmem:[#allocation3 + $0x38] sm:$0xff]
      %v1952 = vld [vmem:[#allocation3 + $0x40] sm:$0xff]
      %v1953 = vld [vmem:[#allocation3 + $0x48] sm:$0xff]
      %v1954 = vld [vmem:[#allocation3 + $0x60] sm:$0xff]
      %v1955 = vld [vmem:[#allocation3 + $0x68] sm:$0xff]
      %v1956 = vld [vmem:[#allocation3 + $0x70] sm:$0xff]
      %v1957 = vld [vmem:[#allocation3 + $0x78] sm:$0xff]
      %v1958 = vld [vmem:[#allocation3 + $0x90] sm:$0xff]
      %v1959 = vld [vmem:[#allocation3 + $0x98] sm:$0xff]
      %v1960 = vld [vmem:[#allocation3 + $0xa0] sm:$0xff]
      %v1961 = vld [vmem:[#allocation3 + $0xa8] sm:$0xff]
      %1978 = vrot.lane.b32.xlu0 %v1946, 94
      %v1979 = vpop.permute.xlu0 %1978
      %1980 = vrot.lane.b32.xlu0 %v1947, 94
      %v1981 = vpop.permute.xlu0 %1980
      %1982 = vrot.lane.b32.xlu0 %v1948, 94
      %v1983 = vpop.permute.xlu0 %1982
      %1984 = vrot.lane.b32.xlu0 %v1949, 94
      %v1985 = vpop.permute.xlu0 %1984
      %1986 = vrot.lane.b32.xlu0 %v1950, 94
      %v1987 = vpop.permute.xlu0 %1986
      %1988 = vrot.lane.b32.xlu0 %v1951, 94
      %v1989 = vpop.permute.xlu0 %1988
      %1990 = vrot.lane.b32.xlu0 %v1952, 94
      %v1991 = vpop.permute.xlu0 %1990
      %1992 = vrot.lane.b32.xlu0 %v1953, 94
      %v1993 = vpop.permute.xlu0 %1992
      %1994 = vrot.lane.b32.xlu0 %v1954, 94
      %v1995 = vpop.permute.xlu0 %1994
      %1996 = vrot.lane.b32.xlu0 %v1955, 94
      %v1997 = vpop.permute.xlu0 %1996
      %1998 = vrot.lane.b32.xlu0 %v1956, 94
      %v1999 = vpop.permute.xlu0 %1998
      %2000 = vrot.lane.b32.xlu0 %v1957, 94
      %v2001 = vpop.permute.xlu0 %2000
      %2002 = vrot.lane.b32.xlu0 %v1958, 94
      %v2003 = vpop.permute.xlu0 %2002
      %2004 = vrot.lane.b32.xlu0 %v1959, 94
      %v2005 = vpop.permute.xlu0 %2004
      %2006 = vrot.lane.b32.xlu0 %v1960, 94
      %v2007 = vpop.permute.xlu0 %2006
      %2008 = vrot.lane.b32.xlu0 %v1961, 94
      %v2009 = vpop.permute.xlu0 %2008
      %v2010 = vsel %vm586, %v1979, %v1981
      %v2011 = vsel %vm586, %v1981, %v1983
      %v2012 = vsel %vm586, %v1983, %v1985
      %v2013 = vsel %vm586, %v1987, %v1989
      %v2014 = vsel %vm586, %v1989, %v1991
      %v2015 = vsel %vm586, %v1991, %v1993
      %v2016 = vsel %vm586, %v1995, %v1997
      %v2017 = vsel %vm586, %v1997, %v1999
      %v2018 = vsel %vm586, %v1999, %v2001
      %v2019 = vsel %vm586, %v2003, %v2005
      %v2020 = vsel %vm586, %v2005, %v2007
      %v2021 = vsel %vm586, %v2007, %v2009
      %2034 = vst [vmem:[#allocation4 + $0x320] sm:$0xff] %v2010
      %2035 = vst [vmem:[#allocation4 + $0x328] sm:$0xff] %v2011
      %2036 = vst [vmem:[#allocation4 + $0x330] sm:$0xff] %v2012
      %2037 = vst [vmem:[#allocation4 + $0x348] sm:$0xff] %v2013
      %2038 = vst [vmem:[#allocation4 + $0x350] sm:$0xff] %v2014
      %2039 = vst [vmem:[#allocation4 + $0x358] sm:$0xff] %v2015
      %2040 = vst [vmem:[#allocation4 + $0x370] sm:$0xff] %v2016
      %2041 = vst [vmem:[#allocation4 + $0x378] sm:$0xff] %v2017
      %2042 = vst [vmem:[#allocation4 + $0x380] sm:$0xff] %v2018
      %2043 = vst [vmem:[#allocation4 + $0x398] sm:$0xff] %v2019
      %2044 = vst [vmem:[#allocation4 + $0x3a0] sm:$0xff] %v2020
      %2045 = vst [vmem:[#allocation4 + $0x3a8] sm:$0xff] %v2021
      %v2046 = vld [vmem:[#allocation3] sm:$0xff]
      %v2047 = vld [vmem:[#allocation3 + $0x8] sm:$0xff]
      %v2048 = vld [vmem:[#allocation3 + $0x10] sm:$0xff]
      %v2049 = vld [vmem:[#allocation3 + $0x18] sm:$0xff]
      %v2050 = vld [vmem:[#allocation3 + $0x30] sm:$0xff]
      %v2051 = vld [vmem:[#allocation3 + $0x38] sm:$0xff]
      %v2052 = vld [vmem:[#allocation3 + $0x40] sm:$0xff]
      %v2053 = vld [vmem:[#allocation3 + $0x48] sm:$0xff]
      %v2054 = vld [vmem:[#allocation3 + $0x60] sm:$0xff]
      %v2055 = vld [vmem:[#allocation3 + $0x68] sm:$0xff]
      %v2056 = vld [vmem:[#allocation3 + $0x70] sm:$0xff]
      %v2057 = vld [vmem:[#allocation3 + $0x78] sm:$0xff]
      %v2058 = vld [vmem:[#allocation3 + $0x90] sm:$0xff]
      %v2059 = vld [vmem:[#allocation3 + $0x98] sm:$0xff]
      %v2060 = vld [vmem:[#allocation3 + $0xa0] sm:$0xff]
      %v2061 = vld [vmem:[#allocation3 + $0xa8] sm:$0xff]
      %2078 = vrot.lane.b32.xlu0 %v2046, 64
      %v2079 = vpop.permute.xlu0 %2078
      %2080 = vrot.lane.b32.xlu0 %v2047, 64
      %v2081 = vpop.permute.xlu0 %2080
      %2082 = vrot.lane.b32.xlu0 %v2048, 64
      %v2083 = vpop.permute.xlu0 %2082
      %2084 = vrot.lane.b32.xlu0 %v2049, 64
      %v2085 = vpop.permute.xlu0 %2084
      %2086 = vrot.lane.b32.xlu0 %v2050, 64
      %v2087 = vpop.permute.xlu0 %2086
      %2088 = vrot.lane.b32.xlu0 %v2051, 64
      %v2089 = vpop.permute.xlu0 %2088
      %2090 = vrot.lane.b32.xlu0 %v2052, 64
      %v2091 = vpop.permute.xlu0 %2090
      %2092 = vrot.lane.b32.xlu0 %v2053, 64
      %v2093 = vpop.permute.xlu0 %2092
      %2094 = vrot.lane.b32.xlu0 %v2054, 64
      %v2095 = vpop.permute.xlu0 %2094
      %2096 = vrot.lane.b32.xlu0 %v2055, 64
      %v2097 = vpop.permute.xlu0 %2096
      %2098 = vrot.lane.b32.xlu0 %v2056, 64
      %v2099 = vpop.permute.xlu0 %2098
      %2100 = vrot.lane.b32.xlu0 %v2057, 64
      %v2101 = vpop.permute.xlu0 %2100
      %2102 = vrot.lane.b32.xlu0 %v2058, 64
      %v2103 = vpop.permute.xlu0 %2102
      %2104 = vrot.lane.b32.xlu0 %v2059, 64
      %v2105 = vpop.permute.xlu0 %2104
      %2106 = vrot.lane.b32.xlu0 %v2060, 64
      %v2107 = vpop.permute.xlu0 %2106
      %2108 = vrot.lane.b32.xlu0 %v2061, 64
      %v2109 = vpop.permute.xlu0 %2108
      %v2110 = vsel %vm203, %v2079, %v2081
      %v2111 = vsel %vm203, %v2081, %v2083
      %v2112 = vsel %vm203, %v2083, %v2085
      %v2113 = vsel %vm203, %v2087, %v2089
      %v2114 = vsel %vm203, %v2089, %v2091
      %v2115 = vsel %vm203, %v2091, %v2093
      %v2116 = vsel %vm203, %v2095, %v2097
      %v2117 = vsel %vm203, %v2097, %v2099
      %v2118 = vsel %vm203, %v2099, %v2101
      %v2119 = vsel %vm203, %v2103, %v2105
      %v2120 = vsel %vm203, %v2105, %v2107
      %v2121 = vsel %vm203, %v2107, %v2109
      %2134 = vst [vmem:[#allocation4 + $0x3c0] sm:$0xff] %v2110
      %2135 = vst [vmem:[#allocation4 + $0x3c8] sm:$0xff] %v2111
      %2136 = vst [vmem:[#allocation4 + $0x3d0] sm:$0xff] %v2112
      %2137 = vst [vmem:[#allocation4 + $0x3e8] sm:$0xff] %v2113
      %2138 = vst [vmem:[#allocation4 + $0x3f0] sm:$0xff] %v2114
      %2139 = vst [vmem:[#allocation4 + $0x3f8] sm:$0xff] %v2115
      %2140 = vst [vmem:[#allocation4 + $0x410] sm:$0xff] %v2116
      %2141 = vst [vmem:[#allocation4 + $0x418] sm:$0xff] %v2117
      %2142 = vst [vmem:[#allocation4 + $0x420] sm:$0xff] %v2118
      %2143 = vst [vmem:[#allocation4 + $0x438] sm:$0xff] %v2119
      %2144 = vst [vmem:[#allocation4 + $0x440] sm:$0xff] %v2120
      %2145 = vst [vmem:[#allocation4 + $0x448] sm:$0xff] %v2121
      %v2146 = vld [vmem:[#allocation3] sm:$0xff]
      %v2147 = vld [vmem:[#allocation3 + $0x8] sm:$0xff]
      %v2148 = vld [vmem:[#allocation3 + $0x10] sm:$0xff]
      %v2149 = vld [vmem:[#allocation3 + $0x18] sm:$0xff]
      %v2150 = vld [vmem:[#allocation3 + $0x30] sm:$0xff]
      %v2151 = vld [vmem:[#allocation3 + $0x38] sm:$0xff]
      %v2152 = vld [vmem:[#allocation3 + $0x40] sm:$0xff]
      %v2153 = vld [vmem:[#allocation3 + $0x48] sm:$0xff]
      %v2154 = vld [vmem:[#allocation3 + $0x60] sm:$0xff]
      %v2155 = vld [vmem:[#allocation3 + $0x68] sm:$0xff]
      %v2156 = vld [vmem:[#allocation3 + $0x70] sm:$0xff]
      %v2157 = vld [vmem:[#allocation3 + $0x78] sm:$0xff]
      %v2158 = vld [vmem:[#allocation3 + $0x90] sm:$0xff]
      %v2159 = vld [vmem:[#allocation3 + $0x98] sm:$0xff]
      %v2160 = vld [vmem:[#allocation3 + $0xa0] sm:$0xff]
      %v2161 = vld [vmem:[#allocation3 + $0xa8] sm:$0xff]
      %2178 = vrot.lane.b32.xlu0 %v2146, 63
      %v2179 = vpop.permute.xlu0 %2178
      %2180 = vrot.lane.b32.xlu0 %v2147, 63
      %v2181 = vpop.permute.xlu0 %2180
      %2182 = vrot.lane.b32.xlu0 %v2148, 63
      %v2183 = vpop.permute.xlu0 %2182
      %2184 = vrot.lane.b32.xlu0 %v2149, 63
      %v2185 = vpop.permute.xlu0 %2184
      %2186 = vrot.lane.b32.xlu0 %v2150, 63
      %v2187 = vpop.permute.xlu0 %2186
      %2188 = vrot.lane.b32.xlu0 %v2151, 63
      %v2189 = vpop.permute.xlu0 %2188
      %2190 = vrot.lane.b32.xlu0 %v2152, 63
      %v2191 = vpop.permute.xlu0 %2190
      %2192 = vrot.lane.b32.xlu0 %v2153, 63
      %v2193 = vpop.permute.xlu0 %2192
      %2194 = vrot.lane.b32.xlu0 %v2154, 63
      %v2195 = vpop.permute.xlu0 %2194
      %2196 = vrot.lane.b32.xlu0 %v2155, 63
      %v2197 = vpop.permute.xlu0 %2196
      %2198 = vrot.lane.b32.xlu0 %v2156, 63
      %v2199 = vpop.permute.xlu0 %2198
      %2200 = vrot.lane.b32.xlu0 %v2157, 63
      %v2201 = vpop.permute.xlu0 %2200
      %2202 = vrot.lane.b32.xlu0 %v2158, 63
      %v2203 = vpop.permute.xlu0 %2202
      %2204 = vrot.lane.b32.xlu0 %v2159, 63
      %v2205 = vpop.permute.xlu0 %2204
      %2206 = vrot.lane.b32.xlu0 %v2160, 63
      %v2207 = vpop.permute.xlu0 %2206
      %2208 = vrot.lane.b32.xlu0 %v2161, 63
      %v2209 = vpop.permute.xlu0 %2208
      %v2210 = vsel %vm763, %v2179, %v2181
      %v2211 = vsel %vm763, %v2181, %v2183
      %v2212 = vsel %vm763, %v2183, %v2185
      %v2213 = vsel %vm763, %v2187, %v2189
      %v2214 = vsel %vm763, %v2189, %v2191
      %v2215 = vsel %vm763, %v2191, %v2193
      %v2216 = vsel %vm763, %v2195, %v2197
      %v2217 = vsel %vm763, %v2197, %v2199
      %v2218 = vsel %vm763, %v2199, %v2201
      %v2219 = vsel %vm763, %v2203, %v2205
      %v2220 = vsel %vm763, %v2205, %v2207
      %v2221 = vsel %vm763, %v2207, %v2209
      %2234 = vst [vmem:[#allocation4 + $0x460] sm:$0xff] %v2210
      %2235 = vst [vmem:[#allocation4 + $0x468] sm:$0xff] %v2211
      %2236 = vst [vmem:[#allocation4 + $0x470] sm:$0xff] %v2212
      %2237 = vst [vmem:[#allocation4 + $0x488] sm:$0xff] %v2213
      %2238 = vst [vmem:[#allocation4 + $0x490] sm:$0xff] %v2214
      %2239 = vst [vmem:[#allocation4 + $0x498] sm:$0xff] %v2215
      %2240 = vst [vmem:[#allocation4 + $0x4b0] sm:$0xff] %v2216
      %2241 = vst [vmem:[#allocation4 + $0x4b8] sm:$0xff] %v2217
      %2242 = vst [vmem:[#allocation4 + $0x4c0] sm:$0xff] %v2218
      %2243 = vst [vmem:[#allocation4 + $0x4d8] sm:$0xff] %v2219
      %2244 = vst [vmem:[#allocation4 + $0x4e0] sm:$0xff] %v2220
      %2245 = vst [vmem:[#allocation4 + $0x4e8] sm:$0xff] %v2221
      %v2246 = vld [vmem:[#allocation3] sm:$0xff]
      %v2247 = vld [vmem:[#allocation3 + $0x8] sm:$0xff]
      %v2248 = vld [vmem:[#allocation3 + $0x10] sm:$0xff]
      %v2249 = vld [vmem:[#allocation3 + $0x18] sm:$0xff]
      %v2250 = vld [vmem:[#allocation3 + $0x30] sm:$0xff]
      %v2251 = vld [vmem:[#allocation3 + $0x38] sm:$0xff]
      %v2252 = vld [vmem:[#allocation3 + $0x40] sm:$0xff]
      %v2253 = vld [vmem:[#allocation3 + $0x48] sm:$0xff]
      %v2254 = vld [vmem:[#allocation3 + $0x60] sm:$0xff]
      %v2255 = vld [vmem:[#allocation3 + $0x68] sm:$0xff]
      %v2256 = vld [vmem:[#allocation3 + $0x70] sm:$0xff]
      %v2257 = vld [vmem:[#allocation3 + $0x78] sm:$0xff]
      %v2258 = vld [vmem:[#allocation3 + $0x90] sm:$0xff]
      %v2259 = vld [vmem:[#allocation3 + $0x98] sm:$0xff]
      %v2260 = vld [vmem:[#allocation3 + $0xa0] sm:$0xff]
      %v2261 = vld [vmem:[#allocation3 + $0xa8] sm:$0xff]
      %2278 = vrot.lane.b32.xlu0 %v2246, 62
      %v2279 = vpop.permute.xlu0 %2278
      %2280 = vrot.lane.b32.xlu0 %v2247, 62
      %v2281 = vpop.permute.xlu0 %2280
      %2282 = vrot.lane.b32.xlu0 %v2248, 62
      %v2283 = vpop.permute.xlu0 %2282
      %2284 = vrot.lane.b32.xlu0 %v2249, 62
      %v2285 = vpop.permute.xlu0 %2284
      %2286 = vrot.lane.b32.xlu0 %v2250, 62
      %v2287 = vpop.permute.xlu0 %2286
      %2288 = vrot.lane.b32.xlu0 %v2251, 62
      %v2289 = vpop.permute.xlu0 %2288
      %2290 = vrot.lane.b32.xlu0 %v2252, 62
      %v2291 = vpop.permute.xlu0 %2290
      %2292 = vrot.lane.b32.xlu0 %v2253, 62
      %v2293 = vpop.permute.xlu0 %2292
      %2294 = vrot.lane.b32.xlu0 %v2254, 62
      %v2295 = vpop.permute.xlu0 %2294
      %2296 = vrot.lane.b32.xlu0 %v2255, 62
      %v2297 = vpop.permute.xlu0 %2296
      %2298 = vrot.lane.b32.xlu0 %v2256, 62
      %v2299 = vpop.permute.xlu0 %2298
      %2300 = vrot.lane.b32.xlu0 %v2257, 62
      %v2301 = vpop.permute.xlu0 %2300
      %2302 = vrot.lane.b32.xlu0 %v2258, 62
      %v2303 = vpop.permute.xlu0 %2302
      %2304 = vrot.lane.b32.xlu0 %v2259, 62
      %v2305 = vpop.permute.xlu0 %2304
      %2306 = vrot.lane.b32.xlu0 %v2260, 62
      %v2307 = vpop.permute.xlu0 %2306
      %2308 = vrot.lane.b32.xlu0 %v2261, 62
      %v2309 = vpop.permute.xlu0 %2308
      %v2310 = vsel %vm864, %v2279, %v2281
      %v2311 = vsel %vm864, %v2281, %v2283
      %v2312 = vsel %vm864, %v2283, %v2285
      %v2313 = vsel %vm864, %v2287, %v2289
      %v2314 = vsel %vm864, %v2289, %v2291
      %v2315 = vsel %vm864, %v2291, %v2293
      %v2316 = vsel %vm864, %v2295, %v2297
      %v2317 = vsel %vm864, %v2297, %v2299
      %v2318 = vsel %vm864, %v2299, %v2301
      %v2319 = vsel %vm864, %v2303, %v2305
      %v2320 = vsel %vm864, %v2305, %v2307
      %v2321 = vsel %vm864, %v2307, %v2309
      %2334 = vst [vmem:[#allocation4 + $0x500] sm:$0xff] %v2310
      %2335 = vst [vmem:[#allocation4 + $0x508] sm:$0xff] %v2311
      %2336 = vst [vmem:[#allocation4 + $0x510] sm:$0xff] %v2312
      %2337 = vst [vmem:[#allocation4 + $0x528] sm:$0xff] %v2313
      %2338 = vst [vmem:[#allocation4 + $0x530] sm:$0xff] %v2314
      %2339 = vst [vmem:[#allocation4 + $0x538] sm:$0xff] %v2315
      %2340 = vst [vmem:[#allocation4 + $0x550] sm:$0xff] %v2316
      %2341 = vst [vmem:[#allocation4 + $0x558] sm:$0xff] %v2317
      %2342 = vst [vmem:[#allocation4 + $0x560] sm:$0xff] %v2318
      %2343 = vst [vmem:[#allocation4 + $0x578] sm:$0xff] %v2319
      %2344 = vst [vmem:[#allocation4 + $0x580] sm:$0xff] %v2320
      %2345 = vst [vmem:[#allocation4 + $0x588] sm:$0xff] %v2321
      %s2346 = scalar_lea.vmem %s1, 96
      %v2347 = vld [vmem:[%s2346] sm:$0xff]
      %v2348 = vld [vmem:[%s2346 + $0x8] sm:$0xff]
      %v2349 = vld [vmem:[%s2346 + $0x10] sm:$0xff]
      %v2350 = vld [vmem:[%s2346 + $0x18] sm:$0xff]
      %v2351 = vld [vmem:[%s2346 + $0x20] sm:$0xff]
      %v2352 = vld [vmem:[%s2346 + $0x28] sm:$0xff]
      %v2353 = vld [vmem:[%s2346 + $0x30] sm:$0xff]
      %v2354 = vld [vmem:[%s2346 + $0x38] sm:$0xff]
      %v2355 = vld [vmem:[%s2346 + $0x40] sm:$0xff]
      %v2356 = vld [vmem:[%s2346 + $0x48] sm:$0xff]
      %v2357 = vld [vmem:[%s2346 + $0x50] sm:$0xff]
      %v2358 = vld [vmem:[%s2346 + $0x58] sm:$0xff]
      %v2359 = vld [vmem:[#allocation4] sm:$0xff]
      %v2360 = vld [vmem:[#allocation4 + $0x8] sm:$0xff]
      %v2361 = vld [vmem:[#allocation4 + $0x10] sm:$0xff]
      %v2362 = vld [vmem:[#allocation4 + $0x28] sm:$0xff]
      %v2363 = vld [vmem:[#allocation4 + $0x30] sm:$0xff]
      %v2364 = vld [vmem:[#allocation4 + $0x38] sm:$0xff]
      %v2365 = vld [vmem:[#allocation4 + $0x50] sm:$0xff]
      %v2366 = vld [vmem:[#allocation4 + $0x58] sm:$0xff]
      %v2367 = vld [vmem:[#allocation4 + $0x60] sm:$0xff]
      %v2368 = vld [vmem:[#allocation4 + $0x78] sm:$0xff]
      %v2369 = vld [vmem:[#allocation4 + $0x80] sm:$0xff]
      %v2370 = vld [vmem:[#allocation4 + $0x88] sm:$0xff]
      %v2371 = vld [vmem:[#allocation4 + $0xa0] sm:$0xff]
      %v2372 = vld [vmem:[#allocation4 + $0xa8] sm:$0xff]
      %v2373 = vld [vmem:[#allocation4 + $0xb0] sm:$0xff]
      %v2374 = vld [vmem:[#allocation4 + $0xc8] sm:$0xff]
      %v2375 = vld [vmem:[#allocation4 + $0xd0] sm:$0xff]
      %v2376 = vld [vmem:[#allocation4 + $0xd8] sm:$0xff]
      %v2377 = vld [vmem:[#allocation4 + $0xf0] sm:$0xff]
      %v2378 = vld [vmem:[#allocation4 + $0xf8] sm:$0xff]
      %v2379 = vld [vmem:[#allocation4 + $0x100] sm:$0xff]
      %v2380 = vld [vmem:[#allocation4 + $0x118] sm:$0xff]
      %v2381 = vld [vmem:[#allocation4 + $0x120] sm:$0xff]
      %v2382 = vld [vmem:[#allocation4 + $0x128] sm:$0xff]
      %v2383 = vld [vmem:[#allocation4 + $0x140] sm:$0xff]
      %v2384 = vld [vmem:[#allocation4 + $0x148] sm:$0xff]
      %v2385 = vld [vmem:[#allocation4 + $0x150] sm:$0xff]
      %v2386 = vld [vmem:[#allocation4 + $0x168] sm:$0xff]
      %v2387 = vld [vmem:[#allocation4 + $0x170] sm:$0xff]
      %v2388 = vld [vmem:[#allocation4 + $0x178] sm:$0xff]
      %v2389 = vld [vmem:[#allocation4 + $0x190] sm:$0xff]
      %v2390 = vld [vmem:[#allocation4 + $0x198] sm:$0xff]
      %v2391 = vld [vmem:[#allocation4 + $0x1a0] sm:$0xff]
      %v2392 = vld [vmem:[#allocation4 + $0x1b8] sm:$0xff]
      %v2393 = vld [vmem:[#allocation4 + $0x1c0] sm:$0xff]
      %v2394 = vld [vmem:[#allocation4 + $0x1c8] sm:$0xff]
      %v2395 = vld [vmem:[#allocation4 + $0x1e0] sm:$0xff]
      %v2396 = vld [vmem:[#allocation4 + $0x1e8] sm:$0xff]
      %v2397 = vld [vmem:[#allocation4 + $0x1f0] sm:$0xff]
      %v2398 = vld [vmem:[#allocation4 + $0x208] sm:$0xff]
      %v2399 = vld [vmem:[#allocation4 + $0x210] sm:$0xff]
      %v2400 = vld [vmem:[#allocation4 + $0x218] sm:$0xff]
      %v2401 = vld [vmem:[#allocation4 + $0x230] sm:$0xff]
      %v2402 = vld [vmem:[#allocation4 + $0x238] sm:$0xff]
      %v2403 = vld [vmem:[#allocation4 + $0x240] sm:$0xff]
      %v2404 = vld [vmem:[#allocation4 + $0x258] sm:$0xff]
      %v2405 = vld [vmem:[#allocation4 + $0x260] sm:$0xff]
      %v2406 = vld [vmem:[#allocation4 + $0x268] sm:$0xff]
      %v2407 = vld [vmem:[#allocation4 + $0x280] sm:$0xff]
      %v2408 = vld [vmem:[#allocation4 + $0x288] sm:$0xff]
      %v2409 = vld [vmem:[#allocation4 + $0x290] sm:$0xff]
      %v2410 = vld [vmem:[#allocation4 + $0x2a8] sm:$0xff]
      %v2411 = vld [vmem:[#allocation4 + $0x2b0] sm:$0xff]
      %v2412 = vld [vmem:[#allocation4 + $0x2b8] sm:$0xff]
      %v2413 = vld [vmem:[#allocation4 + $0x2d0] sm:$0xff]
      %v2414 = vld [vmem:[#allocation4 + $0x2d8] sm:$0xff]
      %v2415 = vld [vmem:[#allocation4 + $0x2e0] sm:$0xff]
      %v2416 = vld [vmem:[#allocation4 + $0x2f8] sm:$0xff]
      %v2417 = vld [vmem:[#allocation4 + $0x300] sm:$0xff]
      %v2418 = vld [vmem:[#allocation4 + $0x308] sm:$0xff]
      %v2419 = vld [vmem:[#allocation4 + $0x320] sm:$0xff]
      %v2420 = vld [vmem:[#allocation4 + $0x328] sm:$0xff]
      %v2421 = vld [vmem:[#allocation4 + $0x330] sm:$0xff]
      %v2422 = vld [vmem:[#allocation4 + $0x348] sm:$0xff]
      %v2423 = vld [vmem:[#allocation4 + $0x350] sm:$0xff]
      %v2424 = vld [vmem:[#allocation4 + $0x358] sm:$0xff]
      %v2425 = vld [vmem:[#allocation4 + $0x370] sm:$0xff]
      %v2426 = vld [vmem:[#allocation4 + $0x378] sm:$0xff]
      %v2427 = vld [vmem:[#allocation4 + $0x380] sm:$0xff]
      %v2428 = vld [vmem:[#allocation4 + $0x398] sm:$0xff]
      %v2429 = vld [vmem:[#allocation4 + $0x3a0] sm:$0xff]
      %v2430 = vld [vmem:[#allocation4 + $0x3a8] sm:$0xff]
      %v2431 = vld [vmem:[#allocation4 + $0x3c0] sm:$0xff]
      %v2432 = vld [vmem:[#allocation4 + $0x3c8] sm:$0xff]
      %v2433 = vld [vmem:[#allocation4 + $0x3d0] sm:$0xff]
      %v2434 = vld [vmem:[#allocation4 + $0x3e8] sm:$0xff]
      %v2435 = vld [vmem:[#allocation4 + $0x3f0] sm:$0xff]
      %v2436 = vld [vmem:[#allocation4 + $0x3f8] sm:$0xff]
      %v2437 = vld [vmem:[#allocation4 + $0x410] sm:$0xff]
      %v2438 = vld [vmem:[#allocation4 + $0x418] sm:$0xff]
      %v2439 = vld [vmem:[#allocation4 + $0x420] sm:$0xff]
      %v2440 = vld [vmem:[#allocation4 + $0x438] sm:$0xff]
      %v2441 = vld [vmem:[#allocation4 + $0x440] sm:$0xff]
      %v2442 = vld [vmem:[#allocation4 + $0x448] sm:$0xff]
      %v2443 = vld [vmem:[#allocation4 + $0x460] sm:$0xff]
      %v2444 = vld [vmem:[#allocation4 + $0x468] sm:$0xff]
      %v2445 = vld [vmem:[#allocation4 + $0x470] sm:$0xff]
      %v2446 = vld [vmem:[#allocation4 + $0x488] sm:$0xff]
      %v2447 = vld [vmem:[#allocation4 + $0x490] sm:$0xff]
      %v2448 = vld [vmem:[#allocation4 + $0x498] sm:$0xff]
      %v2449 = vld [vmem:[#allocation4 + $0x4b0] sm:$0xff]
      %v2450 = vld [vmem:[#allocation4 + $0x4b8] sm:$0xff]
      %v2451 = vld [vmem:[#allocation4 + $0x4c0] sm:$0xff]
      %v2452 = vld [vmem:[#allocation4 + $0x4d8] sm:$0xff]
      %v2453 = vld [vmem:[#allocation4 + $0x4e0] sm:$0xff]
      %v2454 = vld [vmem:[#allocation4 + $0x4e8] sm:$0xff]
      %v2455 = vld [vmem:[#allocation4 + $0x500] sm:$0xff]
      %v2456 = vld [vmem:[#allocation4 + $0x508] sm:$0xff]
      %v2457 = vld [vmem:[#allocation4 + $0x510] sm:$0xff]
      %v2458 = vld [vmem:[#allocation4 + $0x528] sm:$0xff]
      %v2459 = vld [vmem:[#allocation4 + $0x530] sm:$0xff]
      %v2460 = vld [vmem:[#allocation4 + $0x538] sm:$0xff]
      %v2461 = vld [vmem:[#allocation4 + $0x550] sm:$0xff]
      %v2462 = vld [vmem:[#allocation4 + $0x558] sm:$0xff]
      %v2463 = vld [vmem:[#allocation4 + $0x560] sm:$0xff]
      %v2464 = vld [vmem:[#allocation4 + $0x578] sm:$0xff]
      %v2465 = vld [vmem:[#allocation4 + $0x580] sm:$0xff]
      %v2466 = vld [vmem:[#allocation4 + $0x588] sm:$0xff]
      %s2467 = scalar_lea.vmem %s2, 32
      %v2468 = vld [vmem:[%s2467] sm:$0xff]
      %v2469 = vld [vmem:[%s2467 + $0x8] sm:$0xff]
      %v2470 = vld [vmem:[%s2467 + $0x10] sm:$0xff]
      %v2471 = vld [vmem:[%s2467 + $0x18] sm:$0xff]
      %2473 = vset.pattern.permute.xlu0 0
      %2474 = vperm.xlu0 %2473, %v2468
      %v2475 = vpop.permute.xlu0 %2474
      %2478 = vset.pattern.permute.xlu0 0
      %2479 = vperm.xlu0 %2478, %v2469
      %v2480 = vpop.permute.xlu0 %2479
      %2483 = vset.pattern.permute.xlu0 0
      %2484 = vperm.xlu0 %2483, %v2470
      %v2485 = vpop.permute.xlu0 %2484
      %2488 = vset.pattern.permute.xlu0 0
      %2489 = vperm.xlu0 %2488, %v2471
      %v2490 = vpop.permute.xlu0 %2489
      %v2493 = vsel %vm1045, %v2349, 0
      %v2496 = vsel %vm1045, %v2352, 0
      %v2499 = vsel %vm1045, %v2355, 0
      %v2502 = vsel %vm1045, %v2358, 0
      %2504 = vmatprep.subr.mxu0 %v2360
      %2505 = vmatpush1.msra.mxu0 %v2359
      %2506 = vmatprep.subr.mxu0 %v2363
      %2507 = vmatpush1.msra.mxu0 %v2362
      %2508 = vmatprep.subr.mxu0 %v2366
      %2509 = vmatpush1.msra.mxu0 %v2365
      %2510 = vmatprep.subr.mxu0 %v2369
      %2511 = vmatpush1.msra.mxu0 %v2368
      %2512 = vmatprep.subr.mxu0 %v2372
      %2513 = vmatpush1.msra.mxu0 %v2371
      %2514 = vmatprep.subr.mxu0 %v2375
      %2515 = vmatpush1.msra.mxu0 %v2374
      %2516 = vmatprep.subr.mxu0 %v2378
      %2517 = vmatpush1.msra.mxu0 %v2377
      %2518 = vmatprep.subr.mxu0 %v2381
      %2519 = vmatpush1.msra.mxu0 %v2380
      %2520 = vmatprep.subr.mxu0 %v2384
      %2521 = vmatpush1.msra.mxu0 %v2383
      %2522 = vmatprep.subr.mxu0 %v2387
      %2523 = vmatpush1.msra.mxu0 %v2386
      %2524 = vmatprep.subr.mxu0 %v2390
      %2525 = vmatpush1.msra.mxu0 %v2389
      %2526 = vmatprep.subr.mxu0 %v2393
      %2527 = vmatpush1.msra.mxu0 %v2392
      %2528 = vmatprep.subr.mxu0 %v2396
      %2529 = vmatpush1.msra.mxu0 %v2395
      %2530 = vmatprep.subr.mxu0 %v2399
      %2531 = vmatpush1.msra.mxu0 %v2398
      %2532 = vmatprep.subr.mxu0 %v2402
      %2533 = vmatpush1.msra.mxu0 %v2401
      %2534 = vmatprep.subr.mxu0 %v2405
      %2535 = vmatpush1.msra.mxu0 %v2404
      %2536 = vmatprep.subr.mxu0 %v2408
      %2537 = vmatpush1.msra.mxu0 %v2407
      %2538 = vmatprep.subr.mxu0 %v2411
      %2539 = vmatpush1.msra.mxu0 %v2410
      %2540 = vmatprep.subr.mxu0 %v2414
      %2541 = vmatpush1.msra.mxu0 %v2413
      %2542 = vmatprep.subr.mxu0 %v2417
      %2543 = vmatpush1.msra.mxu0 %v2416
      %2544 = vmatprep.subr.mxu0 %v2420
      %2545 = vmatpush1.msra.mxu0 %v2419
      %2546 = vmatprep.subr.mxu0 %v2423
      %2547 = vmatpush1.msra.mxu0 %v2422
      %2548 = vmatprep.subr.mxu0 %v2426
      %2549 = vmatpush1.msra.mxu0 %v2425
      %2550 = vmatprep.subr.mxu0 %v2429
      %2551 = vmatpush1.msra.mxu0 %v2428
      %2552 = vmatprep.subr.mxu0 %v2432
      %2553 = vmatpush1.msra.mxu0 %v2431
      %2554 = vmatprep.subr.mxu0 %v2435
      %2555 = vmatpush1.msra.mxu0 %v2434
      %2556 = vmatprep.subr.mxu0 %v2438
      %2557 = vmatpush1.msra.mxu0 %v2437
      %2558 = vmatprep.subr.mxu0 %v2441
      %2559 = vmatpush1.msra.mxu0 %v2440
      %2560 = vmatprep.subr.mxu0 %v2444
      %2561 = vmatpush1.msra.mxu0 %v2443
      %2562 = vmatprep.subr.mxu0 %v2447
      %2563 = vmatpush1.msra.mxu0 %v2446
      %2564 = vmatprep.subr.mxu0 %v2450
      %2565 = vmatpush1.msra.mxu0 %v2449
      %2566 = vmatprep.subr.mxu0 %v2453
      %2567 = vmatpush1.msra.mxu0 %v2452
      %2568 = vmatprep.mubr.f32.mxu0 %v2348
      %2569 = vmatmul.mubr.f32.gmra.mrb[0].mxu0 %v2347
      %v2570 = vpop.f32.mrb[0].mxu0
      %v2571 = vadd.f32 %v2475, %v2570
      %v2572 = vpop.f32.mrb[0].mxu0
      %v2573 = vadd.f32 %v2475, %v2572
      %2574 = vmatprep.mubr.f32.mxu0 %v2351
      %2575 = vmatmul.mubr.f32.gmra.mrb[0].mxu0 %v2350
      %v2576 = vpop.f32.mrb[0].mxu0
      %v2577 = vadd.f32 %v2480, %v2576
      %v2578 = vpop.f32.mrb[0].mxu0
      %v2579 = vadd.f32 %v2480, %v2578
      %2580 = vmatprep.mubr.f32.mxu0 %v2354
      %2581 = vmatmul.mubr.f32.gmra.mrb[0].mxu0 %v2353
      %v2582 = vpop.f32.mrb[0].mxu0
      %v2583 = vadd.f32 %v2485, %v2582
      %v2584 = vpop.f32.mrb[0].mxu0
      %v2585 = vadd.f32 %v2485, %v2584
      %2586 = vmatprep.mubr.f32.mxu0 %v2357
      %2587 = vmatmul.mubr.f32.gmra.mrb[0].mxu0 %v2356
      %v2588 = vpop.f32.mrb[0].mxu0
      %v2589 = vadd.f32 %v2490, %v2588
      %v2590 = vpop.f32.mrb[0].mxu0
      %v2591 = vadd.f32 %v2490, %v2590
      %2592 = vdwg.mxu0
      %2593 = vmatprep.subr.mxu0 %v2456
      %2594 = vmatpush1.msra.mxu0 %v2455
      %2595 = vmatprep.subr.mxu0 %v2459
      %2596 = vmatpush1.msra.mxu0 %v2458
      %2597 = vmatprep.subr.mxu0 %v2462
      %2598 = vmatpush1.msra.mxu0 %v2461
      %2599 = vmatprep.subr.mxu0 %v2465
      %2600 = vmatpush1.msra.mxu0 %v2464
      %2601 = vmatprep.subr.mxu0 0.0
      %2602 = vmatpush1.msra.mxu0 0.0
      %2603 = vmatprep.subr.mxu0 0.0
      %2604 = vmatpush1.msra.mxu0 0.0
      %2605 = vmatprep.subr.mxu0 0.0
      %2606 = vmatpush1.msra.mxu0 0.0
      %2607 = vmatprep.subr.mxu0 0.0
      %2608 = vmatpush1.msra.mxu0 0.0
      %2609 = vmatprep.subr.mxu0 0.0
      %2610 = vmatpush1.msra.mxu0 0.0
      %2611 = vmatprep.subr.mxu0 0.0
      %2612 = vmatpush1.msra.mxu0 0.0
      %2613 = vmatprep.subr.mxu0 0.0
      %2614 = vmatpush1.msra.mxu0 0.0
      %2615 = vmatprep.subr.mxu0 0.0
      %2616 = vmatpush1.msra.mxu0 0.0
      %2617 = vmatprep.subr.mxu0 0.0
      %2618 = vmatpush1.msra.mxu0 0.0
      %2619 = vmatprep.subr.mxu0 0.0
      %2620 = vmatpush1.msra.mxu0 0.0
      %2621 = vmatprep.subr.mxu0 0.0
      %2622 = vmatpush1.msra.mxu0 0.0
      %2623 = vmatprep.subr.mxu0 0.0
      %2624 = vmatpush1.msra.mxu0 0.0
      %2625 = vmatprep.subr.mxu0 0.0
      %2626 = vmatpush1.msra.mxu0 0.0
      %2627 = vmatprep.subr.mxu0 0.0
      %2628 = vmatpush1.msra.mxu0 0.0
      %2629 = vmatprep.subr.mxu0 0.0
      %2630 = vmatpush1.msra.mxu0 0.0
      %2631 = vmatprep.subr.mxu0 0.0
      %2632 = vmatpush1.msra.mxu0 0.0
      %2633 = vmatprep.subr.mxu0 0.0
      %2634 = vmatpush1.msra.mxu0 0.0
      %2635 = vmatprep.subr.mxu0 0.0
      %2636 = vmatpush1.msra.mxu0 0.0
      %2637 = vmatprep.subr.mxu0 0.0
      %2638 = vmatpush1.msra.mxu0 0.0
      %2639 = vmatprep.subr.mxu0 0.0
      %2640 = vmatpush1.msra.mxu0 0.0
      %2641 = vmatprep.subr.mxu0 0.0
      %2642 = vmatpush1.msra.mxu0 0.0
      %2643 = vmatprep.subr.mxu0 0.0
      %2644 = vmatpush1.msra.mxu0 0.0
      %2645 = vmatprep.subr.mxu0 0.0
      %2646 = vmatpush1.msra.mxu0 0.0
      %2647 = vmatprep.subr.mxu0 0.0
      %2648 = vmatpush1.msra.mxu0 0.0
      %2649 = vmatprep.subr.mxu0 0.0
      %2650 = vmatpush1.msra.mxu0 0.0
      %2651 = vmatprep.subr.mxu0 0.0
      %2652 = vmatpush1.msra.mxu0 0.0
      %2653 = vmatprep.subr.mxu0 0.0
      %2654 = vmatpush1.msra.mxu0 0.0
      %2655 = vmatprep.subr.mxu0 0.0
      %2656 = vmatpush1.msra.mxu0 0.0
      %2657 = vmatprep.mubr.f32.mxu0 0.0
      %2658 = vmatmul.mubr.f32.gmra.mrb[0].mxu0 %v2493
      %v2659 = vpop.f32.mrb[0].mxu0
      %v2660 = vadd.f32 %v2571, %v2659
      %v2661 = vpop.f32.mrb[0].mxu0
      %v2662 = vadd.f32 %v2573, %v2661
      %2663 = vmatprep.mubr.f32.mxu0 0.0
      %2664 = vmatmul.mubr.f32.gmra.mrb[0].mxu0 %v2496
      %v2665 = vpop.f32.mrb[0].mxu0
      %v2666 = vadd.f32 %v2577, %v2665
      %v2667 = vpop.f32.mrb[0].mxu0
      %v2668 = vadd.f32 %v2579, %v2667
      %2669 = vmatprep.mubr.f32.mxu0 0.0
      %2670 = vmatmul.mubr.f32.gmra.mrb[0].mxu0 %v2499
      %v2671 = vpop.f32.mrb[0].mxu0
      %v2672 = vadd.f32 %v2583, %v2671
      %v2673 = vpop.f32.mrb[0].mxu0
      %v2674 = vadd.f32 %v2585, %v2673
      %2675 = vmatprep.mubr.f32.mxu0 0.0
      %2676 = vmatmul.mubr.f32.gmra.mrb[0].mxu0 %v2502
      %v2677 = vpop.f32.mrb[0].mxu0
      %v2678 = vadd.f32 %v2589, %v2677
      %v2679 = vpop.f32.mrb[0].mxu0
      %v2680 = vadd.f32 %v2591, %v2679
      %2681 = vdwg.mxu0
      %2682 = vmatprep.subr.mxu0 0.0
      %2683 = vmatpush1.msra.mxu0 %v2361
      %2684 = vmatprep.subr.mxu0 0.0
      %2685 = vmatpush1.msra.mxu0 %v2364
      %2686 = vmatprep.subr.mxu0 0.0
      %2687 = vmatpush1.msra.mxu0 %v2367
      %2688 = vmatprep.subr.mxu0 0.0
      %2689 = vmatpush1.msra.mxu0 %v2370
      %2690 = vmatprep.subr.mxu0 0.0
      %2691 = vmatpush1.msra.mxu0 %v2373
      %2692 = vmatprep.subr.mxu0 0.0
      %2693 = vmatpush1.msra.mxu0 %v2376
      %2694 = vmatprep.subr.mxu0 0.0
      %2695 = vmatpush1.msra.mxu0 %v2379
      %2696 = vmatprep.subr.mxu0 0.0
      %2697 = vmatpush1.msra.mxu0 %v2382
      %2698 = vmatprep.subr.mxu0 0.0
      %2699 = vmatpush1.msra.mxu0 %v2385
      %2700 = vmatprep.subr.mxu0 0.0
      %2701 = vmatpush1.msra.mxu0 %v2388
      %2702 = vmatprep.subr.mxu0 0.0
      %2703 = vmatpush1.msra.mxu0 %v2391
      %2704 = vmatprep.subr.mxu0 0.0
      %2705 = vmatpush1.msra.mxu0 %v2394
      %2706 = vmatprep.subr.mxu0 0.0
      %2707 = vmatpush1.msra.mxu0 %v2397
      %2708 = vmatprep.subr.mxu0 0.0
      %2709 = vmatpush1.msra.mxu0 %v2400
      %2710 = vmatprep.subr.mxu0 0.0
      %2711 = vmatpush1.msra.mxu0 %v2403
      %2712 = vmatprep.subr.mxu0 0.0
      %2713 = vmatpush1.msra.mxu0 %v2406
      %2714 = vmatprep.subr.mxu0 0.0
      %2715 = vmatpush1.msra.mxu0 %v2409
      %2716 = vmatprep.subr.mxu0 0.0
      %2717 = vmatpush1.msra.mxu0 %v2412
      %2718 = vmatprep.subr.mxu0 0.0
      %2719 = vmatpush1.msra.mxu0 %v2415
      %2720 = vmatprep.subr.mxu0 0.0
      %2721 = vmatpush1.msra.mxu0 %v2418
      %2722 = vmatprep.subr.mxu0 0.0
      %2723 = vmatpush1.msra.mxu0 %v2421
      %2724 = vmatprep.subr.mxu0 0.0
      %2725 = vmatpush1.msra.mxu0 %v2424
      %2726 = vmatprep.subr.mxu0 0.0
      %2727 = vmatpush1.msra.mxu0 %v2427
      %2728 = vmatprep.subr.mxu0 0.0
      %2729 = vmatpush1.msra.mxu0 %v2430
      %2730 = vmatprep.subr.mxu0 0.0
      %2731 = vmatpush1.msra.mxu0 %v2433
      %2732 = vmatprep.subr.mxu0 0.0
      %2733 = vmatpush1.msra.mxu0 %v2436
      %2734 = vmatprep.subr.mxu0 0.0
      %2735 = vmatpush1.msra.mxu0 %v2439
      %2736 = vmatprep.subr.mxu0 0.0
      %2737 = vmatpush1.msra.mxu0 %v2442
      %2738 = vmatprep.subr.mxu0 0.0
      %2739 = vmatpush1.msra.mxu0 %v2445
      %2740 = vmatprep.subr.mxu0 0.0
      %2741 = vmatpush1.msra.mxu0 %v2448
      %2742 = vmatprep.subr.mxu0 0.0
      %2743 = vmatpush1.msra.mxu0 %v2451
      %2744 = vmatprep.subr.mxu0 0.0
      %2745 = vmatpush1.msra.mxu0 %v2454
      %2746 = vmatprep.mubr.f32.mxu0 %v2348
      %2747 = vmatmul.mubr.f32.gmra.mrb[0].mxu0 %v2347
      %v2748 = vpop.f32.mrb[0].mxu0
      %v2749 = vadd.f32 %v2475, %v2748
      %v2750 = vpop.f32.mrb[0].mxu0
      %2751 = vmatprep.mubr.f32.mxu0 %v2351
      %2752 = vmatmul.mubr.f32.gmra.mrb[0].mxu0 %v2350
      %v2753 = vpop.f32.mrb[0].mxu0
      %v2754 = vadd.f32 %v2480, %v2753
      %v2755 = vpop.f32.mrb[0].mxu0
      %2756 = vmatprep.mubr.f32.mxu0 %v2354
      %2757 = vmatmul.mubr.f32.gmra.mrb[0].mxu0 %v2353
      %v2758 = vpop.f32.mrb[0].mxu0
      %v2759 = vadd.f32 %v2485, %v2758
      %v2760 = vpop.f32.mrb[0].mxu0
      %2761 = vmatprep.mubr.f32.mxu0 %v2357
      %2762 = vmatmul.mubr.f32.gmra.mrb[0].mxu0 %v2356
      %v2763 = vpop.f32.mrb[0].mxu0
      %v2764 = vadd.f32 %v2490, %v2763
      %v2765 = vpop.f32.mrb[0].mxu0
      %2766 = vdwg.mxu0
      %2767 = vmatprep.subr.mxu0 0.0
      %2768 = vmatpush1.msra.mxu0 %v2457
      %2769 = vmatprep.subr.mxu0 0.0
      %2770 = vmatpush1.msra.mxu0 %v2460
      %2771 = vmatprep.subr.mxu0 0.0
      %2772 = vmatpush1.msra.mxu0 %v2463
      %2773 = vmatprep.subr.mxu0 0.0
      %2774 = vmatpush1.msra.mxu0 %v2466
      %2775 = vmatprep.subr.mxu0 0.0
      %2776 = vmatpush1.msra.mxu0 0.0
      %2777 = vmatprep.subr.mxu0 0.0
      %2778 = vmatpush1.msra.mxu0 0.0
      %2779 = vmatprep.subr.mxu0 0.0
      %2780 = vmatpush1.msra.mxu0 0.0
      %2781 = vmatprep.subr.mxu0 0.0
      %2782 = vmatpush1.msra.mxu0 0.0
      %2783 = vmatprep.subr.mxu0 0.0
      %2784 = vmatpush1.msra.mxu0 0.0
      %2785 = vmatprep.subr.mxu0 0.0
      %2786 = vmatpush1.msra.mxu0 0.0
      %2787 = vmatprep.subr.mxu0 0.0
      %2788 = vmatpush1.msra.mxu0 0.0
      %2789 = vmatprep.subr.mxu0 0.0
      %2790 = vmatpush1.msra.mxu0 0.0
      %2791 = vmatprep.subr.mxu0 0.0
      %2792 = vmatpush1.msra.mxu0 0.0
      %2793 = vmatprep.subr.mxu0 0.0
      %2794 = vmatpush1.msra.mxu0 0.0
      %2795 = vmatprep.subr.mxu0 0.0
      %2796 = vmatpush1.msra.mxu0 0.0
      %2797 = vmatprep.subr.mxu0 0.0
      %2798 = vmatpush1.msra.mxu0 0.0
      %2799 = vmatprep.subr.mxu0 0.0
      %2800 = vmatpush1.msra.mxu0 0.0
      %2801 = vmatprep.subr.mxu0 0.0
      %2802 = vmatpush1.msra.mxu0 0.0
      %2803 = vmatprep.subr.mxu0 0.0
      %2804 = vmatpush1.msra.mxu0 0.0
      %2805 = vmatprep.subr.mxu0 0.0
      %2806 = vmatpush1.msra.mxu0 0.0
      %2807 = vmatprep.subr.mxu0 0.0
      %2808 = vmatpush1.msra.mxu0 0.0
      %2809 = vmatprep.subr.mxu0 0.0
      %2810 = vmatpush1.msra.mxu0 0.0
      %2811 = vmatprep.subr.mxu0 0.0
      %2812 = vmatpush1.msra.mxu0 0.0
      %2813 = vmatprep.subr.mxu0 0.0
      %2814 = vmatpush1.msra.mxu0 0.0
      %2815 = vmatprep.subr.mxu0 0.0
      %2816 = vmatpush1.msra.mxu0 0.0
      %2817 = vmatprep.subr.mxu0 0.0
      %2818 = vmatpush1.msra.mxu0 0.0
      %2819 = vmatprep.subr.mxu0 0.0
      %2820 = vmatpush1.msra.mxu0 0.0
      %2821 = vmatprep.subr.mxu0 0.0
      %2822 = vmatpush1.msra.mxu0 0.0
      %2823 = vmatprep.subr.mxu0 0.0
      %2824 = vmatpush1.msra.mxu0 0.0
      %2825 = vmatprep.subr.mxu0 0.0
      %2826 = vmatpush1.msra.mxu0 0.0
      %2827 = vmatprep.subr.mxu0 0.0
      %2828 = vmatpush1.msra.mxu0 0.0
      %2829 = vmatprep.subr.mxu0 0.0
      %2830 = vmatpush1.msra.mxu0 0.0
      %2831 = vmatprep.mubr.f32.mxu0 0.0
      %2832 = vmatmul.mubr.f32.gmra.mrb[0].mxu0 %v2493
      %v2833 = vpop.f32.mrb[0].mxu0
      %v2834 = vadd.f32 %v2749, %v2833
      %v2835 = vpop.f32.mrb[0].mxu0
      %2836 = vmatprep.mubr.f32.mxu0 0.0
      %2837 = vmatmul.mubr.f32.gmra.mrb[0].mxu0 %v2496
      %v2838 = vpop.f32.mrb[0].mxu0
      %v2839 = vadd.f32 %v2754, %v2838
      %v2840 = vpop.f32.mrb[0].mxu0
      %2841 = vmatprep.mubr.f32.mxu0 0.0
      %2842 = vmatmul.mubr.f32.gmra.mrb[0].mxu0 %v2499
      %v2843 = vpop.f32.mrb[0].mxu0
      %v2844 = vadd.f32 %v2759, %v2843
      %v2845 = vpop.f32.mrb[0].mxu0
      %2846 = vmatprep.mubr.f32.mxu0 0.0
      %2847 = vmatmul.mubr.f32.gmra.mrb[0].mxu0 %v2502
      %v2848 = vpop.f32.mrb[0].mxu0
      %v2849 = vadd.f32 %v2764, %v2848
      %v2850 = vpop.f32.mrb[0].mxu0
      %2851 = vdwg.mxu0
      %v2852 = vmax.f32 %v2660, 0.0
      %v2853 = vmax.f32 %v2662, 0.0
      %v2854 = vmax.f32 %v2834, 0.0
      %v2855 = vmax.f32 %v2666, 0.0
      %v2856 = vmax.f32 %v2668, 0.0
      %v2857 = vmax.f32 %v2839, 0.0
      %v2858 = vmax.f32 %v2672, 0.0
      %v2859 = vmax.f32 %v2674, 0.0
      %v2860 = vmax.f32 %v2844, 0.0
      %v2861 = vmax.f32 %v2678, 0.0
      %v2862 = vmax.f32 %v2680, 0.0
      %v2863 = vmax.f32 %v2849, 0.0
      %vm2864 = vcmp.lt.s32.totalorder %v175, 12
      %vm2865 = vcmp.lt.s32.totalorder %v176, 12
      %vm2866 = vcmp.lt.s32.totalorder %v177, 12
      %v2867 = vsel %vm2864, 1, 0
      %v2868 = vsel %vm2865, 1, 0
      %v2869 = vsel %vm2866, 1, 0
      %vm2870 = vcmp.eq.s32.totalorder %v2867, 1
      %vm2871 = vcmp.eq.s32.totalorder %v2868, 1
      %vm2872 = vcmp.eq.s32.totalorder %v2869, 1
      %v2873 = vsel %vm2870, %v2852, 0.0
      %v2874 = vsel %vm2871, %v2853, 0.0
      %v2875 = vsel %vm2872, %v2854, 0.0
      %v2876 = vsel %vm2870, %v2855, 0.0
      %v2877 = vsel %vm2871, %v2856, 0.0
      %v2878 = vsel %vm2872, %v2857, 0.0
      %v2879 = vsel %vm2870, %v2858, 0.0
      %v2880 = vsel %vm2871, %v2859, 0.0
      %v2881 = vsel %vm2872, %v2860, 0.0
      %v2882 = vsel %vm2870, %v2861, 0.0
      %v2883 = vsel %vm2871, %v2862, 0.0
      %v2884 = vsel %vm2872, %v2863, 0.0
      %2897 = vrot.lane.b32.xlu0 %v2873, 66
      %v2898 = vpop.permute.xlu0 %2897
      %2899 = vrot.lane.b32.xlu0 %v2874, 66
      %v2900 = vpop.permute.xlu0 %2899
      %2901 = vrot.lane.b32.xlu0 %v2875, 66
      %v2902 = vpop.permute.xlu0 %2901
      %2903 = vrot.lane.b32.xlu0 %v2876, 66
      %v2904 = vpop.permute.xlu0 %2903
      %2905 = vrot.lane.b32.xlu0 %v2877, 66
      %v2906 = vpop.permute.xlu0 %2905
      %2907 = vrot.lane.b32.xlu0 %v2878, 66
      %v2908 = vpop.permute.xlu0 %2907
      %2909 = vrot.lane.b32.xlu0 %v2879, 66
      %v2910 = vpop.permute.xlu0 %2909
      %2911 = vrot.lane.b32.xlu0 %v2880, 66
      %v2912 = vpop.permute.xlu0 %2911
      %2913 = vrot.lane.b32.xlu0 %v2881, 66
      %v2914 = vpop.permute.xlu0 %2913
      %2915 = vrot.lane.b32.xlu0 %v2882, 66
      %v2916 = vpop.permute.xlu0 %2915
      %2917 = vrot.lane.b32.xlu0 %v2883, 66
      %v2918 = vpop.permute.xlu0 %2917
      %2919 = vrot.lane.b32.xlu0 %v2884, 66
      %v2920 = vpop.permute.xlu0 %2919
      %v2921 = vsel %vm180, %v2898, %v2900
      %v2922 = vsel %vm180, %v2900, %v2902
      %v2923 = vsel %vm180, %v2904, %v2906
      %v2924 = vsel %vm180, %v2906, %v2908
      %v2925 = vsel %vm180, %v2910, %v2912
      %v2926 = vsel %vm180, %v2912, %v2914
      %v2927 = vsel %vm180, %v2916, %v2918
      %v2928 = vsel %vm180, %v2918, %v2920
      %2945 = vst.msk [vmem:[#allocation2] sm:$0xff] %vm1499, %v2898
      %2946 = vst [vmem:[#allocation2 + $0x8] sm:$0xff] %v2921
      %2947 = vst [vmem:[#allocation2 + $0x10] sm:$0xff] %v2922
      %2948 = vst.msk [vmem:[#allocation2 + $0x18] sm:$0xff] %vm180, %v2902
      %2949 = vst.msk [vmem:[#allocation2 + $0x30] sm:$0xff] %vm1499, %v2904
      %2950 = vst [vmem:[#allocation2 + $0x38] sm:$0xff] %v2923
      %2951 = vst [vmem:[#allocation2 + $0x40] sm:$0xff] %v2924
      %2952 = vst.msk [vmem:[#allocation2 + $0x48] sm:$0xff] %vm180, %v2908
      %2953 = vst.msk [vmem:[#allocation2 + $0x60] sm:$0xff] %vm1499, %v2910
      %2954 = vst [vmem:[#allocation2 + $0x68] sm:$0xff] %v2925
      %2955 = vst [vmem:[#allocation2 + $0x70] sm:$0xff] %v2926
      %2956 = vst.msk [vmem:[#allocation2 + $0x78] sm:$0xff] %vm180, %v2914
      %2957 = vst.msk [vmem:[#allocation2 + $0x90] sm:$0xff] %vm1499, %v2916
      %2958 = vst [vmem:[#allocation2 + $0x98] sm:$0xff] %v2927
      %2959 = vst [vmem:[#allocation2 + $0xa0] sm:$0xff] %v2928
      %2960 = vst.msk [vmem:[#allocation2 + $0xa8] sm:$0xff] %vm180, %v2920
      %2961 = vst.msk [vmem:[#allocation2 + $0x18] sm:$0xff] %vm1499, 0.0
      %2962 = vst.msk [vmem:[#allocation2 + $0x20] sm:$0xff] %vm1503, 0.0
      %2963 = vst.msk [vmem:[#allocation2 + $0x48] sm:$0xff] %vm1499, 0.0
      %2964 = vst.msk [vmem:[#allocation2 + $0x50] sm:$0xff] %vm1503, 0.0
      %2965 = vst.msk [vmem:[#allocation2 + $0x78] sm:$0xff] %vm1499, 0.0
      %2966 = vst.msk [vmem:[#allocation2 + $0x80] sm:$0xff] %vm1503, 0.0
      %2967 = vst.msk [vmem:[#allocation2 + $0xa8] sm:$0xff] %vm1499, 0.0
      %2968 = vst.msk [vmem:[#allocation2 + $0xb0] sm:$0xff] %vm1503, 0.0
      %v2969 = vld [vmem:[#allocation2] sm:$0xff]
      %v2970 = vld [vmem:[#allocation2 + $0x8] sm:$0xff]
      %v2971 = vld [vmem:[#allocation2 + $0x10] sm:$0xff]
      %v2972 = vld [vmem:[#allocation2 + $0x18] sm:$0xff]
      %v2973 = vld [vmem:[#allocation2 + $0x30] sm:$0xff]
      %v2974 = vld [vmem:[#allocation2 + $0x38] sm:$0xff]
      %v2975 = vld [vmem:[#allocation2 + $0x40] sm:$0xff]
      %v2976 = vld [vmem:[#allocation2 + $0x48] sm:$0xff]
      %v2977 = vld [vmem:[#allocation2 + $0x60] sm:$0xff]
      %v2978 = vld [vmem:[#allocation2 + $0x68] sm:$0xff]
      %v2979 = vld [vmem:[#allocation2 + $0x70] sm:$0xff]
      %v2980 = vld [vmem:[#allocation2 + $0x78] sm:$0xff]
      %v2981 = vld [vmem:[#allocation2 + $0x90] sm:$0xff]
      %v2982 = vld [vmem:[#allocation2 + $0x98] sm:$0xff]
      %v2983 = vld [vmem:[#allocation2 + $0xa0] sm:$0xff]
      %v2984 = vld [vmem:[#allocation2 + $0xa8] sm:$0xff]
      %2985 = vst [vmem:[#allocation4] sm:$0xff] %v2969
      %2986 = vst [vmem:[#allocation4 + $0x8] sm:$0xff] %v2970
      %2987 = vst [vmem:[#allocation4 + $0x10] sm:$0xff] %v2971
      %2988 = vst.msk [vmem:[#allocation4 + $0x18] sm:$0xff] %vm203, %v2972
      %2989 = vst [vmem:[#allocation4 + $0x28] sm:$0xff] %v2973
      %2990 = vst [vmem:[#allocation4 + $0x30] sm:$0xff] %v2974
      %2991 = vst [vmem:[#allocation4 + $0x38] sm:$0xff] %v2975
      %2992 = vst.msk [vmem:[#allocation4 + $0x40] sm:$0xff] %vm203, %v2976
      %2993 = vst [vmem:[#allocation4 + $0x50] sm:$0xff] %v2977
      %2994 = vst [vmem:[#allocation4 + $0x58] sm:$0xff] %v2978
      %2995 = vst [vmem:[#allocation4 + $0x60] sm:$0xff] %v2979
      %2996 = vst.msk [vmem:[#allocation4 + $0x68] sm:$0xff] %vm203, %v2980
      %2997 = vst [vmem:[#allocation4 + $0x78] sm:$0xff] %v2981
      %2998 = vst [vmem:[#allocation4 + $0x80] sm:$0xff] %v2982
      %2999 = vst [vmem:[#allocation4 + $0x88] sm:$0xff] %v2983
      %3000 = vst.msk [vmem:[#allocation4 + $0x90] sm:$0xff] %vm203, %v2984
      %v3001 = vld [vmem:[#allocation2] sm:$0xff]
      %v3002 = vld [vmem:[#allocation2 + $0x8] sm:$0xff]
      %v3003 = vld [vmem:[#allocation2 + $0x10] sm:$0xff]
      %v3004 = vld [vmem:[#allocation2 + $0x18] sm:$0xff]
      %v3005 = vld [vmem:[#allocation2 + $0x30] sm:$0xff]
      %v3006 = vld [vmem:[#allocation2 + $0x38] sm:$0xff]
      %v3007 = vld [vmem:[#allocation2 + $0x40] sm:$0xff]
      %v3008 = vld [vmem:[#allocation2 + $0x48] sm:$0xff]
      %v3009 = vld [vmem:[#allocation2 + $0x60] sm:$0xff]
      %v3010 = vld [vmem:[#allocation2 + $0x68] sm:$0xff]
      %v3011 = vld [vmem:[#allocation2 + $0x70] sm:$0xff]
      %v3012 = vld [vmem:[#allocation2 + $0x78] sm:$0xff]
      %v3013 = vld [vmem:[#allocation2 + $0x90] sm:$0xff]
      %v3014 = vld [vmem:[#allocation2 + $0x98] sm:$0xff]
      %v3015 = vld [vmem:[#allocation2 + $0xa0] sm:$0xff]
      %v3016 = vld [vmem:[#allocation2 + $0xa8] sm:$0xff]
      %3033 = vrot.lane.b32.xlu0 %v3001, 127
      %v3034 = vpop.permute.xlu0 %3033
      %3035 = vrot.lane.b32.xlu0 %v3002, 127
      %v3036 = vpop.permute.xlu0 %3035
      %3037 = vrot.lane.b32.xlu0 %v3003, 127
      %v3038 = vpop.permute.xlu0 %3037
      %3039 = vrot.lane.b32.xlu0 %v3004, 127
      %v3040 = vpop.permute.xlu0 %3039
      %3041 = vrot.lane.b32.xlu0 %v3005, 127
      %v3042 = vpop.permute.xlu0 %3041
      %3043 = vrot.lane.b32.xlu0 %v3006, 127
      %v3044 = vpop.permute.xlu0 %3043
      %3045 = vrot.lane.b32.xlu0 %v3007, 127
      %v3046 = vpop.permute.xlu0 %3045
      %3047 = vrot.lane.b32.xlu0 %v3008, 127
      %v3048 = vpop.permute.xlu0 %3047
      %3049 = vrot.lane.b32.xlu0 %v3009, 127
      %v3050 = vpop.permute.xlu0 %3049
      %3051 = vrot.lane.b32.xlu0 %v3010, 127
      %v3052 = vpop.permute.xlu0 %3051
      %3053 = vrot.lane.b32.xlu0 %v3011, 127
      %v3054 = vpop.permute.xlu0 %3053
      %3055 = vrot.lane.b32.xlu0 %v3012, 127
      %v3056 = vpop.permute.xlu0 %3055
      %3057 = vrot.lane.b32.xlu0 %v3013, 127
      %v3058 = vpop.permute.xlu0 %3057
      %3059 = vrot.lane.b32.xlu0 %v3014, 127
      %v3060 = vpop.permute.xlu0 %3059
      %3061 = vrot.lane.b32.xlu0 %v3015, 127
      %v3062 = vpop.permute.xlu0 %3061
      %3063 = vrot.lane.b32.xlu0 %v3016, 127
      %v3064 = vpop.permute.xlu0 %3063
      %v3065 = vsel %vm262, %v3034, %v3036
      %v3066 = vsel %vm262, %v3036, %v3038
      %v3067 = vsel %vm262, %v3038, %v3040
      %v3068 = vsel %vm262, %v3042, %v3044
      %v3069 = vsel %vm262, %v3044, %v3046
      %v3070 = vsel %vm262, %v3046, %v3048
      %v3071 = vsel %vm262, %v3050, %v3052
      %v3072 = vsel %vm262, %v3052, %v3054
      %v3073 = vsel %vm262, %v3054, %v3056
      %v3074 = vsel %vm262, %v3058, %v3060
      %v3075 = vsel %vm262, %v3060, %v3062
      %v3076 = vsel %vm262, %v3062, %v3064
      %3093 = vst [vmem:[#allocation4 + $0xa0] sm:$0xff] %v3065
      %3094 = vst [vmem:[#allocation4 + $0xa8] sm:$0xff] %v3066
      %3095 = vst [vmem:[#allocation4 + $0xb0] sm:$0xff] %v3067
      %3096 = vst.msk [vmem:[#allocation4 + $0xb8] sm:$0xff] %vm203, %v3040
      %3097 = vst [vmem:[#allocation4 + $0xc8] sm:$0xff] %v3068
      %3098 = vst [vmem:[#allocation4 + $0xd0] sm:$0xff] %v3069
      %3099 = vst [vmem:[#allocation4 + $0xd8] sm:$0xff] %v3070
      %3100 = vst.msk [vmem:[#allocation4 + $0xe0] sm:$0xff] %vm203, %v3048
      %3101 = vst [vmem:[#allocation4 + $0xf0] sm:$0xff] %v3071
      %3102 = vst [vmem:[#allocation4 + $0xf8] sm:$0xff] %v3072
      %3103 = vst [vmem:[#allocation4 + $0x100] sm:$0xff] %v3073
      %3104 = vst.msk [vmem:[#allocation4 + $0x108] sm:$0xff] %vm203, %v3056
      %3105 = vst [vmem:[#allocation4 + $0x118] sm:$0xff] %v3074
      %3106 = vst [vmem:[#allocation4 + $0x120] sm:$0xff] %v3075
      %3107 = vst [vmem:[#allocation4 + $0x128] sm:$0xff] %v3076
      %3108 = vst.msk [vmem:[#allocation4 + $0x130] sm:$0xff] %vm203, %v3064
      %v3109 = vld [vmem:[#allocation2] sm:$0xff]
      %v3110 = vld [vmem:[#allocation2 + $0x8] sm:$0xff]
      %v3111 = vld [vmem:[#allocation2 + $0x10] sm:$0xff]
      %v3112 = vld [vmem:[#allocation2 + $0x18] sm:$0xff]
      %v3113 = vld [vmem:[#allocation2 + $0x30] sm:$0xff]
      %v3114 = vld [vmem:[#allocation2 + $0x38] sm:$0xff]
      %v3115 = vld [vmem:[#allocation2 + $0x40] sm:$0xff]
      %v3116 = vld [vmem:[#allocation2 + $0x48] sm:$0xff]
      %v3117 = vld [vmem:[#allocation2 + $0x60] sm:$0xff]
      %v3118 = vld [vmem:[#allocation2 + $0x68] sm:$0xff]
      %v3119 = vld [vmem:[#allocation2 + $0x70] sm:$0xff]
      %v3120 = vld [vmem:[#allocation2 + $0x78] sm:$0xff]
      %v3121 = vld [vmem:[#allocation2 + $0x90] sm:$0xff]
      %v3122 = vld [vmem:[#allocation2 + $0x98] sm:$0xff]
      %v3123 = vld [vmem:[#allocation2 + $0xa0] sm:$0xff]
      %v3124 = vld [vmem:[#allocation2 + $0xa8] sm:$0xff]
      %3141 = vrot.lane.b32.xlu0 %v3109, 126
      %v3142 = vpop.permute.xlu0 %3141
      %3143 = vrot.lane.b32.xlu0 %v3110, 126
      %v3144 = vpop.permute.xlu0 %3143
      %3145 = vrot.lane.b32.xlu0 %v3111, 126
      %v3146 = vpop.permute.xlu0 %3145
      %3147 = vrot.lane.b32.xlu0 %v3112, 126
      %v3148 = vpop.permute.xlu0 %3147
      %3149 = vrot.lane.b32.xlu0 %v3113, 126
      %v3150 = vpop.permute.xlu0 %3149
      %3151 = vrot.lane.b32.xlu0 %v3114, 126
      %v3152 = vpop.permute.xlu0 %3151
      %3153 = vrot.lane.b32.xlu0 %v3115, 126
      %v3154 = vpop.permute.xlu0 %3153
      %3155 = vrot.lane.b32.xlu0 %v3116, 126
      %v3156 = vpop.permute.xlu0 %3155
      %3157 = vrot.lane.b32.xlu0 %v3117, 126
      %v3158 = vpop.permute.xlu0 %3157
      %3159 = vrot.lane.b32.xlu0 %v3118, 126
      %v3160 = vpop.permute.xlu0 %3159
      %3161 = vrot.lane.b32.xlu0 %v3119, 126
      %v3162 = vpop.permute.xlu0 %3161
      %3163 = vrot.lane.b32.xlu0 %v3120, 126
      %v3164 = vpop.permute.xlu0 %3163
      %3165 = vrot.lane.b32.xlu0 %v3121, 126
      %v3166 = vpop.permute.xlu0 %3165
      %3167 = vrot.lane.b32.xlu0 %v3122, 126
      %v3168 = vpop.permute.xlu0 %3167
      %3169 = vrot.lane.b32.xlu0 %v3123, 126
      %v3170 = vpop.permute.xlu0 %3169
      %3171 = vrot.lane.b32.xlu0 %v3124, 126
      %v3172 = vpop.permute.xlu0 %3171
      %v3173 = vsel %vm343, %v3142, %v3144
      %v3174 = vsel %vm343, %v3144, %v3146
      %v3175 = vsel %vm343, %v3146, %v3148
      %v3176 = vsel %vm343, %v3150, %v3152
      %v3177 = vsel %vm343, %v3152, %v3154
      %v3178 = vsel %vm343, %v3154, %v3156
      %v3179 = vsel %vm343, %v3158, %v3160
      %v3180 = vsel %vm343, %v3160, %v3162
      %v3181 = vsel %vm343, %v3162, %v3164
      %v3182 = vsel %vm343, %v3166, %v3168
      %v3183 = vsel %vm343, %v3168, %v3170
      %v3184 = vsel %vm343, %v3170, %v3172
      %3201 = vst [vmem:[#allocation4 + $0x140] sm:$0xff] %v3173
      %3202 = vst [vmem:[#allocation4 + $0x148] sm:$0xff] %v3174
      %3203 = vst [vmem:[#allocation4 + $0x150] sm:$0xff] %v3175
      %3204 = vst.msk [vmem:[#allocation4 + $0x158] sm:$0xff] %vm203, %v3148
      %3205 = vst [vmem:[#allocation4 + $0x168] sm:$0xff] %v3176
      %3206 = vst [vmem:[#allocation4 + $0x170] sm:$0xff] %v3177
      %3207 = vst [vmem:[#allocation4 + $0x178] sm:$0xff] %v3178
      %3208 = vst.msk [vmem:[#allocation4 + $0x180] sm:$0xff] %vm203, %v3156
      %3209 = vst [vmem:[#allocation4 + $0x190] sm:$0xff] %v3179
      %3210 = vst [vmem:[#allocation4 + $0x198] sm:$0xff] %v3180
      %3211 = vst [vmem:[#allocation4 + $0x1a0] sm:$0xff] %v3181
      %3212 = vst.msk [vmem:[#allocation4 + $0x1a8] sm:$0xff] %vm203, %v3164
      %3213 = vst [vmem:[#allocation4 + $0x1b8] sm:$0xff] %v3182
      %3214 = vst [vmem:[#allocation4 + $0x1c0] sm:$0xff] %v3183
      %3215 = vst [vmem:[#allocation4 + $0x1c8] sm:$0xff] %v3184
      %3216 = vst.msk [vmem:[#allocation4 + $0x1d0] sm:$0xff] %vm203, %v3172
      %v3217 = vld [vmem:[#allocation2] sm:$0xff]
      %v3218 = vld [vmem:[#allocation2 + $0x8] sm:$0xff]
      %v3219 = vld [vmem:[#allocation2 + $0x10] sm:$0xff]
      %v3220 = vld [vmem:[#allocation2 + $0x18] sm:$0xff]
      %v3221 = vld [vmem:[#allocation2 + $0x30] sm:$0xff]
      %v3222 = vld [vmem:[#allocation2 + $0x38] sm:$0xff]
      %v3223 = vld [vmem:[#allocation2 + $0x40] sm:$0xff]
      %v3224 = vld [vmem:[#allocation2 + $0x48] sm:$0xff]
      %v3225 = vld [vmem:[#allocation2 + $0x60] sm:$0xff]
      %v3226 = vld [vmem:[#allocation2 + $0x68] sm:$0xff]
      %v3227 = vld [vmem:[#allocation2 + $0x70] sm:$0xff]
      %v3228 = vld [vmem:[#allocation2 + $0x78] sm:$0xff]
      %v3229 = vld [vmem:[#allocation2 + $0x90] sm:$0xff]
      %v3230 = vld [vmem:[#allocation2 + $0x98] sm:$0xff]
      %v3231 = vld [vmem:[#allocation2 + $0xa0] sm:$0xff]
      %v3232 = vld [vmem:[#allocation2 + $0xa8] sm:$0xff]
      %3249 = vrot.lane.b32.xlu0 %v3217, 96
      %v3250 = vpop.permute.xlu0 %3249
      %3251 = vrot.lane.b32.xlu0 %v3218, 96
      %v3252 = vpop.permute.xlu0 %3251
      %3253 = vrot.lane.b32.xlu0 %v3219, 96
      %v3254 = vpop.permute.xlu0 %3253
      %3255 = vrot.lane.b32.xlu0 %v3220, 96
      %v3256 = vpop.permute.xlu0 %3255
      %3257 = vrot.lane.b32.xlu0 %v3221, 96
      %v3258 = vpop.permute.xlu0 %3257
      %3259 = vrot.lane.b32.xlu0 %v3222, 96
      %v3260 = vpop.permute.xlu0 %3259
      %3261 = vrot.lane.b32.xlu0 %v3223, 96
      %v3262 = vpop.permute.xlu0 %3261
      %3263 = vrot.lane.b32.xlu0 %v3224, 96
      %v3264 = vpop.permute.xlu0 %3263
      %3265 = vrot.lane.b32.xlu0 %v3225, 96
      %v3266 = vpop.permute.xlu0 %3265
      %3267 = vrot.lane.b32.xlu0 %v3226, 96
      %v3268 = vpop.permute.xlu0 %3267
      %3269 = vrot.lane.b32.xlu0 %v3227, 96
      %v3270 = vpop.permute.xlu0 %3269
      %3271 = vrot.lane.b32.xlu0 %v3228, 96
      %v3272 = vpop.permute.xlu0 %3271
      %3273 = vrot.lane.b32.xlu0 %v3229, 96
      %v3274 = vpop.permute.xlu0 %3273
      %3275 = vrot.lane.b32.xlu0 %v3230, 96
      %v3276 = vpop.permute.xlu0 %3275
      %3277 = vrot.lane.b32.xlu0 %v3231, 96
      %v3278 = vpop.permute.xlu0 %3277
      %3279 = vrot.lane.b32.xlu0 %v3232, 96
      %v3280 = vpop.permute.xlu0 %3279
      %v3281 = vsel %vm424, %v3250, %v3252
      %v3282 = vsel %vm424, %v3252, %v3254
      %v3283 = vsel %vm424, %v3254, %v3256
      %v3284 = vsel %vm424, %v3258, %v3260
      %v3285 = vsel %vm424, %v3260, %v3262
      %v3286 = vsel %vm424, %v3262, %v3264
      %v3287 = vsel %vm424, %v3266, %v3268
      %v3288 = vsel %vm424, %v3268, %v3270
      %v3289 = vsel %vm424, %v3270, %v3272
      %v3290 = vsel %vm424, %v3274, %v3276
      %v3291 = vsel %vm424, %v3276, %v3278
      %v3292 = vsel %vm424, %v3278, %v3280
      %3309 = vst [vmem:[#allocation4 + $0x1e0] sm:$0xff] %v3281
      %3310 = vst [vmem:[#allocation4 + $0x1e8] sm:$0xff] %v3282
      %3311 = vst [vmem:[#allocation4 + $0x1f0] sm:$0xff] %v3283
      %3312 = vst.msk [vmem:[#allocation4 + $0x1f8] sm:$0xff] %vm203, %v3256
      %3313 = vst [vmem:[#allocation4 + $0x208] sm:$0xff] %v3284
      %3314 = vst [vmem:[#allocation4 + $0x210] sm:$0xff] %v3285
      %3315 = vst [vmem:[#allocation4 + $0x218] sm:$0xff] %v3286
      %3316 = vst.msk [vmem:[#allocation4 + $0x220] sm:$0xff] %vm203, %v3264
      %3317 = vst [vmem:[#allocation4 + $0x230] sm:$0xff] %v3287
      %3318 = vst [vmem:[#allocation4 + $0x238] sm:$0xff] %v3288
      %3319 = vst [vmem:[#allocation4 + $0x240] sm:$0xff] %v3289
      %3320 = vst.msk [vmem:[#allocation4 + $0x248] sm:$0xff] %vm203, %v3272
      %3321 = vst [vmem:[#allocation4 + $0x258] sm:$0xff] %v3290
      %3322 = vst [vmem:[#allocation4 + $0x260] sm:$0xff] %v3291
      %3323 = vst [vmem:[#allocation4 + $0x268] sm:$0xff] %v3292
      %3324 = vst.msk [vmem:[#allocation4 + $0x270] sm:$0xff] %vm203, %v3280
      %v3325 = vld [vmem:[#allocation2] sm:$0xff]
      %v3326 = vld [vmem:[#allocation2 + $0x8] sm:$0xff]
      %v3327 = vld [vmem:[#allocation2 + $0x10] sm:$0xff]
      %v3328 = vld [vmem:[#allocation2 + $0x18] sm:$0xff]
      %v3329 = vld [vmem:[#allocation2 + $0x30] sm:$0xff]
      %v3330 = vld [vmem:[#allocation2 + $0x38] sm:$0xff]
      %v3331 = vld [vmem:[#allocation2 + $0x40] sm:$0xff]
      %v3332 = vld [vmem:[#allocation2 + $0x48] sm:$0xff]
      %v3333 = vld [vmem:[#allocation2 + $0x60] sm:$0xff]
      %v3334 = vld [vmem:[#allocation2 + $0x68] sm:$0xff]
      %v3335 = vld [vmem:[#allocation2 + $0x70] sm:$0xff]
      %v3336 = vld [vmem:[#allocation2 + $0x78] sm:$0xff]
      %v3337 = vld [vmem:[#allocation2 + $0x90] sm:$0xff]
      %v3338 = vld [vmem:[#allocation2 + $0x98] sm:$0xff]
      %v3339 = vld [vmem:[#allocation2 + $0xa0] sm:$0xff]
      %v3340 = vld [vmem:[#allocation2 + $0xa8] sm:$0xff]
      %3357 = vrot.lane.b32.xlu0 %v3325, 95
      %v3358 = vpop.permute.xlu0 %3357
      %3359 = vrot.lane.b32.xlu0 %v3326, 95
      %v3360 = vpop.permute.xlu0 %3359
      %3361 = vrot.lane.b32.xlu0 %v3327, 95
      %v3362 = vpop.permute.xlu0 %3361
      %3363 = vrot.lane.b32.xlu0 %v3328, 95
      %v3364 = vpop.permute.xlu0 %3363
      %3365 = vrot.lane.b32.xlu0 %v3329, 95
      %v3366 = vpop.permute.xlu0 %3365
      %3367 = vrot.lane.b32.xlu0 %v3330, 95
      %v3368 = vpop.permute.xlu0 %3367
      %3369 = vrot.lane.b32.xlu0 %v3331, 95
      %v3370 = vpop.permute.xlu0 %3369
      %3371 = vrot.lane.b32.xlu0 %v3332, 95
      %v3372 = vpop.permute.xlu0 %3371
      %3373 = vrot.lane.b32.xlu0 %v3333, 95
      %v3374 = vpop.permute.xlu0 %3373
      %3375 = vrot.lane.b32.xlu0 %v3334, 95
      %v3376 = vpop.permute.xlu0 %3375
      %3377 = vrot.lane.b32.xlu0 %v3335, 95
      %v3378 = vpop.permute.xlu0 %3377
      %3379 = vrot.lane.b32.xlu0 %v3336, 95
      %v3380 = vpop.permute.xlu0 %3379
      %3381 = vrot.lane.b32.xlu0 %v3337, 95
      %v3382 = vpop.permute.xlu0 %3381
      %3383 = vrot.lane.b32.xlu0 %v3338, 95
      %v3384 = vpop.permute.xlu0 %3383
      %3385 = vrot.lane.b32.xlu0 %v3339, 95
      %v3386 = vpop.permute.xlu0 %3385
      %3387 = vrot.lane.b32.xlu0 %v3340, 95
      %v3388 = vpop.permute.xlu0 %3387
      %v3389 = vsel %vm505, %v3358, %v3360
      %v3390 = vsel %vm505, %v3360, %v3362
      %v3391 = vsel %vm505, %v3362, %v3364
      %v3392 = vsel %vm505, %v3366, %v3368
      %v3393 = vsel %vm505, %v3368, %v3370
      %v3394 = vsel %vm505, %v3370, %v3372
      %v3395 = vsel %vm505, %v3374, %v3376
      %v3396 = vsel %vm505, %v3376, %v3378
      %v3397 = vsel %vm505, %v3378, %v3380
      %v3398 = vsel %vm505, %v3382, %v3384
      %v3399 = vsel %vm505, %v3384, %v3386
      %v3400 = vsel %vm505, %v3386, %v3388
      %3417 = vst [vmem:[#allocation4 + $0x280] sm:$0xff] %v3389
      %3418 = vst [vmem:[#allocation4 + $0x288] sm:$0xff] %v3390
      %3419 = vst [vmem:[#allocation4 + $0x290] sm:$0xff] %v3391
      %3420 = vst.msk [vmem:[#allocation4 + $0x298] sm:$0xff] %vm203, %v3364
      %3421 = vst [vmem:[#allocation4 + $0x2a8] sm:$0xff] %v3392
      %3422 = vst [vmem:[#allocation4 + $0x2b0] sm:$0xff] %v3393
      %3423 = vst [vmem:[#allocation4 + $0x2b8] sm:$0xff] %v3394
      %3424 = vst.msk [vmem:[#allocation4 + $0x2c0] sm:$0xff] %vm203, %v3372
      %3425 = vst [vmem:[#allocation4 + $0x2d0] sm:$0xff] %v3395
      %3426 = vst [vmem:[#allocation4 + $0x2d8] sm:$0xff] %v3396
      %3427 = vst [vmem:[#allocation4 + $0x2e0] sm:$0xff] %v3397
      %3428 = vst.msk [vmem:[#allocation4 + $0x2e8] sm:$0xff] %vm203, %v3380
      %3429 = vst [vmem:[#allocation4 + $0x2f8] sm:$0xff] %v3398
      %3430 = vst [vmem:[#allocation4 + $0x300] sm:$0xff] %v3399
      %3431 = vst [vmem:[#allocation4 + $0x308] sm:$0xff] %v3400
      %3432 = vst.msk [vmem:[#allocation4 + $0x310] sm:$0xff] %vm203, %v3388
      %v3433 = vld [vmem:[#allocation2] sm:$0xff]
      %v3434 = vld [vmem:[#allocation2 + $0x8] sm:$0xff]
      %v3435 = vld [vmem:[#allocation2 + $0x10] sm:$0xff]
      %v3436 = vld [vmem:[#allocation2 + $0x18] sm:$0xff]
      %v3437 = vld [vmem:[#allocation2 + $0x30] sm:$0xff]
      %v3438 = vld [vmem:[#allocation2 + $0x38] sm:$0xff]
      %v3439 = vld [vmem:[#allocation2 + $0x40] sm:$0xff]
      %v3440 = vld [vmem:[#allocation2 + $0x48] sm:$0xff]
      %v3441 = vld [vmem:[#allocation2 + $0x60] sm:$0xff]
      %v3442 = vld [vmem:[#allocation2 + $0x68] sm:$0xff]
      %v3443 = vld [vmem:[#allocation2 + $0x70] sm:$0xff]
      %v3444 = vld [vmem:[#allocation2 + $0x78] sm:$0xff]
      %v3445 = vld [vmem:[#allocation2 + $0x90] sm:$0xff]
      %v3446 = vld [vmem:[#allocation2 + $0x98] sm:$0xff]
      %v3447 = vld [vmem:[#allocation2 + $0xa0] sm:$0xff]
      %v3448 = vld [vmem:[#allocation2 + $0xa8] sm:$0xff]
      %3465 = vrot.lane.b32.xlu0 %v3433, 94
      %v3466 = vpop.permute.xlu0 %3465
      %3467 = vrot.lane.b32.xlu0 %v3434, 94
      %v3468 = vpop.permute.xlu0 %3467
      %3469 = vrot.lane.b32.xlu0 %v3435, 94
      %v3470 = vpop.permute.xlu0 %3469
      %3471 = vrot.lane.b32.xlu0 %v3436, 94
      %v3472 = vpop.permute.xlu0 %3471
      %3473 = vrot.lane.b32.xlu0 %v3437, 94
      %v3474 = vpop.permute.xlu0 %3473
      %3475 = vrot.lane.b32.xlu0 %v3438, 94
      %v3476 = vpop.permute.xlu0 %3475
      %3477 = vrot.lane.b32.xlu0 %v3439, 94
      %v3478 = vpop.permute.xlu0 %3477
      %3479 = vrot.lane.b32.xlu0 %v3440, 94
      %v3480 = vpop.permute.xlu0 %3479
      %3481 = vrot.lane.b32.xlu0 %v3441, 94
      %v3482 = vpop.permute.xlu0 %3481
      %3483 = vrot.lane.b32.xlu0 %v3442, 94
      %v3484 = vpop.permute.xlu0 %3483
      %3485 = vrot.lane.b32.xlu0 %v3443, 94
      %v3486 = vpop.permute.xlu0 %3485
      %3487 = vrot.lane.b32.xlu0 %v3444, 94
      %v3488 = vpop.permute.xlu0 %3487
      %3489 = vrot.lane.b32.xlu0 %v3445, 94
      %v3490 = vpop.permute.xlu0 %3489
      %3491 = vrot.lane.b32.xlu0 %v3446, 94
      %v3492 = vpop.permute.xlu0 %3491
      %3493 = vrot.lane.b32.xlu0 %v3447, 94
      %v3494 = vpop.permute.xlu0 %3493
      %3495 = vrot.lane.b32.xlu0 %v3448, 94
      %v3496 = vpop.permute.xlu0 %3495
      %v3497 = vsel %vm586, %v3466, %v3468
      %v3498 = vsel %vm586, %v3468, %v3470
      %v3499 = vsel %vm586, %v3470, %v3472
      %v3500 = vsel %vm586, %v3474, %v3476
      %v3501 = vsel %vm586, %v3476, %v3478
      %v3502 = vsel %vm586, %v3478, %v3480
      %v3503 = vsel %vm586, %v3482, %v3484
      %v3504 = vsel %vm586, %v3484, %v3486
      %v3505 = vsel %vm586, %v3486, %v3488
      %v3506 = vsel %vm586, %v3490, %v3492
      %v3507 = vsel %vm586, %v3492, %v3494
      %v3508 = vsel %vm586, %v3494, %v3496
      %3525 = vst [vmem:[#allocation4 + $0x320] sm:$0xff] %v3497
      %3526 = vst [vmem:[#allocation4 + $0x328] sm:$0xff] %v3498
      %3527 = vst [vmem:[#allocation4 + $0x330] sm:$0xff] %v3499
      %3528 = vst.msk [vmem:[#allocation4 + $0x338] sm:$0xff] %vm203, %v3472
      %3529 = vst [vmem:[#allocation4 + $0x348] sm:$0xff] %v3500
      %3530 = vst [vmem:[#allocation4 + $0x350] sm:$0xff] %v3501
      %3531 = vst [vmem:[#allocation4 + $0x358] sm:$0xff] %v3502
      %3532 = vst.msk [vmem:[#allocation4 + $0x360] sm:$0xff] %vm203, %v3480
      %3533 = vst [vmem:[#allocation4 + $0x370] sm:$0xff] %v3503
      %3534 = vst [vmem:[#allocation4 + $0x378] sm:$0xff] %v3504
      %3535 = vst [vmem:[#allocation4 + $0x380] sm:$0xff] %v3505
      %3536 = vst.msk [vmem:[#allocation4 + $0x388] sm:$0xff] %vm203, %v3488
      %3537 = vst [vmem:[#allocation4 + $0x398] sm:$0xff] %v3506
      %3538 = vst [vmem:[#allocation4 + $0x3a0] sm:$0xff] %v3507
      %3539 = vst [vmem:[#allocation4 + $0x3a8] sm:$0xff] %v3508
      %3540 = vst.msk [vmem:[#allocation4 + $0x3b0] sm:$0xff] %vm203, %v3496
      %v3541 = vld [vmem:[#allocation2] sm:$0xff]
      %v3542 = vld [vmem:[#allocation2 + $0x8] sm:$0xff]
      %v3543 = vld [vmem:[#allocation2 + $0x10] sm:$0xff]
      %v3544 = vld [vmem:[#allocation2 + $0x18] sm:$0xff]
      %v3545 = vld [vmem:[#allocation2 + $0x30] sm:$0xff]
      %v3546 = vld [vmem:[#allocation2 + $0x38] sm:$0xff]
      %v3547 = vld [vmem:[#allocation2 + $0x40] sm:$0xff]
      %v3548 = vld [vmem:[#allocation2 + $0x48] sm:$0xff]
      %v3549 = vld [vmem:[#allocation2 + $0x60] sm:$0xff]
      %v3550 = vld [vmem:[#allocation2 + $0x68] sm:$0xff]
      %v3551 = vld [vmem:[#allocation2 + $0x70] sm:$0xff]
      %v3552 = vld [vmem:[#allocation2 + $0x78] sm:$0xff]
      %v3553 = vld [vmem:[#allocation2 + $0x90] sm:$0xff]
      %v3554 = vld [vmem:[#allocation2 + $0x98] sm:$0xff]
      %v3555 = vld [vmem:[#allocation2 + $0xa0] sm:$0xff]
      %v3556 = vld [vmem:[#allocation2 + $0xa8] sm:$0xff]
      %3573 = vrot.lane.b32.xlu0 %v3541, 64
      %v3574 = vpop.permute.xlu0 %3573
      %3575 = vrot.lane.b32.xlu0 %v3542, 64
      %v3576 = vpop.permute.xlu0 %3575
      %3577 = vrot.lane.b32.xlu0 %v3543, 64
      %v3578 = vpop.permute.xlu0 %3577
      %3579 = vrot.lane.b32.xlu0 %v3544, 64
      %v3580 = vpop.permute.xlu0 %3579
      %3581 = vrot.lane.b32.xlu0 %v3545, 64
      %v3582 = vpop.permute.xlu0 %3581
      %3583 = vrot.lane.b32.xlu0 %v3546, 64
      %v3584 = vpop.permute.xlu0 %3583
      %3585 = vrot.lane.b32.xlu0 %v3547, 64
      %v3586 = vpop.permute.xlu0 %3585
      %3587 = vrot.lane.b32.xlu0 %v3548, 64
      %v3588 = vpop.permute.xlu0 %3587
      %3589 = vrot.lane.b32.xlu0 %v3549, 64
      %v3590 = vpop.permute.xlu0 %3589
      %3591 = vrot.lane.b32.xlu0 %v3550, 64
      %v3592 = vpop.permute.xlu0 %3591
      %3593 = vrot.lane.b32.xlu0 %v3551, 64
      %v3594 = vpop.permute.xlu0 %3593
      %3595 = vrot.lane.b32.xlu0 %v3552, 64
      %v3596 = vpop.permute.xlu0 %3595
      %3597 = vrot.lane.b32.xlu0 %v3553, 64
      %v3598 = vpop.permute.xlu0 %3597
      %3599 = vrot.lane.b32.xlu0 %v3554, 64
      %v3600 = vpop.permute.xlu0 %3599
      %3601 = vrot.lane.b32.xlu0 %v3555, 64
      %v3602 = vpop.permute.xlu0 %3601
      %3603 = vrot.lane.b32.xlu0 %v3556, 64
      %v3604 = vpop.permute.xlu0 %3603
      %v3605 = vsel %vm203, %v3574, %v3576
      %v3606 = vsel %vm203, %v3576, %v3578
      %v3607 = vsel %vm203, %v3578, %v3580
      %v3608 = vsel %vm203, %v3582, %v3584
      %v3609 = vsel %vm203, %v3584, %v3586
      %v3610 = vsel %vm203, %v3586, %v3588
      %v3611 = vsel %vm203, %v3590, %v3592
      %v3612 = vsel %vm203, %v3592, %v3594
      %v3613 = vsel %vm203, %v3594, %v3596
      %v3614 = vsel %vm203, %v3598, %v3600
      %v3615 = vsel %vm203, %v3600, %v3602
      %v3616 = vsel %vm203, %v3602, %v3604
      %3633 = vst [vmem:[#allocation4 + $0x3c0] sm:$0xff] %v3605
      %3634 = vst [vmem:[#allocation4 + $0x3c8] sm:$0xff] %v3606
      %3635 = vst [vmem:[#allocation4 + $0x3d0] sm:$0xff] %v3607
      %3636 = vst.msk [vmem:[#allocation4 + $0x3d8] sm:$0xff] %vm203, %v3580
      %3637 = vst [vmem:[#allocation4 + $0x3e8] sm:$0xff] %v3608
      %3638 = vst [vmem:[#allocation4 + $0x3f0] sm:$0xff] %v3609
      %3639 = vst [vmem:[#allocation4 + $0x3f8] sm:$0xff] %v3610
      %3640 = vst.msk [vmem:[#allocation4 + $0x400] sm:$0xff] %vm203, %v3588
      %3641 = vst [vmem:[#allocation4 + $0x410] sm:$0xff] %v3611
      %3642 = vst [vmem:[#allocation4 + $0x418] sm:$0xff] %v3612
      %3643 = vst [vmem:[#allocation4 + $0x420] sm:$0xff] %v3613
      %3644 = vst.msk [vmem:[#allocation4 + $0x428] sm:$0xff] %vm203, %v3596
      %3645 = vst [vmem:[#allocation4 + $0x438] sm:$0xff] %v3614
      %3646 = vst [vmem:[#allocation4 + $0x440] sm:$0xff] %v3615
      %3647 = vst [vmem:[#allocation4 + $0x448] sm:$0xff] %v3616
      %3648 = vst.msk [vmem:[#allocation4 + $0x450] sm:$0xff] %vm203, %v3604
      %v3649 = vld [vmem:[#allocation2] sm:$0xff]
      %v3650 = vld [vmem:[#allocation2 + $0x8] sm:$0xff]
      %v3651 = vld [vmem:[#allocation2 + $0x10] sm:$0xff]
      %v3652 = vld [vmem:[#allocation2 + $0x18] sm:$0xff]
      %v3653 = vld [vmem:[#allocation2 + $0x20] sm:$0xff]
      %v3654 = vld [vmem:[#allocation2 + $0x30] sm:$0xff]
      %v3655 = vld [vmem:[#allocation2 + $0x38] sm:$0xff]
      %v3656 = vld [vmem:[#allocation2 + $0x40] sm:$0xff]
      %v3657 = vld [vmem:[#allocation2 + $0x48] sm:$0xff]
      %v3658 = vld [vmem:[#allocation2 + $0x50] sm:$0xff]
      %v3659 = vld [vmem:[#allocation2 + $0x60] sm:$0xff]
      %v3660 = vld [vmem:[#allocation2 + $0x68] sm:$0xff]
      %v3661 = vld [vmem:[#allocation2 + $0x70] sm:$0xff]
      %v3662 = vld [vmem:[#allocation2 + $0x78] sm:$0xff]
      %v3663 = vld [vmem:[#allocation2 + $0x80] sm:$0xff]
      %v3664 = vld [vmem:[#allocation2 + $0x90] sm:$0xff]
      %v3665 = vld [vmem:[#allocation2 + $0x98] sm:$0xff]
      %v3666 = vld [vmem:[#allocation2 + $0xa0] sm:$0xff]
      %v3667 = vld [vmem:[#allocation2 + $0xa8] sm:$0xff]
      %v3668 = vld [vmem:[#allocation2 + $0xb0] sm:$0xff]
      %3689 = vrot.lane.b32.xlu0 %v3649, 63
      %v3690 = vpop.permute.xlu0 %3689
      %3691 = vrot.lane.b32.xlu0 %v3650, 63
      %v3692 = vpop.permute.xlu0 %3691
      %3693 = vrot.lane.b32.xlu0 %v3651, 63
      %v3694 = vpop.permute.xlu0 %3693
      %3695 = vrot.lane.b32.xlu0 %v3652, 63
      %v3696 = vpop.permute.xlu0 %3695
      %3697 = vrot.lane.b32.xlu0 %v3653, 63
      %v3698 = vpop.permute.xlu0 %3697
      %3699 = vrot.lane.b32.xlu0 %v3654, 63
      %v3700 = vpop.permute.xlu0 %3699
      %3701 = vrot.lane.b32.xlu0 %v3655, 63
      %v3702 = vpop.permute.xlu0 %3701
      %3703 = vrot.lane.b32.xlu0 %v3656, 63
      %v3704 = vpop.permute.xlu0 %3703
      %3705 = vrot.lane.b32.xlu0 %v3657, 63
      %v3706 = vpop.permute.xlu0 %3705
      %3707 = vrot.lane.b32.xlu0 %v3658, 63
      %v3708 = vpop.permute.xlu0 %3707
      %3709 = vrot.lane.b32.xlu0 %v3659, 63
      %v3710 = vpop.permute.xlu0 %3709
      %3711 = vrot.lane.b32.xlu0 %v3660, 63
      %v3712 = vpop.permute.xlu0 %3711
      %3713 = vrot.lane.b32.xlu0 %v3661, 63
      %v3714 = vpop.permute.xlu0 %3713
      %3715 = vrot.lane.b32.xlu0 %v3662, 63
      %v3716 = vpop.permute.xlu0 %3715
      %3717 = vrot.lane.b32.xlu0 %v3663, 63
      %v3718 = vpop.permute.xlu0 %3717
      %3719 = vrot.lane.b32.xlu0 %v3664, 63
      %v3720 = vpop.permute.xlu0 %3719
      %3721 = vrot.lane.b32.xlu0 %v3665, 63
      %v3722 = vpop.permute.xlu0 %3721
      %3723 = vrot.lane.b32.xlu0 %v3666, 63
      %v3724 = vpop.permute.xlu0 %3723
      %3725 = vrot.lane.b32.xlu0 %v3667, 63
      %v3726 = vpop.permute.xlu0 %3725
      %3727 = vrot.lane.b32.xlu0 %v3668, 63
      %v3728 = vpop.permute.xlu0 %3727
      %v3729 = vsel %vm763, %v3690, %v3692
      %v3730 = vsel %vm763, %v3692, %v3694
      %v3731 = vsel %vm763, %v3694, %v3696
      %v3732 = vsel %vm763, %v3696, %v3698
      %v3733 = vsel %vm763, %v3700, %v3702
      %v3734 = vsel %vm763, %v3702, %v3704
      %v3735 = vsel %vm763, %v3704, %v3706
      %v3736 = vsel %vm763, %v3706, %v3708
      %v3737 = vsel %vm763, %v3710, %v3712
      %v3738 = vsel %vm763, %v3712, %v3714
      %v3739 = vsel %vm763, %v3714, %v3716
      %v3740 = vsel %vm763, %v3716, %v3718
      %v3741 = vsel %vm763, %v3720, %v3722
      %v3742 = vsel %vm763, %v3722, %v3724
      %v3743 = vsel %vm763, %v3724, %v3726
      %v3744 = vsel %vm763, %v3726, %v3728
      %3761 = vst [vmem:[#allocation4 + $0x460] sm:$0xff] %v3729
      %3762 = vst [vmem:[#allocation4 + $0x468] sm:$0xff] %v3730
      %3763 = vst [vmem:[#allocation4 + $0x470] sm:$0xff] %v3731
      %3764 = vst.msk [vmem:[#allocation4 + $0x478] sm:$0xff] %vm203, %v3732
      %3765 = vst [vmem:[#allocation4 + $0x488] sm:$0xff] %v3733
      %3766 = vst [vmem:[#allocation4 + $0x490] sm:$0xff] %v3734
      %3767 = vst [vmem:[#allocation4 + $0x498] sm:$0xff] %v3735
      %3768 = vst.msk [vmem:[#allocation4 + $0x4a0] sm:$0xff] %vm203, %v3736
      %3769 = vst [vmem:[#allocation4 + $0x4b0] sm:$0xff] %v3737
      %3770 = vst [vmem:[#allocation4 + $0x4b8] sm:$0xff] %v3738
      %3771 = vst [vmem:[#allocation4 + $0x4c0] sm:$0xff] %v3739
      %3772 = vst.msk [vmem:[#allocation4 + $0x4c8] sm:$0xff] %vm203, %v3740
      %3773 = vst [vmem:[#allocation4 + $0x4d8] sm:$0xff] %v3741
      %3774 = vst [vmem:[#allocation4 + $0x4e0] sm:$0xff] %v3742
      %3775 = vst [vmem:[#allocation4 + $0x4e8] sm:$0xff] %v3743
      %3776 = vst.msk [vmem:[#allocation4 + $0x4f0] sm:$0xff] %vm203, %v3744
      %v3777 = vld [vmem:[#allocation2] sm:$0xff]
      %v3778 = vld [vmem:[#allocation2 + $0x8] sm:$0xff]
      %v3779 = vld [vmem:[#allocation2 + $0x10] sm:$0xff]
      %v3780 = vld [vmem:[#allocation2 + $0x18] sm:$0xff]
      %v3781 = vld [vmem:[#allocation2 + $0x20] sm:$0xff]
      %v3782 = vld [vmem:[#allocation2 + $0x30] sm:$0xff]
      %v3783 = vld [vmem:[#allocation2 + $0x38] sm:$0xff]
      %v3784 = vld [vmem:[#allocation2 + $0x40] sm:$0xff]
      %v3785 = vld [vmem:[#allocation2 + $0x48] sm:$0xff]
      %v3786 = vld [vmem:[#allocation2 + $0x50] sm:$0xff]
      %v3787 = vld [vmem:[#allocation2 + $0x60] sm:$0xff]
      %v3788 = vld [vmem:[#allocation2 + $0x68] sm:$0xff]
      %v3789 = vld [vmem:[#allocation2 + $0x70] sm:$0xff]
      %v3790 = vld [vmem:[#allocation2 + $0x78] sm:$0xff]
      %v3791 = vld [vmem:[#allocation2 + $0x80] sm:$0xff]
      %v3792 = vld [vmem:[#allocation2 + $0x90] sm:$0xff]
      %v3793 = vld [vmem:[#allocation2 + $0x98] sm:$0xff]
      %v3794 = vld [vmem:[#allocation2 + $0xa0] sm:$0xff]
      %v3795 = vld [vmem:[#allocation2 + $0xa8] sm:$0xff]
      %v3796 = vld [vmem:[#allocation2 + $0xb0] sm:$0xff]
      %3817 = vrot.lane.b32.xlu0 %v3777, 62
      %v3818 = vpop.permute.xlu0 %3817
      %3819 = vrot.lane.b32.xlu0 %v3778, 62
      %v3820 = vpop.permute.xlu0 %3819
      %3821 = vrot.lane.b32.xlu0 %v3779, 62
      %v3822 = vpop.permute.xlu0 %3821
      %3823 = vrot.lane.b32.xlu0 %v3780, 62
      %v3824 = vpop.permute.xlu0 %3823
      %3825 = vrot.lane.b32.xlu0 %v3781, 62
      %v3826 = vpop.permute.xlu0 %3825
      %3827 = vrot.lane.b32.xlu0 %v3782, 62
      %v3828 = vpop.permute.xlu0 %3827
      %3829 = vrot.lane.b32.xlu0 %v3783, 62
      %v3830 = vpop.permute.xlu0 %3829
      %3831 = vrot.lane.b32.xlu0 %v3784, 62
      %v3832 = vpop.permute.xlu0 %3831
      %3833 = vrot.lane.b32.xlu0 %v3785, 62
      %v3834 = vpop.permute.xlu0 %3833
      %3835 = vrot.lane.b32.xlu0 %v3786, 62
      %v3836 = vpop.permute.xlu0 %3835
      %3837 = vrot.lane.b32.xlu0 %v3787, 62
      %v3838 = vpop.permute.xlu0 %3837
      %3839 = vrot.lane.b32.xlu0 %v3788, 62
      %v3840 = vpop.permute.xlu0 %3839
      %3841 = vrot.lane.b32.xlu0 %v3789, 62
      %v3842 = vpop.permute.xlu0 %3841
      %3843 = vrot.lane.b32.xlu0 %v3790, 62
      %v3844 = vpop.permute.xlu0 %3843
      %3845 = vrot.lane.b32.xlu0 %v3791, 62
      %v3846 = vpop.permute.xlu0 %3845
      %3847 = vrot.lane.b32.xlu0 %v3792, 62
      %v3848 = vpop.permute.xlu0 %3847
      %3849 = vrot.lane.b32.xlu0 %v3793, 62
      %v3850 = vpop.permute.xlu0 %3849
      %3851 = vrot.lane.b32.xlu0 %v3794, 62
      %v3852 = vpop.permute.xlu0 %3851
      %3853 = vrot.lane.b32.xlu0 %v3795, 62
      %v3854 = vpop.permute.xlu0 %3853
      %3855 = vrot.lane.b32.xlu0 %v3796, 62
      %v3856 = vpop.permute.xlu0 %3855
      %v3857 = vsel %vm864, %v3818, %v3820
      %v3858 = vsel %vm864, %v3820, %v3822
      %v3859 = vsel %vm864, %v3822, %v3824
      %v3860 = vsel %vm864, %v3824, %v3826
      %v3861 = vsel %vm864, %v3828, %v3830
      %v3862 = vsel %vm864, %v3830, %v3832
      %v3863 = vsel %vm864, %v3832, %v3834
      %v3864 = vsel %vm864, %v3834, %v3836
      %v3865 = vsel %vm864, %v3838, %v3840
      %v3866 = vsel %vm864, %v3840, %v3842
      %v3867 = vsel %vm864, %v3842, %v3844
      %v3868 = vsel %vm864, %v3844, %v3846
      %v3869 = vsel %vm864, %v3848, %v3850
      %v3870 = vsel %vm864, %v3850, %v3852
      %v3871 = vsel %vm864, %v3852, %v3854
      %v3872 = vsel %vm864, %v3854, %v3856
      %3889 = vst [vmem:[#allocation4 + $0x500] sm:$0xff] %v3857
      %3890 = vst [vmem:[#allocation4 + $0x508] sm:$0xff] %v3858
      %3891 = vst [vmem:[#allocation4 + $0x510] sm:$0xff] %v3859
      %3892 = vst.msk [vmem:[#allocation4 + $0x518] sm:$0xff] %vm203, %v3860
      %3893 = vst [vmem:[#allocation4 + $0x528] sm:$0xff] %v3861
      %3894 = vst [vmem:[#allocation4 + $0x530] sm:$0xff] %v3862
      %3895 = vst [vmem:[#allocation4 + $0x538] sm:$0xff] %v3863
      %3896 = vst.msk [vmem:[#allocation4 + $0x540] sm:$0xff] %vm203, %v3864
      %3897 = vst [vmem:[#allocation4 + $0x550] sm:$0xff] %v3865
      %3898 = vst [vmem:[#allocation4 + $0x558] sm:$0xff] %v3866
      %3899 = vst [vmem:[#allocation4 + $0x560] sm:$0xff] %v3867
      %3900 = vst.msk [vmem:[#allocation4 + $0x568] sm:$0xff] %vm203, %v3868
      %3901 = vst [vmem:[#allocation4 + $0x578] sm:$0xff] %v3869
      %3902 = vst [vmem:[#allocation4 + $0x580] sm:$0xff] %v3870
      %3903 = vst [vmem:[#allocation4 + $0x588] sm:$0xff] %v3871
      %3904 = vst.msk [vmem:[#allocation4 + $0x590] sm:$0xff] %vm203, %v3872
      %s3905 = scalar_lea.vmem %s1, 192
      %v3906 = vld [vmem:[%s3905] sm:$0xff]
      %v3907 = vld [vmem:[%s3905 + $0x8] sm:$0xff]
      %v3908 = vld [vmem:[%s3905 + $0x10] sm:$0xff]
      %v3909 = vld [vmem:[%s3905 + $0x18] sm:$0xff]
      %v3910 = vld [vmem:[%s3905 + $0x20] sm:$0xff]
      %v3911 = vld [vmem:[%s3905 + $0x28] sm:$0xff]
      %v3912 = vld [vmem:[%s3905 + $0x30] sm:$0xff]
      %v3913 = vld [vmem:[%s3905 + $0x38] sm:$0xff]
      %v3914 = vld [vmem:[%s3905 + $0x40] sm:$0xff]
      %v3915 = vld [vmem:[%s3905 + $0x48] sm:$0xff]
      %v3916 = vld [vmem:[%s3905 + $0x50] sm:$0xff]
      %v3917 = vld [vmem:[%s3905 + $0x58] sm:$0xff]
      %v3918 = vld [vmem:[#allocation4] sm:$0xff]
      %v3919 = vld [vmem:[#allocation4 + $0x8] sm:$0xff]
      %v3920 = vld [vmem:[#allocation4 + $0x10] sm:$0xff]
      %v3921 = vld [vmem:[#allocation4 + $0x18] sm:$0xff]
      %v3922 = vld [vmem:[#allocation4 + $0x28] sm:$0xff]
      %v3923 = vld [vmem:[#allocation4 + $0x30] sm:$0xff]
      %v3924 = vld [vmem:[#allocation4 + $0x38] sm:$0xff]
      %v3925 = vld [vmem:[#allocation4 + $0x40] sm:$0xff]
      %v3926 = vld [vmem:[#allocation4 + $0x50] sm:$0xff]
      %v3927 = vld [vmem:[#allocation4 + $0x58] sm:$0xff]
      %v3928 = vld [vmem:[#allocation4 + $0x60] sm:$0xff]
      %v3929 = vld [vmem:[#allocation4 + $0x68] sm:$0xff]
      %v3930 = vld [vmem:[#allocation4 + $0x78] sm:$0xff]
      %v3931 = vld [vmem:[#allocation4 + $0x80] sm:$0xff]
      %v3932 = vld [vmem:[#allocation4 + $0x88] sm:$0xff]
      %v3933 = vld [vmem:[#allocation4 + $0x90] sm:$0xff]
      %v3934 = vld [vmem:[#allocation4 + $0xa0] sm:$0xff]
      %v3935 = vld [vmem:[#allocation4 + $0xa8] sm:$0xff]
      %v3936 = vld [vmem:[#allocation4 + $0xb0] sm:$0xff]
      %v3937 = vld [vmem:[#allocation4 + $0xb8] sm:$0xff]
      %v3938 = vld [vmem:[#allocation4 + $0xc8] sm:$0xff]
      %v3939 = vld [vmem:[#allocation4 + $0xd0] sm:$0xff]
      %v3940 = vld [vmem:[#allocation4 + $0xd8] sm:$0xff]
      %v3941 = vld [vmem:[#allocation4 + $0xe0] sm:$0xff]
      %v3942 = vld [vmem:[#allocation4 + $0xf0] sm:$0xff]
      %v3943 = vld [vmem:[#allocation4 + $0xf8] sm:$0xff]
      %v3944 = vld [vmem:[#allocation4 + $0x100] sm:$0xff]
      %v3945 = vld [vmem:[#allocation4 + $0x108] sm:$0xff]
      %v3946 = vld [vmem:[#allocation4 + $0x118] sm:$0xff]
      %v3947 = vld [vmem:[#allocation4 + $0x120] sm:$0xff]
      %v3948 = vld [vmem:[#allocation4 + $0x128] sm:$0xff]
      %v3949 = vld [vmem:[#allocation4 + $0x130] sm:$0xff]
      %v3950 = vld [vmem:[#allocation4 + $0x140] sm:$0xff]
      %v3951 = vld [vmem:[#allocation4 + $0x148] sm:$0xff]
      %v3952 = vld [vmem:[#allocation4 + $0x150] sm:$0xff]
      %v3953 = vld [vmem:[#allocation4 + $0x158] sm:$0xff]
      %v3954 = vld [vmem:[#allocation4 + $0x168] sm:$0xff]
      %v3955 = vld [vmem:[#allocation4 + $0x170] sm:$0xff]
      %v3956 = vld [vmem:[#allocation4 + $0x178] sm:$0xff]
      %v3957 = vld [vmem:[#allocation4 + $0x180] sm:$0xff]
      %v3958 = vld [vmem:[#allocation4 + $0x190] sm:$0xff]
      %v3959 = vld [vmem:[#allocation4 + $0x198] sm:$0xff]
      %v3960 = vld [vmem:[#allocation4 + $0x1a0] sm:$0xff]
      %v3961 = vld [vmem:[#allocation4 + $0x1a8] sm:$0xff]
      %v3962 = vld [vmem:[#allocation4 + $0x1b8] sm:$0xff]
      %v3963 = vld [vmem:[#allocation4 + $0x1c0] sm:$0xff]
      %v3964 = vld [vmem:[#allocation4 + $0x1c8] sm:$0xff]
      %v3965 = vld [vmem:[#allocation4 + $0x1d0] sm:$0xff]
      %v3966 = vld [vmem:[#allocation4 + $0x1e0] sm:$0xff]
      %v3967 = vld [vmem:[#allocation4 + $0x1e8] sm:$0xff]
      %v3968 = vld [vmem:[#allocation4 + $0x1f0] sm:$0xff]
      %v3969 = vld [vmem:[#allocation4 + $0x1f8] sm:$0xff]
      %v3970 = vld [vmem:[#allocation4 + $0x208] sm:$0xff]
      %v3971 = vld [vmem:[#allocation4 + $0x210] sm:$0xff]
      %v3972 = vld [vmem:[#allocation4 + $0x218] sm:$0xff]
      %v3973 = vld [vmem:[#allocation4 + $0x220] sm:$0xff]
      %v3974 = vld [vmem:[#allocation4 + $0x230] sm:$0xff]
      %v3975 = vld [vmem:[#allocation4 + $0x238] sm:$0xff]
      %v3976 = vld [vmem:[#allocation4 + $0x240] sm:$0xff]
      %v3977 = vld [vmem:[#allocation4 + $0x248] sm:$0xff]
      %v3978 = vld [vmem:[#allocation4 + $0x258] sm:$0xff]
      %v3979 = vld [vmem:[#allocation4 + $0x260] sm:$0xff]
      %v3980 = vld [vmem:[#allocation4 + $0x268] sm:$0xff]
      %v3981 = vld [vmem:[#allocation4 + $0x270] sm:$0xff]
      %v3982 = vld [vmem:[#allocation4 + $0x280] sm:$0xff]
      %v3983 = vld [vmem:[#allocation4 + $0x288] sm:$0xff]
      %v3984 = vld [vmem:[#allocation4 + $0x290] sm:$0xff]
      %v3985 = vld [vmem:[#allocation4 + $0x298] sm:$0xff]
      %v3986 = vld [vmem:[#allocation4 + $0x2a8] sm:$0xff]
      %v3987 = vld [vmem:[#allocation4 + $0x2b0] sm:$0xff]
      %v3988 = vld [vmem:[#allocation4 + $0x2b8] sm:$0xff]
      %v3989 = vld [vmem:[#allocation4 + $0x2c0] sm:$0xff]
      %v3990 = vld [vmem:[#allocation4 + $0x2d0] sm:$0xff]
      %v3991 = vld [vmem:[#allocation4 + $0x2d8] sm:$0xff]
      %v3992 = vld [vmem:[#allocation4 + $0x2e0] sm:$0xff]
      %v3993 = vld [vmem:[#allocation4 + $0x2e8] sm:$0xff]
      %v3994 = vld [vmem:[#allocation4 + $0x2f8] sm:$0xff]
      %v3995 = vld [vmem:[#allocation4 + $0x300] sm:$0xff]
      %v3996 = vld [vmem:[#allocation4 + $0x308] sm:$0xff]
      %v3997 = vld [vmem:[#allocation4 + $0x310] sm:$0xff]
      %v3998 = vld [vmem:[#allocation4 + $0x320] sm:$0xff]
      %v3999 = vld [vmem:[#allocation4 + $0x328] sm:$0xff]
      %v4000 = vld [vmem:[#allocation4 + $0x330] sm:$0xff]
      %v4001 = vld [vmem:[#allocation4 + $0x338] sm:$0xff]
      %v4002 = vld [vmem:[#allocation4 + $0x348] sm:$0xff]
      %v4003 = vld [vmem:[#allocation4 + $0x350] sm:$0xff]
      %v4004 = vld [vmem:[#allocation4 + $0x358] sm:$0xff]
      %v4005 = vld [vmem:[#allocation4 + $0x360] sm:$0xff]
      %v4006 = vld [vmem:[#allocation4 + $0x370] sm:$0xff]
      %v4007 = vld [vmem:[#allocation4 + $0x378] sm:$0xff]
      %v4008 = vld [vmem:[#allocation4 + $0x380] sm:$0xff]
      %v4009 = vld [vmem:[#allocation4 + $0x388] sm:$0xff]
      %v4010 = vld [vmem:[#allocation4 + $0x398] sm:$0xff]
      %v4011 = vld [vmem:[#allocation4 + $0x3a0] sm:$0xff]
      %v4012 = vld [vmem:[#allocation4 + $0x3a8] sm:$0xff]
      %v4013 = vld [vmem:[#allocation4 + $0x3b0] sm:$0xff]
      %v4014 = vld [vmem:[#allocation4 + $0x3c0] sm:$0xff]
      %v4015 = vld [vmem:[#allocation4 + $0x3c8] sm:$0xff]
      %v4016 = vld [vmem:[#allocation4 + $0x3d0] sm:$0xff]
      %v4017 = vld [vmem:[#allocation4 + $0x3d8] sm:$0xff]
      %v4018 = vld [vmem:[#allocation4 + $0x3e8] sm:$0xff]
      %v4019 = vld [vmem:[#allocation4 + $0x3f0] sm:$0xff]
      %v4020 = vld [vmem:[#allocation4 + $0x3f8] sm:$0xff]
      %v4021 = vld [vmem:[#allocation4 + $0x400] sm:$0xff]
      %v4022 = vld [vmem:[#allocation4 + $0x410] sm:$0xff]
      %v4023 = vld [vmem:[#allocation4 + $0x418] sm:$0xff]
      %v4024 = vld [vmem:[#allocation4 + $0x420] sm:$0xff]
      %v4025 = vld [vmem:[#allocation4 + $0x428] sm:$0xff]
      %v4026 = vld [vmem:[#allocation4 + $0x438] sm:$0xff]
      %v4027 = vld [vmem:[#allocation4 + $0x440] sm:$0xff]
      %v4028 = vld [vmem:[#allocation4 + $0x448] sm:$0xff]
      %v4029 = vld [vmem:[#allocation4 + $0x450] sm:$0xff]
      %v4030 = vld [vmem:[#allocation4 + $0x460] sm:$0xff]
      %v4031 = vld [vmem:[#allocation4 + $0x468] sm:$0xff]
      %v4032 = vld [vmem:[#allocation4 + $0x470] sm:$0xff]
      %v4033 = vld [vmem:[#allocation4 + $0x478] sm:$0xff]
      %v4034 = vld [vmem:[#allocation4 + $0x488] sm:$0xff]
      %v4035 = vld [vmem:[#allocation4 + $0x490] sm:$0xff]
      %v4036 = vld [vmem:[#allocation4 + $0x498] sm:$0xff]
      %v4037 = vld [vmem:[#allocation4 + $0x4a0] sm:$0xff]
      %v4038 = vld [vmem:[#allocation4 + $0x4b0] sm:$0xff]
      %v4039 = vld [vmem:[#allocation4 + $0x4b8] sm:$0xff]
      %v4040 = vld [vmem:[#allocation4 + $0x4c0] sm:$0xff]
      %v4041 = vld [vmem:[#allocation4 + $0x4c8] sm:$0xff]
      %v4042 = vld [vmem:[#allocation4 + $0x4d8] sm:$0xff]
      %v4043 = vld [vmem:[#allocation4 + $0x4e0] sm:$0xff]
      %v4044 = vld [vmem:[#allocation4 + $0x4e8] sm:$0xff]
      %v4045 = vld [vmem:[#allocation4 + $0x4f0] sm:$0xff]
      %v4046 = vld [vmem:[#allocation4 + $0x500] sm:$0xff]
      %v4047 = vld [vmem:[#allocation4 + $0x508] sm:$0xff]
      %v4048 = vld [vmem:[#allocation4 + $0x510] sm:$0xff]
      %v4049 = vld [vmem:[#allocation4 + $0x518] sm:$0xff]
      %v4050 = vld [vmem:[#allocation4 + $0x528] sm:$0xff]
      %v4051 = vld [vmem:[#allocation4 + $0x530] sm:$0xff]
      %v4052 = vld [vmem:[#allocation4 + $0x538] sm:$0xff]
      %v4053 = vld [vmem:[#allocation4 + $0x540] sm:$0xff]
      %v4054 = vld [vmem:[#allocation4 + $0x550] sm:$0xff]
      %v4055 = vld [vmem:[#allocation4 + $0x558] sm:$0xff]
      %v4056 = vld [vmem:[#allocation4 + $0x560] sm:$0xff]
      %v4057 = vld [vmem:[#allocation4 + $0x568] sm:$0xff]
      %v4058 = vld [vmem:[#allocation4 + $0x578] sm:$0xff]
      %v4059 = vld [vmem:[#allocation4 + $0x580] sm:$0xff]
      %v4060 = vld [vmem:[#allocation4 + $0x588] sm:$0xff]
      %v4061 = vld [vmem:[#allocation4 + $0x590] sm:$0xff]
      %s4062 = scalar_lea.vmem %s2, 64
      %v4063 = vld [vmem:[%s4062] sm:$0xff]
      %v4064 = vld [vmem:[%s4062 + $0x8] sm:$0xff]
      %v4065 = vld [vmem:[%s4062 + $0x10] sm:$0xff]
      %v4066 = vld [vmem:[%s4062 + $0x18] sm:$0xff]
      %4068 = vset.pattern.permute.xlu0 0
      %4069 = vperm.xlu0 %4068, %v4063
      %v4070 = vpop.permute.xlu0 %4069
      %4073 = vset.pattern.permute.xlu0 0
      %4074 = vperm.xlu0 %4073, %v4064
      %v4075 = vpop.permute.xlu0 %4074
      %4078 = vset.pattern.permute.xlu0 0
      %4079 = vperm.xlu0 %4078, %v4065
      %v4080 = vpop.permute.xlu0 %4079
      %4083 = vset.pattern.permute.xlu0 0
      %4084 = vperm.xlu0 %4083, %v4066
      %v4085 = vpop.permute.xlu0 %4084
      %v4088 = vsel %vm1045, %v3908, 0
      %v4091 = vsel %vm1045, %v3911, 0
      %v4094 = vsel %vm1045, %v3914, 0
      %v4097 = vsel %vm1045, %v3917, 0
      %4099 = vmatprep.subr.mxu0 %v3919
      %4100 = vmatpush1.msra.mxu0 %v3918
      %4101 = vmatprep.subr.mxu0 %v3923
      %4102 = vmatpush1.msra.mxu0 %v3922
      %4103 = vmatprep.subr.mxu0 %v3927
      %4104 = vmatpush1.msra.mxu0 %v3926
      %4105 = vmatprep.subr.mxu0 %v3931
      %4106 = vmatpush1.msra.mxu0 %v3930
      %4107 = vmatprep.subr.mxu0 %v3935
      %4108 = vmatpush1.msra.mxu0 %v3934
      %4109 = vmatprep.subr.mxu0 %v3939
      %4110 = vmatpush1.msra.mxu0 %v3938
      %4111 = vmatprep.subr.mxu0 %v3943
      %4112 = vmatpush1.msra.mxu0 %v3942
      %4113 = vmatprep.subr.mxu0 %v3947
      %4114 = vmatpush1.msra.mxu0 %v3946
      %4115 = vmatprep.subr.mxu0 %v3951
      %4116 = vmatpush1.msra.mxu0 %v3950
      %4117 = vmatprep.subr.mxu0 %v3955
      %4118 = vmatpush1.msra.mxu0 %v3954
      %4119 = vmatprep.subr.mxu0 %v3959
      %4120 = vmatpush1.msra.mxu0 %v3958
      %4121 = vmatprep.subr.mxu0 %v3963
      %4122 = vmatpush1.msra.mxu0 %v3962
      %4123 = vmatprep.subr.mxu0 %v3967
      %4124 = vmatpush1.msra.mxu0 %v3966
      %4125 = vmatprep.subr.mxu0 %v3971
      %4126 = vmatpush1.msra.mxu0 %v3970
      %4127 = vmatprep.subr.mxu0 %v3975
      %4128 = vmatpush1.msra.mxu0 %v3974
      %4129 = vmatprep.subr.mxu0 %v3979
      %4130 = vmatpush1.msra.mxu0 %v3978
      %4131 = vmatprep.subr.mxu0 %v3983
      %4132 = vmatpush1.msra.mxu0 %v3982
      %4133 = vmatprep.subr.mxu0 %v3987
      %4134 = vmatpush1.msra.mxu0 %v3986
      %4135 = vmatprep.subr.mxu0 %v3991
      %4136 = vmatpush1.msra.mxu0 %v3990
      %4137 = vmatprep.subr.mxu0 %v3995
      %4138 = vmatpush1.msra.mxu0 %v3994
      %4139 = vmatprep.subr.mxu0 %v3999
      %4140 = vmatpush1.msra.mxu0 %v3998
      %4141 = vmatprep.subr.mxu0 %v4003
      %4142 = vmatpush1.msra.mxu0 %v4002
      %4143 = vmatprep.subr.mxu0 %v4007
      %4144 = vmatpush1.msra.mxu0 %v4006
      %4145 = vmatprep.subr.mxu0 %v4011
      %4146 = vmatpush1.msra.mxu0 %v4010
      %4147 = vmatprep.subr.mxu0 %v4015
      %4148 = vmatpush1.msra.mxu0 %v4014
      %4149 = vmatprep.subr.mxu0 %v4019
      %4150 = vmatpush1.msra.mxu0 %v4018
      %4151 = vmatprep.subr.mxu0 %v4023
      %4152 = vmatpush1.msra.mxu0 %v4022
      %4153 = vmatprep.subr.mxu0 %v4027
      %4154 = vmatpush1.msra.mxu0 %v4026
      %4155 = vmatprep.subr.mxu0 %v4031
      %4156 = vmatpush1.msra.mxu0 %v4030
      %4157 = vmatprep.subr.mxu0 %v4035
      %4158 = vmatpush1.msra.mxu0 %v4034
      %4159 = vmatprep.subr.mxu0 %v4039
      %4160 = vmatpush1.msra.mxu0 %v4038
      %4161 = vmatprep.subr.mxu0 %v4043
      %4162 = vmatpush1.msra.mxu0 %v4042
      %4163 = vmatprep.mubr.f32.mxu0 %v3907
      %4164 = vmatmul.mubr.f32.gmra.mrb[0].mxu0 %v3906
      %v4165 = vpop.f32.mrb[0].mxu0
      %v4166 = vadd.f32 %v4070, %v4165
      %v4167 = vpop.f32.mrb[0].mxu0
      %v4168 = vadd.f32 %v4070, %v4167
      %4169 = vmatprep.mubr.f32.mxu0 %v3910
      %4170 = vmatmul.mubr.f32.gmra.mrb[0].mxu0 %v3909
      %v4171 = vpop.f32.mrb[0].mxu0
      %v4172 = vadd.f32 %v4075, %v4171
      %v4173 = vpop.f32.mrb[0].mxu0
      %v4174 = vadd.f32 %v4075, %v4173
      %4175 = vmatprep.mubr.f32.mxu0 %v3913
      %4176 = vmatmul.mubr.f32.gmra.mrb[0].mxu0 %v3912
      %v4177 = vpop.f32.mrb[0].mxu0
      %v4178 = vadd.f32 %v4080, %v4177
      %v4179 = vpop.f32.mrb[0].mxu0
      %v4180 = vadd.f32 %v4080, %v4179
      %4181 = vmatprep.mubr.f32.mxu0 %v3916
      %4182 = vmatmul.mubr.f32.gmra.mrb[0].mxu0 %v3915
      %v4183 = vpop.f32.mrb[0].mxu0
      %v4184 = vadd.f32 %v4085, %v4183
      %v4185 = vpop.f32.mrb[0].mxu0
      %v4186 = vadd.f32 %v4085, %v4185
      %4187 = vdwg.mxu0
      %4188 = vmatprep.subr.mxu0 %v4047
      %4189 = vmatpush1.msra.mxu0 %v4046
      %4190 = vmatprep.subr.mxu0 %v4051
      %4191 = vmatpush1.msra.mxu0 %v4050
      %4192 = vmatprep.subr.mxu0 %v4055
      %4193 = vmatpush1.msra.mxu0 %v4054
      %4194 = vmatprep.subr.mxu0 %v4059
      %4195 = vmatpush1.msra.mxu0 %v4058
      %4196 = vmatprep.subr.mxu0 0.0
      %4197 = vmatpush1.msra.mxu0 0.0
      %4198 = vmatprep.subr.mxu0 0.0
      %4199 = vmatpush1.msra.mxu0 0.0
      %4200 = vmatprep.subr.mxu0 0.0
      %4201 = vmatpush1.msra.mxu0 0.0
      %4202 = vmatprep.subr.mxu0 0.0
      %4203 = vmatpush1.msra.mxu0 0.0
      %4204 = vmatprep.subr.mxu0 0.0
      %4205 = vmatpush1.msra.mxu0 0.0
      %4206 = vmatprep.subr.mxu0 0.0
      %4207 = vmatpush1.msra.mxu0 0.0
      %4208 = vmatprep.subr.mxu0 0.0
      %4209 = vmatpush1.msra.mxu0 0.0
      %4210 = vmatprep.subr.mxu0 0.0
      %4211 = vmatpush1.msra.mxu0 0.0
      %4212 = vmatprep.subr.mxu0 0.0
      %4213 = vmatpush1.msra.mxu0 0.0
      %4214 = vmatprep.subr.mxu0 0.0
      %4215 = vmatpush1.msra.mxu0 0.0
      %4216 = vmatprep.subr.mxu0 0.0
      %4217 = vmatpush1.msra.mxu0 0.0
      %4218 = vmatprep.subr.mxu0 0.0
      %4219 = vmatpush1.msra.mxu0 0.0
      %4220 = vmatprep.subr.mxu0 0.0
      %4221 = vmatpush1.msra.mxu0 0.0
      %4222 = vmatprep.subr.mxu0 0.0
      %4223 = vmatpush1.msra.mxu0 0.0
      %4224 = vmatprep.subr.mxu0 0.0
      %4225 = vmatpush1.msra.mxu0 0.0
      %4226 = vmatprep.subr.mxu0 0.0
      %4227 = vmatpush1.msra.mxu0 0.0
      %4228 = vmatprep.subr.mxu0 0.0
      %4229 = vmatpush1.msra.mxu0 0.0
      %4230 = vmatprep.subr.mxu0 0.0
      %4231 = vmatpush1.msra.mxu0 0.0
      %4232 = vmatprep.subr.mxu0 0.0
      %4233 = vmatpush1.msra.mxu0 0.0
      %4234 = vmatprep.subr.mxu0 0.0
      %4235 = vmatpush1.msra.mxu0 0.0
      %4236 = vmatprep.subr.mxu0 0.0
      %4237 = vmatpush1.msra.mxu0 0.0
      %4238 = vmatprep.subr.mxu0 0.0
      %4239 = vmatpush1.msra.mxu0 0.0
      %4240 = vmatprep.subr.mxu0 0.0
      %4241 = vmatpush1.msra.mxu0 0.0
      %4242 = vmatprep.subr.mxu0 0.0
      %4243 = vmatpush1.msra.mxu0 0.0
      %4244 = vmatprep.subr.mxu0 0.0
      %4245 = vmatpush1.msra.mxu0 0.0
      %4246 = vmatprep.subr.mxu0 0.0
      %4247 = vmatpush1.msra.mxu0 0.0
      %4248 = vmatprep.subr.mxu0 0.0
      %4249 = vmatpush1.msra.mxu0 0.0
      %4250 = vmatprep.subr.mxu0 0.0
      %4251 = vmatpush1.msra.mxu0 0.0
      %4252 = vmatprep.mubr.f32.mxu0 0.0
      %4253 = vmatmul.mubr.f32.gmra.mrb[0].mxu0 %v4088
      %v4254 = vpop.f32.mrb[0].mxu0
      %v4255 = vadd.f32 %v4166, %v4254
      %v4256 = vpop.f32.mrb[0].mxu0
      %v4257 = vadd.f32 %v4168, %v4256
      %4258 = vmatprep.mubr.f32.mxu0 0.0
      %4259 = vmatmul.mubr.f32.gmra.mrb[0].mxu0 %v4091
      %v4260 = vpop.f32.mrb[0].mxu0
      %v4261 = vadd.f32 %v4172, %v4260
      %v4262 = vpop.f32.mrb[0].mxu0
      %v4263 = vadd.f32 %v4174, %v4262
      %4264 = vmatprep.mubr.f32.mxu0 0.0
      %4265 = vmatmul.mubr.f32.gmra.mrb[0].mxu0 %v4094
      %v4266 = vpop.f32.mrb[0].mxu0
      %v4267 = vadd.f32 %v4178, %v4266
      %v4268 = vpop.f32.mrb[0].mxu0
      %v4269 = vadd.f32 %v4180, %v4268
      %4270 = vmatprep.mubr.f32.mxu0 0.0
      %4271 = vmatmul.mubr.f32.gmra.mrb[0].mxu0 %v4097
      %v4272 = vpop.f32.mrb[0].mxu0
      %v4273 = vadd.f32 %v4184, %v4272
      %v4274 = vpop.f32.mrb[0].mxu0
      %v4275 = vadd.f32 %v4186, %v4274
      %4276 = vdwg.mxu0
      %4277 = vmatprep.subr.mxu0 %v3921
      %4278 = vmatpush1.msra.mxu0 %v3920
      %4279 = vmatprep.subr.mxu0 %v3925
      %4280 = vmatpush1.msra.mxu0 %v3924
      %4281 = vmatprep.subr.mxu0 %v3929
      %4282 = vmatpush1.msra.mxu0 %v3928
      %4283 = vmatprep.subr.mxu0 %v3933
      %4284 = vmatpush1.msra.mxu0 %v3932
      %4285 = vmatprep.subr.mxu0 %v3937
      %4286 = vmatpush1.msra.mxu0 %v3936
      %4287 = vmatprep.subr.mxu0 %v3941
      %4288 = vmatpush1.msra.mxu0 %v3940
      %4289 = vmatprep.subr.mxu0 %v3945
      %4290 = vmatpush1.msra.mxu0 %v3944
      %4291 = vmatprep.subr.mxu0 %v3949
      %4292 = vmatpush1.msra.mxu0 %v3948
      %4293 = vmatprep.subr.mxu0 %v3953
      %4294 = vmatpush1.msra.mxu0 %v3952
      %4295 = vmatprep.subr.mxu0 %v3957
      %4296 = vmatpush1.msra.mxu0 %v3956
      %4297 = vmatprep.subr.mxu0 %v3961
      %4298 = vmatpush1.msra.mxu0 %v3960
      %4299 = vmatprep.subr.mxu0 %v3965
      %4300 = vmatpush1.msra.mxu0 %v3964
      %4301 = vmatprep.subr.mxu0 %v3969
      %4302 = vmatpush1.msra.mxu0 %v3968
      %4303 = vmatprep.subr.mxu0 %v3973
      %4304 = vmatpush1.msra.mxu0 %v3972
      %4305 = vmatprep.subr.mxu0 %v3977
      %4306 = vmatpush1.msra.mxu0 %v3976
      %4307 = vmatprep.subr.mxu0 %v3981
      %4308 = vmatpush1.msra.mxu0 %v3980
      %4309 = vmatprep.subr.mxu0 %v3985
      %4310 = vmatpush1.msra.mxu0 %v3984
      %4311 = vmatprep.subr.mxu0 %v3989
      %4312 = vmatpush1.msra.mxu0 %v3988
      %4313 = vmatprep.subr.mxu0 %v3993
      %4314 = vmatpush1.msra.mxu0 %v3992
      %4315 = vmatprep.subr.mxu0 %v3997
      %4316 = vmatpush1.msra.mxu0 %v3996
      %4317 = vmatprep.subr.mxu0 %v4001
      %4318 = vmatpush1.msra.mxu0 %v4000
      %4319 = vmatprep.subr.mxu0 %v4005
      %4320 = vmatpush1.msra.mxu0 %v4004
      %4321 = vmatprep.subr.mxu0 %v4009
      %4322 = vmatpush1.msra.mxu0 %v4008
      %4323 = vmatprep.subr.mxu0 %v4013
      %4324 = vmatpush1.msra.mxu0 %v4012
      %4325 = vmatprep.subr.mxu0 %v4017
      %4326 = vmatpush1.msra.mxu0 %v4016
      %4327 = vmatprep.subr.mxu0 %v4021
      %4328 = vmatpush1.msra.mxu0 %v4020
      %4329 = vmatprep.subr.mxu0 %v4025
      %4330 = vmatpush1.msra.mxu0 %v4024
      %4331 = vmatprep.subr.mxu0 %v4029
      %4332 = vmatpush1.msra.mxu0 %v4028
      %4333 = vmatprep.subr.mxu0 %v4033
      %4334 = vmatpush1.msra.mxu0 %v4032
      %4335 = vmatprep.subr.mxu0 %v4037
      %4336 = vmatpush1.msra.mxu0 %v4036
      %4337 = vmatprep.subr.mxu0 %v4041
      %4338 = vmatpush1.msra.mxu0 %v4040
      %4339 = vmatprep.subr.mxu0 %v4045
      %4340 = vmatpush1.msra.mxu0 %v4044
      %4341 = vmatprep.mubr.f32.mxu0 %v3907
      %4342 = vmatmul.mubr.f32.gmra.mrb[0].mxu0 %v3906
      %v4343 = vpop.f32.mrb[0].mxu0
      %v4344 = vadd.f32 %v4070, %v4343
      %v4345 = vpop.f32.mrb[0].mxu0
      %v4346 = vadd.f32 %v4070, %v4345
      %4347 = vmatprep.mubr.f32.mxu0 %v3910
      %4348 = vmatmul.mubr.f32.gmra.mrb[0].mxu0 %v3909
      %v4349 = vpop.f32.mrb[0].mxu0
      %v4350 = vadd.f32 %v4075, %v4349
      %v4351 = vpop.f32.mrb[0].mxu0
      %v4352 = vadd.f32 %v4075, %v4351
      %4353 = vmatprep.mubr.f32.mxu0 %v3913
      %4354 = vmatmul.mubr.f32.gmra.mrb[0].mxu0 %v3912
      %v4355 = vpop.f32.mrb[0].mxu0
      %v4356 = vadd.f32 %v4080, %v4355
      %v4357 = vpop.f32.mrb[0].mxu0
      %v4358 = vadd.f32 %v4080, %v4357
      %4359 = vmatprep.mubr.f32.mxu0 %v3916
      %4360 = vmatmul.mubr.f32.gmra.mrb[0].mxu0 %v3915
      %v4361 = vpop.f32.mrb[0].mxu0
      %v4362 = vadd.f32 %v4085, %v4361
      %v4363 = vpop.f32.mrb[0].mxu0
      %v4364 = vadd.f32 %v4085, %v4363
      %4365 = vdwg.mxu0
      %4366 = vmatprep.subr.mxu0 %v4049
      %4367 = vmatpush1.msra.mxu0 %v4048
      %4368 = vmatprep.subr.mxu0 %v4053
      %4369 = vmatpush1.msra.mxu0 %v4052
      %4370 = vmatprep.subr.mxu0 %v4057
      %4371 = vmatpush1.msra.mxu0 %v4056
      %4372 = vmatprep.subr.mxu0 %v4061
      %4373 = vmatpush1.msra.mxu0 %v4060
      %4374 = vmatprep.subr.mxu0 0.0
      %4375 = vmatpush1.msra.mxu0 0.0
      %4376 = vmatprep.subr.mxu0 0.0
      %4377 = vmatpush1.msra.mxu0 0.0
      %4378 = vmatprep.subr.mxu0 0.0
      %4379 = vmatpush1.msra.mxu0 0.0
      %4380 = vmatprep.subr.mxu0 0.0
      %4381 = vmatpush1.msra.mxu0 0.0
      %4382 = vmatprep.subr.mxu0 0.0
      %4383 = vmatpush1.msra.mxu0 0.0
      %4384 = vmatprep.subr.mxu0 0.0
      %4385 = vmatpush1.msra.mxu0 0.0
      %4386 = vmatprep.subr.mxu0 0.0
      %4387 = vmatpush1.msra.mxu0 0.0
      %4388 = vmatprep.subr.mxu0 0.0
      %4389 = vmatpush1.msra.mxu0 0.0
      %4390 = vmatprep.subr.mxu0 0.0
      %4391 = vmatpush1.msra.mxu0 0.0
      %4392 = vmatprep.subr.mxu0 0.0
      %4393 = vmatpush1.msra.mxu0 0.0
      %4394 = vmatprep.subr.mxu0 0.0
      %4395 = vmatpush1.msra.mxu0 0.0
      %4396 = vmatprep.subr.mxu0 0.0
      %4397 = vmatpush1.msra.mxu0 0.0
      %4398 = vmatprep.subr.mxu0 0.0
      %4399 = vmatpush1.msra.mxu0 0.0
      %4400 = vmatprep.subr.mxu0 0.0
      %4401 = vmatpush1.msra.mxu0 0.0
      %4402 = vmatprep.subr.mxu0 0.0
      %4403 = vmatpush1.msra.mxu0 0.0
      %4404 = vmatprep.subr.mxu0 0.0
      %4405 = vmatpush1.msra.mxu0 0.0
      %4406 = vmatprep.subr.mxu0 0.0
      %4407 = vmatpush1.msra.mxu0 0.0
      %4408 = vmatprep.subr.mxu0 0.0
      %4409 = vmatpush1.msra.mxu0 0.0
      %4410 = vmatprep.subr.mxu0 0.0
      %4411 = vmatpush1.msra.mxu0 0.0
      %4412 = vmatprep.subr.mxu0 0.0
      %4413 = vmatpush1.msra.mxu0 0.0
      %4414 = vmatprep.subr.mxu0 0.0
      %4415 = vmatpush1.msra.mxu0 0.0
      %4416 = vmatprep.subr.mxu0 0.0
      %4417 = vmatpush1.msra.mxu0 0.0
      %4418 = vmatprep.subr.mxu0 0.0
      %4419 = vmatpush1.msra.mxu0 0.0
      %4420 = vmatprep.subr.mxu0 0.0
      %4421 = vmatpush1.msra.mxu0 0.0
      %4422 = vmatprep.subr.mxu0 0.0
      %4423 = vmatpush1.msra.mxu0 0.0
      %4424 = vmatprep.subr.mxu0 0.0
      %4425 = vmatpush1.msra.mxu0 0.0
      %4426 = vmatprep.subr.mxu0 0.0
      %4427 = vmatpush1.msra.mxu0 0.0
      %4428 = vmatprep.subr.mxu0 0.0
      %4429 = vmatpush1.msra.mxu0 0.0
      %4430 = vmatprep.mubr.f32.mxu0 0.0
      %4431 = vmatmul.mubr.f32.gmra.mrb[0].mxu0 %v4088
      %v4432 = vpop.f32.mrb[0].mxu0
      %v4433 = vadd.f32 %v4344, %v4432
      %v4434 = vpop.f32.mrb[0].mxu0
      %v4435 = vadd.f32 %v4346, %v4434
      %4436 = vmatprep.mubr.f32.mxu0 0.0
      %4437 = vmatmul.mubr.f32.gmra.mrb[0].mxu0 %v4091
      %v4438 = vpop.f32.mrb[0].mxu0
      %v4439 = vadd.f32 %v4350, %v4438
      %v4440 = vpop.f32.mrb[0].mxu0
      %v4441 = vadd.f32 %v4352, %v4440
      %4442 = vmatprep.mubr.f32.mxu0 0.0
      %4443 = vmatmul.mubr.f32.gmra.mrb[0].mxu0 %v4094
      %v4444 = vpop.f32.mrb[0].mxu0
      %v4445 = vadd.f32 %v4356, %v4444
      %v4446 = vpop.f32.mrb[0].mxu0
      %v4447 = vadd.f32 %v4358, %v4446
      %4448 = vmatprep.mubr.f32.mxu0 0.0
      %4449 = vmatmul.mubr.f32.gmra.mrb[0].mxu0 %v4097
      %v4450 = vpop.f32.mrb[0].mxu0
      %v4451 = vadd.f32 %v4362, %v4450
      %v4452 = vpop.f32.mrb[0].mxu0
      %v4453 = vadd.f32 %v4364, %v4452
      %4454 = vdwg.mxu0
      %v4455 = vmax.f32 %v4255, 0.0
      %v4456 = vmax.f32 %v4257, 0.0
      %v4457 = vmax.f32 %v4433, 0.0
      %v4458 = vmax.f32 %v4435, 0.0
      %v4459 = vmax.f32 %v4261, 0.0
      %v4460 = vmax.f32 %v4263, 0.0
      %v4461 = vmax.f32 %v4439, 0.0
      %v4462 = vmax.f32 %v4441, 0.0
      %v4463 = vmax.f32 %v4267, 0.0
      %v4464 = vmax.f32 %v4269, 0.0
      %v4465 = vmax.f32 %v4445, 0.0
      %v4466 = vmax.f32 %v4447, 0.0
      %v4467 = vmax.f32 %v4273, 0.0
      %v4468 = vmax.f32 %v4275, 0.0
      %v4469 = vmax.f32 %v4451, 0.0
      %v4470 = vmax.f32 %v4453, 0.0
      %vm4471 = vcmp.lt.s32.totalorder %v175, 14
      %vm4472 = vcmp.lt.s32.totalorder %v176, 14
      %vm4473 = vcmp.lt.s32.totalorder %v177, 14
      %vm4474 = vcmp.lt.s32.totalorder %v178, 14
      %v4475 = vsel %vm4471, 1, 0
      %v4476 = vsel %vm4472, 1, 0
      %v4477 = vsel %vm4473, 1, 0
      %v4478 = vsel %vm4474, 1, 0
      %vm4479 = vcmp.eq.s32.totalorder %v4475, 1
      %vm4480 = vcmp.eq.s32.totalorder %v4476, 1
      %vm4481 = vcmp.eq.s32.totalorder %v4477, 1
      %vm4482 = vcmp.eq.s32.totalorder %v4478, 1
      %v4483 = vsel %vm4479, %v4455, 0.0
      %v4484 = vsel %vm4480, %v4456, 0.0
      %v4485 = vsel %vm4481, %v4457, 0.0
      %v4486 = vsel %vm4482, %v4458, 0.0
      %v4487 = vsel %vm4479, %v4459, 0.0
      %v4488 = vsel %vm4480, %v4460, 0.0
      %v4489 = vsel %vm4481, %v4461, 0.0
      %v4490 = vsel %vm4482, %v4462, 0.0
      %v4491 = vsel %vm4479, %v4463, 0.0
      %v4492 = vsel %vm4480, %v4464, 0.0
      %v4493 = vsel %vm4481, %v4465, 0.0
      %v4494 = vsel %vm4482, %v4466, 0.0
      %v4495 = vsel %vm4479, %v4467, 0.0
      %v4496 = vsel %vm4480, %v4468, 0.0
      %v4497 = vsel %vm4481, %v4469, 0.0
      %v4498 = vsel %vm4482, %v4470, 0.0
      %4515 = vrot.lane.b32.xlu0 %v4483, 66
      %v4516 = vpop.permute.xlu0 %4515
      %4517 = vrot.lane.b32.xlu0 %v4484, 66
      %v4518 = vpop.permute.xlu0 %4517
      %4519 = vrot.lane.b32.xlu0 %v4485, 66
      %v4520 = vpop.permute.xlu0 %4519
      %4521 = vrot.lane.b32.xlu0 %v4486, 66
      %v4522 = vpop.permute.xlu0 %4521
      %4523 = vrot.lane.b32.xlu0 %v4487, 66
      %v4524 = vpop.permute.xlu0 %4523
      %4525 = vrot.lane.b32.xlu0 %v4488, 66
      %v4526 = vpop.permute.xlu0 %4525
      %4527 = vrot.lane.b32.xlu0 %v4489, 66
      %v4528 = vpop.permute.xlu0 %4527
      %4529 = vrot.lane.b32.xlu0 %v4490, 66
      %v4530 = vpop.permute.xlu0 %4529
      %4531 = vrot.lane.b32.xlu0 %v4491, 66
      %v4532 = vpop.permute.xlu0 %4531
      %4533 = vrot.lane.b32.xlu0 %v4492, 66
      %v4534 = vpop.permute.xlu0 %4533
      %4535 = vrot.lane.b32.xlu0 %v4493, 66
      %v4536 = vpop.permute.xlu0 %4535
      %4537 = vrot.lane.b32.xlu0 %v4494, 66
      %v4538 = vpop.permute.xlu0 %4537
      %4539 = vrot.lane.b32.xlu0 %v4495, 66
      %v4540 = vpop.permute.xlu0 %4539
      %4541 = vrot.lane.b32.xlu0 %v4496, 66
      %v4542 = vpop.permute.xlu0 %4541
      %4543 = vrot.lane.b32.xlu0 %v4497, 66
      %v4544 = vpop.permute.xlu0 %4543
      %4545 = vrot.lane.b32.xlu0 %v4498, 66
      %v4546 = vpop.permute.xlu0 %4545
      %v4547 = vsel %vm180, %v4516, %v4518
      %v4548 = vsel %vm180, %v4518, %v4520
      %v4549 = vsel %vm180, %v4520, %v4522
      %v4550 = vsel %vm180, %v4524, %v4526
      %v4551 = vsel %vm180, %v4526, %v4528
      %v4552 = vsel %vm180, %v4528, %v4530
      %v4553 = vsel %vm180, %v4532, %v4534
      %v4554 = vsel %vm180, %v4534, %v4536
      %v4555 = vsel %vm180, %v4536, %v4538
      %v4556 = vsel %vm180, %v4540, %v4542
      %v4557 = vsel %vm180, %v4542, %v4544
      %v4558 = vsel %vm180, %v4544, %v4546
      %4579 = vst.msk [vmem:[#allocation3] sm:$0xff] %vm1499, %v4516
      %4580 = vst [vmem:[#allocation3 + $0x8] sm:$0xff] %v4547
      %4581 = vst [vmem:[#allocation3 + $0x10] sm:$0xff] %v4548
      %4582 = vst [vmem:[#allocation3 + $0x18] sm:$0xff] %v4549
      %4583 = vst.msk [vmem:[#allocation3 + $0x20] sm:$0xff] %vm1503, %v4522
      %4584 = vst.msk [vmem:[#allocation3 + $0x30] sm:$0xff] %vm1499, %v4524
      %4585 = vst [vmem:[#allocation3 + $0x38] sm:$0xff] %v4550
      %4586 = vst [vmem:[#allocation3 + $0x40] sm:$0xff] %v4551
      %4587 = vst [vmem:[#allocation3 + $0x48] sm:$0xff] %v4552
      %4588 = vst.msk [vmem:[#allocation3 + $0x50] sm:$0xff] %vm1503, %v4530
      %4589 = vst.msk [vmem:[#allocation3 + $0x60] sm:$0xff] %vm1499, %v4532
      %4590 = vst [vmem:[#allocation3 + $0x68] sm:$0xff] %v4553
      %4591 = vst [vmem:[#allocation3 + $0x70] sm:$0xff] %v4554
      %4592 = vst [vmem:[#allocation3 + $0x78] sm:$0xff] %v4555
      %4593 = vst.msk [vmem:[#allocation3 + $0x80] sm:$0xff] %vm1503, %v4538
      %4594 = vst.msk [vmem:[#allocation3 + $0x90] sm:$0xff] %vm1499, %v4540
      %4595 = vst [vmem:[#allocation3 + $0x98] sm:$0xff] %v4556
      %4596 = vst [vmem:[#allocation3 + $0xa0] sm:$0xff] %v4557
      %4597 = vst [vmem:[#allocation3 + $0xa8] sm:$0xff] %v4558
      %4598 = vst.msk [vmem:[#allocation3 + $0xb0] sm:$0xff] %vm1503, %v4546
      %4599 = vst.msk [vmem:[#allocation3 + $0x20] sm:$0xff] %vm1517, 0.0
      %4600 = vst.msk [vmem:[#allocation3 + $0x50] sm:$0xff] %vm1517, 0.0
      %4601 = vst.msk [vmem:[#allocation3 + $0x80] sm:$0xff] %vm1517, 0.0
      %4602 = vst.msk [vmem:[#allocation3 + $0xb0] sm:$0xff] %vm1517, 0.0
      %v4603 = vld [vmem:[#allocation3] sm:$0xff]
      %v4604 = vld [vmem:[#allocation3 + $0x8] sm:$0xff]
      %v4605 = vld [vmem:[#allocation3 + $0x10] sm:$0xff]
      %v4606 = vld [vmem:[#allocation3 + $0x18] sm:$0xff]
      %v4607 = vld [vmem:[#allocation3 + $0x30] sm:$0xff]
      %v4608 = vld [vmem:[#allocation3 + $0x38] sm:$0xff]
      %v4609 = vld [vmem:[#allocation3 + $0x40] sm:$0xff]
      %v4610 = vld [vmem:[#allocation3 + $0x48] sm:$0xff]
      %v4611 = vld [vmem:[#allocation3 + $0x60] sm:$0xff]
      %v4612 = vld [vmem:[#allocation3 + $0x68] sm:$0xff]
      %v4613 = vld [vmem:[#allocation3 + $0x70] sm:$0xff]
      %v4614 = vld [vmem:[#allocation3 + $0x78] sm:$0xff]
      %v4615 = vld [vmem:[#allocation3 + $0x90] sm:$0xff]
      %v4616 = vld [vmem:[#allocation3 + $0x98] sm:$0xff]
      %v4617 = vld [vmem:[#allocation3 + $0xa0] sm:$0xff]
      %v4618 = vld [vmem:[#allocation3 + $0xa8] sm:$0xff]
      %4619 = vst [vmem:[#allocation4] sm:$0xff] %v4603
      %4620 = vst [vmem:[#allocation4 + $0x8] sm:$0xff] %v4604
      %4621 = vst [vmem:[#allocation4 + $0x10] sm:$0xff] %v4605
      %4622 = vst [vmem:[#allocation4 + $0x18] sm:$0xff] %v4606
      %4623 = vst [vmem:[#allocation4 + $0x28] sm:$0xff] %v4607
      %4624 = vst [vmem:[#allocation4 + $0x30] sm:$0xff] %v4608
      %4625 = vst [vmem:[#allocation4 + $0x38] sm:$0xff] %v4609
      %4626 = vst [vmem:[#allocation4 + $0x40] sm:$0xff] %v4610
      %4627 = vst [vmem:[#allocation4 + $0x50] sm:$0xff] %v4611
      %4628 = vst [vmem:[#allocation4 + $0x58] sm:$0xff] %v4612
      %4629 = vst [vmem:[#allocation4 + $0x60] sm:$0xff] %v4613
      %4630 = vst [vmem:[#allocation4 + $0x68] sm:$0xff] %v4614
      %4631 = vst [vmem:[#allocation4 + $0x78] sm:$0xff] %v4615
      %4632 = vst [vmem:[#allocation4 + $0x80] sm:$0xff] %v4616
      %4633 = vst [vmem:[#allocation4 + $0x88] sm:$0xff] %v4617
      %4634 = vst [vmem:[#allocation4 + $0x90] sm:$0xff] %v4618
      %v4635 = vld [vmem:[#allocation3] sm:$0xff]
      %v4636 = vld [vmem:[#allocation3 + $0x8] sm:$0xff]
      %v4637 = vld [vmem:[#allocation3 + $0x10] sm:$0xff]
      %v4638 = vld [vmem:[#allocation3 + $0x18] sm:$0xff]
      %v4639 = vld [vmem:[#allocation3 + $0x20] sm:$0xff]
      %v4640 = vld [vmem:[#allocation3 + $0x30] sm:$0xff]
      %v4641 = vld [vmem:[#allocation3 + $0x38] sm:$0xff]
      %v4642 = vld [vmem:[#allocation3 + $0x40] sm:$0xff]
      %v4643 = vld [vmem:[#allocation3 + $0x48] sm:$0xff]
      %v4644 = vld [vmem:[#allocation3 + $0x50] sm:$0xff]
      %v4645 = vld [vmem:[#allocation3 + $0x60] sm:$0xff]
      %v4646 = vld [vmem:[#allocation3 + $0x68] sm:$0xff]
      %v4647 = vld [vmem:[#allocation3 + $0x70] sm:$0xff]
      %v4648 = vld [vmem:[#allocation3 + $0x78] sm:$0xff]
      %v4649 = vld [vmem:[#allocation3 + $0x80] sm:$0xff]
      %v4650 = vld [vmem:[#allocation3 + $0x90] sm:$0xff]
      %v4651 = vld [vmem:[#allocation3 + $0x98] sm:$0xff]
      %v4652 = vld [vmem:[#allocation3 + $0xa0] sm:$0xff]
      %v4653 = vld [vmem:[#allocation3 + $0xa8] sm:$0xff]
      %v4654 = vld [vmem:[#allocation3 + $0xb0] sm:$0xff]
      %4675 = vrot.lane.b32.xlu0 %v4635, 127
      %v4676 = vpop.permute.xlu0 %4675
      %4677 = vrot.lane.b32.xlu0 %v4636, 127
      %v4678 = vpop.permute.xlu0 %4677
      %4679 = vrot.lane.b32.xlu0 %v4637, 127
      %v4680 = vpop.permute.xlu0 %4679
      %4681 = vrot.lane.b32.xlu0 %v4638, 127
      %v4682 = vpop.permute.xlu0 %4681
      %4683 = vrot.lane.b32.xlu0 %v4639, 127
      %v4684 = vpop.permute.xlu0 %4683
      %4685 = vrot.lane.b32.xlu0 %v4640, 127
      %v4686 = vpop.permute.xlu0 %4685
      %4687 = vrot.lane.b32.xlu0 %v4641, 127
      %v4688 = vpop.permute.xlu0 %4687
      %4689 = vrot.lane.b32.xlu0 %v4642, 127
      %v4690 = vpop.permute.xlu0 %4689
      %4691 = vrot.lane.b32.xlu0 %v4643, 127
      %v4692 = vpop.permute.xlu0 %4691
      %4693 = vrot.lane.b32.xlu0 %v4644, 127
      %v4694 = vpop.permute.xlu0 %4693
      %4695 = vrot.lane.b32.xlu0 %v4645, 127
      %v4696 = vpop.permute.xlu0 %4695
      %4697 = vrot.lane.b32.xlu0 %v4646, 127
      %v4698 = vpop.permute.xlu0 %4697
      %4699 = vrot.lane.b32.xlu0 %v4647, 127
      %v4700 = vpop.permute.xlu0 %4699
      %4701 = vrot.lane.b32.xlu0 %v4648, 127
      %v4702 = vpop.permute.xlu0 %4701
      %4703 = vrot.lane.b32.xlu0 %v4649, 127
      %v4704 = vpop.permute.xlu0 %4703
      %4705 = vrot.lane.b32.xlu0 %v4650, 127
      %v4706 = vpop.permute.xlu0 %4705
      %4707 = vrot.lane.b32.xlu0 %v4651, 127
      %v4708 = vpop.permute.xlu0 %4707
      %4709 = vrot.lane.b32.xlu0 %v4652, 127
      %v4710 = vpop.permute.xlu0 %4709
      %4711 = vrot.lane.b32.xlu0 %v4653, 127
      %v4712 = vpop.permute.xlu0 %4711
      %4713 = vrot.lane.b32.xlu0 %v4654, 127
      %v4714 = vpop.permute.xlu0 %4713
      %v4715 = vsel %vm262, %v4676, %v4678
      %v4716 = vsel %vm262, %v4678, %v4680
      %v4717 = vsel %vm262, %v4680, %v4682
      %v4718 = vsel %vm262, %v4682, %v4684
      %v4719 = vsel %vm262, %v4686, %v4688
      %v4720 = vsel %vm262, %v4688, %v4690
      %v4721 = vsel %vm262, %v4690, %v4692
      %v4722 = vsel %vm262, %v4692, %v4694
      %v4723 = vsel %vm262, %v4696, %v4698
      %v4724 = vsel %vm262, %v4698, %v4700
      %v4725 = vsel %vm262, %v4700, %v4702
      %v4726 = vsel %vm262, %v4702, %v4704
      %v4727 = vsel %vm262, %v4706, %v4708
      %v4728 = vsel %vm262, %v4708, %v4710
      %v4729 = vsel %vm262, %v4710, %v4712
      %v4730 = vsel %vm262, %v4712, %v4714
      %4747 = vst [vmem:[#allocation4 + $0xa0] sm:$0xff] %v4715
      %4748 = vst [vmem:[#allocation4 + $0xa8] sm:$0xff] %v4716
      %4749 = vst [vmem:[#allocation4 + $0xb0] sm:$0xff] %v4717
      %4750 = vst [vmem:[#allocation4 + $0xb8] sm:$0xff] %v4718
      %4751 = vst [vmem:[#allocation4 + $0xc8] sm:$0xff] %v4719
      %4752 = vst [vmem:[#allocation4 + $0xd0] sm:$0xff] %v4720
      %4753 = vst [vmem:[#allocation4 + $0xd8] sm:$0xff] %v4721
      %4754 = vst [vmem:[#allocation4 + $0xe0] sm:$0xff] %v4722
      %4755 = vst [vmem:[#allocation4 + $0xf0] sm:$0xff] %v4723
      %4756 = vst [vmem:[#allocation4 + $0xf8] sm:$0xff] %v4724
      %4757 = vst [vmem:[#allocation4 + $0x100] sm:$0xff] %v4725
      %4758 = vst [vmem:[#allocation4 + $0x108] sm:$0xff] %v4726
      %4759 = vst [vmem:[#allocation4 + $0x118] sm:$0xff] %v4727
      %4760 = vst [vmem:[#allocation4 + $0x120] sm:$0xff] %v4728
      %4761 = vst [vmem:[#allocation4 + $0x128] sm:$0xff] %v4729
      %4762 = vst [vmem:[#allocation4 + $0x130] sm:$0xff] %v4730
      %v4763 = vld [vmem:[#allocation3] sm:$0xff]
      %v4764 = vld [vmem:[#allocation3 + $0x8] sm:$0xff]
      %v4765 = vld [vmem:[#allocation3 + $0x10] sm:$0xff]
      %v4766 = vld [vmem:[#allocation3 + $0x18] sm:$0xff]
      %v4767 = vld [vmem:[#allocation3 + $0x20] sm:$0xff]
      %v4768 = vld [vmem:[#allocation3 + $0x30] sm:$0xff]
      %v4769 = vld [vmem:[#allocation3 + $0x38] sm:$0xff]
      %v4770 = vld [vmem:[#allocation3 + $0x40] sm:$0xff]
      %v4771 = vld [vmem:[#allocation3 + $0x48] sm:$0xff]
      %v4772 = vld [vmem:[#allocation3 + $0x50] sm:$0xff]
      %v4773 = vld [vmem:[#allocation3 + $0x60] sm:$0xff]
      %v4774 = vld [vmem:[#allocation3 + $0x68] sm:$0xff]
      %v4775 = vld [vmem:[#allocation3 + $0x70] sm:$0xff]
      %v4776 = vld [vmem:[#allocation3 + $0x78] sm:$0xff]
      %v4777 = vld [vmem:[#allocation3 + $0x80] sm:$0xff]
      %v4778 = vld [vmem:[#allocation3 + $0x90] sm:$0xff]
      %v4779 = vld [vmem:[#allocation3 + $0x98] sm:$0xff]
      %v4780 = vld [vmem:[#allocation3 + $0xa0] sm:$0xff]
      %v4781 = vld [vmem:[#allocation3 + $0xa8] sm:$0xff]
      %v4782 = vld [vmem:[#allocation3 + $0xb0] sm:$0xff]
      %4803 = vrot.lane.b32.xlu0 %v4763, 126
      %v4804 = vpop.permute.xlu0 %4803
      %4805 = vrot.lane.b32.xlu0 %v4764, 126
      %v4806 = vpop.permute.xlu0 %4805
      %4807 = vrot.lane.b32.xlu0 %v4765, 126
      %v4808 = vpop.permute.xlu0 %4807
      %4809 = vrot.lane.b32.xlu0 %v4766, 126
      %v4810 = vpop.permute.xlu0 %4809
      %4811 = vrot.lane.b32.xlu0 %v4767, 126
      %v4812 = vpop.permute.xlu0 %4811
      %4813 = vrot.lane.b32.xlu0 %v4768, 126
      %v4814 = vpop.permute.xlu0 %4813
      %4815 = vrot.lane.b32.xlu0 %v4769, 126
      %v4816 = vpop.permute.xlu0 %4815
      %4817 = vrot.lane.b32.xlu0 %v4770, 126
      %v4818 = vpop.permute.xlu0 %4817
      %4819 = vrot.lane.b32.xlu0 %v4771, 126
      %v4820 = vpop.permute.xlu0 %4819
      %4821 = vrot.lane.b32.xlu0 %v4772, 126
      %v4822 = vpop.permute.xlu0 %4821
      %4823 = vrot.lane.b32.xlu0 %v4773, 126
      %v4824 = vpop.permute.xlu0 %4823
      %4825 = vrot.lane.b32.xlu0 %v4774, 126
      %v4826 = vpop.permute.xlu0 %4825
      %4827 = vrot.lane.b32.xlu0 %v4775, 126
      %v4828 = vpop.permute.xlu0 %4827
      %4829 = vrot.lane.b32.xlu0 %v4776, 126
      %v4830 = vpop.permute.xlu0 %4829
      %4831 = vrot.lane.b32.xlu0 %v4777, 126
      %v4832 = vpop.permute.xlu0 %4831
      %4833 = vrot.lane.b32.xlu0 %v4778, 126
      %v4834 = vpop.permute.xlu0 %4833
      %4835 = vrot.lane.b32.xlu0 %v4779, 126
      %v4836 = vpop.permute.xlu0 %4835
      %4837 = vrot.lane.b32.xlu0 %v4780, 126
      %v4838 = vpop.permute.xlu0 %4837
      %4839 = vrot.lane.b32.xlu0 %v4781, 126
      %v4840 = vpop.permute.xlu0 %4839
      %4841 = vrot.lane.b32.xlu0 %v4782, 126
      %v4842 = vpop.permute.xlu0 %4841
      %v4843 = vsel %vm343, %v4804, %v4806
      %v4844 = vsel %vm343, %v4806, %v4808
      %v4845 = vsel %vm343, %v4808, %v4810
      %v4846 = vsel %vm343, %v4810, %v4812
      %v4847 = vsel %vm343, %v4814, %v4816
      %v4848 = vsel %vm343, %v4816, %v4818
      %v4849 = vsel %vm343, %v4818, %v4820
      %v4850 = vsel %vm343, %v4820, %v4822
      %v4851 = vsel %vm343, %v4824, %v4826
      %v4852 = vsel %vm343, %v4826, %v4828
      %v4853 = vsel %vm343, %v4828, %v4830
      %v4854 = vsel %vm343, %v4830, %v4832
      %v4855 = vsel %vm343, %v4834, %v4836
      %v4856 = vsel %vm343, %v4836, %v4838
      %v4857 = vsel %vm343, %v4838, %v4840
      %v4858 = vsel %vm343, %v4840, %v4842
      %4875 = vst [vmem:[#allocation4 + $0x140] sm:$0xff] %v4843
      %4876 = vst [vmem:[#allocation4 + $0x148] sm:$0xff] %v4844
      %4877 = vst [vmem:[#allocation4 + $0x150] sm:$0xff] %v4845
      %4878 = vst [vmem:[#allocation4 + $0x158] sm:$0xff] %v4846
      %4879 = vst [vmem:[#allocation4 + $0x168] sm:$0xff] %v4847
      %4880 = vst [vmem:[#allocation4 + $0x170] sm:$0xff] %v4848
      %4881 = vst [vmem:[#allocation4 + $0x178] sm:$0xff] %v4849
      %4882 = vst [vmem:[#allocation4 + $0x180] sm:$0xff] %v4850
      %4883 = vst [vmem:[#allocation4 + $0x190] sm:$0xff] %v4851
      %4884 = vst [vmem:[#allocation4 + $0x198] sm:$0xff] %v4852
      %4885 = vst [vmem:[#allocation4 + $0x1a0] sm:$0xff] %v4853
      %4886 = vst [vmem:[#allocation4 + $0x1a8] sm:$0xff] %v4854
      %4887 = vst [vmem:[#allocation4 + $0x1b8] sm:$0xff] %v4855
      %4888 = vst [vmem:[#allocation4 + $0x1c0] sm:$0xff] %v4856
      %4889 = vst [vmem:[#allocation4 + $0x1c8] sm:$0xff] %v4857
      %4890 = vst [vmem:[#allocation4 + $0x1d0] sm:$0xff] %v4858
      %v4891 = vld [vmem:[#allocation3] sm:$0xff]
      %v4892 = vld [vmem:[#allocation3 + $0x8] sm:$0xff]
      %v4893 = vld [vmem:[#allocation3 + $0x10] sm:$0xff]
      %v4894 = vld [vmem:[#allocation3 + $0x18] sm:$0xff]
      %v4895 = vld [vmem:[#allocation3 + $0x20] sm:$0xff]
      %v4896 = vld [vmem:[#allocation3 + $0x30] sm:$0xff]
      %v4897 = vld [vmem:[#allocation3 + $0x38] sm:$0xff]
      %v4898 = vld [vmem:[#allocation3 + $0x40] sm:$0xff]
      %v4899 = vld [vmem:[#allocation3 + $0x48] sm:$0xff]
      %v4900 = vld [vmem:[#allocation3 + $0x50] sm:$0xff]
      %v4901 = vld [vmem:[#allocation3 + $0x60] sm:$0xff]
      %v4902 = vld [vmem:[#allocation3 + $0x68] sm:$0xff]
      %v4903 = vld [vmem:[#allocation3 + $0x70] sm:$0xff]
      %v4904 = vld [vmem:[#allocation3 + $0x78] sm:$0xff]
      %v4905 = vld [vmem:[#allocation3 + $0x80] sm:$0xff]
      %v4906 = vld [vmem:[#allocation3 + $0x90] sm:$0xff]
      %v4907 = vld [vmem:[#allocation3 + $0x98] sm:$0xff]
      %v4908 = vld [vmem:[#allocation3 + $0xa0] sm:$0xff]
      %v4909 = vld [vmem:[#allocation3 + $0xa8] sm:$0xff]
      %v4910 = vld [vmem:[#allocation3 + $0xb0] sm:$0xff]
      %4931 = vrot.lane.b32.xlu0 %v4891, 96
      %v4932 = vpop.permute.xlu0 %4931
      %4933 = vrot.lane.b32.xlu0 %v4892, 96
      %v4934 = vpop.permute.xlu0 %4933
      %4935 = vrot.lane.b32.xlu0 %v4893, 96
      %v4936 = vpop.permute.xlu0 %4935
      %4937 = vrot.lane.b32.xlu0 %v4894, 96
      %v4938 = vpop.permute.xlu0 %4937
      %4939 = vrot.lane.b32.xlu0 %v4895, 96
      %v4940 = vpop.permute.xlu0 %4939
      %4941 = vrot.lane.b32.xlu0 %v4896, 96
      %v4942 = vpop.permute.xlu0 %4941
      %4943 = vrot.lane.b32.xlu0 %v4897, 96
      %v4944 = vpop.permute.xlu0 %4943
      %4945 = vrot.lane.b32.xlu0 %v4898, 96
      %v4946 = vpop.permute.xlu0 %4945
      %4947 = vrot.lane.b32.xlu0 %v4899, 96
      %v4948 = vpop.permute.xlu0 %4947
      %4949 = vrot.lane.b32.xlu0 %v4900, 96
      %v4950 = vpop.permute.xlu0 %4949
      %4951 = vrot.lane.b32.xlu0 %v4901, 96
      %v4952 = vpop.permute.xlu0 %4951
      %4953 = vrot.lane.b32.xlu0 %v4902, 96
      %v4954 = vpop.permute.xlu0 %4953
      %4955 = vrot.lane.b32.xlu0 %v4903, 96
      %v4956 = vpop.permute.xlu0 %4955
      %4957 = vrot.lane.b32.xlu0 %v4904, 96
      %v4958 = vpop.permute.xlu0 %4957
      %4959 = vrot.lane.b32.xlu0 %v4905, 96
      %v4960 = vpop.permute.xlu0 %4959
      %4961 = vrot.lane.b32.xlu0 %v4906, 96
      %v4962 = vpop.permute.xlu0 %4961
      %4963 = vrot.lane.b32.xlu0 %v4907, 96
      %v4964 = vpop.permute.xlu0 %4963
      %4965 = vrot.lane.b32.xlu0 %v4908, 96
      %v4966 = vpop.permute.xlu0 %4965
      %4967 = vrot.lane.b32.xlu0 %v4909, 96
      %v4968 = vpop.permute.xlu0 %4967
      %4969 = vrot.lane.b32.xlu0 %v4910, 96
      %v4970 = vpop.permute.xlu0 %4969
      %v4971 = vsel %vm424, %v4932, %v4934
      %v4972 = vsel %vm424, %v4934, %v4936
      %v4973 = vsel %vm424, %v4936, %v4938
      %v4974 = vsel %vm424, %v4938, %v4940
      %v4975 = vsel %vm424, %v4942, %v4944
      %v4976 = vsel %vm424, %v4944, %v4946
      %v4977 = vsel %vm424, %v4946, %v4948
      %v4978 = vsel %vm424, %v4948, %v4950
      %v4979 = vsel %vm424, %v4952, %v4954
      %v4980 = vsel %vm424, %v4954, %v4956
      %v4981 = vsel %vm424, %v4956, %v4958
      %v4982 = vsel %vm424, %v4958, %v4960
      %v4983 = vsel %vm424, %v4962, %v4964
      %v4984 = vsel %vm424, %v4964, %v4966
      %v4985 = vsel %vm424, %v4966, %v4968
      %v4986 = vsel %vm424, %v4968, %v4970
      %5003 = vst [vmem:[#allocation4 + $0x1e0] sm:$0xff] %v4971
      %5004 = vst [vmem:[#allocation4 + $0x1e8] sm:$0xff] %v4972
      %5005 = vst [vmem:[#allocation4 + $0x1f0] sm:$0xff] %v4973
      %5006 = vst [vmem:[#allocation4 + $0x1f8] sm:$0xff] %v4974
      %5007 = vst [vmem:[#allocation4 + $0x208] sm:$0xff] %v4975
      %5008 = vst [vmem:[#allocation4 + $0x210] sm:$0xff] %v4976
      %5009 = vst [vmem:[#allocation4 + $0x218] sm:$0xff] %v4977
      %5010 = vst [vmem:[#allocation4 + $0x220] sm:$0xff] %v4978
      %5011 = vst [vmem:[#allocation4 + $0x230] sm:$0xff] %v4979
      %5012 = vst [vmem:[#allocation4 + $0x238] sm:$0xff] %v4980
      %5013 = vst [vmem:[#allocation4 + $0x240] sm:$0xff] %v4981
      %5014 = vst [vmem:[#allocation4 + $0x248] sm:$0xff] %v4982
      %5015 = vst [vmem:[#allocation4 + $0x258] sm:$0xff] %v4983
      %5016 = vst [vmem:[#allocation4 + $0x260] sm:$0xff] %v4984
      %5017 = vst [vmem:[#allocation4 + $0x268] sm:$0xff] %v4985
      %5018 = vst [vmem:[#allocation4 + $0x270] sm:$0xff] %v4986
      %v5019 = vld [vmem:[#allocation3] sm:$0xff]
      %v5020 = vld [vmem:[#allocation3 + $0x8] sm:$0xff]
      %v5021 = vld [vmem:[#allocation3 + $0x10] sm:$0xff]
      %v5022 = vld [vmem:[#allocation3 + $0x18] sm:$0xff]
      %v5023 = vld [vmem:[#allocation3 + $0x20] sm:$0xff]
      %v5024 = vld [vmem:[#allocation3 + $0x30] sm:$0xff]
      %v5025 = vld [vmem:[#allocation3 + $0x38] sm:$0xff]
      %v5026 = vld [vmem:[#allocation3 + $0x40] sm:$0xff]
      %v5027 = vld [vmem:[#allocation3 + $0x48] sm:$0xff]
      %v5028 = vld [vmem:[#allocation3 + $0x50] sm:$0xff]
      %v5029 = vld [vmem:[#allocation3 + $0x60] sm:$0xff]
      %v5030 = vld [vmem:[#allocation3 + $0x68] sm:$0xff]
      %v5031 = vld [vmem:[#allocation3 + $0x70] sm:$0xff]
      %v5032 = vld [vmem:[#allocation3 + $0x78] sm:$0xff]
      %v5033 = vld [vmem:[#allocation3 + $0x80] sm:$0xff]
      %v5034 = vld [vmem:[#allocation3 + $0x90] sm:$0xff]
      %v5035 = vld [vmem:[#allocation3 + $0x98] sm:$0xff]
      %v5036 = vld [vmem:[#allocation3 + $0xa0] sm:$0xff]
      %v5037 = vld [vmem:[#allocation3 + $0xa8] sm:$0xff]
      %v5038 = vld [vmem:[#allocation3 + $0xb0] sm:$0xff]
      %5059 = vrot.lane.b32.xlu0 %v5019, 95
      %v5060 = vpop.permute.xlu0 %5059
      %5061 = vrot.lane.b32.xlu0 %v5020, 95
      %v5062 = vpop.permute.xlu0 %5061
      %5063 = vrot.lane.b32.xlu0 %v5021, 95
      %v5064 = vpop.permute.xlu0 %5063
      %5065 = vrot.lane.b32.xlu0 %v5022, 95
      %v5066 = vpop.permute.xlu0 %5065
      %5067 = vrot.lane.b32.xlu0 %v5023, 95
      %v5068 = vpop.permute.xlu0 %5067
      %5069 = vrot.lane.b32.xlu0 %v5024, 95
      %v5070 = vpop.permute.xlu0 %5069
      %5071 = vrot.lane.b32.xlu0 %v5025, 95
      %v5072 = vpop.permute.xlu0 %5071
      %5073 = vrot.lane.b32.xlu0 %v5026, 95
      %v5074 = vpop.permute.xlu0 %5073
      %5075 = vrot.lane.b32.xlu0 %v5027, 95
      %v5076 = vpop.permute.xlu0 %5075
      %5077 = vrot.lane.b32.xlu0 %v5028, 95
      %v5078 = vpop.permute.xlu0 %5077
      %5079 = vrot.lane.b32.xlu0 %v5029, 95
      %v5080 = vpop.permute.xlu0 %5079
      %5081 = vrot.lane.b32.xlu0 %v5030, 95
      %v5082 = vpop.permute.xlu0 %5081
      %5083 = vrot.lane.b32.xlu0 %v5031, 95
      %v5084 = vpop.permute.xlu0 %5083
      %5085 = vrot.lane.b32.xlu0 %v5032, 95
      %v5086 = vpop.permute.xlu0 %5085
      %5087 = vrot.lane.b32.xlu0 %v5033, 95
      %v5088 = vpop.permute.xlu0 %5087
      %5089 = vrot.lane.b32.xlu0 %v5034, 95
      %v5090 = vpop.permute.xlu0 %5089
      %5091 = vrot.lane.b32.xlu0 %v5035, 95
      %v5092 = vpop.permute.xlu0 %5091
      %5093 = vrot.lane.b32.xlu0 %v5036, 95
      %v5094 = vpop.permute.xlu0 %5093
      %5095 = vrot.lane.b32.xlu0 %v5037, 95
      %v5096 = vpop.permute.xlu0 %5095
      %5097 = vrot.lane.b32.xlu0 %v5038, 95
      %v5098 = vpop.permute.xlu0 %5097
      %v5099 = vsel %vm505, %v5060, %v5062
      %v5100 = vsel %vm505, %v5062, %v5064
      %v5101 = vsel %vm505, %v5064, %v5066
      %v5102 = vsel %vm505, %v5066, %v5068
      %v5103 = vsel %vm505, %v5070, %v5072
      %v5104 = vsel %vm505, %v5072, %v5074
      %v5105 = vsel %vm505, %v5074, %v5076
      %v5106 = vsel %vm505, %v5076, %v5078
      %v5107 = vsel %vm505, %v5080, %v5082
      %v5108 = vsel %vm505, %v5082, %v5084
      %v5109 = vsel %vm505, %v5084, %v5086
      %v5110 = vsel %vm505, %v5086, %v5088
      %v5111 = vsel %vm505, %v5090, %v5092
      %v5112 = vsel %vm505, %v5092, %v5094
      %v5113 = vsel %vm505, %v5094, %v5096
      %v5114 = vsel %vm505, %v5096, %v5098
      %5131 = vst [vmem:[#allocation4 + $0x280] sm:$0xff] %v5099
      %5132 = vst [vmem:[#allocation4 + $0x288] sm:$0xff] %v5100
      %5133 = vst [vmem:[#allocation4 + $0x290] sm:$0xff] %v5101
      %5134 = vst [vmem:[#allocation4 + $0x298] sm:$0xff] %v5102
      %5135 = vst [vmem:[#allocation4 + $0x2a8] sm:$0xff] %v5103
      %5136 = vst [vmem:[#allocation4 + $0x2b0] sm:$0xff] %v5104
      %5137 = vst [vmem:[#allocation4 + $0x2b8] sm:$0xff] %v5105
      %5138 = vst [vmem:[#allocation4 + $0x2c0] sm:$0xff] %v5106
      %5139 = vst [vmem:[#allocation4 + $0x2d0] sm:$0xff] %v5107
      %5140 = vst [vmem:[#allocation4 + $0x2d8] sm:$0xff] %v5108
      %5141 = vst [vmem:[#allocation4 + $0x2e0] sm:$0xff] %v5109
      %5142 = vst [vmem:[#allocation4 + $0x2e8] sm:$0xff] %v5110
      %5143 = vst [vmem:[#allocation4 + $0x2f8] sm:$0xff] %v5111
      %5144 = vst [vmem:[#allocation4 + $0x300] sm:$0xff] %v5112
      %5145 = vst [vmem:[#allocation4 + $0x308] sm:$0xff] %v5113
      %5146 = vst [vmem:[#allocation4 + $0x310] sm:$0xff] %v5114
      %v5147 = vld [vmem:[#allocation3] sm:$0xff]
      %v5148 = vld [vmem:[#allocation3 + $0x8] sm:$0xff]
      %v5149 = vld [vmem:[#allocation3 + $0x10] sm:$0xff]
      %v5150 = vld [vmem:[#allocation3 + $0x18] sm:$0xff]
      %v5151 = vld [vmem:[#allocation3 + $0x20] sm:$0xff]
      %v5152 = vld [vmem:[#allocation3 + $0x30] sm:$0xff]
      %v5153 = vld [vmem:[#allocation3 + $0x38] sm:$0xff]
      %v5154 = vld [vmem:[#allocation3 + $0x40] sm:$0xff]
      %v5155 = vld [vmem:[#allocation3 + $0x48] sm:$0xff]
      %v5156 = vld [vmem:[#allocation3 + $0x50] sm:$0xff]
      %v5157 = vld [vmem:[#allocation3 + $0x60] sm:$0xff]
      %v5158 = vld [vmem:[#allocation3 + $0x68] sm:$0xff]
      %v5159 = vld [vmem:[#allocation3 + $0x70] sm:$0xff]
      %v5160 = vld [vmem:[#allocation3 + $0x78] sm:$0xff]
      %v5161 = vld [vmem:[#allocation3 + $0x80] sm:$0xff]
      %v5162 = vld [vmem:[#allocation3 + $0x90] sm:$0xff]
      %v5163 = vld [vmem:[#allocation3 + $0x98] sm:$0xff]
      %v5164 = vld [vmem:[#allocation3 + $0xa0] sm:$0xff]
      %v5165 = vld [vmem:[#allocation3 + $0xa8] sm:$0xff]
      %v5166 = vld [vmem:[#allocation3 + $0xb0] sm:$0xff]
      %5187 = vrot.lane.b32.xlu0 %v5147, 94
      %v5188 = vpop.permute.xlu0 %5187
      %5189 = vrot.lane.b32.xlu0 %v5148, 94
      %v5190 = vpop.permute.xlu0 %5189
      %5191 = vrot.lane.b32.xlu0 %v5149, 94
      %v5192 = vpop.permute.xlu0 %5191
      %5193 = vrot.lane.b32.xlu0 %v5150, 94
      %v5194 = vpop.permute.xlu0 %5193
      %5195 = vrot.lane.b32.xlu0 %v5151, 94
      %v5196 = vpop.permute.xlu0 %5195
      %5197 = vrot.lane.b32.xlu0 %v5152, 94
      %v5198 = vpop.permute.xlu0 %5197
      %5199 = vrot.lane.b32.xlu0 %v5153, 94
      %v5200 = vpop.permute.xlu0 %5199
      %5201 = vrot.lane.b32.xlu0 %v5154, 94
      %v5202 = vpop.permute.xlu0 %5201
      %5203 = vrot.lane.b32.xlu0 %v5155, 94
      %v5204 = vpop.permute.xlu0 %5203
      %5205 = vrot.lane.b32.xlu0 %v5156, 94
      %v5206 = vpop.permute.xlu0 %5205
      %5207 = vrot.lane.b32.xlu0 %v5157, 94
      %v5208 = vpop.permute.xlu0 %5207
      %5209 = vrot.lane.b32.xlu0 %v5158, 94
      %v5210 = vpop.permute.xlu0 %5209
      %5211 = vrot.lane.b32.xlu0 %v5159, 94
      %v5212 = vpop.permute.xlu0 %5211
      %5213 = vrot.lane.b32.xlu0 %v5160, 94
      %v5214 = vpop.permute.xlu0 %5213
      %5215 = vrot.lane.b32.xlu0 %v5161, 94
      %v5216 = vpop.permute.xlu0 %5215
      %5217 = vrot.lane.b32.xlu0 %v5162, 94
      %v5218 = vpop.permute.xlu0 %5217
      %5219 = vrot.lane.b32.xlu0 %v5163, 94
      %v5220 = vpop.permute.xlu0 %5219
      %5221 = vrot.lane.b32.xlu0 %v5164, 94
      %v5222 = vpop.permute.xlu0 %5221
      %5223 = vrot.lane.b32.xlu0 %v5165, 94
      %v5224 = vpop.permute.xlu0 %5223
      %5225 = vrot.lane.b32.xlu0 %v5166, 94
      %v5226 = vpop.permute.xlu0 %5225
      %v5227 = vsel %vm586, %v5188, %v5190
      %v5228 = vsel %vm586, %v5190, %v5192
      %v5229 = vsel %vm586, %v5192, %v5194
      %v5230 = vsel %vm586, %v5194, %v5196
      %v5231 = vsel %vm586, %v5198, %v5200
      %v5232 = vsel %vm586, %v5200, %v5202
      %v5233 = vsel %vm586, %v5202, %v5204
      %v5234 = vsel %vm586, %v5204, %v5206
      %v5235 = vsel %vm586, %v5208, %v5210
      %v5236 = vsel %vm586, %v5210, %v5212
      %v5237 = vsel %vm586, %v5212, %v5214
      %v5238 = vsel %vm586, %v5214, %v5216
      %v5239 = vsel %vm586, %v5218, %v5220
      %v5240 = vsel %vm586, %v5220, %v5222
      %v5241 = vsel %vm586, %v5222, %v5224
      %v5242 = vsel %vm586, %v5224, %v5226
      %5259 = vst [vmem:[#allocation4 + $0x320] sm:$0xff] %v5227
      %5260 = vst [vmem:[#allocation4 + $0x328] sm:$0xff] %v5228
      %5261 = vst [vmem:[#allocation4 + $0x330] sm:$0xff] %v5229
      %5262 = vst [vmem:[#allocation4 + $0x338] sm:$0xff] %v5230
      %5263 = vst [vmem:[#allocation4 + $0x348] sm:$0xff] %v5231
      %5264 = vst [vmem:[#allocation4 + $0x350] sm:$0xff] %v5232
      %5265 = vst [vmem:[#allocation4 + $0x358] sm:$0xff] %v5233
      %5266 = vst [vmem:[#allocation4 + $0x360] sm:$0xff] %v5234
      %5267 = vst [vmem:[#allocation4 + $0x370] sm:$0xff] %v5235
      %5268 = vst [vmem:[#allocation4 + $0x378] sm:$0xff] %v5236
      %5269 = vst [vmem:[#allocation4 + $0x380] sm:$0xff] %v5237
      %5270 = vst [vmem:[#allocation4 + $0x388] sm:$0xff] %v5238
      %5271 = vst [vmem:[#allocation4 + $0x398] sm:$0xff] %v5239
      %5272 = vst [vmem:[#allocation4 + $0x3a0] sm:$0xff] %v5240
      %5273 = vst [vmem:[#allocation4 + $0x3a8] sm:$0xff] %v5241
      %5274 = vst [vmem:[#allocation4 + $0x3b0] sm:$0xff] %v5242
      %v5275 = vld [vmem:[#allocation3] sm:$0xff]
      %v5276 = vld [vmem:[#allocation3 + $0x8] sm:$0xff]
      %v5277 = vld [vmem:[#allocation3 + $0x10] sm:$0xff]
      %v5278 = vld [vmem:[#allocation3 + $0x18] sm:$0xff]
      %v5279 = vld [vmem:[#allocation3 + $0x20] sm:$0xff]
      %v5280 = vld [vmem:[#allocation3 + $0x30] sm:$0xff]
      %v5281 = vld [vmem:[#allocation3 + $0x38] sm:$0xff]
      %v5282 = vld [vmem:[#allocation3 + $0x40] sm:$0xff]
      %v5283 = vld [vmem:[#allocation3 + $0x48] sm:$0xff]
      %v5284 = vld [vmem:[#allocation3 + $0x50] sm:$0xff]
      %v5285 = vld [vmem:[#allocation3 + $0x60] sm:$0xff]
      %v5286 = vld [vmem:[#allocation3 + $0x68] sm:$0xff]
      %v5287 = vld [vmem:[#allocation3 + $0x70] sm:$0xff]
      %v5288 = vld [vmem:[#allocation3 + $0x78] sm:$0xff]
      %v5289 = vld [vmem:[#allocation3 + $0x80] sm:$0xff]
      %v5290 = vld [vmem:[#allocation3 + $0x90] sm:$0xff]
      %v5291 = vld [vmem:[#allocation3 + $0x98] sm:$0xff]
      %v5292 = vld [vmem:[#allocation3 + $0xa0] sm:$0xff]
      %v5293 = vld [vmem:[#allocation3 + $0xa8] sm:$0xff]
      %v5294 = vld [vmem:[#allocation3 + $0xb0] sm:$0xff]
      %5315 = vrot.lane.b32.xlu0 %v5275, 64
      %v5316 = vpop.permute.xlu0 %5315
      %5317 = vrot.lane.b32.xlu0 %v5276, 64
      %v5318 = vpop.permute.xlu0 %5317
      %5319 = vrot.lane.b32.xlu0 %v5277, 64
      %v5320 = vpop.permute.xlu0 %5319
      %5321 = vrot.lane.b32.xlu0 %v5278, 64
      %v5322 = vpop.permute.xlu0 %5321
      %5323 = vrot.lane.b32.xlu0 %v5279, 64
      %v5324 = vpop.permute.xlu0 %5323
      %5325 = vrot.lane.b32.xlu0 %v5280, 64
      %v5326 = vpop.permute.xlu0 %5325
      %5327 = vrot.lane.b32.xlu0 %v5281, 64
      %v5328 = vpop.permute.xlu0 %5327
      %5329 = vrot.lane.b32.xlu0 %v5282, 64
      %v5330 = vpop.permute.xlu0 %5329
      %5331 = vrot.lane.b32.xlu0 %v5283, 64
      %v5332 = vpop.permute.xlu0 %5331
      %5333 = vrot.lane.b32.xlu0 %v5284, 64
      %v5334 = vpop.permute.xlu0 %5333
      %5335 = vrot.lane.b32.xlu0 %v5285, 64
      %v5336 = vpop.permute.xlu0 %5335
      %5337 = vrot.lane.b32.xlu0 %v5286, 64
      %v5338 = vpop.permute.xlu0 %5337
      %5339 = vrot.lane.b32.xlu0 %v5287, 64
      %v5340 = vpop.permute.xlu0 %5339
      %5341 = vrot.lane.b32.xlu0 %v5288, 64
      %v5342 = vpop.permute.xlu0 %5341
      %5343 = vrot.lane.b32.xlu0 %v5289, 64
      %v5344 = vpop.permute.xlu0 %5343
      %5345 = vrot.lane.b32.xlu0 %v5290, 64
      %v5346 = vpop.permute.xlu0 %5345
      %5347 = vrot.lane.b32.xlu0 %v5291, 64
      %v5348 = vpop.permute.xlu0 %5347
      %5349 = vrot.lane.b32.xlu0 %v5292, 64
      %v5350 = vpop.permute.xlu0 %5349
      %5351 = vrot.lane.b32.xlu0 %v5293, 64
      %v5352 = vpop.permute.xlu0 %5351
      %5353 = vrot.lane.b32.xlu0 %v5294, 64
      %v5354 = vpop.permute.xlu0 %5353
      %v5355 = vsel %vm203, %v5316, %v5318
      %v5356 = vsel %vm203, %v5318, %v5320
      %v5357 = vsel %vm203, %v5320, %v5322
      %v5358 = vsel %vm203, %v5322, %v5324
      %v5359 = vsel %vm203, %v5326, %v5328
      %v5360 = vsel %vm203, %v5328, %v5330
      %v5361 = vsel %vm203, %v5330, %v5332
      %v5362 = vsel %vm203, %v5332, %v5334
      %v5363 = vsel %vm203, %v5336, %v5338
      %v5364 = vsel %vm203, %v5338, %v5340
      %v5365 = vsel %vm203, %v5340, %v5342
      %v5366 = vsel %vm203, %v5342, %v5344
      %v5367 = vsel %vm203, %v5346, %v5348
      %v5368 = vsel %vm203, %v5348, %v5350
      %v5369 = vsel %vm203, %v5350, %v5352
      %v5370 = vsel %vm203, %v5352, %v5354
      %5387 = vst [vmem:[#allocation4 + $0x3c0] sm:$0xff] %v5355
      %5388 = vst [vmem:[#allocation4 + $0x3c8] sm:$0xff] %v5356
      %5389 = vst [vmem:[#allocation4 + $0x3d0] sm:$0xff] %v5357
      %5390 = vst [vmem:[#allocation4 + $0x3d8] sm:$0xff] %v5358
      %5391 = vst [vmem:[#allocation4 + $0x3e8] sm:$0xff] %v5359
      %5392 = vst [vmem:[#allocation4 + $0x3f0] sm:$0xff] %v5360
      %5393 = vst [vmem:[#allocation4 + $0x3f8] sm:$0xff] %v5361
      %5394 = vst [vmem:[#allocation4 + $0x400] sm:$0xff] %v5362
      %5395 = vst [vmem:[#allocation4 + $0x410] sm:$0xff] %v5363
      %5396 = vst [vmem:[#allocation4 + $0x418] sm:$0xff] %v5364
      %5397 = vst [vmem:[#allocation4 + $0x420] sm:$0xff] %v5365
      %5398 = vst [vmem:[#allocation4 + $0x428] sm:$0xff] %v5366
      %5399 = vst [vmem:[#allocation4 + $0x438] sm:$0xff] %v5367
      %5400 = vst [vmem:[#allocation4 + $0x440] sm:$0xff] %v5368
      %5401 = vst [vmem:[#allocation4 + $0x448] sm:$0xff] %v5369
      %5402 = vst [vmem:[#allocation4 + $0x450] sm:$0xff] %v5370
      %v5403 = vld [vmem:[#allocation3] sm:$0xff]
      %v5404 = vld [vmem:[#allocation3 + $0x8] sm:$0xff]
      %v5405 = vld [vmem:[#allocation3 + $0x10] sm:$0xff]
      %v5406 = vld [vmem:[#allocation3 + $0x18] sm:$0xff]
      %v5407 = vld [vmem:[#allocation3 + $0x20] sm:$0xff]
      %v5408 = vld [vmem:[#allocation3 + $0x30] sm:$0xff]
      %v5409 = vld [vmem:[#allocation3 + $0x38] sm:$0xff]
      %v5410 = vld [vmem:[#allocation3 + $0x40] sm:$0xff]
      %v5411 = vld [vmem:[#allocation3 + $0x48] sm:$0xff]
      %v5412 = vld [vmem:[#allocation3 + $0x50] sm:$0xff]
      %v5413 = vld [vmem:[#allocation3 + $0x60] sm:$0xff]
      %v5414 = vld [vmem:[#allocation3 + $0x68] sm:$0xff]
      %v5415 = vld [vmem:[#allocation3 + $0x70] sm:$0xff]
      %v5416 = vld [vmem:[#allocation3 + $0x78] sm:$0xff]
      %v5417 = vld [vmem:[#allocation3 + $0x80] sm:$0xff]
      %v5418 = vld [vmem:[#allocation3 + $0x90] sm:$0xff]
      %v5419 = vld [vmem:[#allocation3 + $0x98] sm:$0xff]
      %v5420 = vld [vmem:[#allocation3 + $0xa0] sm:$0xff]
      %v5421 = vld [vmem:[#allocation3 + $0xa8] sm:$0xff]
      %v5422 = vld [vmem:[#allocation3 + $0xb0] sm:$0xff]
      %5443 = vrot.lane.b32.xlu0 %v5403, 63
      %v5444 = vpop.permute.xlu0 %5443
      %5445 = vrot.lane.b32.xlu0 %v5404, 63
      %v5446 = vpop.permute.xlu0 %5445
      %5447 = vrot.lane.b32.xlu0 %v5405, 63
      %v5448 = vpop.permute.xlu0 %5447
      %5449 = vrot.lane.b32.xlu0 %v5406, 63
      %v5450 = vpop.permute.xlu0 %5449
      %5451 = vrot.lane.b32.xlu0 %v5407, 63
      %v5452 = vpop.permute.xlu0 %5451
      %5453 = vrot.lane.b32.xlu0 %v5408, 63
      %v5454 = vpop.permute.xlu0 %5453
      %5455 = vrot.lane.b32.xlu0 %v5409, 63
      %v5456 = vpop.permute.xlu0 %5455
      %5457 = vrot.lane.b32.xlu0 %v5410, 63
      %v5458 = vpop.permute.xlu0 %5457
      %5459 = vrot.lane.b32.xlu0 %v5411, 63
      %v5460 = vpop.permute.xlu0 %5459
      %5461 = vrot.lane.b32.xlu0 %v5412, 63
      %v5462 = vpop.permute.xlu0 %5461
      %5463 = vrot.lane.b32.xlu0 %v5413, 63
      %v5464 = vpop.permute.xlu0 %5463
      %5465 = vrot.lane.b32.xlu0 %v5414, 63
      %v5466 = vpop.permute.xlu0 %5465
      %5467 = vrot.lane.b32.xlu0 %v5415, 63
      %v5468 = vpop.permute.xlu0 %5467
      %5469 = vrot.lane.b32.xlu0 %v5416, 63
      %v5470 = vpop.permute.xlu0 %5469
      %5471 = vrot.lane.b32.xlu0 %v5417, 63
      %v5472 = vpop.permute.xlu0 %5471
      %5473 = vrot.lane.b32.xlu0 %v5418, 63
      %v5474 = vpop.permute.xlu0 %5473
      %5475 = vrot.lane.b32.xlu0 %v5419, 63
      %v5476 = vpop.permute.xlu0 %5475
      %5477 = vrot.lane.b32.xlu0 %v5420, 63
      %v5478 = vpop.permute.xlu0 %5477
      %5479 = vrot.lane.b32.xlu0 %v5421, 63
      %v5480 = vpop.permute.xlu0 %5479
      %5481 = vrot.lane.b32.xlu0 %v5422, 63
      %v5482 = vpop.permute.xlu0 %5481
      %v5483 = vsel %vm763, %v5444, %v5446
      %v5484 = vsel %vm763, %v5446, %v5448
      %v5485 = vsel %vm763, %v5448, %v5450
      %v5486 = vsel %vm763, %v5450, %v5452
      %v5487 = vsel %vm763, %v5454, %v5456
      %v5488 = vsel %vm763, %v5456, %v5458
      %v5489 = vsel %vm763, %v5458, %v5460
      %v5490 = vsel %vm763, %v5460, %v5462
      %v5491 = vsel %vm763, %v5464, %v5466
      %v5492 = vsel %vm763, %v5466, %v5468
      %v5493 = vsel %vm763, %v5468, %v5470
      %v5494 = vsel %vm763, %v5470, %v5472
      %v5495 = vsel %vm763, %v5474, %v5476
      %v5496 = vsel %vm763, %v5476, %v5478
      %v5497 = vsel %vm763, %v5478, %v5480
      %v5498 = vsel %vm763, %v5480, %v5482
      %5515 = vst [vmem:[#allocation4 + $0x460] sm:$0xff] %v5483
      %5516 = vst [vmem:[#allocation4 + $0x468] sm:$0xff] %v5484
      %5517 = vst [vmem:[#allocation4 + $0x470] sm:$0xff] %v5485
      %5518 = vst [vmem:[#allocation4 + $0x478] sm:$0xff] %v5486
      %5519 = vst [vmem:[#allocation4 + $0x488] sm:$0xff] %v5487
      %5520 = vst [vmem:[#allocation4 + $0x490] sm:$0xff] %v5488
      %5521 = vst [vmem:[#allocation4 + $0x498] sm:$0xff] %v5489
      %5522 = vst [vmem:[#allocation4 + $0x4a0] sm:$0xff] %v5490
      %5523 = vst [vmem:[#allocation4 + $0x4b0] sm:$0xff] %v5491
      %5524 = vst [vmem:[#allocation4 + $0x4b8] sm:$0xff] %v5492
      %5525 = vst [vmem:[#allocation4 + $0x4c0] sm:$0xff] %v5493
      %5526 = vst [vmem:[#allocation4 + $0x4c8] sm:$0xff] %v5494
      %5527 = vst [vmem:[#allocation4 + $0x4d8] sm:$0xff] %v5495
      %5528 = vst [vmem:[#allocation4 + $0x4e0] sm:$0xff] %v5496
      %5529 = vst [vmem:[#allocation4 + $0x4e8] sm:$0xff] %v5497
      %5530 = vst [vmem:[#allocation4 + $0x4f0] sm:$0xff] %v5498
      %v5531 = vld [vmem:[#allocation3] sm:$0xff]
      %v5532 = vld [vmem:[#allocation3 + $0x8] sm:$0xff]
      %v5533 = vld [vmem:[#allocation3 + $0x10] sm:$0xff]
      %v5534 = vld [vmem:[#allocation3 + $0x18] sm:$0xff]
      %v5535 = vld [vmem:[#allocation3 + $0x20] sm:$0xff]
      %v5536 = vld [vmem:[#allocation3 + $0x30] sm:$0xff]
      %v5537 = vld [vmem:[#allocation3 + $0x38] sm:$0xff]
      %v5538 = vld [vmem:[#allocation3 + $0x40] sm:$0xff]
      %v5539 = vld [vmem:[#allocation3 + $0x48] sm:$0xff]
      %v5540 = vld [vmem:[#allocation3 + $0x50] sm:$0xff]
      %v5541 = vld [vmem:[#allocation3 + $0x60] sm:$0xff]
      %v5542 = vld [vmem:[#allocation3 + $0x68] sm:$0xff]
      %v5543 = vld [vmem:[#allocation3 + $0x70] sm:$0xff]
      %v5544 = vld [vmem:[#allocation3 + $0x78] sm:$0xff]
      %v5545 = vld [vmem:[#allocation3 + $0x80] sm:$0xff]
      %v5546 = vld [vmem:[#allocation3 + $0x90] sm:$0xff]
      %v5547 = vld [vmem:[#allocation3 + $0x98] sm:$0xff]
      %v5548 = vld [vmem:[#allocation3 + $0xa0] sm:$0xff]
      %v5549 = vld [vmem:[#allocation3 + $0xa8] sm:$0xff]
      %v5550 = vld [vmem:[#allocation3 + $0xb0] sm:$0xff]
      %5571 = vrot.lane.b32.xlu0 %v5531, 62
      %v5572 = vpop.permute.xlu0 %5571
      %5573 = vrot.lane.b32.xlu0 %v5532, 62
      %v5574 = vpop.permute.xlu0 %5573
      %5575 = vrot.lane.b32.xlu0 %v5533, 62
      %v5576 = vpop.permute.xlu0 %5575
      %5577 = vrot.lane.b32.xlu0 %v5534, 62
      %v5578 = vpop.permute.xlu0 %5577
      %5579 = vrot.lane.b32.xlu0 %v5535, 62
      %v5580 = vpop.permute.xlu0 %5579
      %5581 = vrot.lane.b32.xlu0 %v5536, 62
      %v5582 = vpop.permute.xlu0 %5581
      %5583 = vrot.lane.b32.xlu0 %v5537, 62
      %v5584 = vpop.permute.xlu0 %5583
      %5585 = vrot.lane.b32.xlu0 %v5538, 62
      %v5586 = vpop.permute.xlu0 %5585
      %5587 = vrot.lane.b32.xlu0 %v5539, 62
      %v5588 = vpop.permute.xlu0 %5587
      %5589 = vrot.lane.b32.xlu0 %v5540, 62
      %v5590 = vpop.permute.xlu0 %5589
      %5591 = vrot.lane.b32.xlu0 %v5541, 62
      %v5592 = vpop.permute.xlu0 %5591
      %5593 = vrot.lane.b32.xlu0 %v5542, 62
      %v5594 = vpop.permute.xlu0 %5593
      %5595 = vrot.lane.b32.xlu0 %v5543, 62
      %v5596 = vpop.permute.xlu0 %5595
      %5597 = vrot.lane.b32.xlu0 %v5544, 62
      %v5598 = vpop.permute.xlu0 %5597
      %5599 = vrot.lane.b32.xlu0 %v5545, 62
      %v5600 = vpop.permute.xlu0 %5599
      %5601 = vrot.lane.b32.xlu0 %v5546, 62
      %v5602 = vpop.permute.xlu0 %5601
      %5603 = vrot.lane.b32.xlu0 %v5547, 62
      %v5604 = vpop.permute.xlu0 %5603
      %5605 = vrot.lane.b32.xlu0 %v5548, 62
      %v5606 = vpop.permute.xlu0 %5605
      %5607 = vrot.lane.b32.xlu0 %v5549, 62
      %v5608 = vpop.permute.xlu0 %5607
      %5609 = vrot.lane.b32.xlu0 %v5550, 62
      %v5610 = vpop.permute.xlu0 %5609
      %v5611 = vsel %vm864, %v5572, %v5574
      %v5612 = vsel %vm864, %v5574, %v5576
      %v5613 = vsel %vm864, %v5576, %v5578
      %v5614 = vsel %vm864, %v5578, %v5580
      %v5615 = vsel %vm864, %v5582, %v5584
      %v5616 = vsel %vm864, %v5584, %v5586
      %v5617 = vsel %vm864, %v5586, %v5588
      %v5618 = vsel %vm864, %v5588, %v5590
      %v5619 = vsel %vm864, %v5592, %v5594
      %v5620 = vsel %vm864, %v5594, %v5596
      %v5621 = vsel %vm864, %v5596, %v5598
      %v5622 = vsel %vm864, %v5598, %v5600
      %v5623 = vsel %vm864, %v5602, %v5604
      %v5624 = vsel %vm864, %v5604, %v5606
      %v5625 = vsel %vm864, %v5606, %v5608
      %v5626 = vsel %vm864, %v5608, %v5610
      %5643 = vst [vmem:[#allocation4 + $0x500] sm:$0xff] %v5611
      %5644 = vst [vmem:[#allocation4 + $0x508] sm:$0xff] %v5612
      %5645 = vst [vmem:[#allocation4 + $0x510] sm:$0xff] %v5613
      %5646 = vst [vmem:[#allocation4 + $0x518] sm:$0xff] %v5614
      %5647 = vst [vmem:[#allocation4 + $0x528] sm:$0xff] %v5615
      %5648 = vst [vmem:[#allocation4 + $0x530] sm:$0xff] %v5616
      %5649 = vst [vmem:[#allocation4 + $0x538] sm:$0xff] %v5617
      %5650 = vst [vmem:[#allocation4 + $0x540] sm:$0xff] %v5618
      %5651 = vst [vmem:[#allocation4 + $0x550] sm:$0xff] %v5619
      %5652 = vst [vmem:[#allocation4 + $0x558] sm:$0xff] %v5620
      %5653 = vst [vmem:[#allocation4 + $0x560] sm:$0xff] %v5621
      %5654 = vst [vmem:[#allocation4 + $0x568] sm:$0xff] %v5622
      %5655 = vst [vmem:[#allocation4 + $0x578] sm:$0xff] %v5623
      %5656 = vst [vmem:[#allocation4 + $0x580] sm:$0xff] %v5624
      %5657 = vst [vmem:[#allocation4 + $0x588] sm:$0xff] %v5625
      %5658 = vst [vmem:[#allocation4 + $0x590] sm:$0xff] %v5626
      %s5659 = scalar_lea.vmem %s1, 288
      %v5660 = vld [vmem:[%s5659] sm:$0xff]
      %v5661 = vld [vmem:[%s5659 + $0x8] sm:$0xff]
      %v5662 = vld [vmem:[%s5659 + $0x10] sm:$0xff]
      %v5663 = vld [vmem:[%s5659 + $0x18] sm:$0xff]
      %v5664 = vld [vmem:[%s5659 + $0x20] sm:$0xff]
      %v5665 = vld [vmem:[%s5659 + $0x28] sm:$0xff]
      %v5666 = vld [vmem:[%s5659 + $0x30] sm:$0xff]
      %v5667 = vld [vmem:[%s5659 + $0x38] sm:$0xff]
      %v5668 = vld [vmem:[%s5659 + $0x40] sm:$0xff]
      %v5669 = vld [vmem:[%s5659 + $0x48] sm:$0xff]
      %v5670 = vld [vmem:[%s5659 + $0x50] sm:$0xff]
      %v5671 = vld [vmem:[%s5659 + $0x58] sm:$0xff]
      %v5672 = vld [vmem:[#allocation4] sm:$0xff]
      %v5673 = vld [vmem:[#allocation4 + $0x8] sm:$0xff]
      %v5674 = vld [vmem:[#allocation4 + $0x10] sm:$0xff]
      %v5675 = vld [vmem:[#allocation4 + $0x18] sm:$0xff]
      %v5676 = vld [vmem:[#allocation4 + $0x28] sm:$0xff]
      %v5677 = vld [vmem:[#allocation4 + $0x30] sm:$0xff]
      %v5678 = vld [vmem:[#allocation4 + $0x38] sm:$0xff]
      %v5679 = vld [vmem:[#allocation4 + $0x40] sm:$0xff]
      %v5680 = vld [vmem:[#allocation4 + $0x50] sm:$0xff]
      %v5681 = vld [vmem:[#allocation4 + $0x58] sm:$0xff]
      %v5682 = vld [vmem:[#allocation4 + $0x60] sm:$0xff]
      %v5683 = vld [vmem:[#allocation4 + $0x68] sm:$0xff]
      %v5684 = vld [vmem:[#allocation4 + $0x78] sm:$0xff]
      %v5685 = vld [vmem:[#allocation4 + $0x80] sm:$0xff]
      %v5686 = vld [vmem:[#allocation4 + $0x88] sm:$0xff]
      %v5687 = vld [vmem:[#allocation4 + $0x90] sm:$0xff]
      %v5688 = vld [vmem:[#allocation4 + $0xa0] sm:$0xff]
      %v5689 = vld [vmem:[#allocation4 + $0xa8] sm:$0xff]
      %v5690 = vld [vmem:[#allocation4 + $0xb0] sm:$0xff]
      %v5691 = vld [vmem:[#allocation4 + $0xb8] sm:$0xff]
      %v5692 = vld [vmem:[#allocation4 + $0xc8] sm:$0xff]
      %v5693 = vld [vmem:[#allocation4 + $0xd0] sm:$0xff]
      %v5694 = vld [vmem:[#allocation4 + $0xd8] sm:$0xff]
      %v5695 = vld [vmem:[#allocation4 + $0xe0] sm:$0xff]
      %v5696 = vld [vmem:[#allocation4 + $0xf0] sm:$0xff]
      %v5697 = vld [vmem:[#allocation4 + $0xf8] sm:$0xff]
      %v5698 = vld [vmem:[#allocation4 + $0x100] sm:$0xff]
      %v5699 = vld [vmem:[#allocation4 + $0x108] sm:$0xff]
      %v5700 = vld [vmem:[#allocation4 + $0x118] sm:$0xff]
      %v5701 = vld [vmem:[#allocation4 + $0x120] sm:$0xff]
      %v5702 = vld [vmem:[#allocation4 + $0x128] sm:$0xff]
      %v5703 = vld [vmem:[#allocation4 + $0x130] sm:$0xff]
      %v5704 = vld [vmem:[#allocation4 + $0x140] sm:$0xff]
      %v5705 = vld [vmem:[#allocation4 + $0x148] sm:$0xff]
      %v5706 = vld [vmem:[#allocation4 + $0x150] sm:$0xff]
      %v5707 = vld [vmem:[#allocation4 + $0x158] sm:$0xff]
      %v5708 = vld [vmem:[#allocation4 + $0x168] sm:$0xff]
      %v5709 = vld [vmem:[#allocation4 + $0x170] sm:$0xff]
      %v5710 = vld [vmem:[#allocation4 + $0x178] sm:$0xff]
      %v5711 = vld [vmem:[#allocation4 + $0x180] sm:$0xff]
      %v5712 = vld [vmem:[#allocation4 + $0x190] sm:$0xff]
      %v5713 = vld [vmem:[#allocation4 + $0x198] sm:$0xff]
      %v5714 = vld [vmem:[#allocation4 + $0x1a0] sm:$0xff]
      %v5715 = vld [vmem:[#allocation4 + $0x1a8] sm:$0xff]
      %v5716 = vld [vmem:[#allocation4 + $0x1b8] sm:$0xff]
      %v5717 = vld [vmem:[#allocation4 + $0x1c0] sm:$0xff]
      %v5718 = vld [vmem:[#allocation4 + $0x1c8] sm:$0xff]
      %v5719 = vld [vmem:[#allocation4 + $0x1d0] sm:$0xff]
      %v5720 = vld [vmem:[#allocation4 + $0x1e0] sm:$0xff]
      %v5721 = vld [vmem:[#allocation4 + $0x1e8] sm:$0xff]
      %v5722 = vld [vmem:[#allocation4 + $0x1f0] sm:$0xff]
      %v5723 = vld [vmem:[#allocation4 + $0x1f8] sm:$0xff]
      %v5724 = vld [vmem:[#allocation4 + $0x208] sm:$0xff]
      %v5725 = vld [vmem:[#allocation4 + $0x210] sm:$0xff]
      %v5726 = vld [vmem:[#allocation4 + $0x218] sm:$0xff]
      %v5727 = vld [vmem:[#allocation4 + $0x220] sm:$0xff]
      %v5728 = vld [vmem:[#allocation4 + $0x230] sm:$0xff]
      %v5729 = vld [vmem:[#allocation4 + $0x238] sm:$0xff]
      %v5730 = vld [vmem:[#allocation4 + $0x240] sm:$0xff]
      %v5731 = vld [vmem:[#allocation4 + $0x248] sm:$0xff]
      %v5732 = vld [vmem:[#allocation4 + $0x258] sm:$0xff]
      %v5733 = vld [vmem:[#allocation4 + $0x260] sm:$0xff]
      %v5734 = vld [vmem:[#allocation4 + $0x268] sm:$0xff]
      %v5735 = vld [vmem:[#allocation4 + $0x270] sm:$0xff]
      %v5736 = vld [vmem:[#allocation4 + $0x280] sm:$0xff]
      %v5737 = vld [vmem:[#allocation4 + $0x288] sm:$0xff]
      %v5738 = vld [vmem:[#allocation4 + $0x290] sm:$0xff]
      %v5739 = vld [vmem:[#allocation4 + $0x298] sm:$0xff]
      %v5740 = vld [vmem:[#allocation4 + $0x2a8] sm:$0xff]
      %v5741 = vld [vmem:[#allocation4 + $0x2b0] sm:$0xff]
      %v5742 = vld [vmem:[#allocation4 + $0x2b8] sm:$0xff]
      %v5743 = vld [vmem:[#allocation4 + $0x2c0] sm:$0xff]
      %v5744 = vld [vmem:[#allocation4 + $0x2d0] sm:$0xff]
      %v5745 = vld [vmem:[#allocation4 + $0x2d8] sm:$0xff]
      %v5746 = vld [vmem:[#allocation4 + $0x2e0] sm:$0xff]
      %v5747 = vld [vmem:[#allocation4 + $0x2e8] sm:$0xff]
      %v5748 = vld [vmem:[#allocation4 + $0x2f8] sm:$0xff]
      %v5749 = vld [vmem:[#allocation4 + $0x300] sm:$0xff]
      %v5750 = vld [vmem:[#allocation4 + $0x308] sm:$0xff]
      %v5751 = vld [vmem:[#allocation4 + $0x310] sm:$0xff]
      %v5752 = vld [vmem:[#allocation4 + $0x320] sm:$0xff]
      %v5753 = vld [vmem:[#allocation4 + $0x328] sm:$0xff]
      %v5754 = vld [vmem:[#allocation4 + $0x330] sm:$0xff]
      %v5755 = vld [vmem:[#allocation4 + $0x338] sm:$0xff]
      %v5756 = vld [vmem:[#allocation4 + $0x348] sm:$0xff]
      %v5757 = vld [vmem:[#allocation4 + $0x350] sm:$0xff]
      %v5758 = vld [vmem:[#allocation4 + $0x358] sm:$0xff]
      %v5759 = vld [vmem:[#allocation4 + $0x360] sm:$0xff]
      %v5760 = vld [vmem:[#allocation4 + $0x370] sm:$0xff]
      %v5761 = vld [vmem:[#allocation4 + $0x378] sm:$0xff]
      %v5762 = vld [vmem:[#allocation4 + $0x380] sm:$0xff]
      %v5763 = vld [vmem:[#allocation4 + $0x388] sm:$0xff]
      %v5764 = vld [vmem:[#allocation4 + $0x398] sm:$0xff]
      %v5765 = vld [vmem:[#allocation4 + $0x3a0] sm:$0xff]
      %v5766 = vld [vmem:[#allocation4 + $0x3a8] sm:$0xff]
      %v5767 = vld [vmem:[#allocation4 + $0x3b0] sm:$0xff]
      %v5768 = vld [vmem:[#allocation4 + $0x3c0] sm:$0xff]
      %v5769 = vld [vmem:[#allocation4 + $0x3c8] sm:$0xff]
      %v5770 = vld [vmem:[#allocation4 + $0x3d0] sm:$0xff]
      %v5771 = vld [vmem:[#allocation4 + $0x3d8] sm:$0xff]
      %v5772 = vld [vmem:[#allocation4 + $0x3e8] sm:$0xff]
      %v5773 = vld [vmem:[#allocation4 + $0x3f0] sm:$0xff]
      %v5774 = vld [vmem:[#allocation4 + $0x3f8] sm:$0xff]
      %v5775 = vld [vmem:[#allocation4 + $0x400] sm:$0xff]
      %v5776 = vld [vmem:[#allocation4 + $0x410] sm:$0xff]
      %v5777 = vld [vmem:[#allocation4 + $0x418] sm:$0xff]
      %v5778 = vld [vmem:[#allocation4 + $0x420] sm:$0xff]
      %v5779 = vld [vmem:[#allocation4 + $0x428] sm:$0xff]
      %v5780 = vld [vmem:[#allocation4 + $0x438] sm:$0xff]
      %v5781 = vld [vmem:[#allocation4 + $0x440] sm:$0xff]
      %v5782 = vld [vmem:[#allocation4 + $0x448] sm:$0xff]
      %v5783 = vld [vmem:[#allocation4 + $0x450] sm:$0xff]
      %v5784 = vld [vmem:[#allocation4 + $0x460] sm:$0xff]
      %v5785 = vld [vmem:[#allocation4 + $0x468] sm:$0xff]
      %v5786 = vld [vmem:[#allocation4 + $0x470] sm:$0xff]
      %v5787 = vld [vmem:[#allocation4 + $0x478] sm:$0xff]
      %v5788 = vld [vmem:[#allocation4 + $0x488] sm:$0xff]
      %v5789 = vld [vmem:[#allocation4 + $0x490] sm:$0xff]
      %v5790 = vld [vmem:[#allocation4 + $0x498] sm:$0xff]
      %v5791 = vld [vmem:[#allocation4 + $0x4a0] sm:$0xff]
      %v5792 = vld [vmem:[#allocation4 + $0x4b0] sm:$0xff]
      %v5793 = vld [vmem:[#allocation4 + $0x4b8] sm:$0xff]
      %v5794 = vld [vmem:[#allocation4 + $0x4c0] sm:$0xff]
      %v5795 = vld [vmem:[#allocation4 + $0x4c8] sm:$0xff]
      %v5796 = vld [vmem:[#allocation4 + $0x4d8] sm:$0xff]
      %v5797 = vld [vmem:[#allocation4 + $0x4e0] sm:$0xff]
      %v5798 = vld [vmem:[#allocation4 + $0x4e8] sm:$0xff]
      %v5799 = vld [vmem:[#allocation4 + $0x4f0] sm:$0xff]
      %v5800 = vld [vmem:[#allocation4 + $0x500] sm:$0xff]
      %v5801 = vld [vmem:[#allocation4 + $0x508] sm:$0xff]
      %v5802 = vld [vmem:[#allocation4 + $0x510] sm:$0xff]
      %v5803 = vld [vmem:[#allocation4 + $0x518] sm:$0xff]
      %v5804 = vld [vmem:[#allocation4 + $0x528] sm:$0xff]
      %v5805 = vld [vmem:[#allocation4 + $0x530] sm:$0xff]
      %v5806 = vld [vmem:[#allocation4 + $0x538] sm:$0xff]
      %v5807 = vld [vmem:[#allocation4 + $0x540] sm:$0xff]
      %v5808 = vld [vmem:[#allocation4 + $0x550] sm:$0xff]
      %v5809 = vld [vmem:[#allocation4 + $0x558] sm:$0xff]
      %v5810 = vld [vmem:[#allocation4 + $0x560] sm:$0xff]
      %v5811 = vld [vmem:[#allocation4 + $0x568] sm:$0xff]
      %v5812 = vld [vmem:[#allocation4 + $0x578] sm:$0xff]
      %v5813 = vld [vmem:[#allocation4 + $0x580] sm:$0xff]
      %v5814 = vld [vmem:[#allocation4 + $0x588] sm:$0xff]
      %v5815 = vld [vmem:[#allocation4 + $0x590] sm:$0xff]
      %s5816 = scalar_lea.vmem %s2, 96
      %v5817 = vld [vmem:[%s5816] sm:$0xff]
      %v5818 = vld [vmem:[%s5816 + $0x8] sm:$0xff]
      %v5819 = vld [vmem:[%s5816 + $0x10] sm:$0xff]
      %v5820 = vld [vmem:[%s5816 + $0x18] sm:$0xff]
      %5822 = vset.pattern.permute.xlu0 0
      %5823 = vperm.xlu0 %5822, %v5817
      %v5824 = vpop.permute.xlu0 %5823
      %5827 = vset.pattern.permute.xlu0 0
      %5828 = vperm.xlu0 %5827, %v5818
      %v5829 = vpop.permute.xlu0 %5828
      %5832 = vset.pattern.permute.xlu0 0
      %5833 = vperm.xlu0 %5832, %v5819
      %v5834 = vpop.permute.xlu0 %5833
      %5837 = vset.pattern.permute.xlu0 0
      %5838 = vperm.xlu0 %5837, %v5820
      %v5839 = vpop.permute.xlu0 %5838
      %v5842 = vsel %vm1045, %v5662, 0
      %v5845 = vsel %vm1045, %v5665, 0
      %v5848 = vsel %vm1045, %v5668, 0
      %v5851 = vsel %vm1045, %v5671, 0
      %5853 = vmatprep.subr.mxu0 %v5673
      %5854 = vmatpush1.msra.mxu0 %v5672
      %5855 = vmatprep.subr.mxu0 %v5677
      %5856 = vmatpush1.msra.mxu0 %v5676
      %5857 = vmatprep.subr.mxu0 %v5681
      %5858 = vmatpush1.msra.mxu0 %v5680
      %5859 = vmatprep.subr.mxu0 %v5685
      %5860 = vmatpush1.msra.mxu0 %v5684
      %5861 = vmatprep.subr.mxu0 %v5689
      %5862 = vmatpush1.msra.mxu0 %v5688
      %5863 = vmatprep.subr.mxu0 %v5693
      %5864 = vmatpush1.msra.mxu0 %v5692
      %5865 = vmatprep.subr.mxu0 %v5697
      %5866 = vmatpush1.msra.mxu0 %v5696
      %5867 = vmatprep.subr.mxu0 %v5701
      %5868 = vmatpush1.msra.mxu0 %v5700
      %5869 = vmatprep.subr.mxu0 %v5705
      %5870 = vmatpush1.msra.mxu0 %v5704
      %5871 = vmatprep.subr.mxu0 %v5709
      %5872 = vmatpush1.msra.mxu0 %v5708
      %5873 = vmatprep.subr.mxu0 %v5713
      %5874 = vmatpush1.msra.mxu0 %v5712
      %5875 = vmatprep.subr.mxu0 %v5717
      %5876 = vmatpush1.msra.mxu0 %v5716
      %5877 = vmatprep.subr.mxu0 %v5721
      %5878 = vmatpush1.msra.mxu0 %v5720
      %5879 = vmatprep.subr.mxu0 %v5725
      %5880 = vmatpush1.msra.mxu0 %v5724
      %5881 = vmatprep.subr.mxu0 %v5729
      %5882 = vmatpush1.msra.mxu0 %v5728
      %5883 = vmatprep.subr.mxu0 %v5733
      %5884 = vmatpush1.msra.mxu0 %v5732
      %5885 = vmatprep.subr.mxu0 %v5737
      %5886 = vmatpush1.msra.mxu0 %v5736
      %5887 = vmatprep.subr.mxu0 %v5741
      %5888 = vmatpush1.msra.mxu0 %v5740
      %5889 = vmatprep.subr.mxu0 %v5745
      %5890 = vmatpush1.msra.mxu0 %v5744
      %5891 = vmatprep.subr.mxu0 %v5749
      %5892 = vmatpush1.msra.mxu0 %v5748
      %5893 = vmatprep.subr.mxu0 %v5753
      %5894 = vmatpush1.msra.mxu0 %v5752
      %5895 = vmatprep.subr.mxu0 %v5757
      %5896 = vmatpush1.msra.mxu0 %v5756
      %5897 = vmatprep.subr.mxu0 %v5761
      %5898 = vmatpush1.msra.mxu0 %v5760
      %5899 = vmatprep.subr.mxu0 %v5765
      %5900 = vmatpush1.msra.mxu0 %v5764
      %5901 = vmatprep.subr.mxu0 %v5769
      %5902 = vmatpush1.msra.mxu0 %v5768
      %5903 = vmatprep.subr.mxu0 %v5773
      %5904 = vmatpush1.msra.mxu0 %v5772
      %5905 = vmatprep.subr.mxu0 %v5777
      %5906 = vmatpush1.msra.mxu0 %v5776
      %5907 = vmatprep.subr.mxu0 %v5781
      %5908 = vmatpush1.msra.mxu0 %v5780
      %5909 = vmatprep.subr.mxu0 %v5785
      %5910 = vmatpush1.msra.mxu0 %v5784
      %5911 = vmatprep.subr.mxu0 %v5789
      %5912 = vmatpush1.msra.mxu0 %v5788
      %5913 = vmatprep.subr.mxu0 %v5793
      %5914 = vmatpush1.msra.mxu0 %v5792
      %5915 = vmatprep.subr.mxu0 %v5797
      %5916 = vmatpush1.msra.mxu0 %v5796
      %5917 = vmatprep.mubr.f32.mxu0 %v5661
      %5918 = vmatmul.mubr.f32.gmra.mrb[0].mxu0 %v5660
      %v5919 = vpop.f32.mrb[0].mxu0
      %v5920 = vadd.f32 %v5824, %v5919
      %v5921 = vpop.f32.mrb[0].mxu0
      %v5922 = vadd.f32 %v5824, %v5921
      %5923 = vmatprep.mubr.f32.mxu0 %v5664
      %5924 = vmatmul.mubr.f32.gmra.mrb[0].mxu0 %v5663
      %v5925 = vpop.f32.mrb[0].mxu0
      %v5926 = vadd.f32 %v5829, %v5925
      %v5927 = vpop.f32.mrb[0].mxu0
      %v5928 = vadd.f32 %v5829, %v5927
      %5929 = vmatprep.mubr.f32.mxu0 %v5667
      %5930 = vmatmul.mubr.f32.gmra.mrb[0].mxu0 %v5666
      %v5931 = vpop.f32.mrb[0].mxu0
      %v5932 = vadd.f32 %v5834, %v5931
      %v5933 = vpop.f32.mrb[0].mxu0
      %v5934 = vadd.f32 %v5834, %v5933
      %5935 = vmatprep.mubr.f32.mxu0 %v5670
      %5936 = vmatmul.mubr.f32.gmra.mrb[0].mxu0 %v5669
      %v5937 = vpop.f32.mrb[0].mxu0
      %v5938 = vadd.f32 %v5839, %v5937
      %v5939 = vpop.f32.mrb[0].mxu0
      %v5940 = vadd.f32 %v5839, %v5939
      %5941 = vdwg.mxu0
      %5942 = vmatprep.subr.mxu0 %v5801
      %5943 = vmatpush1.msra.mxu0 %v5800
      %5944 = vmatprep.subr.mxu0 %v5805
      %5945 = vmatpush1.msra.mxu0 %v5804
      %5946 = vmatprep.subr.mxu0 %v5809
      %5947 = vmatpush1.msra.mxu0 %v5808
      %5948 = vmatprep.subr.mxu0 %v5813
      %5949 = vmatpush1.msra.mxu0 %v5812
      %5950 = vmatprep.subr.mxu0 0.0
      %5951 = vmatpush1.msra.mxu0 0.0
      %5952 = vmatprep.subr.mxu0 0.0
      %5953 = vmatpush1.msra.mxu0 0.0
      %5954 = vmatprep.subr.mxu0 0.0
      %5955 = vmatpush1.msra.mxu0 0.0
      %5956 = vmatprep.subr.mxu0 0.0
      %5957 = vmatpush1.msra.mxu0 0.0
      %5958 = vmatprep.subr.mxu0 0.0
      %5959 = vmatpush1.msra.mxu0 0.0
      %5960 = vmatprep.subr.mxu0 0.0
      %5961 = vmatpush1.msra.mxu0 0.0
      %5962 = vmatprep.subr.mxu0 0.0
      %5963 = vmatpush1.msra.mxu0 0.0
      %5964 = vmatprep.subr.mxu0 0.0
      %5965 = vmatpush1.msra.mxu0 0.0
      %5966 = vmatprep.subr.mxu0 0.0
      %5967 = vmatpush1.msra.mxu0 0.0
      %5968 = vmatprep.subr.mxu0 0.0
      %5969 = vmatpush1.msra.mxu0 0.0
      %5970 = vmatprep.subr.mxu0 0.0
      %5971 = vmatpush1.msra.mxu0 0.0
      %5972 = vmatprep.subr.mxu0 0.0
      %5973 = vmatpush1.msra.mxu0 0.0
      %5974 = vmatprep.subr.mxu0 0.0
      %5975 = vmatpush1.msra.mxu0 0.0
      %5976 = vmatprep.subr.mxu0 0.0
      %5977 = vmatpush1.msra.mxu0 0.0
      %5978 = vmatprep.subr.mxu0 0.0
      %5979 = vmatpush1.msra.mxu0 0.0
      %5980 = vmatprep.subr.mxu0 0.0
      %5981 = vmatpush1.msra.mxu0 0.0
      %5982 = vmatprep.subr.mxu0 0.0
      %5983 = vmatpush1.msra.mxu0 0.0
      %5984 = vmatprep.subr.mxu0 0.0
      %5985 = vmatpush1.msra.mxu0 0.0
      %5986 = vmatprep.subr.mxu0 0.0
      %5987 = vmatpush1.msra.mxu0 0.0
      %5988 = vmatprep.subr.mxu0 0.0
      %5989 = vmatpush1.msra.mxu0 0.0
      %5990 = vmatprep.subr.mxu0 0.0
      %5991 = vmatpush1.msra.mxu0 0.0
      %5992 = vmatprep.subr.mxu0 0.0
      %5993 = vmatpush1.msra.mxu0 0.0
      %5994 = vmatprep.subr.mxu0 0.0
      %5995 = vmatpush1.msra.mxu0 0.0
      %5996 = vmatprep.subr.mxu0 0.0
      %5997 = vmatpush1.msra.mxu0 0.0
      %5998 = vmatprep.subr.mxu0 0.0
      %5999 = vmatpush1.msra.mxu0 0.0
      %6000 = vmatprep.subr.mxu0 0.0
      %6001 = vmatpush1.msra.mxu0 0.0
      %6002 = vmatprep.subr.mxu0 0.0
      %6003 = vmatpush1.msra.mxu0 0.0
      %6004 = vmatprep.subr.mxu0 0.0
      %6005 = vmatpush1.msra.mxu0 0.0
      %6006 = vmatprep.mubr.f32.mxu0 0.0
      %6007 = vmatmul.mubr.f32.gmra.mrb[0].mxu0 %v5842
      %v6008 = vpop.f32.mrb[0].mxu0
      %v6009 = vadd.f32 %v5920, %v6008
      %v6010 = vpop.f32.mrb[0].mxu0
      %v6011 = vadd.f32 %v5922, %v6010
      %6012 = vmatprep.mubr.f32.mxu0 0.0
      %6013 = vmatmul.mubr.f32.gmra.mrb[0].mxu0 %v5845
      %v6014 = vpop.f32.mrb[0].mxu0
      %v6015 = vadd.f32 %v5926, %v6014
      %v6016 = vpop.f32.mrb[0].mxu0
      %v6017 = vadd.f32 %v5928, %v6016
      %6018 = vmatprep.mubr.f32.mxu0 0.0
      %6019 = vmatmul.mubr.f32.gmra.mrb[0].mxu0 %v5848
      %v6020 = vpop.f32.mrb[0].mxu0
      %v6021 = vadd.f32 %v5932, %v6020
      %v6022 = vpop.f32.mrb[0].mxu0
      %v6023 = vadd.f32 %v5934, %v6022
      %6024 = vmatprep.mubr.f32.mxu0 0.0
      %6025 = vmatmul.mubr.f32.gmra.mrb[0].mxu0 %v5851
      %v6026 = vpop.f32.mrb[0].mxu0
      %v6027 = vadd.f32 %v5938, %v6026
      %v6028 = vpop.f32.mrb[0].mxu0
      %v6029 = vadd.f32 %v5940, %v6028
      %6030 = vdwg.mxu0
      %6031 = vmatprep.subr.mxu0 %v5675
      %6032 = vmatpush1.msra.mxu0 %v5674
      %6033 = vmatprep.subr.mxu0 %v5679
      %6034 = vmatpush1.msra.mxu0 %v5678
      %6035 = vmatprep.subr.mxu0 %v5683
      %6036 = vmatpush1.msra.mxu0 %v5682
      %6037 = vmatprep.subr.mxu0 %v5687
      %6038 = vmatpush1.msra.mxu0 %v5686
      %6039 = vmatprep.subr.mxu0 %v5691
      %6040 = vmatpush1.msra.mxu0 %v5690
      %6041 = vmatprep.subr.mxu0 %v5695
      %6042 = vmatpush1.msra.mxu0 %v5694
      %6043 = vmatprep.subr.mxu0 %v5699
      %6044 = vmatpush1.msra.mxu0 %v5698
      %6045 = vmatprep.subr.mxu0 %v5703
      %6046 = vmatpush1.msra.mxu0 %v5702
      %6047 = vmatprep.subr.mxu0 %v5707
      %6048 = vmatpush1.msra.mxu0 %v5706
      %6049 = vmatprep.subr.mxu0 %v5711
      %6050 = vmatpush1.msra.mxu0 %v5710
      %6051 = vmatprep.subr.mxu0 %v5715
      %6052 = vmatpush1.msra.mxu0 %v5714
      %6053 = vmatprep.subr.mxu0 %v5719
      %6054 = vmatpush1.msra.mxu0 %v5718
      %6055 = vmatprep.subr.mxu0 %v5723
      %6056 = vmatpush1.msra.mxu0 %v5722
      %6057 = vmatprep.subr.mxu0 %v5727
      %6058 = vmatpush1.msra.mxu0 %v5726
      %6059 = vmatprep.subr.mxu0 %v5731
      %6060 = vmatpush1.msra.mxu0 %v5730
      %6061 = vmatprep.subr.mxu0 %v5735
      %6062 = vmatpush1.msra.mxu0 %v5734
      %6063 = vmatprep.subr.mxu0 %v5739
      %6064 = vmatpush1.msra.mxu0 %v5738
      %6065 = vmatprep.subr.mxu0 %v5743
      %6066 = vmatpush1.msra.mxu0 %v5742
      %6067 = vmatprep.subr.mxu0 %v5747
      %6068 = vmatpush1.msra.mxu0 %v5746
      %6069 = vmatprep.subr.mxu0 %v5751
      %6070 = vmatpush1.msra.mxu0 %v5750
      %6071 = vmatprep.subr.mxu0 %v5755
      %6072 = vmatpush1.msra.mxu0 %v5754
      %6073 = vmatprep.subr.mxu0 %v5759
      %6074 = vmatpush1.msra.mxu0 %v5758
      %6075 = vmatprep.subr.mxu0 %v5763
      %6076 = vmatpush1.msra.mxu0 %v5762
      %6077 = vmatprep.subr.mxu0 %v5767
      %6078 = vmatpush1.msra.mxu0 %v5766
      %6079 = vmatprep.subr.mxu0 %v5771
      %6080 = vmatpush1.msra.mxu0 %v5770
      %6081 = vmatprep.subr.mxu0 %v5775
      %6082 = vmatpush1.msra.mxu0 %v5774
      %6083 = vmatprep.subr.mxu0 %v5779
      %6084 = vmatpush1.msra.mxu0 %v5778
      %6085 = vmatprep.subr.mxu0 %v5783
      %6086 = vmatpush1.msra.mxu0 %v5782
      %6087 = vmatprep.subr.mxu0 %v5787
      %6088 = vmatpush1.msra.mxu0 %v5786
      %6089 = vmatprep.subr.mxu0 %v5791
      %6090 = vmatpush1.msra.mxu0 %v5790
      %6091 = vmatprep.subr.mxu0 %v5795
      %6092 = vmatpush1.msra.mxu0 %v5794
      %6093 = vmatprep.subr.mxu0 %v5799
      %6094 = vmatpush1.msra.mxu0 %v5798
      %6095 = vmatprep.mubr.f32.mxu0 %v5661
      %6096 = vmatmul.mubr.f32.gmra.mrb[0].mxu0 %v5660
      %v6097 = vpop.f32.mrb[0].mxu0
      %v6098 = vadd.f32 %v5824, %v6097
      %v6099 = vpop.f32.mrb[0].mxu0
      %v6100 = vadd.f32 %v5824, %v6099
      %6101 = vmatprep.mubr.f32.mxu0 %v5664
      %6102 = vmatmul.mubr.f32.gmra.mrb[0].mxu0 %v5663
      %v6103 = vpop.f32.mrb[0].mxu0
      %v6104 = vadd.f32 %v5829, %v6103
      %v6105 = vpop.f32.mrb[0].mxu0
      %v6106 = vadd.f32 %v5829, %v6105
      %6107 = vmatprep.mubr.f32.mxu0 %v5667
      %6108 = vmatmul.mubr.f32.gmra.mrb[0].mxu0 %v5666
      %v6109 = vpop.f32.mrb[0].mxu0
      %v6110 = vadd.f32 %v5834, %v6109
      %v6111 = vpop.f32.mrb[0].mxu0
      %v6112 = vadd.f32 %v5834, %v6111
      %6113 = vmatprep.mubr.f32.mxu0 %v5670
      %6114 = vmatmul.mubr.f32.gmra.mrb[0].mxu0 %v5669
      %v6115 = vpop.f32.mrb[0].mxu0
      %v6116 = vadd.f32 %v5839, %v6115
      %v6117 = vpop.f32.mrb[0].mxu0
      %v6118 = vadd.f32 %v5839, %v6117
      %6119 = vdwg.mxu0
      %6120 = vmatprep.subr.mxu0 %v5803
      %6121 = vmatpush1.msra.mxu0 %v5802
      %6122 = vmatprep.subr.mxu0 %v5807
      %6123 = vmatpush1.msra.mxu0 %v5806
      %6124 = vmatprep.subr.mxu0 %v5811
      %6125 = vmatpush1.msra.mxu0 %v5810
      %6126 = vmatprep.subr.mxu0 %v5815
      %6127 = vmatpush1.msra.mxu0 %v5814
      %6128 = vmatprep.subr.mxu0 0.0
      %6129 = vmatpush1.msra.mxu0 0.0
      %6130 = vmatprep.subr.mxu0 0.0
      %6131 = vmatpush1.msra.mxu0 0.0
      %6132 = vmatprep.subr.mxu0 0.0
      %6133 = vmatpush1.msra.mxu0 0.0
      %6134 = vmatprep.subr.mxu0 0.0
      %6135 = vmatpush1.msra.mxu0 0.0
      %6136 = vmatprep.subr.mxu0 0.0
      %6137 = vmatpush1.msra.mxu0 0.0
      %6138 = vmatprep.subr.mxu0 0.0
      %6139 = vmatpush1.msra.mxu0 0.0
      %6140 = vmatprep.subr.mxu0 0.0
      %6141 = vmatpush1.msra.mxu0 0.0
      %6142 = vmatprep.subr.mxu0 0.0
      %6143 = vmatpush1.msra.mxu0 0.0
      %6144 = vmatprep.subr.mxu0 0.0
      %6145 = vmatpush1.msra.mxu0 0.0
      %6146 = vmatprep.subr.mxu0 0.0
      %6147 = vmatpush1.msra.mxu0 0.0
      %6148 = vmatprep.subr.mxu0 0.0
      %6149 = vmatpush1.msra.mxu0 0.0
      %6150 = vmatprep.subr.mxu0 0.0
      %6151 = vmatpush1.msra.mxu0 0.0
      %6152 = vmatprep.subr.mxu0 0.0
      %6153 = vmatpush1.msra.mxu0 0.0
      %6154 = vmatprep.subr.mxu0 0.0
      %6155 = vmatpush1.msra.mxu0 0.0
      %6156 = vmatprep.subr.mxu0 0.0
      %6157 = vmatpush1.msra.mxu0 0.0
      %6158 = vmatprep.subr.mxu0 0.0
      %6159 = vmatpush1.msra.mxu0 0.0
      %6160 = vmatprep.subr.mxu0 0.0
      %6161 = vmatpush1.msra.mxu0 0.0
      %6162 = vmatprep.subr.mxu0 0.0
      %6163 = vmatpush1.msra.mxu0 0.0
      %6164 = vmatprep.subr.mxu0 0.0
      %6165 = vmatpush1.msra.mxu0 0.0
      %6166 = vmatprep.subr.mxu0 0.0
      %6167 = vmatpush1.msra.mxu0 0.0
      %6168 = vmatprep.subr.mxu0 0.0
      %6169 = vmatpush1.msra.mxu0 0.0
      %6170 = vmatprep.subr.mxu0 0.0
      %6171 = vmatpush1.msra.mxu0 0.0
      %6172 = vmatprep.subr.mxu0 0.0
      %6173 = vmatpush1.msra.mxu0 0.0
      %6174 = vmatprep.subr.mxu0 0.0
      %6175 = vmatpush1.msra.mxu0 0.0
      %6176 = vmatprep.subr.mxu0 0.0
      %6177 = vmatpush1.msra.mxu0 0.0
      %6178 = vmatprep.subr.mxu0 0.0
      %6179 = vmatpush1.msra.mxu0 0.0
      %6180 = vmatprep.subr.mxu0 0.0
      %6181 = vmatpush1.msra.mxu0 0.0
      %6182 = vmatprep.subr.mxu0 0.0
      %6183 = vmatpush1.msra.mxu0 0.0
      %6184 = vmatprep.mubr.f32.mxu0 0.0
      %6185 = vmatmul.mubr.f32.gmra.mrb[0].mxu0 %v5842
      %v6186 = vpop.f32.mrb[0].mxu0
      %v6187 = vadd.f32 %v6098, %v6186
      %v6188 = vpop.f32.mrb[0].mxu0
      %v6189 = vadd.f32 %v6100, %v6188
      %6190 = vmatprep.mubr.f32.mxu0 0.0
      %6191 = vmatmul.mubr.f32.gmra.mrb[0].mxu0 %v5845
      %v6192 = vpop.f32.mrb[0].mxu0
      %v6193 = vadd.f32 %v6104, %v6192
      %v6194 = vpop.f32.mrb[0].mxu0
      %v6195 = vadd.f32 %v6106, %v6194
      %6196 = vmatprep.mubr.f32.mxu0 0.0
      %6197 = vmatmul.mubr.f32.gmra.mrb[0].mxu0 %v5848
      %v6198 = vpop.f32.mrb[0].mxu0
      %v6199 = vadd.f32 %v6110, %v6198
      %v6200 = vpop.f32.mrb[0].mxu0
      %v6201 = vadd.f32 %v6112, %v6200
      %6202 = vmatprep.mubr.f32.mxu0 0.0
      %6203 = vmatmul.mubr.f32.gmra.mrb[0].mxu0 %v5851
      %v6204 = vpop.f32.mrb[0].mxu0
      %v6205 = vadd.f32 %v6116, %v6204
      %v6206 = vpop.f32.mrb[0].mxu0
      %v6207 = vadd.f32 %v6118, %v6206
      %6208 = vdwg.mxu0
      %v6209 = vmax.f32 %v6009, 0.0
      %v6210 = vmax.f32 %v6011, 0.0
      %v6211 = vmax.f32 %v6187, 0.0
      %v6212 = vmax.f32 %v6189, 0.0
      %v6213 = vmax.f32 %v6015, 0.0
      %v6214 = vmax.f32 %v6017, 0.0
      %v6215 = vmax.f32 %v6193, 0.0
      %v6216 = vmax.f32 %v6195, 0.0
      %v6217 = vmax.f32 %v6021, 0.0
      %v6218 = vmax.f32 %v6023, 0.0
      %v6219 = vmax.f32 %v6199, 0.0
      %v6220 = vmax.f32 %v6201, 0.0
      %v6221 = vmax.f32 %v6027, 0.0
      %v6222 = vmax.f32 %v6029, 0.0
      %v6223 = vmax.f32 %v6205, 0.0
      %v6224 = vmax.f32 %v6207, 0.0
      %vm6225 = vcmp.lt.s32.totalorder %v175, 16
      %vm6226 = vcmp.lt.s32.totalorder %v176, 16
      %vm6227 = vcmp.lt.s32.totalorder %v177, 16
      %vm6228 = vcmp.lt.s32.totalorder %v178, 16
      %v6229 = vsel %vm6225, 1, 0
      %v6230 = vsel %vm6226, 1, 0
      %v6231 = vsel %vm6227, 1, 0
      %v6232 = vsel %vm6228, 1, 0
      %vm6233 = vcmp.eq.s32.totalorder %v6229, 1
      %vm6234 = vcmp.eq.s32.totalorder %v6230, 1
      %vm6235 = vcmp.eq.s32.totalorder %v6231, 1
      %vm6236 = vcmp.eq.s32.totalorder %v6232, 1
      %v6237 = vsel %vm6233, %v6209, 0.0
      %v6238 = vsel %vm6234, %v6210, 0.0
      %v6239 = vsel %vm6235, %v6211, 0.0
      %v6240 = vsel %vm6236, %v6212, 0.0
      %v6241 = vsel %vm6233, %v6213, 0.0
      %v6242 = vsel %vm6234, %v6214, 0.0
      %v6243 = vsel %vm6235, %v6215, 0.0
      %v6244 = vsel %vm6236, %v6216, 0.0
      %v6245 = vsel %vm6233, %v6217, 0.0
      %v6246 = vsel %vm6234, %v6218, 0.0
      %v6247 = vsel %vm6235, %v6219, 0.0
      %v6248 = vsel %vm6236, %v6220, 0.0
      %v6249 = vsel %vm6233, %v6221, 0.0
      %v6250 = vsel %vm6234, %v6222, 0.0
      %v6251 = vsel %vm6235, %v6223, 0.0
      %v6252 = vsel %vm6236, %v6224, 0.0
      %6269 = vrot.lane.b32.xlu0 %v6237, 66
      %v6270 = vpop.permute.xlu0 %6269
      %6271 = vrot.lane.b32.xlu0 %v6238, 66
      %v6272 = vpop.permute.xlu0 %6271
      %6273 = vrot.lane.b32.xlu0 %v6239, 66
      %v6274 = vpop.permute.xlu0 %6273
      %6275 = vrot.lane.b32.xlu0 %v6240, 66
      %v6276 = vpop.permute.xlu0 %6275
      %6277 = vrot.lane.b32.xlu0 %v6241, 66
      %v6278 = vpop.permute.xlu0 %6277
      %6279 = vrot.lane.b32.xlu0 %v6242, 66
      %v6280 = vpop.permute.xlu0 %6279
      %6281 = vrot.lane.b32.xlu0 %v6243, 66
      %v6282 = vpop.permute.xlu0 %6281
      %6283 = vrot.lane.b32.xlu0 %v6244, 66
      %v6284 = vpop.permute.xlu0 %6283
      %6285 = vrot.lane.b32.xlu0 %v6245, 66
      %v6286 = vpop.permute.xlu0 %6285
      %6287 = vrot.lane.b32.xlu0 %v6246, 66
      %v6288 = vpop.permute.xlu0 %6287
      %6289 = vrot.lane.b32.xlu0 %v6247, 66
      %v6290 = vpop.permute.xlu0 %6289
      %6291 = vrot.lane.b32.xlu0 %v6248, 66
      %v6292 = vpop.permute.xlu0 %6291
      %6293 = vrot.lane.b32.xlu0 %v6249, 66
      %v6294 = vpop.permute.xlu0 %6293
      %6295 = vrot.lane.b32.xlu0 %v6250, 66
      %v6296 = vpop.permute.xlu0 %6295
      %6297 = vrot.lane.b32.xlu0 %v6251, 66
      %v6298 = vpop.permute.xlu0 %6297
      %6299 = vrot.lane.b32.xlu0 %v6252, 66
      %v6300 = vpop.permute.xlu0 %6299
      %v6301 = vsel %vm180, %v6270, %v6272
      %v6302 = vsel %vm180, %v6272, %v6274
      %v6303 = vsel %vm180, %v6274, %v6276
      %v6304 = vsel %vm180, %v6278, %v6280
      %v6305 = vsel %vm180, %v6280, %v6282
      %v6306 = vsel %vm180, %v6282, %v6284
      %v6307 = vsel %vm180, %v6286, %v6288
      %v6308 = vsel %vm180, %v6288, %v6290
      %v6309 = vsel %vm180, %v6290, %v6292
      %v6310 = vsel %vm180, %v6294, %v6296
      %v6311 = vsel %vm180, %v6296, %v6298
      %v6312 = vsel %vm180, %v6298, %v6300
      %6333 = vst.msk [vmem:[#allocation2] sm:$0xff] %vm1499, %v6270
      %6334 = vst [vmem:[#allocation2 + $0x8] sm:$0xff] %v6301
      %6335 = vst [vmem:[#allocation2 + $0x10] sm:$0xff] %v6302
      %6336 = vst [vmem:[#allocation2 + $0x18] sm:$0xff] %v6303
      %6337 = vst.msk [vmem:[#allocation2 + $0x20] sm:$0xff] %vm180, %v6276
      %6338 = vst.msk [vmem:[#allocation2 + $0x30] sm:$0xff] %vm1499, %v6278
      %6339 = vst [vmem:[#allocation2 + $0x38] sm:$0xff] %v6304
      %6340 = vst [vmem:[#allocation2 + $0x40] sm:$0xff] %v6305
      %6341 = vst [vmem:[#allocation2 + $0x48] sm:$0xff] %v6306
      %6342 = vst.msk [vmem:[#allocation2 + $0x50] sm:$0xff] %vm180, %v6284
      %6343 = vst.msk [vmem:[#allocation2 + $0x60] sm:$0xff] %vm1499, %v6286
      %6344 = vst [vmem:[#allocation2 + $0x68] sm:$0xff] %v6307
      %6345 = vst [vmem:[#allocation2 + $0x70] sm:$0xff] %v6308
      %6346 = vst [vmem:[#allocation2 + $0x78] sm:$0xff] %v6309
      %6347 = vst.msk [vmem:[#allocation2 + $0x80] sm:$0xff] %vm180, %v6292
      %6348 = vst.msk [vmem:[#allocation2 + $0x90] sm:$0xff] %vm1499, %v6294
      %6349 = vst [vmem:[#allocation2 + $0x98] sm:$0xff] %v6310
      %6350 = vst [vmem:[#allocation2 + $0xa0] sm:$0xff] %v6311
      %6351 = vst [vmem:[#allocation2 + $0xa8] sm:$0xff] %v6312
      %6352 = vst.msk [vmem:[#allocation2 + $0xb0] sm:$0xff] %vm180, %v6300
      %6353 = vst.msk [vmem:[#allocation2 + $0x20] sm:$0xff] %vm1499, 0.0
      %6354 = vst.msk [vmem:[#allocation2 + $0x28] sm:$0xff] %vm1503, 0.0
      %6355 = vst.msk [vmem:[#allocation2 + $0x50] sm:$0xff] %vm1499, 0.0
      %6356 = vst.msk [vmem:[#allocation2 + $0x58] sm:$0xff] %vm1503, 0.0
      %6357 = vst.msk [vmem:[#allocation2 + $0x80] sm:$0xff] %vm1499, 0.0
      %6358 = vst.msk [vmem:[#allocation2 + $0x88] sm:$0xff] %vm1503, 0.0
      %6359 = vst.msk [vmem:[#allocation2 + $0xb0] sm:$0xff] %vm1499, 0.0
      %6360 = vst.msk [vmem:[#allocation2 + $0xb8] sm:$0xff] %vm1503, 0.0
      %v6361 = vld [vmem:[#allocation2] sm:$0xff]
      %v6362 = vld [vmem:[#allocation2 + $0x8] sm:$0xff]
      %v6363 = vld [vmem:[#allocation2 + $0x10] sm:$0xff]
      %v6364 = vld [vmem:[#allocation2 + $0x18] sm:$0xff]
      %v6365 = vld [vmem:[#allocation2 + $0x20] sm:$0xff]
      %v6366 = vld [vmem:[#allocation2 + $0x30] sm:$0xff]
      %v6367 = vld [vmem:[#allocation2 + $0x38] sm:$0xff]
      %v6368 = vld [vmem:[#allocation2 + $0x40] sm:$0xff]
      %v6369 = vld [vmem:[#allocation2 + $0x48] sm:$0xff]
      %v6370 = vld [vmem:[#allocation2 + $0x50] sm:$0xff]
      %v6371 = vld [vmem:[#allocation2 + $0x60] sm:$0xff]
      %v6372 = vld [vmem:[#allocation2 + $0x68] sm:$0xff]
      %v6373 = vld [vmem:[#allocation2 + $0x70] sm:$0xff]
      %v6374 = vld [vmem:[#allocation2 + $0x78] sm:$0xff]
      %v6375 = vld [vmem:[#allocation2 + $0x80] sm:$0xff]
      %v6376 = vld [vmem:[#allocation2 + $0x90] sm:$0xff]
      %v6377 = vld [vmem:[#allocation2 + $0x98] sm:$0xff]
      %v6378 = vld [vmem:[#allocation2 + $0xa0] sm:$0xff]
      %v6379 = vld [vmem:[#allocation2 + $0xa8] sm:$0xff]
      %v6380 = vld [vmem:[#allocation2 + $0xb0] sm:$0xff]
      %6381 = vst [vmem:[#allocation4] sm:$0xff] %v6361
      %6382 = vst [vmem:[#allocation4 + $0x8] sm:$0xff] %v6362
      %6383 = vst [vmem:[#allocation4 + $0x10] sm:$0xff] %v6363
      %6384 = vst [vmem:[#allocation4 + $0x18] sm:$0xff] %v6364
      %6385 = vst.msk [vmem:[#allocation4 + $0x20] sm:$0xff] %vm203, %v6365
      %6386 = vst [vmem:[#allocation4 + $0x28] sm:$0xff] %v6366
      %6387 = vst [vmem:[#allocation4 + $0x30] sm:$0xff] %v6367
      %6388 = vst [vmem:[#allocation4 + $0x38] sm:$0xff] %v6368
      %6389 = vst [vmem:[#allocation4 + $0x40] sm:$0xff] %v6369
      %6390 = vst.msk [vmem:[#allocation4 + $0x48] sm:$0xff] %vm203, %v6370
      %6391 = vst [vmem:[#allocation4 + $0x50] sm:$0xff] %v6371
      %6392 = vst [vmem:[#allocation4 + $0x58] sm:$0xff] %v6372
      %6393 = vst [vmem:[#allocation4 + $0x60] sm:$0xff] %v6373
      %6394 = vst [vmem:[#allocation4 + $0x68] sm:$0xff] %v6374
      %6395 = vst.msk [vmem:[#allocation4 + $0x70] sm:$0xff] %vm203, %v6375
      %6396 = vst [vmem:[#allocation4 + $0x78] sm:$0xff] %v6376
      %6397 = vst [vmem:[#allocation4 + $0x80] sm:$0xff] %v6377
      %6398 = vst [vmem:[#allocation4 + $0x88] sm:$0xff] %v6378
      %6399 = vst [vmem:[#allocation4 + $0x90] sm:$0xff] %v6379
      %6400 = vst.msk [vmem:[#allocation4 + $0x98] sm:$0xff] %vm203, %v6380
      %v6401 = vld [vmem:[#allocation2] sm:$0xff]
      %v6402 = vld [vmem:[#allocation2 + $0x8] sm:$0xff]
      %v6403 = vld [vmem:[#allocation2 + $0x10] sm:$0xff]
      %v6404 = vld [vmem:[#allocation2 + $0x18] sm:$0xff]
      %v6405 = vld [vmem:[#allocation2 + $0x20] sm:$0xff]
      %v6406 = vld [vmem:[#allocation2 + $0x30] sm:$0xff]
      %v6407 = vld [vmem:[#allocation2 + $0x38] sm:$0xff]
      %v6408 = vld [vmem:[#allocation2 + $0x40] sm:$0xff]
      %v6409 = vld [vmem:[#allocation2 + $0x48] sm:$0xff]
      %v6410 = vld [vmem:[#allocation2 + $0x50] sm:$0xff]
      %v6411 = vld [vmem:[#allocation2 + $0x60] sm:$0xff]
      %v6412 = vld [vmem:[#allocation2 + $0x68] sm:$0xff]
      %v6413 = vld [vmem:[#allocation2 + $0x70] sm:$0xff]
      %v6414 = vld [vmem:[#allocation2 + $0x78] sm:$0xff]
      %v6415 = vld [vmem:[#allocation2 + $0x80] sm:$0xff]
      %v6416 = vld [vmem:[#allocation2 + $0x90] sm:$0xff]
      %v6417 = vld [vmem:[#allocation2 + $0x98] sm:$0xff]
      %v6418 = vld [vmem:[#allocation2 + $0xa0] sm:$0xff]
      %v6419 = vld [vmem:[#allocation2 + $0xa8] sm:$0xff]
      %v6420 = vld [vmem:[#allocation2 + $0xb0] sm:$0xff]
      %6441 = vrot.lane.b32.xlu0 %v6401, 127
      %v6442 = vpop.permute.xlu0 %6441
      %6443 = vrot.lane.b32.xlu0 %v6402, 127
      %v6444 = vpop.permute.xlu0 %6443
      %6445 = vrot.lane.b32.xlu0 %v6403, 127
      %v6446 = vpop.permute.xlu0 %6445
      %6447 = vrot.lane.b32.xlu0 %v6404, 127
      %v6448 = vpop.permute.xlu0 %6447
      %6449 = vrot.lane.b32.xlu0 %v6405, 127
      %v6450 = vpop.permute.xlu0 %6449
      %6451 = vrot.lane.b32.xlu0 %v6406, 127
      %v6452 = vpop.permute.xlu0 %6451
      %6453 = vrot.lane.b32.xlu0 %v6407, 127
      %v6454 = vpop.permute.xlu0 %6453
      %6455 = vrot.lane.b32.xlu0 %v6408, 127
      %v6456 = vpop.permute.xlu0 %6455
      %6457 = vrot.lane.b32.xlu0 %v6409, 127
      %v6458 = vpop.permute.xlu0 %6457
      %6459 = vrot.lane.b32.xlu0 %v6410, 127
      %v6460 = vpop.permute.xlu0 %6459
      %6461 = vrot.lane.b32.xlu0 %v6411, 127
      %v6462 = vpop.permute.xlu0 %6461
      %6463 = vrot.lane.b32.xlu0 %v6412, 127
      %v6464 = vpop.permute.xlu0 %6463
      %6465 = vrot.lane.b32.xlu0 %v6413, 127
      %v6466 = vpop.permute.xlu0 %6465
      %6467 = vrot.lane.b32.xlu0 %v6414, 127
      %v6468 = vpop.permute.xlu0 %6467
      %6469 = vrot.lane.b32.xlu0 %v6415, 127
      %v6470 = vpop.permute.xlu0 %6469
      %6471 = vrot.lane.b32.xlu0 %v6416, 127
      %v6472 = vpop.permute.xlu0 %6471
      %6473 = vrot.lane.b32.xlu0 %v6417, 127
      %v6474 = vpop.permute.xlu0 %6473
      %6475 = vrot.lane.b32.xlu0 %v6418, 127
      %v6476 = vpop.permute.xlu0 %6475
      %6477 = vrot.lane.b32.xlu0 %v6419, 127
      %v6478 = vpop.permute.xlu0 %6477
      %6479 = vrot.lane.b32.xlu0 %v6420, 127
      %v6480 = vpop.permute.xlu0 %6479
      %v6481 = vsel %vm262, %v6442, %v6444
      %v6482 = vsel %vm262, %v6444, %v6446
      %v6483 = vsel %vm262, %v6446, %v6448
      %v6484 = vsel %vm262, %v6448, %v6450
      %v6485 = vsel %vm262, %v6452, %v6454
      %v6486 = vsel %vm262, %v6454, %v6456
      %v6487 = vsel %vm262, %v6456, %v6458
      %v6488 = vsel %vm262, %v6458, %v6460
      %v6489 = vsel %vm262, %v6462, %v6464
      %v6490 = vsel %vm262, %v6464, %v6466
      %v6491 = vsel %vm262, %v6466, %v6468
      %v6492 = vsel %vm262, %v6468, %v6470
      %v6493 = vsel %vm262, %v6472, %v6474
      %v6494 = vsel %vm262, %v6474, %v6476
      %v6495 = vsel %vm262, %v6476, %v6478
      %v6496 = vsel %vm262, %v6478, %v6480
      %6517 = vst [vmem:[#allocation4 + $0xa0] sm:$0xff] %v6481
      %6518 = vst [vmem:[#allocation4 + $0xa8] sm:$0xff] %v6482
      %6519 = vst [vmem:[#allocation4 + $0xb0] sm:$0xff] %v6483
      %6520 = vst [vmem:[#allocation4 + $0xb8] sm:$0xff] %v6484
      %6521 = vst.msk [vmem:[#allocation4 + $0xc0] sm:$0xff] %vm203, %v6450
      %6522 = vst [vmem:[#allocation4 + $0xc8] sm:$0xff] %v6485
      %6523 = vst [vmem:[#allocation4 + $0xd0] sm:$0xff] %v6486
      %6524 = vst [vmem:[#allocation4 + $0xd8] sm:$0xff] %v6487
      %6525 = vst [vmem:[#allocation4 + $0xe0] sm:$0xff] %v6488
      %6526 = vst.msk [vmem:[#allocation4 + $0xe8] sm:$0xff] %vm203, %v6460
      %6527 = vst [vmem:[#allocation4 + $0xf0] sm:$0xff] %v6489
      %6528 = vst [vmem:[#allocation4 + $0xf8] sm:$0xff] %v6490
      %6529 = vst [vmem:[#allocation4 + $0x100] sm:$0xff] %v6491
      %6530 = vst [vmem:[#allocation4 + $0x108] sm:$0xff] %v6492
      %6531 = vst.msk [vmem:[#allocation4 + $0x110] sm:$0xff] %vm203, %v6470
      %6532 = vst [vmem:[#allocation4 + $0x118] sm:$0xff] %v6493
      %6533 = vst [vmem:[#allocation4 + $0x120] sm:$0xff] %v6494
      %6534 = vst [vmem:[#allocation4 + $0x128] sm:$0xff] %v6495
      %6535 = vst [vmem:[#allocation4 + $0x130] sm:$0xff] %v6496
      %6536 = vst.msk [vmem:[#allocation4 + $0x138] sm:$0xff] %vm203, %v6480
      %v6537 = vld [vmem:[#allocation2] sm:$0xff]
      %v6538 = vld [vmem:[#allocation2 + $0x8] sm:$0xff]
      %v6539 = vld [vmem:[#allocation2 + $0x10] sm:$0xff]
      %v6540 = vld [vmem:[#allocation2 + $0x18] sm:$0xff]
      %v6541 = vld [vmem:[#allocation2 + $0x20] sm:$0xff]
      %v6542 = vld [vmem:[#allocation2 + $0x30] sm:$0xff]
      %v6543 = vld [vmem:[#allocation2 + $0x38] sm:$0xff]
      %v6544 = vld [vmem:[#allocation2 + $0x40] sm:$0xff]
      %v6545 = vld [vmem:[#allocation2 + $0x48] sm:$0xff]
      %v6546 = vld [vmem:[#allocation2 + $0x50] sm:$0xff]
      %v6547 = vld [vmem:[#allocation2 + $0x60] sm:$0xff]
      %v6548 = vld [vmem:[#allocation2 + $0x68] sm:$0xff]
      %v6549 = vld [vmem:[#allocation2 + $0x70] sm:$0xff]
      %v6550 = vld [vmem:[#allocation2 + $0x78] sm:$0xff]
      %v6551 = vld [vmem:[#allocation2 + $0x80] sm:$0xff]
      %v6552 = vld [vmem:[#allocation2 + $0x90] sm:$0xff]
      %v6553 = vld [vmem:[#allocation2 + $0x98] sm:$0xff]
      %v6554 = vld [vmem:[#allocation2 + $0xa0] sm:$0xff]
      %v6555 = vld [vmem:[#allocation2 + $0xa8] sm:$0xff]
      %v6556 = vld [vmem:[#allocation2 + $0xb0] sm:$0xff]
      %6577 = vrot.lane.b32.xlu0 %v6537, 126
      %v6578 = vpop.permute.xlu0 %6577
      %6579 = vrot.lane.b32.xlu0 %v6538, 126
      %v6580 = vpop.permute.xlu0 %6579
      %6581 = vrot.lane.b32.xlu0 %v6539, 126
      %v6582 = vpop.permute.xlu0 %6581
      %6583 = vrot.lane.b32.xlu0 %v6540, 126
      %v6584 = vpop.permute.xlu0 %6583
      %6585 = vrot.lane.b32.xlu0 %v6541, 126
      %v6586 = vpop.permute.xlu0 %6585
      %6587 = vrot.lane.b32.xlu0 %v6542, 126
      %v6588 = vpop.permute.xlu0 %6587
      %6589 = vrot.lane.b32.xlu0 %v6543, 126
      %v6590 = vpop.permute.xlu0 %6589
      %6591 = vrot.lane.b32.xlu0 %v6544, 126
      %v6592 = vpop.permute.xlu0 %6591
      %6593 = vrot.lane.b32.xlu0 %v6545, 126
      %v6594 = vpop.permute.xlu0 %6593
      %6595 = vrot.lane.b32.xlu0 %v6546, 126
      %v6596 = vpop.permute.xlu0 %6595
      %6597 = vrot.lane.b32.xlu0 %v6547, 126
      %v6598 = vpop.permute.xlu0 %6597
      %6599 = vrot.lane.b32.xlu0 %v6548, 126
      %v6600 = vpop.permute.xlu0 %6599
      %6601 = vrot.lane.b32.xlu0 %v6549, 126
      %v6602 = vpop.permute.xlu0 %6601
      %6603 = vrot.lane.b32.xlu0 %v6550, 126
      %v6604 = vpop.permute.xlu0 %6603
      %6605 = vrot.lane.b32.xlu0 %v6551, 126
      %v6606 = vpop.permute.xlu0 %6605
      %6607 = vrot.lane.b32.xlu0 %v6552, 126
      %v6608 = vpop.permute.xlu0 %6607
      %6609 = vrot.lane.b32.xlu0 %v6553, 126
      %v6610 = vpop.permute.xlu0 %6609
      %6611 = vrot.lane.b32.xlu0 %v6554, 126
      %v6612 = vpop.permute.xlu0 %6611
      %6613 = vrot.lane.b32.xlu0 %v6555, 126
      %v6614 = vpop.permute.xlu0 %6613
      %6615 = vrot.lane.b32.xlu0 %v6556, 126
      %v6616 = vpop.permute.xlu0 %6615
      %v6617 = vsel %vm343, %v6578, %v6580
      %v6618 = vsel %vm343, %v6580, %v6582
      %v6619 = vsel %vm343, %v6582, %v6584
      %v6620 = vsel %vm343, %v6584, %v6586
      %v6621 = vsel %vm343, %v6588, %v6590
      %v6622 = vsel %vm343, %v6590, %v6592
      %v6623 = vsel %vm343, %v6592, %v6594
      %v6624 = vsel %vm343, %v6594, %v6596
      %v6625 = vsel %vm343, %v6598, %v6600
      %v6626 = vsel %vm343, %v6600, %v6602
      %v6627 = vsel %vm343, %v6602, %v6604
      %v6628 = vsel %vm343, %v6604, %v6606
      %v6629 = vsel %vm343, %v6608, %v6610
      %v6630 = vsel %vm343, %v6610, %v6612
      %v6631 = vsel %vm343, %v6612, %v6614
      %v6632 = vsel %vm343, %v6614, %v6616
      %6653 = vst [vmem:[#allocation4 + $0x140] sm:$0xff] %v6617
      %6654 = vst [vmem:[#allocation4 + $0x148] sm:$0xff] %v6618
      %6655 = vst [vmem:[#allocation4 + $0x150] sm:$0xff] %v6619
      %6656 = vst [vmem:[#allocation4 + $0x158] sm:$0xff] %v6620
      %6657 = vst.msk [vmem:[#allocation4 + $0x160] sm:$0xff] %vm203, %v6586
      %6658 = vst [vmem:[#allocation4 + $0x168] sm:$0xff] %v6621
      %6659 = vst [vmem:[#allocation4 + $0x170] sm:$0xff] %v6622
      %6660 = vst [vmem:[#allocation4 + $0x178] sm:$0xff] %v6623
      %6661 = vst [vmem:[#allocation4 + $0x180] sm:$0xff] %v6624
      %6662 = vst.msk [vmem:[#allocation4 + $0x188] sm:$0xff] %vm203, %v6596
      %6663 = vst [vmem:[#allocation4 + $0x190] sm:$0xff] %v6625
      %6664 = vst [vmem:[#allocation4 + $0x198] sm:$0xff] %v6626
      %6665 = vst [vmem:[#allocation4 + $0x1a0] sm:$0xff] %v6627
      %6666 = vst [vmem:[#allocation4 + $0x1a8] sm:$0xff] %v6628
      %6667 = vst.msk [vmem:[#allocation4 + $0x1b0] sm:$0xff] %vm203, %v6606
      %6668 = vst [vmem:[#allocation4 + $0x1b8] sm:$0xff] %v6629
      %6669 = vst [vmem:[#allocation4 + $0x1c0] sm:$0xff] %v6630
      %6670 = vst [vmem:[#allocation4 + $0x1c8] sm:$0xff] %v6631
      %6671 = vst [vmem:[#allocation4 + $0x1d0] sm:$0xff] %v6632
      %6672 = vst.msk [vmem:[#allocation4 + $0x1d8] sm:$0xff] %vm203, %v6616
      %v6673 = vld [vmem:[#allocation2] sm:$0xff]
      %v6674 = vld [vmem:[#allocation2 + $0x8] sm:$0xff]
      %v6675 = vld [vmem:[#allocation2 + $0x10] sm:$0xff]
      %v6676 = vld [vmem:[#allocation2 + $0x18] sm:$0xff]
      %v6677 = vld [vmem:[#allocation2 + $0x20] sm:$0xff]
      %v6678 = vld [vmem:[#allocation2 + $0x30] sm:$0xff]
      %v6679 = vld [vmem:[#allocation2 + $0x38] sm:$0xff]
      %v6680 = vld [vmem:[#allocation2 + $0x40] sm:$0xff]
      %v6681 = vld [vmem:[#allocation2 + $0x48] sm:$0xff]
      %v6682 = vld [vmem:[#allocation2 + $0x50] sm:$0xff]
      %v6683 = vld [vmem:[#allocation2 + $0x60] sm:$0xff]
      %v6684 = vld [vmem:[#allocation2 + $0x68] sm:$0xff]
      %v6685 = vld [vmem:[#allocation2 + $0x70] sm:$0xff]
      %v6686 = vld [vmem:[#allocation2 + $0x78] sm:$0xff]
      %v6687 = vld [vmem:[#allocation2 + $0x80] sm:$0xff]
      %v6688 = vld [vmem:[#allocation2 + $0x90] sm:$0xff]
      %v6689 = vld [vmem:[#allocation2 + $0x98] sm:$0xff]
      %v6690 = vld [vmem:[#allocation2 + $0xa0] sm:$0xff]
      %v6691 = vld [vmem:[#allocation2 + $0xa8] sm:$0xff]
      %v6692 = vld [vmem:[#allocation2 + $0xb0] sm:$0xff]
      %6713 = vrot.lane.b32.xlu0 %v6673, 96
      %v6714 = vpop.permute.xlu0 %6713
      %6715 = vrot.lane.b32.xlu0 %v6674, 96
      %v6716 = vpop.permute.xlu0 %6715
      %6717 = vrot.lane.b32.xlu0 %v6675, 96
      %v6718 = vpop.permute.xlu0 %6717
      %6719 = vrot.lane.b32.xlu0 %v6676, 96
      %v6720 = vpop.permute.xlu0 %6719
      %6721 = vrot.lane.b32.xlu0 %v6677, 96
      %v6722 = vpop.permute.xlu0 %6721
      %6723 = vrot.lane.b32.xlu0 %v6678, 96
      %v6724 = vpop.permute.xlu0 %6723
      %6725 = vrot.lane.b32.xlu0 %v6679, 96
      %v6726 = vpop.permute.xlu0 %6725
      %6727 = vrot.lane.b32.xlu0 %v6680, 96
      %v6728 = vpop.permute.xlu0 %6727
      %6729 = vrot.lane.b32.xlu0 %v6681, 96
      %v6730 = vpop.permute.xlu0 %6729
      %6731 = vrot.lane.b32.xlu0 %v6682, 96
      %v6732 = vpop.permute.xlu0 %6731
      %6733 = vrot.lane.b32.xlu0 %v6683, 96
      %v6734 = vpop.permute.xlu0 %6733
      %6735 = vrot.lane.b32.xlu0 %v6684, 96
      %v6736 = vpop.permute.xlu0 %6735
      %6737 = vrot.lane.b32.xlu0 %v6685, 96
      %v6738 = vpop.permute.xlu0 %6737
      %6739 = vrot.lane.b32.xlu0 %v6686, 96
      %v6740 = vpop.permute.xlu0 %6739
      %6741 = vrot.lane.b32.xlu0 %v6687, 96
      %v6742 = vpop.permute.xlu0 %6741
      %6743 = vrot.lane.b32.xlu0 %v6688, 96
      %v6744 = vpop.permute.xlu0 %6743
      %6745 = vrot.lane.b32.xlu0 %v6689, 96
      %v6746 = vpop.permute.xlu0 %6745
      %6747 = vrot.lane.b32.xlu0 %v6690, 96
      %v6748 = vpop.permute.xlu0 %6747
      %6749 = vrot.lane.b32.xlu0 %v6691, 96
      %v6750 = vpop.permute.xlu0 %6749
      %6751 = vrot.lane.b32.xlu0 %v6692, 96
      %v6752 = vpop.permute.xlu0 %6751
      %v6753 = vsel %vm424, %v6714, %v6716
      %v6754 = vsel %vm424, %v6716, %v6718
      %v6755 = vsel %vm424, %v6718, %v6720
      %v6756 = vsel %vm424, %v6720, %v6722
      %v6757 = vsel %vm424, %v6724, %v6726
      %v6758 = vsel %vm424, %v6726, %v6728
      %v6759 = vsel %vm424, %v6728, %v6730
      %v6760 = vsel %vm424, %v6730, %v6732
      %v6761 = vsel %vm424, %v6734, %v6736
      %v6762 = vsel %vm424, %v6736, %v6738
      %v6763 = vsel %vm424, %v6738, %v6740
      %v6764 = vsel %vm424, %v6740, %v6742
      %v6765 = vsel %vm424, %v6744, %v6746
      %v6766 = vsel %vm424, %v6746, %v6748
      %v6767 = vsel %vm424, %v6748, %v6750
      %v6768 = vsel %vm424, %v6750, %v6752
      %6789 = vst [vmem:[#allocation4 + $0x1e0] sm:$0xff] %v6753
      %6790 = vst [vmem:[#allocation4 + $0x1e8] sm:$0xff] %v6754
      %6791 = vst [vmem:[#allocation4 + $0x1f0] sm:$0xff] %v6755
      %6792 = vst [vmem:[#allocation4 + $0x1f8] sm:$0xff] %v6756
      %6793 = vst.msk [vmem:[#allocation4 + $0x200] sm:$0xff] %vm203, %v6722
      %6794 = vst [vmem:[#allocation4 + $0x208] sm:$0xff] %v6757
      %6795 = vst [vmem:[#allocation4 + $0x210] sm:$0xff] %v6758
      %6796 = vst [vmem:[#allocation4 + $0x218] sm:$0xff] %v6759
      %6797 = vst [vmem:[#allocation4 + $0x220] sm:$0xff] %v6760
      %6798 = vst.msk [vmem:[#allocation4 + $0x228] sm:$0xff] %vm203, %v6732
      %6799 = vst [vmem:[#allocation4 + $0x230] sm:$0xff] %v6761
      %6800 = vst [vmem:[#allocation4 + $0x238] sm:$0xff] %v6762
      %6801 = vst [vmem:[#allocation4 + $0x240] sm:$0xff] %v6763
      %6802 = vst [vmem:[#allocation4 + $0x248] sm:$0xff] %v6764
      %6803 = vst.msk [vmem:[#allocation4 + $0x250] sm:$0xff] %vm203, %v6742
      %6804 = vst [vmem:[#allocation4 + $0x258] sm:$0xff] %v6765
      %6805 = vst [vmem:[#allocation4 + $0x260] sm:$0xff] %v6766
      %6806 = vst [vmem:[#allocation4 + $0x268] sm:$0xff] %v6767
      %6807 = vst [vmem:[#allocation4 + $0x270] sm:$0xff] %v6768
      %6808 = vst.msk [vmem:[#allocation4 + $0x278] sm:$0xff] %vm203, %v6752
      %v6809 = vld [vmem:[#allocation2] sm:$0xff]
      %v6810 = vld [vmem:[#allocation2 + $0x8] sm:$0xff]
      %v6811 = vld [vmem:[#allocation2 + $0x10] sm:$0xff]
      %v6812 = vld [vmem:[#allocation2 + $0x18] sm:$0xff]
      %v6813 = vld [vmem:[#allocation2 + $0x20] sm:$0xff]
      %v6814 = vld [vmem:[#allocation2 + $0x30] sm:$0xff]
      %v6815 = vld [vmem:[#allocation2 + $0x38] sm:$0xff]
      %v6816 = vld [vmem:[#allocation2 + $0x40] sm:$0xff]
      %v6817 = vld [vmem:[#allocation2 + $0x48] sm:$0xff]
      %v6818 = vld [vmem:[#allocation2 + $0x50] sm:$0xff]
      %v6819 = vld [vmem:[#allocation2 + $0x60] sm:$0xff]
      %v6820 = vld [vmem:[#allocation2 + $0x68] sm:$0xff]
      %v6821 = vld [vmem:[#allocation2 + $0x70] sm:$0xff]
      %v6822 = vld [vmem:[#allocation2 + $0x78] sm:$0xff]
      %v6823 = vld [vmem:[#allocation2 + $0x80] sm:$0xff]
      %v6824 = vld [vmem:[#allocation2 + $0x90] sm:$0xff]
      %v6825 = vld [vmem:[#allocation2 + $0x98] sm:$0xff]
      %v6826 = vld [vmem:[#allocation2 + $0xa0] sm:$0xff]
      %v6827 = vld [vmem:[#allocation2 + $0xa8] sm:$0xff]
      %v6828 = vld [vmem:[#allocation2 + $0xb0] sm:$0xff]
      %6849 = vrot.lane.b32.xlu0 %v6809, 95
      %v6850 = vpop.permute.xlu0 %6849
      %6851 = vrot.lane.b32.xlu0 %v6810, 95
      %v6852 = vpop.permute.xlu0 %6851
      %6853 = vrot.lane.b32.xlu0 %v6811, 95
      %v6854 = vpop.permute.xlu0 %6853
      %6855 = vrot.lane.b32.xlu0 %v6812, 95
      %v6856 = vpop.permute.xlu0 %6855
      %6857 = vrot.lane.b32.xlu0 %v6813, 95
      %v6858 = vpop.permute.xlu0 %6857
      %6859 = vrot.lane.b32.xlu0 %v6814, 95
      %v6860 = vpop.permute.xlu0 %6859
      %6861 = vrot.lane.b32.xlu0 %v6815, 95
      %v6862 = vpop.permute.xlu0 %6861
      %6863 = vrot.lane.b32.xlu0 %v6816, 95
      %v6864 = vpop.permute.xlu0 %6863
      %6865 = vrot.lane.b32.xlu0 %v6817, 95
      %v6866 = vpop.permute.xlu0 %6865
      %6867 = vrot.lane.b32.xlu0 %v6818, 95
      %v6868 = vpop.permute.xlu0 %6867
      %6869 = vrot.lane.b32.xlu0 %v6819, 95
      %v6870 = vpop.permute.xlu0 %6869
      %6871 = vrot.lane.b32.xlu0 %v6820, 95
      %v6872 = vpop.permute.xlu0 %6871
      %6873 = vrot.lane.b32.xlu0 %v6821, 95
      %v6874 = vpop.permute.xlu0 %6873
      %6875 = vrot.lane.b32.xlu0 %v6822, 95
      %v6876 = vpop.permute.xlu0 %6875
      %6877 = vrot.lane.b32.xlu0 %v6823, 95
      %v6878 = vpop.permute.xlu0 %6877
      %6879 = vrot.lane.b32.xlu0 %v6824, 95
      %v6880 = vpop.permute.xlu0 %6879
      %6881 = vrot.lane.b32.xlu0 %v6825, 95
      %v6882 = vpop.permute.xlu0 %6881
      %6883 = vrot.lane.b32.xlu0 %v6826, 95
      %v6884 = vpop.permute.xlu0 %6883
      %6885 = vrot.lane.b32.xlu0 %v6827, 95
      %v6886 = vpop.permute.xlu0 %6885
      %6887 = vrot.lane.b32.xlu0 %v6828, 95
      %v6888 = vpop.permute.xlu0 %6887
      %v6889 = vsel %vm505, %v6850, %v6852
      %v6890 = vsel %vm505, %v6852, %v6854
      %v6891 = vsel %vm505, %v6854, %v6856
      %v6892 = vsel %vm505, %v6856, %v6858
      %v6893 = vsel %vm505, %v6860, %v6862
      %v6894 = vsel %vm505, %v6862, %v6864
      %v6895 = vsel %vm505, %v6864, %v6866
      %v6896 = vsel %vm505, %v6866, %v6868
      %v6897 = vsel %vm505, %v6870, %v6872
      %v6898 = vsel %vm505, %v6872, %v6874
      %v6899 = vsel %vm505, %v6874, %v6876
      %v6900 = vsel %vm505, %v6876, %v6878
      %v6901 = vsel %vm505, %v6880, %v6882
      %v6902 = vsel %vm505, %v6882, %v6884
      %v6903 = vsel %vm505, %v6884, %v6886
      %v6904 = vsel %vm505, %v6886, %v6888
      %6925 = vst [vmem:[#allocation4 + $0x280] sm:$0xff] %v6889
      %6926 = vst [vmem:[#allocation4 + $0x288] sm:$0xff] %v6890
      %6927 = vst [vmem:[#allocation4 + $0x290] sm:$0xff] %v6891
      %6928 = vst [vmem:[#allocation4 + $0x298] sm:$0xff] %v6892
      %6929 = vst.msk [vmem:[#allocation4 + $0x2a0] sm:$0xff] %vm203, %v6858
      %6930 = vst [vmem:[#allocation4 + $0x2a8] sm:$0xff] %v6893
      %6931 = vst [vmem:[#allocation4 + $0x2b0] sm:$0xff] %v6894
      %6932 = vst [vmem:[#allocation4 + $0x2b8] sm:$0xff] %v6895
      %6933 = vst [vmem:[#allocation4 + $0x2c0] sm:$0xff] %v6896
      %6934 = vst.msk [vmem:[#allocation4 + $0x2c8] sm:$0xff] %vm203, %v6868
      %6935 = vst [vmem:[#allocation4 + $0x2d0] sm:$0xff] %v6897
      %6936 = vst [vmem:[#allocation4 + $0x2d8] sm:$0xff] %v6898
      %6937 = vst [vmem:[#allocation4 + $0x2e0] sm:$0xff] %v6899
      %6938 = vst [vmem:[#allocation4 + $0x2e8] sm:$0xff] %v6900
      %6939 = vst.msk [vmem:[#allocation4 + $0x2f0] sm:$0xff] %vm203, %v6878
      %6940 = vst [vmem:[#allocation4 + $0x2f8] sm:$0xff] %v6901
      %6941 = vst [vmem:[#allocation4 + $0x300] sm:$0xff] %v6902
      %6942 = vst [vmem:[#allocation4 + $0x308] sm:$0xff] %v6903
      %6943 = vst [vmem:[#allocation4 + $0x310] sm:$0xff] %v6904
      %6944 = vst.msk [vmem:[#allocation4 + $0x318] sm:$0xff] %vm203, %v6888
      %v6945 = vld [vmem:[#allocation2] sm:$0xff]
      %v6946 = vld [vmem:[#allocation2 + $0x8] sm:$0xff]
      %v6947 = vld [vmem:[#allocation2 + $0x10] sm:$0xff]
      %v6948 = vld [vmem:[#allocation2 + $0x18] sm:$0xff]
      %v6949 = vld [vmem:[#allocation2 + $0x20] sm:$0xff]
      %v6950 = vld [vmem:[#allocation2 + $0x30] sm:$0xff]
      %v6951 = vld [vmem:[#allocation2 + $0x38] sm:$0xff]
      %v6952 = vld [vmem:[#allocation2 + $0x40] sm:$0xff]
      %v6953 = vld [vmem:[#allocation2 + $0x48] sm:$0xff]
      %v6954 = vld [vmem:[#allocation2 + $0x50] sm:$0xff]
      %v6955 = vld [vmem:[#allocation2 + $0x60] sm:$0xff]
      %v6956 = vld [vmem:[#allocation2 + $0x68] sm:$0xff]
      %v6957 = vld [vmem:[#allocation2 + $0x70] sm:$0xff]
      %v6958 = vld [vmem:[#allocation2 + $0x78] sm:$0xff]
      %v6959 = vld [vmem:[#allocation2 + $0x80] sm:$0xff]
      %v6960 = vld [vmem:[#allocation2 + $0x90] sm:$0xff]
      %v6961 = vld [vmem:[#allocation2 + $0x98] sm:$0xff]
      %v6962 = vld [vmem:[#allocation2 + $0xa0] sm:$0xff]
      %v6963 = vld [vmem:[#allocation2 + $0xa8] sm:$0xff]
      %v6964 = vld [vmem:[#allocation2 + $0xb0] sm:$0xff]
      %6985 = vrot.lane.b32.xlu0 %v6945, 94
      %v6986 = vpop.permute.xlu0 %6985
      %6987 = vrot.lane.b32.xlu0 %v6946, 94
      %v6988 = vpop.permute.xlu0 %6987
      %6989 = vrot.lane.b32.xlu0 %v6947, 94
      %v6990 = vpop.permute.xlu0 %6989
      %6991 = vrot.lane.b32.xlu0 %v6948, 94
      %v6992 = vpop.permute.xlu0 %6991
      %6993 = vrot.lane.b32.xlu0 %v6949, 94
      %v6994 = vpop.permute.xlu0 %6993
      %6995 = vrot.lane.b32.xlu0 %v6950, 94
      %v6996 = vpop.permute.xlu0 %6995
      %6997 = vrot.lane.b32.xlu0 %v6951, 94
      %v6998 = vpop.permute.xlu0 %6997
      %6999 = vrot.lane.b32.xlu0 %v6952, 94
      %v7000 = vpop.permute.xlu0 %6999
      %7001 = vrot.lane.b32.xlu0 %v6953, 94
      %v7002 = vpop.permute.xlu0 %7001
      %7003 = vrot.lane.b32.xlu0 %v6954, 94
      %v7004 = vpop.permute.xlu0 %7003
      %7005 = vrot.lane.b32.xlu0 %v6955, 94
      %v7006 = vpop.permute.xlu0 %7005
      %7007 = vrot.lane.b32.xlu0 %v6956, 94
      %v7008 = vpop.permute.xlu0 %7007
      %7009 = vrot.lane.b32.xlu0 %v6957, 94
      %v7010 = vpop.permute.xlu0 %7009
      %7011 = vrot.lane.b32.xlu0 %v6958, 94
      %v7012 = vpop.permute.xlu0 %7011
      %7013 = vrot.lane.b32.xlu0 %v6959, 94
      %v7014 = vpop.permute.xlu0 %7013
      %7015 = vrot.lane.b32.xlu0 %v6960, 94
      %v7016 = vpop.permute.xlu0 %7015
      %7017 = vrot.lane.b32.xlu0 %v6961, 94
      %v7018 = vpop.permute.xlu0 %7017
      %7019 = vrot.lane.b32.xlu0 %v6962, 94
      %v7020 = vpop.permute.xlu0 %7019
      %7021 = vrot.lane.b32.xlu0 %v6963, 94
      %v7022 = vpop.permute.xlu0 %7021
      %7023 = vrot.lane.b32.xlu0 %v6964, 94
      %v7024 = vpop.permute.xlu0 %7023
      %v7025 = vsel %vm586, %v6986, %v6988
      %v7026 = vsel %vm586, %v6988, %v6990
      %v7027 = vsel %vm586, %v6990, %v6992
      %v7028 = vsel %vm586, %v6992, %v6994
      %v7029 = vsel %vm586, %v6996, %v6998
      %v7030 = vsel %vm586, %v6998, %v7000
      %v7031 = vsel %vm586, %v7000, %v7002
      %v7032 = vsel %vm586, %v7002, %v7004
      %v7033 = vsel %vm586, %v7006, %v7008
      %v7034 = vsel %vm586, %v7008, %v7010
      %v7035 = vsel %vm586, %v7010, %v7012
      %v7036 = vsel %vm586, %v7012, %v7014
      %v7037 = vsel %vm586, %v7016, %v7018
      %v7038 = vsel %vm586, %v7018, %v7020
      %v7039 = vsel %vm586, %v7020, %v7022
      %v7040 = vsel %vm586, %v7022, %v7024
      %7061 = vst [vmem:[#allocation4 + $0x320] sm:$0xff] %v7025
      %7062 = vst [vmem:[#allocation4 + $0x328] sm:$0xff] %v7026
      %7063 = vst [vmem:[#allocation4 + $0x330] sm:$0xff] %v7027
      %7064 = vst [vmem:[#allocation4 + $0x338] sm:$0xff] %v7028
      %7065 = vst.msk [vmem:[#allocation4 + $0x340] sm:$0xff] %vm203, %v6994
      %7066 = vst [vmem:[#allocation4 + $0x348] sm:$0xff] %v7029
      %7067 = vst [vmem:[#allocation4 + $0x350] sm:$0xff] %v7030
      %7068 = vst [vmem:[#allocation4 + $0x358] sm:$0xff] %v7031
      %7069 = vst [vmem:[#allocation4 + $0x360] sm:$0xff] %v7032
      %7070 = vst.msk [vmem:[#allocation4 + $0x368] sm:$0xff] %vm203, %v7004
      %7071 = vst [vmem:[#allocation4 + $0x370] sm:$0xff] %v7033
      %7072 = vst [vmem:[#allocation4 + $0x378] sm:$0xff] %v7034
      %7073 = vst [vmem:[#allocation4 + $0x380] sm:$0xff] %v7035
      %7074 = vst [vmem:[#allocation4 + $0x388] sm:$0xff] %v7036
      %7075 = vst.msk [vmem:[#allocation4 + $0x390] sm:$0xff] %vm203, %v7014
      %7076 = vst [vmem:[#allocation4 + $0x398] sm:$0xff] %v7037
      %7077 = vst [vmem:[#allocation4 + $0x3a0] sm:$0xff] %v7038
      %7078 = vst [vmem:[#allocation4 + $0x3a8] sm:$0xff] %v7039
      %7079 = vst [vmem:[#allocation4 + $0x3b0] sm:$0xff] %v7040
      %7080 = vst.msk [vmem:[#allocation4 + $0x3b8] sm:$0xff] %vm203, %v7024
      %v7081 = vld [vmem:[#allocation2] sm:$0xff]
      %v7082 = vld [vmem:[#allocation2 + $0x8] sm:$0xff]
      %v7083 = vld [vmem:[#allocation2 + $0x10] sm:$0xff]
      %v7084 = vld [vmem:[#allocation2 + $0x18] sm:$0xff]
      %v7085 = vld [vmem:[#allocation2 + $0x20] sm:$0xff]
      %v7086 = vld [vmem:[#allocation2 + $0x30] sm:$0xff]
      %v7087 = vld [vmem:[#allocation2 + $0x38] sm:$0xff]
      %v7088 = vld [vmem:[#allocation2 + $0x40] sm:$0xff]
      %v7089 = vld [vmem:[#allocation2 + $0x48] sm:$0xff]
      %v7090 = vld [vmem:[#allocation2 + $0x50] sm:$0xff]
      %v7091 = vld [vmem:[#allocation2 + $0x60] sm:$0xff]
      %v7092 = vld [vmem:[#allocation2 + $0x68] sm:$0xff]
      %v7093 = vld [vmem:[#allocation2 + $0x70] sm:$0xff]
      %v7094 = vld [vmem:[#allocation2 + $0x78] sm:$0xff]
      %v7095 = vld [vmem:[#allocation2 + $0x80] sm:$0xff]
      %v7096 = vld [vmem:[#allocation2 + $0x90] sm:$0xff]
      %v7097 = vld [vmem:[#allocation2 + $0x98] sm:$0xff]
      %v7098 = vld [vmem:[#allocation2 + $0xa0] sm:$0xff]
      %v7099 = vld [vmem:[#allocation2 + $0xa8] sm:$0xff]
      %v7100 = vld [vmem:[#allocation2 + $0xb0] sm:$0xff]
      %7121 = vrot.lane.b32.xlu0 %v7081, 64
      %v7122 = vpop.permute.xlu0 %7121
      %7123 = vrot.lane.b32.xlu0 %v7082, 64
      %v7124 = vpop.permute.xlu0 %7123
      %7125 = vrot.lane.b32.xlu0 %v7083, 64
      %v7126 = vpop.permute.xlu0 %7125
      %7127 = vrot.lane.b32.xlu0 %v7084, 64
      %v7128 = vpop.permute.xlu0 %7127
      %7129 = vrot.lane.b32.xlu0 %v7085, 64
      %v7130 = vpop.permute.xlu0 %7129
      %7131 = vrot.lane.b32.xlu0 %v7086, 64
      %v7132 = vpop.permute.xlu0 %7131
      %7133 = vrot.lane.b32.xlu0 %v7087, 64
      %v7134 = vpop.permute.xlu0 %7133
      %7135 = vrot.lane.b32.xlu0 %v7088, 64
      %v7136 = vpop.permute.xlu0 %7135
      %7137 = vrot.lane.b32.xlu0 %v7089, 64
      %v7138 = vpop.permute.xlu0 %7137
      %7139 = vrot.lane.b32.xlu0 %v7090, 64
      %v7140 = vpop.permute.xlu0 %7139
      %7141 = vrot.lane.b32.xlu0 %v7091, 64
      %v7142 = vpop.permute.xlu0 %7141
      %7143 = vrot.lane.b32.xlu0 %v7092, 64
      %v7144 = vpop.permute.xlu0 %7143
      %7145 = vrot.lane.b32.xlu0 %v7093, 64
      %v7146 = vpop.permute.xlu0 %7145
      %7147 = vrot.lane.b32.xlu0 %v7094, 64
      %v7148 = vpop.permute.xlu0 %7147
      %7149 = vrot.lane.b32.xlu0 %v7095, 64
      %v7150 = vpop.permute.xlu0 %7149
      %7151 = vrot.lane.b32.xlu0 %v7096, 64
      %v7152 = vpop.permute.xlu0 %7151
      %7153 = vrot.lane.b32.xlu0 %v7097, 64
      %v7154 = vpop.permute.xlu0 %7153
      %7155 = vrot.lane.b32.xlu0 %v7098, 64
      %v7156 = vpop.permute.xlu0 %7155
      %7157 = vrot.lane.b32.xlu0 %v7099, 64
      %v7158 = vpop.permute.xlu0 %7157
      %7159 = vrot.lane.b32.xlu0 %v7100, 64
      %v7160 = vpop.permute.xlu0 %7159
      %v7161 = vsel %vm203, %v7122, %v7124
      %v7162 = vsel %vm203, %v7124, %v7126
      %v7163 = vsel %vm203, %v7126, %v7128
      %v7164 = vsel %vm203, %v7128, %v7130
      %v7165 = vsel %vm203, %v7132, %v7134
      %v7166 = vsel %vm203, %v7134, %v7136
      %v7167 = vsel %vm203, %v7136, %v7138
      %v7168 = vsel %vm203, %v7138, %v7140
      %v7169 = vsel %vm203, %v7142, %v7144
      %v7170 = vsel %vm203, %v7144, %v7146
      %v7171 = vsel %vm203, %v7146, %v7148
      %v7172 = vsel %vm203, %v7148, %v7150
      %v7173 = vsel %vm203, %v7152, %v7154
      %v7174 = vsel %vm203, %v7154, %v7156
      %v7175 = vsel %vm203, %v7156, %v7158
      %v7176 = vsel %vm203, %v7158, %v7160
      %7197 = vst [vmem:[#allocation4 + $0x3c0] sm:$0xff] %v7161
      %7198 = vst [vmem:[#allocation4 + $0x3c8] sm:$0xff] %v7162
      %7199 = vst [vmem:[#allocation4 + $0x3d0] sm:$0xff] %v7163
      %7200 = vst [vmem:[#allocation4 + $0x3d8] sm:$0xff] %v7164
      %7201 = vst.msk [vmem:[#allocation4 + $0x3e0] sm:$0xff] %vm203, %v7130
      %7202 = vst [vmem:[#allocation4 + $0x3e8] sm:$0xff] %v7165
      %7203 = vst [vmem:[#allocation4 + $0x3f0] sm:$0xff] %v7166
      %7204 = vst [vmem:[#allocation4 + $0x3f8] sm:$0xff] %v7167
      %7205 = vst [vmem:[#allocation4 + $0x400] sm:$0xff] %v7168
      %7206 = vst.msk [vmem:[#allocation4 + $0x408] sm:$0xff] %vm203, %v7140
      %7207 = vst [vmem:[#allocation4 + $0x410] sm:$0xff] %v7169
      %7208 = vst [vmem:[#allocation4 + $0x418] sm:$0xff] %v7170
      %7209 = vst [vmem:[#allocation4 + $0x420] sm:$0xff] %v7171
      %7210 = vst [vmem:[#allocation4 + $0x428] sm:$0xff] %v7172
      %7211 = vst.msk [vmem:[#allocation4 + $0x430] sm:$0xff] %vm203, %v7150
      %7212 = vst [vmem:[#allocation4 + $0x438] sm:$0xff] %v7173
      %7213 = vst [vmem:[#allocation4 + $0x440] sm:$0xff] %v7174
      %7214 = vst [vmem:[#allocation4 + $0x448] sm:$0xff] %v7175
      %7215 = vst [vmem:[#allocation4 + $0x450] sm:$0xff] %v7176
      %7216 = vst.msk [vmem:[#allocation4 + $0x458] sm:$0xff] %vm203, %v7160
      %v7217 = vld [vmem:[#allocation2] sm:$0xff]
      %v7218 = vld [vmem:[#allocation2 + $0x8] sm:$0xff]
      %v7219 = vld [vmem:[#allocation2 + $0x10] sm:$0xff]
      %v7220 = vld [vmem:[#allocation2 + $0x18] sm:$0xff]
      %v7221 = vld [vmem:[#allocation2 + $0x20] sm:$0xff]
      %v7222 = vld [vmem:[#allocation2 + $0x28] sm:$0xff]
      %v7223 = vld [vmem:[#allocation2 + $0x30] sm:$0xff]
      %v7224 = vld [vmem:[#allocation2 + $0x38] sm:$0xff]
      %v7225 = vld [vmem:[#allocation2 + $0x40] sm:$0xff]
      %v7226 = vld [vmem:[#allocation2 + $0x48] sm:$0xff]
      %v7227 = vld [vmem:[#allocation2 + $0x50] sm:$0xff]
      %v7228 = vld [vmem:[#allocation2 + $0x58] sm:$0xff]
      %v7229 = vld [vmem:[#allocation2 + $0x60] sm:$0xff]
      %v7230 = vld [vmem:[#allocation2 + $0x68] sm:$0xff]
      %v7231 = vld [vmem:[#allocation2 + $0x70] sm:$0xff]
      %v7232 = vld [vmem:[#allocation2 + $0x78] sm:$0xff]
      %v7233 = vld [vmem:[#allocation2 + $0x80] sm:$0xff]
      %v7234 = vld [vmem:[#allocation2 + $0x88] sm:$0xff]
      %v7235 = vld [vmem:[#allocation2 + $0x90] sm:$0xff]
      %v7236 = vld [vmem:[#allocation2 + $0x98] sm:$0xff]
      %v7237 = vld [vmem:[#allocation2 + $0xa0] sm:$0xff]
      %v7238 = vld [vmem:[#allocation2 + $0xa8] sm:$0xff]
      %v7239 = vld [vmem:[#allocation2 + $0xb0] sm:$0xff]
      %v7240 = vld [vmem:[#allocation2 + $0xb8] sm:$0xff]
      %7265 = vrot.lane.b32.xlu0 %v7217, 63
      %v7266 = vpop.permute.xlu0 %7265
      %7267 = vrot.lane.b32.xlu0 %v7218, 63
      %v7268 = vpop.permute.xlu0 %7267
      %7269 = vrot.lane.b32.xlu0 %v7219, 63
      %v7270 = vpop.permute.xlu0 %7269
      %7271 = vrot.lane.b32.xlu0 %v7220, 63
      %v7272 = vpop.permute.xlu0 %7271
      %7273 = vrot.lane.b32.xlu0 %v7221, 63
      %v7274 = vpop.permute.xlu0 %7273
      %7275 = vrot.lane.b32.xlu0 %v7222, 63
      %v7276 = vpop.permute.xlu0 %7275
      %7277 = vrot.lane.b32.xlu0 %v7223, 63
      %v7278 = vpop.permute.xlu0 %7277
      %7279 = vrot.lane.b32.xlu0 %v7224, 63
      %v7280 = vpop.permute.xlu0 %7279
      %7281 = vrot.lane.b32.xlu0 %v7225, 63
      %v7282 = vpop.permute.xlu0 %7281
      %7283 = vrot.lane.b32.xlu0 %v7226, 63
      %v7284 = vpop.permute.xlu0 %7283
      %7285 = vrot.lane.b32.xlu0 %v7227, 63
      %v7286 = vpop.permute.xlu0 %7285
      %7287 = vrot.lane.b32.xlu0 %v7228, 63
      %v7288 = vpop.permute.xlu0 %7287
      %7289 = vrot.lane.b32.xlu0 %v7229, 63
      %v7290 = vpop.permute.xlu0 %7289
      %7291 = vrot.lane.b32.xlu0 %v7230, 63
      %v7292 = vpop.permute.xlu0 %7291
      %7293 = vrot.lane.b32.xlu0 %v7231, 63
      %v7294 = vpop.permute.xlu0 %7293
      %7295 = vrot.lane.b32.xlu0 %v7232, 63
      %v7296 = vpop.permute.xlu0 %7295
      %7297 = vrot.lane.b32.xlu0 %v7233, 63
      %v7298 = vpop.permute.xlu0 %7297
      %7299 = vrot.lane.b32.xlu0 %v7234, 63
      %v7300 = vpop.permute.xlu0 %7299
      %7301 = vrot.lane.b32.xlu0 %v7235, 63
      %v7302 = vpop.permute.xlu0 %7301
      %7303 = vrot.lane.b32.xlu0 %v7236, 63
      %v7304 = vpop.permute.xlu0 %7303
      %7305 = vrot.lane.b32.xlu0 %v7237, 63
      %v7306 = vpop.permute.xlu0 %7305
      %7307 = vrot.lane.b32.xlu0 %v7238, 63
      %v7308 = vpop.permute.xlu0 %7307
      %7309 = vrot.lane.b32.xlu0 %v7239, 63
      %v7310 = vpop.permute.xlu0 %7309
      %7311 = vrot.lane.b32.xlu0 %v7240, 63
      %v7312 = vpop.permute.xlu0 %7311
      %v7313 = vsel %vm763, %v7266, %v7268
      %v7314 = vsel %vm763, %v7268, %v7270
      %v7315 = vsel %vm763, %v7270, %v7272
      %v7316 = vsel %vm763, %v7272, %v7274
      %v7317 = vsel %vm763, %v7274, %v7276
      %v7318 = vsel %vm763, %v7278, %v7280
      %v7319 = vsel %vm763, %v7280, %v7282
      %v7320 = vsel %vm763, %v7282, %v7284
      %v7321 = vsel %vm763, %v7284, %v7286
      %v7322 = vsel %vm763, %v7286, %v7288
      %v7323 = vsel %vm763, %v7290, %v7292
      %v7324 = vsel %vm763, %v7292, %v7294
      %v7325 = vsel %vm763, %v7294, %v7296
      %v7326 = vsel %vm763, %v7296, %v7298
      %v7327 = vsel %vm763, %v7298, %v7300
      %v7328 = vsel %vm763, %v7302, %v7304
      %v7329 = vsel %vm763, %v7304, %v7306
      %v7330 = vsel %vm763, %v7306, %v7308
      %v7331 = vsel %vm763, %v7308, %v7310
      %v7332 = vsel %vm763, %v7310, %v7312
      %7353 = vst [vmem:[#allocation4 + $0x460] sm:$0xff] %v7313
      %7354 = vst [vmem:[#allocation4 + $0x468] sm:$0xff] %v7314
      %7355 = vst [vmem:[#allocation4 + $0x470] sm:$0xff] %v7315
      %7356 = vst [vmem:[#allocation4 + $0x478] sm:$0xff] %v7316
      %7357 = vst.msk [vmem:[#allocation4 + $0x480] sm:$0xff] %vm203, %v7317
      %7358 = vst [vmem:[#allocation4 + $0x488] sm:$0xff] %v7318
      %7359 = vst [vmem:[#allocation4 + $0x490] sm:$0xff] %v7319
      %7360 = vst [vmem:[#allocation4 + $0x498] sm:$0xff] %v7320
      %7361 = vst [vmem:[#allocation4 + $0x4a0] sm:$0xff] %v7321
      %7362 = vst.msk [vmem:[#allocation4 + $0x4a8] sm:$0xff] %vm203, %v7322
      %7363 = vst [vmem:[#allocation4 + $0x4b0] sm:$0xff] %v7323
      %7364 = vst [vmem:[#allocation4 + $0x4b8] sm:$0xff] %v7324
      %7365 = vst [vmem:[#allocation4 + $0x4c0] sm:$0xff] %v7325
      %7366 = vst [vmem:[#allocation4 + $0x4c8] sm:$0xff] %v7326
      %7367 = vst.msk [vmem:[#allocation4 + $0x4d0] sm:$0xff] %vm203, %v7327
      %7368 = vst [vmem:[#allocation4 + $0x4d8] sm:$0xff] %v7328
      %7369 = vst [vmem:[#allocation4 + $0x4e0] sm:$0xff] %v7329
      %7370 = vst [vmem:[#allocation4 + $0x4e8] sm:$0xff] %v7330
      %7371 = vst [vmem:[#allocation4 + $0x4f0] sm:$0xff] %v7331
      %7372 = vst.msk [vmem:[#allocation4 + $0x4f8] sm:$0xff] %vm203, %v7332
      %v7373 = vld [vmem:[#allocation2] sm:$0xff]
      %v7374 = vld [vmem:[#allocation2 + $0x8] sm:$0xff]
      %v7375 = vld [vmem:[#allocation2 + $0x10] sm:$0xff]
      %v7376 = vld [vmem:[#allocation2 + $0x18] sm:$0xff]
      %v7377 = vld [vmem:[#allocation2 + $0x20] sm:$0xff]
      %v7378 = vld [vmem:[#allocation2 + $0x28] sm:$0xff]
      %v7379 = vld [vmem:[#allocation2 + $0x30] sm:$0xff]
      %v7380 = vld [vmem:[#allocation2 + $0x38] sm:$0xff]
      %v7381 = vld [vmem:[#allocation2 + $0x40] sm:$0xff]
      %v7382 = vld [vmem:[#allocation2 + $0x48] sm:$0xff]
      %v7383 = vld [vmem:[#allocation2 + $0x50] sm:$0xff]
      %v7384 = vld [vmem:[#allocation2 + $0x58] sm:$0xff]
      %v7385 = vld [vmem:[#allocation2 + $0x60] sm:$0xff]
      %v7386 = vld [vmem:[#allocation2 + $0x68] sm:$0xff]
      %v7387 = vld [vmem:[#allocation2 + $0x70] sm:$0xff]
      %v7388 = vld [vmem:[#allocation2 + $0x78] sm:$0xff]
      %v7389 = vld [vmem:[#allocation2 + $0x80] sm:$0xff]
      %v7390 = vld [vmem:[#allocation2 + $0x88] sm:$0xff]
      %v7391 = vld [vmem:[#allocation2 + $0x90] sm:$0xff]
      %v7392 = vld [vmem:[#allocation2 + $0x98] sm:$0xff]
      %v7393 = vld [vmem:[#allocation2 + $0xa0] sm:$0xff]
      %v7394 = vld [vmem:[#allocation2 + $0xa8] sm:$0xff]
      %v7395 = vld [vmem:[#allocation2 + $0xb0] sm:$0xff]
      %v7396 = vld [vmem:[#allocation2 + $0xb8] sm:$0xff]
      %7421 = vrot.lane.b32.xlu0 %v7373, 62
      %v7422 = vpop.permute.xlu0 %7421
      %7423 = vrot.lane.b32.xlu0 %v7374, 62
      %v7424 = vpop.permute.xlu0 %7423
      %7425 = vrot.lane.b32.xlu0 %v7375, 62
      %v7426 = vpop.permute.xlu0 %7425
      %7427 = vrot.lane.b32.xlu0 %v7376, 62
      %v7428 = vpop.permute.xlu0 %7427
      %7429 = vrot.lane.b32.xlu0 %v7377, 62
      %v7430 = vpop.permute.xlu0 %7429
      %7431 = vrot.lane.b32.xlu0 %v7378, 62
      %v7432 = vpop.permute.xlu0 %7431
      %7433 = vrot.lane.b32.xlu0 %v7379, 62
      %v7434 = vpop.permute.xlu0 %7433
      %7435 = vrot.lane.b32.xlu0 %v7380, 62
      %v7436 = vpop.permute.xlu0 %7435
      %7437 = vrot.lane.b32.xlu0 %v7381, 62
      %v7438 = vpop.permute.xlu0 %7437
      %7439 = vrot.lane.b32.xlu0 %v7382, 62
      %v7440 = vpop.permute.xlu0 %7439
      %7441 = vrot.lane.b32.xlu0 %v7383, 62
      %v7442 = vpop.permute.xlu0 %7441
      %7443 = vrot.lane.b32.xlu0 %v7384, 62
      %v7444 = vpop.permute.xlu0 %7443
      %7445 = vrot.lane.b32.xlu0 %v7385, 62
      %v7446 = vpop.permute.xlu0 %7445
      %7447 = vrot.lane.b32.xlu0 %v7386, 62
      %v7448 = vpop.permute.xlu0 %7447
      %7449 = vrot.lane.b32.xlu0 %v7387, 62
      %v7450 = vpop.permute.xlu0 %7449
      %7451 = vrot.lane.b32.xlu0 %v7388, 62
      %v7452 = vpop.permute.xlu0 %7451
      %7453 = vrot.lane.b32.xlu0 %v7389, 62
      %v7454 = vpop.permute.xlu0 %7453
      %7455 = vrot.lane.b32.xlu0 %v7390, 62
      %v7456 = vpop.permute.xlu0 %7455
      %7457 = vrot.lane.b32.xlu0 %v7391, 62
      %v7458 = vpop.permute.xlu0 %7457
      %7459 = vrot.lane.b32.xlu0 %v7392, 62
      %v7460 = vpop.permute.xlu0 %7459
      %7461 = vrot.lane.b32.xlu0 %v7393, 62
      %v7462 = vpop.permute.xlu0 %7461
      %7463 = vrot.lane.b32.xlu0 %v7394, 62
      %v7464 = vpop.permute.xlu0 %7463
      %7465 = vrot.lane.b32.xlu0 %v7395, 62
      %v7466 = vpop.permute.xlu0 %7465
      %7467 = vrot.lane.b32.xlu0 %v7396, 62
      %v7468 = vpop.permute.xlu0 %7467
      %v7469 = vsel %vm864, %v7422, %v7424
      %v7470 = vsel %vm864, %v7424, %v7426
      %v7471 = vsel %vm864, %v7426, %v7428
      %v7472 = vsel %vm864, %v7428, %v7430
      %v7473 = vsel %vm864, %v7430, %v7432
      %v7474 = vsel %vm864, %v7434, %v7436
      %v7475 = vsel %vm864, %v7436, %v7438
      %v7476 = vsel %vm864, %v7438, %v7440
      %v7477 = vsel %vm864, %v7440, %v7442
      %v7478 = vsel %vm864, %v7442, %v7444
      %v7479 = vsel %vm864, %v7446, %v7448
      %v7480 = vsel %vm864, %v7448, %v7450
      %v7481 = vsel %vm864, %v7450, %v7452
      %v7482 = vsel %vm864, %v7452, %v7454
      %v7483 = vsel %vm864, %v7454, %v7456
      %v7484 = vsel %vm864, %v7458, %v7460
      %v7485 = vsel %vm864, %v7460, %v7462
      %v7486 = vsel %vm864, %v7462, %v7464
      %v7487 = vsel %vm864, %v7464, %v7466
      %v7488 = vsel %vm864, %v7466, %v7468
      %7509 = vst [vmem:[#allocation4 + $0x500] sm:$0xff] %v7469
      %7510 = vst [vmem:[#allocation4 + $0x508] sm:$0xff] %v7470
      %7511 = vst [vmem:[#allocation4 + $0x510] sm:$0xff] %v7471
      %7512 = vst [vmem:[#allocation4 + $0x518] sm:$0xff] %v7472
      %7513 = vst.msk [vmem:[#allocation4 + $0x520] sm:$0xff] %vm203, %v7473
      %7514 = vst [vmem:[#allocation4 + $0x528] sm:$0xff] %v7474
      %7515 = vst [vmem:[#allocation4 + $0x530] sm:$0xff] %v7475
      %7516 = vst [vmem:[#allocation4 + $0x538] sm:$0xff] %v7476
      %7517 = vst [vmem:[#allocation4 + $0x540] sm:$0xff] %v7477
      %7518 = vst.msk [vmem:[#allocation4 + $0x548] sm:$0xff] %vm203, %v7478
      %7519 = vst [vmem:[#allocation4 + $0x550] sm:$0xff] %v7479
      %7520 = vst [vmem:[#allocation4 + $0x558] sm:$0xff] %v7480
      %7521 = vst [vmem:[#allocation4 + $0x560] sm:$0xff] %v7481
      %7522 = vst [vmem:[#allocation4 + $0x568] sm:$0xff] %v7482
      %7523 = vst.msk [vmem:[#allocation4 + $0x570] sm:$0xff] %vm203, %v7483
      %7524 = vst [vmem:[#allocation4 + $0x578] sm:$0xff] %v7484
      %7525 = vst [vmem:[#allocation4 + $0x580] sm:$0xff] %v7485
      %7526 = vst [vmem:[#allocation4 + $0x588] sm:$0xff] %v7486
      %7527 = vst [vmem:[#allocation4 + $0x590] sm:$0xff] %v7487
      %7528 = vst.msk [vmem:[#allocation4 + $0x598] sm:$0xff] %vm203, %v7488
      %s7529 = scalar_lea.vmem %s1, 384
      %v7530 = vld [vmem:[%s7529] sm:$0xff]
      %v7531 = vld [vmem:[%s7529 + $0x8] sm:$0xff]
      %v7532 = vld [vmem:[%s7529 + $0x10] sm:$0xff]
      %v7533 = vld [vmem:[%s7529 + $0x18] sm:$0xff]
      %v7534 = vld [vmem:[%s7529 + $0x20] sm:$0xff]
      %v7535 = vld [vmem:[%s7529 + $0x28] sm:$0xff]
      %v7536 = vld [vmem:[%s7529 + $0x30] sm:$0xff]
      %v7537 = vld [vmem:[%s7529 + $0x38] sm:$0xff]
      %v7538 = vld [vmem:[%s7529 + $0x40] sm:$0xff]
      %v7539 = vld [vmem:[%s7529 + $0x48] sm:$0xff]
      %v7540 = vld [vmem:[%s7529 + $0x50] sm:$0xff]
      %v7541 = vld [vmem:[%s7529 + $0x58] sm:$0xff]
      %v7542 = vld [vmem:[#allocation4] sm:$0xff]
      %v7543 = vld [vmem:[#allocation4 + $0x8] sm:$0xff]
      %v7544 = vld [vmem:[#allocation4 + $0x10] sm:$0xff]
      %v7545 = vld [vmem:[#allocation4 + $0x18] sm:$0xff]
      %v7546 = vld [vmem:[#allocation4 + $0x20] sm:$0xff]
      %v7547 = vld [vmem:[#allocation4 + $0x28] sm:$0xff]
      %v7548 = vld [vmem:[#allocation4 + $0x30] sm:$0xff]
      %v7549 = vld [vmem:[#allocation4 + $0x38] sm:$0xff]
      %v7550 = vld [vmem:[#allocation4 + $0x40] sm:$0xff]
      %v7551 = vld [vmem:[#allocation4 + $0x48] sm:$0xff]
      %v7552 = vld [vmem:[#allocation4 + $0x50] sm:$0xff]
      %v7553 = vld [vmem:[#allocation4 + $0x58] sm:$0xff]
      %v7554 = vld [vmem:[#allocation4 + $0x60] sm:$0xff]
      %v7555 = vld [vmem:[#allocation4 + $0x68] sm:$0xff]
      %v7556 = vld [vmem:[#allocation4 + $0x70] sm:$0xff]
      %v7557 = vld [vmem:[#allocation4 + $0x78] sm:$0xff]
      %v7558 = vld [vmem:[#allocation4 + $0x80] sm:$0xff]
      %v7559 = vld [vmem:[#allocation4 + $0x88] sm:$0xff]
      %v7560 = vld [vmem:[#allocation4 + $0x90] sm:$0xff]
      %v7561 = vld [vmem:[#allocation4 + $0x98] sm:$0xff]
      %v7562 = vld [vmem:[#allocation4 + $0xa0] sm:$0xff]
      %v7563 = vld [vmem:[#allocation4 + $0xa8] sm:$0xff]
      %v7564 = vld [vmem:[#allocation4 + $0xb0] sm:$0xff]
      %v7565 = vld [vmem:[#allocation4 + $0xb8] sm:$0xff]
      %v7566 = vld [vmem:[#allocation4 + $0xc0] sm:$0xff]
      %v7567 = vld [vmem:[#allocation4 + $0xc8] sm:$0xff]
      %v7568 = vld [vmem:[#allocation4 + $0xd0] sm:$0xff]
      %v7569 = vld [vmem:[#allocation4 + $0xd8] sm:$0xff]
      %v7570 = vld [vmem:[#allocation4 + $0xe0] sm:$0xff]
      %v7571 = vld [vmem:[#allocation4 + $0xe8] sm:$0xff]
      %v7572 = vld [vmem:[#allocation4 + $0xf0] sm:$0xff]
      %v7573 = vld [vmem:[#allocation4 + $0xf8] sm:$0xff]
      %v7574 = vld [vmem:[#allocation4 + $0x100] sm:$0xff]
      %v7575 = vld [vmem:[#allocation4 + $0x108] sm:$0xff]
      %v7576 = vld [vmem:[#allocation4 + $0x110] sm:$0xff]
      %v7577 = vld [vmem:[#allocation4 + $0x118] sm:$0xff]
      %v7578 = vld [vmem:[#allocation4 + $0x120] sm:$0xff]
      %v7579 = vld [vmem:[#allocation4 + $0x128] sm:$0xff]
      %v7580 = vld [vmem:[#allocation4 + $0x130] sm:$0xff]
      %v7581 = vld [vmem:[#allocation4 + $0x138] sm:$0xff]
      %v7582 = vld [vmem:[#allocation4 + $0x140] sm:$0xff]
      %v7583 = vld [vmem:[#allocation4 + $0x148] sm:$0xff]
      %v7584 = vld [vmem:[#allocation4 + $0x150] sm:$0xff]
      %v7585 = vld [vmem:[#allocation4 + $0x158] sm:$0xff]
      %v7586 = vld [vmem:[#allocation4 + $0x160] sm:$0xff]
      %v7587 = vld [vmem:[#allocation4 + $0x168] sm:$0xff]
      %v7588 = vld [vmem:[#allocation4 + $0x170] sm:$0xff]
      %v7589 = vld [vmem:[#allocation4 + $0x178] sm:$0xff]
      %v7590 = vld [vmem:[#allocation4 + $0x180] sm:$0xff]
      %v7591 = vld [vmem:[#allocation4 + $0x188] sm:$0xff]
      %v7592 = vld [vmem:[#allocation4 + $0x190] sm:$0xff]
      %v7593 = vld [vmem:[#allocation4 + $0x198] sm:$0xff]
      %v7594 = vld [vmem:[#allocation4 + $0x1a0] sm:$0xff]
      %v7595 = vld [vmem:[#allocation4 + $0x1a8] sm:$0xff]
      %v7596 = vld [vmem:[#allocation4 + $0x1b0] sm:$0xff]
      %v7597 = vld [vmem:[#allocation4 + $0x1b8] sm:$0xff]
      %v7598 = vld [vmem:[#allocation4 + $0x1c0] sm:$0xff]
      %v7599 = vld [vmem:[#allocation4 + $0x1c8] sm:$0xff]
      %v7600 = vld [vmem:[#allocation4 + $0x1d0] sm:$0xff]
      %v7601 = vld [vmem:[#allocation4 + $0x1d8] sm:$0xff]
      %v7602 = vld [vmem:[#allocation4 + $0x1e0] sm:$0xff]
      %v7603 = vld [vmem:[#allocation4 + $0x1e8] sm:$0xff]
      %v7604 = vld [vmem:[#allocation4 + $0x1f0] sm:$0xff]
      %v7605 = vld [vmem:[#allocation4 + $0x1f8] sm:$0xff]
      %v7606 = vld [vmem:[#allocation4 + $0x200] sm:$0xff]
      %v7607 = vld [vmem:[#allocation4 + $0x208] sm:$0xff]
      %v7608 = vld [vmem:[#allocation4 + $0x210] sm:$0xff]
      %v7609 = vld [vmem:[#allocation4 + $0x218] sm:$0xff]
      %v7610 = vld [vmem:[#allocation4 + $0x220] sm:$0xff]
      %v7611 = vld [vmem:[#allocation4 + $0x228] sm:$0xff]
      %v7612 = vld [vmem:[#allocation4 + $0x230] sm:$0xff]
      %v7613 = vld [vmem:[#allocation4 + $0x238] sm:$0xff]
      %v7614 = vld [vmem:[#allocation4 + $0x240] sm:$0xff]
      %v7615 = vld [vmem:[#allocation4 + $0x248] sm:$0xff]
      %v7616 = vld [vmem:[#allocation4 + $0x250] sm:$0xff]
      %v7617 = vld [vmem:[#allocation4 + $0x258] sm:$0xff]
      %v7618 = vld [vmem:[#allocation4 + $0x260] sm:$0xff]
      %v7619 = vld [vmem:[#allocation4 + $0x268] sm:$0xff]
      %v7620 = vld [vmem:[#allocation4 + $0x270] sm:$0xff]
      %v7621 = vld [vmem:[#allocation4 + $0x278] sm:$0xff]
      %v7622 = vld [vmem:[#allocation4 + $0x280] sm:$0xff]
      %v7623 = vld [vmem:[#allocation4 + $0x288] sm:$0xff]
      %v7624 = vld [vmem:[#allocation4 + $0x290] sm:$0xff]
      %v7625 = vld [vmem:[#allocation4 + $0x298] sm:$0xff]
      %v7626 = vld [vmem:[#allocation4 + $0x2a0] sm:$0xff]
      %v7627 = vld [vmem:[#allocation4 + $0x2a8] sm:$0xff]
      %v7628 = vld [vmem:[#allocation4 + $0x2b0] sm:$0xff]
      %v7629 = vld [vmem:[#allocation4 + $0x2b8] sm:$0xff]
      %v7630 = vld [vmem:[#allocation4 + $0x2c0] sm:$0xff]
      %v7631 = vld [vmem:[#allocation4 + $0x2c8] sm:$0xff]
      %v7632 = vld [vmem:[#allocation4 + $0x2d0] sm:$0xff]
      %v7633 = vld [vmem:[#allocation4 + $0x2d8] sm:$0xff]
      %v7634 = vld [vmem:[#allocation4 + $0x2e0] sm:$0xff]
      %v7635 = vld [vmem:[#allocation4 + $0x2e8] sm:$0xff]
      %v7636 = vld [vmem:[#allocation4 + $0x2f0] sm:$0xff]
      %v7637 = vld [vmem:[#allocation4 + $0x2f8] sm:$0xff]
      %v7638 = vld [vmem:[#allocation4 + $0x300] sm:$0xff]
      %v7639 = vld [vmem:[#allocation4 + $0x308] sm:$0xff]
      %v7640 = vld [vmem:[#allocation4 + $0x310] sm:$0xff]
      %v7641 = vld [vmem:[#allocation4 + $0x318] sm:$0xff]
      %v7642 = vld [vmem:[#allocation4 + $0x320] sm:$0xff]
      %v7643 = vld [vmem:[#allocation4 + $0x328] sm:$0xff]
      %v7644 = vld [vmem:[#allocation4 + $0x330] sm:$0xff]
      %v7645 = vld [vmem:[#allocation4 + $0x338] sm:$0xff]
      %v7646 = vld [vmem:[#allocation4 + $0x340] sm:$0xff]
      %v7647 = vld [vmem:[#allocation4 + $0x348] sm:$0xff]
      %v7648 = vld [vmem:[#allocation4 + $0x350] sm:$0xff]
      %v7649 = vld [vmem:[#allocation4 + $0x358] sm:$0xff]
      %v7650 = vld [vmem:[#allocation4 + $0x360] sm:$0xff]
      %v7651 = vld [vmem:[#allocation4 + $0x368] sm:$0xff]
      %v7652 = vld [vmem:[#allocation4 + $0x370] sm:$0xff]
      %v7653 = vld [vmem:[#allocation4 + $0x378] sm:$0xff]
      %v7654 = vld [vmem:[#allocation4 + $0x380] sm:$0xff]
      %v7655 = vld [vmem:[#allocation4 + $0x388] sm:$0xff]
      %v7656 = vld [vmem:[#allocation4 + $0x390] sm:$0xff]
      %v7657 = vld [vmem:[#allocation4 + $0x398] sm:$0xff]
      %v7658 = vld [vmem:[#allocation4 + $0x3a0] sm:$0xff]
      %v7659 = vld [vmem:[#allocation4 + $0x3a8] sm:$0xff]
      %v7660 = vld [vmem:[#allocation4 + $0x3b0] sm:$0xff]
      %v7661 = vld [vmem:[#allocation4 + $0x3b8] sm:$0xff]
      %v7662 = vld [vmem:[#allocation4 + $0x3c0] sm:$0xff]
      %v7663 = vld [vmem:[#allocation4 + $0x3c8] sm:$0xff]
      %v7664 = vld [vmem:[#allocation4 + $0x3d0] sm:$0xff]
      %v7665 = vld [vmem:[#allocation4 + $0x3d8] sm:$0xff]
      %v7666 = vld [vmem:[#allocation4 + $0x3e0] sm:$0xff]
      %v7667 = vld [vmem:[#allocation4 + $0x3e8] sm:$0xff]
      %v7668 = vld [vmem:[#allocation4 + $0x3f0] sm:$0xff]
      %v7669 = vld [vmem:[#allocation4 + $0x3f8] sm:$0xff]
      %v7670 = vld [vmem:[#allocation4 + $0x400] sm:$0xff]
      %v7671 = vld [vmem:[#allocation4 + $0x408] sm:$0xff]
      %v7672 = vld [vmem:[#allocation4 + $0x410] sm:$0xff]
      %v7673 = vld [vmem:[#allocation4 + $0x418] sm:$0xff]
      %v7674 = vld [vmem:[#allocation4 + $0x420] sm:$0xff]
      %v7675 = vld [vmem:[#allocation4 + $0x428] sm:$0xff]
      %v7676 = vld [vmem:[#allocation4 + $0x430] sm:$0xff]
      %v7677 = vld [vmem:[#allocation4 + $0x438] sm:$0xff]
      %v7678 = vld [vmem:[#allocation4 + $0x440] sm:$0xff]
      %v7679 = vld [vmem:[#allocation4 + $0x448] sm:$0xff]
      %v7680 = vld [vmem:[#allocation4 + $0x450] sm:$0xff]
      %v7681 = vld [vmem:[#allocation4 + $0x458] sm:$0xff]
      %v7682 = vld [vmem:[#allocation4 + $0x460] sm:$0xff]
      %v7683 = vld [vmem:[#allocation4 + $0x468] sm:$0xff]
      %v7684 = vld [vmem:[#allocation4 + $0x470] sm:$0xff]
      %v7685 = vld [vmem:[#allocation4 + $0x478] sm:$0xff]
      %v7686 = vld [vmem:[#allocation4 + $0x480] sm:$0xff]
      %v7687 = vld [vmem:[#allocation4 + $0x488] sm:$0xff]
      %v7688 = vld [vmem:[#allocation4 + $0x490] sm:$0xff]
      %v7689 = vld [vmem:[#allocation4 + $0x498] sm:$0xff]
      %v7690 = vld [vmem:[#allocation4 + $0x4a0] sm:$0xff]
      %v7691 = vld [vmem:[#allocation4 + $0x4a8] sm:$0xff]
      %v7692 = vld [vmem:[#allocation4 + $0x4b0] sm:$0xff]
      %v7693 = vld [vmem:[#allocation4 + $0x4b8] sm:$0xff]
      %v7694 = vld [vmem:[#allocation4 + $0x4c0] sm:$0xff]
      %v7695 = vld [vmem:[#allocation4 + $0x4c8] sm:$0xff]
      %v7696 = vld [vmem:[#allocation4 + $0x4d0] sm:$0xff]
      %v7697 = vld [vmem:[#allocation4 + $0x4d8] sm:$0xff]
      %v7698 = vld [vmem:[#allocation4 + $0x4e0] sm:$0xff]
      %v7699 = vld [vmem:[#allocation4 + $0x4e8] sm:$0xff]
      %v7700 = vld [vmem:[#allocation4 + $0x4f0] sm:$0xff]
      %v7701 = vld [vmem:[#allocation4 + $0x4f8] sm:$0xff]
      %v7702 = vld [vmem:[#allocation4 + $0x500] sm:$0xff]
      %v7703 = vld [vmem:[#allocation4 + $0x508] sm:$0xff]
      %v7704 = vld [vmem:[#allocation4 + $0x510] sm:$0xff]
      %v7705 = vld [vmem:[#allocation4 + $0x518] sm:$0xff]
      %v7706 = vld [vmem:[#allocation4 + $0x520] sm:$0xff]
      %v7707 = vld [vmem:[#allocation4 + $0x528] sm:$0xff]
      %v7708 = vld [vmem:[#allocation4 + $0x530] sm:$0xff]
      %v7709 = vld [vmem:[#allocation4 + $0x538] sm:$0xff]
      %v7710 = vld [vmem:[#allocation4 + $0x540] sm:$0xff]
      %v7711 = vld [vmem:[#allocation4 + $0x548] sm:$0xff]
      %v7712 = vld [vmem:[#allocation4 + $0x550] sm:$0xff]
      %v7713 = vld [vmem:[#allocation4 + $0x558] sm:$0xff]
      %v7714 = vld [vmem:[#allocation4 + $0x560] sm:$0xff]
      %v7715 = vld [vmem:[#allocation4 + $0x568] sm:$0xff]
      %v7716 = vld [vmem:[#allocation4 + $0x570] sm:$0xff]
      %v7717 = vld [vmem:[#allocation4 + $0x578] sm:$0xff]
      %v7718 = vld [vmem:[#allocation4 + $0x580] sm:$0xff]
      %v7719 = vld [vmem:[#allocation4 + $0x588] sm:$0xff]
      %v7720 = vld [vmem:[#allocation4 + $0x590] sm:$0xff]
      %v7721 = vld [vmem:[#allocation4 + $0x598] sm:$0xff]
      %s7722 = scalar_lea.vmem %s2, 128
      %v7723 = vld [vmem:[%s7722] sm:$0xff]
      %v7724 = vld [vmem:[%s7722 + $0x8] sm:$0xff]
      %v7725 = vld [vmem:[%s7722 + $0x10] sm:$0xff]
      %v7726 = vld [vmem:[%s7722 + $0x18] sm:$0xff]
      %7728 = vset.pattern.permute.xlu0 0
      %7729 = vperm.xlu0 %7728, %v7723
      %v7730 = vpop.permute.xlu0 %7729
      %7733 = vset.pattern.permute.xlu0 0
      %7734 = vperm.xlu0 %7733, %v7724
      %v7735 = vpop.permute.xlu0 %7734
      %7738 = vset.pattern.permute.xlu0 0
      %7739 = vperm.xlu0 %7738, %v7725
      %v7740 = vpop.permute.xlu0 %7739
      %7743 = vset.pattern.permute.xlu0 0
      %7744 = vperm.xlu0 %7743, %v7726
      %v7745 = vpop.permute.xlu0 %7744
      %v7748 = vsel %vm1045, %v7532, 0
      %v7751 = vsel %vm1045, %v7535, 0
      %v7754 = vsel %vm1045, %v7538, 0
      %v7757 = vsel %vm1045, %v7541, 0
      %7759 = vmatprep.subr.mxu0 %v7543
      %7760 = vmatpush1.msra.mxu0 %v7542
      %7761 = vmatprep.subr.mxu0 %v7548
      %7762 = vmatpush1.msra.mxu0 %v7547
      %7763 = vmatprep.subr.mxu0 %v7553
      %7764 = vmatpush1.msra.mxu0 %v7552
      %7765 = vmatprep.subr.mxu0 %v7558
      %7766 = vmatpush1.msra.mxu0 %v7557
      %7767 = vmatprep.subr.mxu0 %v7563
      %7768 = vmatpush1.msra.mxu0 %v7562
      %7769 = vmatprep.subr.mxu0 %v7568
      %7770 = vmatpush1.msra.mxu0 %v7567
      %7771 = vmatprep.subr.mxu0 %v7573
      %7772 = vmatpush1.msra.mxu0 %v7572
      %7773 = vmatprep.subr.mxu0 %v7578
      %7774 = vmatpush1.msra.mxu0 %v7577
      %7775 = vmatprep.subr.mxu0 %v7583
      %7776 = vmatpush1.msra.mxu0 %v7582
      %7777 = vmatprep.subr.mxu0 %v7588
      %7778 = vmatpush1.msra.mxu0 %v7587
      %7779 = vmatprep.subr.mxu0 %v7593
      %7780 = vmatpush1.msra.mxu0 %v7592
      %7781 = vmatprep.subr.mxu0 %v7598
      %7782 = vmatpush1.msra.mxu0 %v7597
      %7783 = vmatprep.subr.mxu0 %v7603
      %7784 = vmatpush1.msra.mxu0 %v7602
      %7785 = vmatprep.subr.mxu0 %v7608
      %7786 = vmatpush1.msra.mxu0 %v7607
      %7787 = vmatprep.subr.mxu0 %v7613
      %7788 = vmatpush1.msra.mxu0 %v7612
      %7789 = vmatprep.subr.mxu0 %v7618
      %7790 = vmatpush1.msra.mxu0 %v7617
      %7791 = vmatprep.subr.mxu0 %v7623
      %7792 = vmatpush1.msra.mxu0 %v7622
      %7793 = vmatprep.subr.mxu0 %v7628
      %7794 = vmatpush1.msra.mxu0 %v7627
      %7795 = vmatprep.subr.mxu0 %v7633
      %7796 = vmatpush1.msra.mxu0 %v7632
      %7797 = vmatprep.subr.mxu0 %v7638
      %7798 = vmatpush1.msra.mxu0 %v7637
      %7799 = vmatprep.subr.mxu0 %v7643
      %7800 = vmatpush1.msra.mxu0 %v7642
      %7801 = vmatprep.subr.mxu0 %v7648
      %7802 = vmatpush1.msra.mxu0 %v7647
      %7803 = vmatprep.subr.mxu0 %v7653
      %7804 = vmatpush1.msra.mxu0 %v7652
      %7805 = vmatprep.subr.mxu0 %v7658
      %7806 = vmatpush1.msra.mxu0 %v7657
      %7807 = vmatprep.subr.mxu0 %v7663
      %7808 = vmatpush1.msra.mxu0 %v7662
      %7809 = vmatprep.subr.mxu0 %v7668
      %7810 = vmatpush1.msra.mxu0 %v7667
      %7811 = vmatprep.subr.mxu0 %v7673
      %7812 = vmatpush1.msra.mxu0 %v7672
      %7813 = vmatprep.subr.mxu0 %v7678
      %7814 = vmatpush1.msra.mxu0 %v7677
      %7815 = vmatprep.subr.mxu0 %v7683
      %7816 = vmatpush1.msra.mxu0 %v7682
      %7817 = vmatprep.subr.mxu0 %v7688
      %7818 = vmatpush1.msra.mxu0 %v7687
      %7819 = vmatprep.subr.mxu0 %v7693
      %7820 = vmatpush1.msra.mxu0 %v7692
      %7821 = vmatprep.subr.mxu0 %v7698
      %7822 = vmatpush1.msra.mxu0 %v7697
      %7823 = vmatprep.mubr.f32.mxu0 %v7531
      %7824 = vmatmul.mubr.f32.gmra.mrb[0].mxu0 %v7530
      %v7825 = vpop.f32.mrb[0].mxu0
      %v7826 = vadd.f32 %v7730, %v7825
      %v7827 = vpop.f32.mrb[0].mxu0
      %v7828 = vadd.f32 %v7730, %v7827
      %7829 = vmatprep.mubr.f32.mxu0 %v7534
      %7830 = vmatmul.mubr.f32.gmra.mrb[0].mxu0 %v7533
      %v7831 = vpop.f32.mrb[0].mxu0
      %v7832 = vadd.f32 %v7735, %v7831
      %v7833 = vpop.f32.mrb[0].mxu0
      %v7834 = vadd.f32 %v7735, %v7833
      %7835 = vmatprep.mubr.f32.mxu0 %v7537
      %7836 = vmatmul.mubr.f32.gmra.mrb[0].mxu0 %v7536
      %v7837 = vpop.f32.mrb[0].mxu0
      %v7838 = vadd.f32 %v7740, %v7837
      %v7839 = vpop.f32.mrb[0].mxu0
      %v7840 = vadd.f32 %v7740, %v7839
      %7841 = vmatprep.mubr.f32.mxu0 %v7540
      %7842 = vmatmul.mubr.f32.gmra.mrb[0].mxu0 %v7539
      %v7843 = vpop.f32.mrb[0].mxu0
      %v7844 = vadd.f32 %v7745, %v7843
      %v7845 = vpop.f32.mrb[0].mxu0
      %v7846 = vadd.f32 %v7745, %v7845
      %7847 = vdwg.mxu0
      %7848 = vmatprep.subr.mxu0 %v7703
      %7849 = vmatpush1.msra.mxu0 %v7702
      %7850 = vmatprep.subr.mxu0 %v7708
      %7851 = vmatpush1.msra.mxu0 %v7707
      %7852 = vmatprep.subr.mxu0 %v7713
      %7853 = vmatpush1.msra.mxu0 %v7712
      %7854 = vmatprep.subr.mxu0 %v7718
      %7855 = vmatpush1.msra.mxu0 %v7717
      %7856 = vmatprep.subr.mxu0 0.0
      %7857 = vmatpush1.msra.mxu0 0.0
      %7858 = vmatprep.subr.mxu0 0.0
      %7859 = vmatpush1.msra.mxu0 0.0
      %7860 = vmatprep.subr.mxu0 0.0
      %7861 = vmatpush1.msra.mxu0 0.0
      %7862 = vmatprep.subr.mxu0 0.0
      %7863 = vmatpush1.msra.mxu0 0.0
      %7864 = vmatprep.subr.mxu0 0.0
      %7865 = vmatpush1.msra.mxu0 0.0
      %7866 = vmatprep.subr.mxu0 0.0
      %7867 = vmatpush1.msra.mxu0 0.0
      %7868 = vmatprep.subr.mxu0 0.0
      %7869 = vmatpush1.msra.mxu0 0.0
      %7870 = vmatprep.subr.mxu0 0.0
      %7871 = vmatpush1.msra.mxu0 0.0
      %7872 = vmatprep.subr.mxu0 0.0
      %7873 = vmatpush1.msra.mxu0 0.0
      %7874 = vmatprep.subr.mxu0 0.0
      %7875 = vmatpush1.msra.mxu0 0.0
      %7876 = vmatprep.subr.mxu0 0.0
      %7877 = vmatpush1.msra.mxu0 0.0
      %7878 = vmatprep.subr.mxu0 0.0
      %7879 = vmatpush1.msra.mxu0 0.0
      %7880 = vmatprep.subr.mxu0 0.0
      %7881 = vmatpush1.msra.mxu0 0.0
      %7882 = vmatprep.subr.mxu0 0.0
      %7883 = vmatpush1.msra.mxu0 0.0
      %7884 = vmatprep.subr.mxu0 0.0
      %7885 = vmatpush1.msra.mxu0 0.0
      %7886 = vmatprep.subr.mxu0 0.0
      %7887 = vmatpush1.msra.mxu0 0.0
      %7888 = vmatprep.subr.mxu0 0.0
      %7889 = vmatpush1.msra.mxu0 0.0
      %7890 = vmatprep.subr.mxu0 0.0
      %7891 = vmatpush1.msra.mxu0 0.0
      %7892 = vmatprep.subr.mxu0 0.0
      %7893 = vmatpush1.msra.mxu0 0.0
      %7894 = vmatprep.subr.mxu0 0.0
      %7895 = vmatpush1.msra.mxu0 0.0
      %7896 = vmatprep.subr.mxu0 0.0
      %7897 = vmatpush1.msra.mxu0 0.0
      %7898 = vmatprep.subr.mxu0 0.0
      %7899 = vmatpush1.msra.mxu0 0.0
      %7900 = vmatprep.subr.mxu0 0.0
      %7901 = vmatpush1.msra.mxu0 0.0
      %7902 = vmatprep.subr.mxu0 0.0
      %7903 = vmatpush1.msra.mxu0 0.0
      %7904 = vmatprep.subr.mxu0 0.0
      %7905 = vmatpush1.msra.mxu0 0.0
      %7906 = vmatprep.subr.mxu0 0.0
      %7907 = vmatpush1.msra.mxu0 0.0
      %7908 = vmatprep.subr.mxu0 0.0
      %7909 = vmatpush1.msra.mxu0 0.0
      %7910 = vmatprep.subr.mxu0 0.0
      %7911 = vmatpush1.msra.mxu0 0.0
      %7912 = vmatprep.mubr.f32.mxu0 0.0
      %7913 = vmatmul.mubr.f32.gmra.mrb[0].mxu0 %v7748
      %v7914 = vpop.f32.mrb[0].mxu0
      %v7915 = vadd.f32 %v7826, %v7914
      %v7916 = vpop.f32.mrb[0].mxu0
      %v7917 = vadd.f32 %v7828, %v7916
      %7918 = vmatprep.mubr.f32.mxu0 0.0
      %7919 = vmatmul.mubr.f32.gmra.mrb[0].mxu0 %v7751
      %v7920 = vpop.f32.mrb[0].mxu0
      %v7921 = vadd.f32 %v7832, %v7920
      %v7922 = vpop.f32.mrb[0].mxu0
      %v7923 = vadd.f32 %v7834, %v7922
      %7924 = vmatprep.mubr.f32.mxu0 0.0
      %7925 = vmatmul.mubr.f32.gmra.mrb[0].mxu0 %v7754
      %v7926 = vpop.f32.mrb[0].mxu0
      %v7927 = vadd.f32 %v7838, %v7926
      %v7928 = vpop.f32.mrb[0].mxu0
      %v7929 = vadd.f32 %v7840, %v7928
      %7930 = vmatprep.mubr.f32.mxu0 0.0
      %7931 = vmatmul.mubr.f32.gmra.mrb[0].mxu0 %v7757
      %v7932 = vpop.f32.mrb[0].mxu0
      %v7933 = vadd.f32 %v7844, %v7932
      %v7934 = vpop.f32.mrb[0].mxu0
      %v7935 = vadd.f32 %v7846, %v7934
      %7936 = vdwg.mxu0
      %7937 = vmatprep.subr.mxu0 %v7545
      %7938 = vmatpush1.msra.mxu0 %v7544
      %7939 = vmatprep.subr.mxu0 %v7550
      %7940 = vmatpush1.msra.mxu0 %v7549
      %7941 = vmatprep.subr.mxu0 %v7555
      %7942 = vmatpush1.msra.mxu0 %v7554
      %7943 = vmatprep.subr.mxu0 %v7560
      %7944 = vmatpush1.msra.mxu0 %v7559
      %7945 = vmatprep.subr.mxu0 %v7565
      %7946 = vmatpush1.msra.mxu0 %v7564
      %7947 = vmatprep.subr.mxu0 %v7570
      %7948 = vmatpush1.msra.mxu0 %v7569
      %7949 = vmatprep.subr.mxu0 %v7575
      %7950 = vmatpush1.msra.mxu0 %v7574
      %7951 = vmatprep.subr.mxu0 %v7580
      %7952 = vmatpush1.msra.mxu0 %v7579
      %7953 = vmatprep.subr.mxu0 %v7585
      %7954 = vmatpush1.msra.mxu0 %v7584
      %7955 = vmatprep.subr.mxu0 %v7590
      %7956 = vmatpush1.msra.mxu0 %v7589
      %7957 = vmatprep.subr.mxu0 %v7595
      %7958 = vmatpush1.msra.mxu0 %v7594
      %7959 = vmatprep.subr.mxu0 %v7600
      %7960 = vmatpush1.msra.mxu0 %v7599
      %7961 = vmatprep.subr.mxu0 %v7605
      %7962 = vmatpush1.msra.mxu0 %v7604
      %7963 = vmatprep.subr.mxu0 %v7610
      %7964 = vmatpush1.msra.mxu0 %v7609
      %7965 = vmatprep.subr.mxu0 %v7615
      %7966 = vmatpush1.msra.mxu0 %v7614
      %7967 = vmatprep.subr.mxu0 %v7620
      %7968 = vmatpush1.msra.mxu0 %v7619
      %7969 = vmatprep.subr.mxu0 %v7625
      %7970 = vmatpush1.msra.mxu0 %v7624
      %7971 = vmatprep.subr.mxu0 %v7630
      %7972 = vmatpush1.msra.mxu0 %v7629
      %7973 = vmatprep.subr.mxu0 %v7635
      %7974 = vmatpush1.msra.mxu0 %v7634
      %7975 = vmatprep.subr.mxu0 %v7640
      %7976 = vmatpush1.msra.mxu0 %v7639
      %7977 = vmatprep.subr.mxu0 %v7645
      %7978 = vmatpush1.msra.mxu0 %v7644
      %7979 = vmatprep.subr.mxu0 %v7650
      %7980 = vmatpush1.msra.mxu0 %v7649
      %7981 = vmatprep.subr.mxu0 %v7655
      %7982 = vmatpush1.msra.mxu0 %v7654
      %7983 = vmatprep.subr.mxu0 %v7660
      %7984 = vmatpush1.msra.mxu0 %v7659
      %7985 = vmatprep.subr.mxu0 %v7665
      %7986 = vmatpush1.msra.mxu0 %v7664
      %7987 = vmatprep.subr.mxu0 %v7670
      %7988 = vmatpush1.msra.mxu0 %v7669
      %7989 = vmatprep.subr.mxu0 %v7675
      %7990 = vmatpush1.msra.mxu0 %v7674
      %7991 = vmatprep.subr.mxu0 %v7680
      %7992 = vmatpush1.msra.mxu0 %v7679
      %7993 = vmatprep.subr.mxu0 %v7685
      %7994 = vmatpush1.msra.mxu0 %v7684
      %7995 = vmatprep.subr.mxu0 %v7690
      %7996 = vmatpush1.msra.mxu0 %v7689
      %7997 = vmatprep.subr.mxu0 %v7695
      %7998 = vmatpush1.msra.mxu0 %v7694
      %7999 = vmatprep.subr.mxu0 %v7700
      %8000 = vmatpush1.msra.mxu0 %v7699
      %8001 = vmatprep.mubr.f32.mxu0 %v7531
      %8002 = vmatmul.mubr.f32.gmra.mrb[0].mxu0 %v7530
      %v8003 = vpop.f32.mrb[0].mxu0
      %v8004 = vadd.f32 %v7730, %v8003
      %v8005 = vpop.f32.mrb[0].mxu0
      %v8006 = vadd.f32 %v7730, %v8005
      %8007 = vmatprep.mubr.f32.mxu0 %v7534
      %8008 = vmatmul.mubr.f32.gmra.mrb[0].mxu0 %v7533
      %v8009 = vpop.f32.mrb[0].mxu0
      %v8010 = vadd.f32 %v7735, %v8009
      %v8011 = vpop.f32.mrb[0].mxu0
      %v8012 = vadd.f32 %v7735, %v8011
      %8013 = vmatprep.mubr.f32.mxu0 %v7537
      %8014 = vmatmul.mubr.f32.gmra.mrb[0].mxu0 %v7536
      %v8015 = vpop.f32.mrb[0].mxu0
      %v8016 = vadd.f32 %v7740, %v8015
      %v8017 = vpop.f32.mrb[0].mxu0
      %v8018 = vadd.f32 %v7740, %v8017
      %8019 = vmatprep.mubr.f32.mxu0 %v7540
      %8020 = vmatmul.mubr.f32.gmra.mrb[0].mxu0 %v7539
      %v8021 = vpop.f32.mrb[0].mxu0
      %v8022 = vadd.f32 %v7745, %v8021
      %v8023 = vpop.f32.mrb[0].mxu0
      %v8024 = vadd.f32 %v7745, %v8023
      %8025 = vdwg.mxu0
      %8026 = vmatprep.subr.mxu0 %v7705
      %8027 = vmatpush1.msra.mxu0 %v7704
      %8028 = vmatprep.subr.mxu0 %v7710
      %8029 = vmatpush1.msra.mxu0 %v7709
      %8030 = vmatprep.subr.mxu0 %v7715
      %8031 = vmatpush1.msra.mxu0 %v7714
      %8032 = vmatprep.subr.mxu0 %v7720
      %8033 = vmatpush1.msra.mxu0 %v7719
      %8034 = vmatprep.subr.mxu0 0.0
      %8035 = vmatpush1.msra.mxu0 0.0
      %8036 = vmatprep.subr.mxu0 0.0
      %8037 = vmatpush1.msra.mxu0 0.0
      %8038 = vmatprep.subr.mxu0 0.0
      %8039 = vmatpush1.msra.mxu0 0.0
      %8040 = vmatprep.subr.mxu0 0.0
      %8041 = vmatpush1.msra.mxu0 0.0
      %8042 = vmatprep.subr.mxu0 0.0
      %8043 = vmatpush1.msra.mxu0 0.0
      %8044 = vmatprep.subr.mxu0 0.0
      %8045 = vmatpush1.msra.mxu0 0.0
      %8046 = vmatprep.subr.mxu0 0.0
      %8047 = vmatpush1.msra.mxu0 0.0
      %8048 = vmatprep.subr.mxu0 0.0
      %8049 = vmatpush1.msra.mxu0 0.0
      %8050 = vmatprep.subr.mxu0 0.0
      %8051 = vmatpush1.msra.mxu0 0.0
      %8052 = vmatprep.subr.mxu0 0.0
      %8053 = vmatpush1.msra.mxu0 0.0
      %8054 = vmatprep.subr.mxu0 0.0
      %8055 = vmatpush1.msra.mxu0 0.0
      %8056 = vmatprep.subr.mxu0 0.0
      %8057 = vmatpush1.msra.mxu0 0.0
      %8058 = vmatprep.subr.mxu0 0.0
      %8059 = vmatpush1.msra.mxu0 0.0
      %8060 = vmatprep.subr.mxu0 0.0
      %8061 = vmatpush1.msra.mxu0 0.0
      %8062 = vmatprep.subr.mxu0 0.0
      %8063 = vmatpush1.msra.mxu0 0.0
      %8064 = vmatprep.subr.mxu0 0.0
      %8065 = vmatpush1.msra.mxu0 0.0
      %8066 = vmatprep.subr.mxu0 0.0
      %8067 = vmatpush1.msra.mxu0 0.0
      %8068 = vmatprep.subr.mxu0 0.0
      %8069 = vmatpush1.msra.mxu0 0.0
      %8070 = vmatprep.subr.mxu0 0.0
      %8071 = vmatpush1.msra.mxu0 0.0
      %8072 = vmatprep.subr.mxu0 0.0
      %8073 = vmatpush1.msra.mxu0 0.0
      %8074 = vmatprep.subr.mxu0 0.0
      %8075 = vmatpush1.msra.mxu0 0.0
      %8076 = vmatprep.subr.mxu0 0.0
      %8077 = vmatpush1.msra.mxu0 0.0
      %8078 = vmatprep.subr.mxu0 0.0
      %8079 = vmatpush1.msra.mxu0 0.0
      %8080 = vmatprep.subr.mxu0 0.0
      %8081 = vmatpush1.msra.mxu0 0.0
      %8082 = vmatprep.subr.mxu0 0.0
      %8083 = vmatpush1.msra.mxu0 0.0
      %8084 = vmatprep.subr.mxu0 0.0
      %8085 = vmatpush1.msra.mxu0 0.0
      %8086 = vmatprep.subr.mxu0 0.0
      %8087 = vmatpush1.msra.mxu0 0.0
      %8088 = vmatprep.subr.mxu0 0.0
      %8089 = vmatpush1.msra.mxu0 0.0
      %8090 = vmatprep.mubr.f32.mxu0 0.0
      %8091 = vmatmul.mubr.f32.gmra.mrb[0].mxu0 %v7748
      %v8092 = vpop.f32.mrb[0].mxu0
      %v8093 = vadd.f32 %v8004, %v8092
      %v8094 = vpop.f32.mrb[0].mxu0
      %v8095 = vadd.f32 %v8006, %v8094
      %8096 = vmatprep.mubr.f32.mxu0 0.0
      %8097 = vmatmul.mubr.f32.gmra.mrb[0].mxu0 %v7751
      %v8098 = vpop.f32.mrb[0].mxu0
      %v8099 = vadd.f32 %v8010, %v8098
      %v8100 = vpop.f32.mrb[0].mxu0
      %v8101 = vadd.f32 %v8012, %v8100
      %8102 = vmatprep.mubr.f32.mxu0 0.0
      %8103 = vmatmul.mubr.f32.gmra.mrb[0].mxu0 %v7754
      %v8104 = vpop.f32.mrb[0].mxu0
      %v8105 = vadd.f32 %v8016, %v8104
      %v8106 = vpop.f32.mrb[0].mxu0
      %v8107 = vadd.f32 %v8018, %v8106
      %8108 = vmatprep.mubr.f32.mxu0 0.0
      %8109 = vmatmul.mubr.f32.gmra.mrb[0].mxu0 %v7757
      %v8110 = vpop.f32.mrb[0].mxu0
      %v8111 = vadd.f32 %v8022, %v8110
      %v8112 = vpop.f32.mrb[0].mxu0
      %v8113 = vadd.f32 %v8024, %v8112
      %8114 = vdwg.mxu0
      %8115 = vmatprep.subr.mxu0 0.0
      %8116 = vmatpush1.msra.mxu0 %v7546
      %8117 = vmatprep.subr.mxu0 0.0
      %8118 = vmatpush1.msra.mxu0 %v7551
      %8119 = vmatprep.subr.mxu0 0.0
      %8120 = vmatpush1.msra.mxu0 %v7556
      %8121 = vmatprep.subr.mxu0 0.0
      %8122 = vmatpush1.msra.mxu0 %v7561
      %8123 = vmatprep.subr.mxu0 0.0
      %8124 = vmatpush1.msra.mxu0 %v7566
      %8125 = vmatprep.subr.mxu0 0.0
      %8126 = vmatpush1.msra.mxu0 %v7571
      %8127 = vmatprep.subr.mxu0 0.0
      %8128 = vmatpush1.msra.mxu0 %v7576
      %8129 = vmatprep.subr.mxu0 0.0
      %8130 = vmatpush1.msra.mxu0 %v7581
      %8131 = vmatprep.subr.mxu0 0.0
      %8132 = vmatpush1.msra.mxu0 %v7586
      %8133 = vmatprep.subr.mxu0 0.0
      %8134 = vmatpush1.msra.mxu0 %v7591
      %8135 = vmatprep.subr.mxu0 0.0
      %8136 = vmatpush1.msra.mxu0 %v7596
      %8137 = vmatprep.subr.mxu0 0.0
      %8138 = vmatpush1.msra.mxu0 %v7601
      %8139 = vmatprep.subr.mxu0 0.0
      %8140 = vmatpush1.msra.mxu0 %v7606
      %8141 = vmatprep.subr.mxu0 0.0
      %8142 = vmatpush1.msra.mxu0 %v7611
      %8143 = vmatprep.subr.mxu0 0.0
      %8144 = vmatpush1.msra.mxu0 %v7616
      %8145 = vmatprep.subr.mxu0 0.0
      %8146 = vmatpush1.msra.mxu0 %v7621
      %8147 = vmatprep.subr.mxu0 0.0
      %8148 = vmatpush1.msra.mxu0 %v7626
      %8149 = vmatprep.subr.mxu0 0.0
      %8150 = vmatpush1.msra.mxu0 %v7631
      %8151 = vmatprep.subr.mxu0 0.0
      %8152 = vmatpush1.msra.mxu0 %v7636
      %8153 = vmatprep.subr.mxu0 0.0
      %8154 = vmatpush1.msra.mxu0 %v7641
      %8155 = vmatprep.subr.mxu0 0.0
      %8156 = vmatpush1.msra.mxu0 %v7646
      %8157 = vmatprep.subr.mxu0 0.0
      %8158 = vmatpush1.msra.mxu0 %v7651
      %8159 = vmatprep.subr.mxu0 0.0
      %8160 = vmatpush1.msra.mxu0 %v7656
      %8161 = vmatprep.subr.mxu0 0.0
      %8162 = vmatpush1.msra.mxu0 %v7661
      %8163 = vmatprep.subr.mxu0 0.0
      %8164 = vmatpush1.msra.mxu0 %v7666
      %8165 = vmatprep.subr.mxu0 0.0
      %8166 = vmatpush1.msra.mxu0 %v7671
      %8167 = vmatprep.subr.mxu0 0.0
      %8168 = vmatpush1.msra.mxu0 %v7676
      %8169 = vmatprep.subr.mxu0 0.0
      %8170 = vmatpush1.msra.mxu0 %v7681
      %8171 = vmatprep.subr.mxu0 0.0
      %8172 = vmatpush1.msra.mxu0 %v7686
      %8173 = vmatprep.subr.mxu0 0.0
      %8174 = vmatpush1.msra.mxu0 %v7691
      %8175 = vmatprep.subr.mxu0 0.0
      %8176 = vmatpush1.msra.mxu0 %v7696
      %8177 = vmatprep.subr.mxu0 0.0
      %8178 = vmatpush1.msra.mxu0 %v7701
      %8179 = vmatprep.mubr.f32.mxu0 %v7531
      %8180 = vmatmul.mubr.f32.gmra.mrb[0].mxu0 %v7530
      %v8181 = vpop.f32.mrb[0].mxu0
      %v8182 = vadd.f32 %v7730, %v8181
      %v8183 = vpop.f32.mrb[0].mxu0
      %8184 = vmatprep.mubr.f32.mxu0 %v7534
      %8185 = vmatmul.mubr.f32.gmra.mrb[0].mxu0 %v7533
      %v8186 = vpop.f32.mrb[0].mxu0
      %v8187 = vadd.f32 %v7735, %v8186
      %v8188 = vpop.f32.mrb[0].mxu0
      %8189 = vmatprep.mubr.f32.mxu0 %v7537
      %8190 = vmatmul.mubr.f32.gmra.mrb[0].mxu0 %v7536
      %v8191 = vpop.f32.mrb[0].mxu0
      %v8192 = vadd.f32 %v7740, %v8191
      %v8193 = vpop.f32.mrb[0].mxu0
      %8194 = vmatprep.mubr.f32.mxu0 %v7540
      %8195 = vmatmul.mubr.f32.gmra.mrb[0].mxu0 %v7539
      %v8196 = vpop.f32.mrb[0].mxu0
      %v8197 = vadd.f32 %v7745, %v8196
      %v8198 = vpop.f32.mrb[0].mxu0
      %8199 = vdwg.mxu0
      %8200 = vmatprep.subr.mxu0 0.0
      %8201 = vmatpush1.msra.mxu0 %v7706
      %8202 = vmatprep.subr.mxu0 0.0
      %8203 = vmatpush1.msra.mxu0 %v7711
      %8204 = vmatprep.subr.mxu0 0.0
      %8205 = vmatpush1.msra.mxu0 %v7716
      %8206 = vmatprep.subr.mxu0 0.0
      %8207 = vmatpush1.msra.mxu0 %v7721
      %8208 = vmatprep.subr.mxu0 0.0
      %8209 = vmatpush1.msra.mxu0 0.0
      %8210 = vmatprep.subr.mxu0 0.0
      %8211 = vmatpush1.msra.mxu0 0.0
      %8212 = vmatprep.subr.mxu0 0.0
      %8213 = vmatpush1.msra.mxu0 0.0
      %8214 = vmatprep.subr.mxu0 0.0
      %8215 = vmatpush1.msra.mxu0 0.0
      %8216 = vmatprep.subr.mxu0 0.0
      %8217 = vmatpush1.msra.mxu0 0.0
      %8218 = vmatprep.subr.mxu0 0.0
      %8219 = vmatpush1.msra.mxu0 0.0
      %8220 = vmatprep.subr.mxu0 0.0
      %8221 = vmatpush1.msra.mxu0 0.0
      %8222 = vmatprep.subr.mxu0 0.0
      %8223 = vmatpush1.msra.mxu0 0.0
      %8224 = vmatprep.subr.mxu0 0.0
      %8225 = vmatpush1.msra.mxu0 0.0
      %8226 = vmatprep.subr.mxu0 0.0
      %8227 = vmatpush1.msra.mxu0 0.0
      %8228 = vmatprep.subr.mxu0 0.0
      %8229 = vmatpush1.msra.mxu0 0.0
      %8230 = vmatprep.subr.mxu0 0.0
      %8231 = vmatpush1.msra.mxu0 0.0
      %8232 = vmatprep.subr.mxu0 0.0
      %8233 = vmatpush1.msra.mxu0 0.0
      %8234 = vmatprep.subr.mxu0 0.0
      %8235 = vmatpush1.msra.mxu0 0.0
      %8236 = vmatprep.subr.mxu0 0.0
      %8237 = vmatpush1.msra.mxu0 0.0
      %8238 = vmatprep.subr.mxu0 0.0
      %8239 = vmatpush1.msra.mxu0 0.0
      %8240 = vmatprep.subr.mxu0 0.0
      %8241 = vmatpush1.msra.mxu0 0.0
      %8242 = vmatprep.subr.mxu0 0.0
      %8243 = vmatpush1.msra.mxu0 0.0
      %8244 = vmatprep.subr.mxu0 0.0
      %8245 = vmatpush1.msra.mxu0 0.0
      %8246 = vmatprep.subr.mxu0 0.0
      %8247 = vmatpush1.msra.mxu0 0.0
      %8248 = vmatprep.subr.mxu0 0.0
      %8249 = vmatpush1.msra.mxu0 0.0
      %8250 = vmatprep.subr.mxu0 0.0
      %8251 = vmatpush1.msra.mxu0 0.0
      %8252 = vmatprep.subr.mxu0 0.0
      %8253 = vmatpush1.msra.mxu0 0.0
      %8254 = vmatprep.subr.mxu0 0.0
      %8255 = vmatpush1.msra.mxu0 0.0
      %8256 = vmatprep.subr.mxu0 0.0
      %8257 = vmatpush1.msra.mxu0 0.0
      %8258 = vmatprep.subr.mxu0 0.0
      %8259 = vmatpush1.msra.mxu0 0.0
      %8260 = vmatprep.subr.mxu0 0.0
      %8261 = vmatpush1.msra.mxu0 0.0
      %8262 = vmatprep.subr.mxu0 0.0
      %8263 = vmatpush1.msra.mxu0 0.0
      %8264 = vmatprep.mubr.f32.mxu0 0.0
      %8265 = vmatmul.mubr.f32.gmra.mrb[0].mxu0 %v7748
      %v8266 = vpop.f32.mrb[0].mxu0
      %v8267 = vadd.f32 %v8182, %v8266
      %v8268 = vpop.f32.mrb[0].mxu0
      %8269 = vmatprep.mubr.f32.mxu0 0.0
      %8270 = vmatmul.mubr.f32.gmra.mrb[0].mxu0 %v7751
      %v8271 = vpop.f32.mrb[0].mxu0
      %v8272 = vadd.f32 %v8187, %v8271
      %v8273 = vpop.f32.mrb[0].mxu0
      %8274 = vmatprep.mubr.f32.mxu0 0.0
      %8275 = vmatmul.mubr.f32.gmra.mrb[0].mxu0 %v7754
      %v8276 = vpop.f32.mrb[0].mxu0
      %v8277 = vadd.f32 %v8192, %v8276
      %v8278 = vpop.f32.mrb[0].mxu0
      %8279 = vmatprep.mubr.f32.mxu0 0.0
      %8280 = vmatmul.mubr.f32.gmra.mrb[0].mxu0 %v7757
      %v8281 = vpop.f32.mrb[0].mxu0
      %v8282 = vadd.f32 %v8197, %v8281
      %v8283 = vpop.f32.mrb[0].mxu0
      %8284 = vdwg.mxu0
      %v8285 = vmax.f32 %v7915, 0.0
      %v8286 = vmax.f32 %v7917, 0.0
      %v8287 = vmax.f32 %v8093, 0.0
      %v8288 = vmax.f32 %v8095, 0.0
      %v8289 = vmax.f32 %v8267, 0.0
      %v8290 = vmax.f32 %v7921, 0.0
      %v8291 = vmax.f32 %v7923, 0.0
      %v8292 = vmax.f32 %v8099, 0.0
      %v8293 = vmax.f32 %v8101, 0.0
      %v8294 = vmax.f32 %v8272, 0.0
      %v8295 = vmax.f32 %v7927, 0.0
      %v8296 = vmax.f32 %v7929, 0.0
      %v8297 = vmax.f32 %v8105, 0.0
      %v8298 = vmax.f32 %v8107, 0.0
      %v8299 = vmax.f32 %v8277, 0.0
      %v8300 = vmax.f32 %v7933, 0.0
      %v8301 = vmax.f32 %v7935, 0.0
      %v8302 = vmax.f32 %v8111, 0.0
      %v8303 = vmax.f32 %v8113, 0.0
      %v8304 = vmax.f32 %v8282, 0.0
      %vm8305 = vcmp.lt.s32.totalorder %v175, 18
      %vm8306 = vcmp.lt.s32.totalorder %v176, 18
      %vm8307 = vcmp.lt.s32.totalorder %v177, 18
      %vm8308 = vcmp.lt.s32.totalorder %v178, 18
      %vm8309 = vcmp.lt.s32.totalorder %v179, 18
      %v8310 = vsel %vm8305, 1, 0
      %v8311 = vsel %vm8306, 1, 0
      %v8312 = vsel %vm8307, 1, 0
      %v8313 = vsel %vm8308, 1, 0
      %v8314 = vsel %vm8309, 1, 0
      %vm8315 = vcmp.eq.s32.totalorder %v8310, 1
      %vm8316 = vcmp.eq.s32.totalorder %v8311, 1
      %vm8317 = vcmp.eq.s32.totalorder %v8312, 1
      %vm8318 = vcmp.eq.s32.totalorder %v8313, 1
      %vm8319 = vcmp.eq.s32.totalorder %v8314, 1
      %v8320 = vsel %vm8315, %v8285, 0.0
      %v8321 = vsel %vm8316, %v8286, 0.0
      %v8322 = vsel %vm8317, %v8287, 0.0
      %v8323 = vsel %vm8318, %v8288, 0.0
      %v8324 = vsel %vm8319, %v8289, 0.0
      %v8325 = vsel %vm8315, %v8290, 0.0
      %v8326 = vsel %vm8316, %v8291, 0.0
      %v8327 = vsel %vm8317, %v8292, 0.0
      %v8328 = vsel %vm8318, %v8293, 0.0
      %v8329 = vsel %vm8319, %v8294, 0.0
      %v8330 = vsel %vm8315, %v8295, 0.0
      %v8331 = vsel %vm8316, %v8296, 0.0
      %v8332 = vsel %vm8317, %v8297, 0.0
      %v8333 = vsel %vm8318, %v8298, 0.0
      %v8334 = vsel %vm8319, %v8299, 0.0
      %v8335 = vsel %vm8315, %v8300, 0.0
      %v8336 = vsel %vm8316, %v8301, 0.0
      %v8337 = vsel %vm8317, %v8302, 0.0
      %v8338 = vsel %vm8318, %v8303, 0.0
      %v8339 = vsel %vm8319, %v8304, 0.0
      %8360 = vrot.lane.b32.xlu0 %v8320, 66
      %v8361 = vpop.permute.xlu0 %8360
      %8362 = vrot.lane.b32.xlu0 %v8321, 66
      %v8363 = vpop.permute.xlu0 %8362
      %8364 = vrot.lane.b32.xlu0 %v8322, 66
      %v8365 = vpop.permute.xlu0 %8364
      %8366 = vrot.lane.b32.xlu0 %v8323, 66
      %v8367 = vpop.permute.xlu0 %8366
      %8368 = vrot.lane.b32.xlu0 %v8324, 66
      %v8369 = vpop.permute.xlu0 %8368
      %8370 = vrot.lane.b32.xlu0 %v8325, 66
      %v8371 = vpop.permute.xlu0 %8370
      %8372 = vrot.lane.b32.xlu0 %v8326, 66
      %v8373 = vpop.permute.xlu0 %8372
      %8374 = vrot.lane.b32.xlu0 %v8327, 66
      %v8375 = vpop.permute.xlu0 %8374
      %8376 = vrot.lane.b32.xlu0 %v8328, 66
      %v8377 = vpop.permute.xlu0 %8376
      %8378 = vrot.lane.b32.xlu0 %v8329, 66
      %v8379 = vpop.permute.xlu0 %8378
      %8380 = vrot.lane.b32.xlu0 %v8330, 66
      %v8381 = vpop.permute.xlu0 %8380
      %8382 = vrot.lane.b32.xlu0 %v8331, 66
      %v8383 = vpop.permute.xlu0 %8382
      %8384 = vrot.lane.b32.xlu0 %v8332, 66
      %v8385 = vpop.permute.xlu0 %8384
      %8386 = vrot.lane.b32.xlu0 %v8333, 66
      %v8387 = vpop.permute.xlu0 %8386
      %8388 = vrot.lane.b32.xlu0 %v8334, 66
      %v8389 = vpop.permute.xlu0 %8388
      %8390 = vrot.lane.b32.xlu0 %v8335, 66
      %v8391 = vpop.permute.xlu0 %8390
      %8392 = vrot.lane.b32.xlu0 %v8336, 66
      %v8393 = vpop.permute.xlu0 %8392
      %8394 = vrot.lane.b32.xlu0 %v8337, 66
      %v8395 = vpop.permute.xlu0 %8394
      %8396 = vrot.lane.b32.xlu0 %v8338, 66
      %v8397 = vpop.permute.xlu0 %8396
      %8398 = vrot.lane.b32.xlu0 %v8339, 66
      %v8399 = vpop.permute.xlu0 %8398
      %v8400 = vsel %vm180, %v8361, %v8363
      %v8401 = vsel %vm180, %v8363, %v8365
      %v8402 = vsel %vm180, %v8365, %v8367
      %v8403 = vsel %vm180, %v8367, %v8369
      %v8404 = vsel %vm180, %v8371, %v8373
      %v8405 = vsel %vm180, %v8373, %v8375
      %v8406 = vsel %vm180, %v8375, %v8377
      %v8407 = vsel %vm180, %v8377, %v8379
      %v8408 = vsel %vm180, %v8381, %v8383
      %v8409 = vsel %vm180, %v8383, %v8385
      %v8410 = vsel %vm180, %v8385, %v8387
      %v8411 = vsel %vm180, %v8387, %v8389
      %v8412 = vsel %vm180, %v8391, %v8393
      %v8413 = vsel %vm180, %v8393, %v8395
      %v8414 = vsel %vm180, %v8395, %v8397
      %v8415 = vsel %vm180, %v8397, %v8399
      %8440 = vst.msk [vmem:[#allocation3] sm:$0xff] %vm1499, %v8361
      %8441 = vst [vmem:[#allocation3 + $0x8] sm:$0xff] %v8400
      %8442 = vst [vmem:[#allocation3 + $0x10] sm:$0xff] %v8401
      %8443 = vst [vmem:[#allocation3 + $0x18] sm:$0xff] %v8402
      %8444 = vst [vmem:[#allocation3 + $0x20] sm:$0xff] %v8403
      %8445 = vst.msk [vmem:[#allocation3 + $0x28] sm:$0xff] %vm1503, %v8369
      %8446 = vst.msk [vmem:[#allocation3 + $0x30] sm:$0xff] %vm1499, %v8371
      %8447 = vst [vmem:[#allocation3 + $0x38] sm:$0xff] %v8404
      %8448 = vst [vmem:[#allocation3 + $0x40] sm:$0xff] %v8405
      %8449 = vst [vmem:[#allocation3 + $0x48] sm:$0xff] %v8406
      %8450 = vst [vmem:[#allocation3 + $0x50] sm:$0xff] %v8407
      %8451 = vst.msk [vmem:[#allocation3 + $0x58] sm:$0xff] %vm1503, %v8379
      %8452 = vst.msk [vmem:[#allocation3 + $0x60] sm:$0xff] %vm1499, %v8381
      %8453 = vst [vmem:[#allocation3 + $0x68] sm:$0xff] %v8408
      %8454 = vst [vmem:[#allocation3 + $0x70] sm:$0xff] %v8409
      %8455 = vst [vmem:[#allocation3 + $0x78] sm:$0xff] %v8410
      %8456 = vst [vmem:[#allocation3 + $0x80] sm:$0xff] %v8411
      %8457 = vst.msk [vmem:[#allocation3 + $0x88] sm:$0xff] %vm1503, %v8389
      %8458 = vst.msk [vmem:[#allocation3 + $0x90] sm:$0xff] %vm1499, %v8391
      %8459 = vst [vmem:[#allocation3 + $0x98] sm:$0xff] %v8412
      %8460 = vst [vmem:[#allocation3 + $0xa0] sm:$0xff] %v8413
      %8461 = vst [vmem:[#allocation3 + $0xa8] sm:$0xff] %v8414
      %8462 = vst [vmem:[#allocation3 + $0xb0] sm:$0xff] %v8415
      %8463 = vst.msk [vmem:[#allocation3 + $0xb8] sm:$0xff] %vm1503, %v8399
      %8464 = vst.msk [vmem:[#allocation3 + $0x28] sm:$0xff] %vm1517, 0.0
      %8465 = vst.msk [vmem:[#allocation3 + $0x58] sm:$0xff] %vm1517, 0.0
      %8466 = vst.msk [vmem:[#allocation3 + $0x88] sm:$0xff] %vm1517, 0.0
      %8467 = vst.msk [vmem:[#allocation3 + $0xb8] sm:$0xff] %vm1517, 0.0
      %v8468 = vld [vmem:[#allocation3] sm:$0xff]
      %v8469 = vld [vmem:[#allocation3 + $0x8] sm:$0xff]
      %v8470 = vld [vmem:[#allocation3 + $0x10] sm:$0xff]
      %v8471 = vld [vmem:[#allocation3 + $0x18] sm:$0xff]
      %v8472 = vld [vmem:[#allocation3 + $0x20] sm:$0xff]
      %v8473 = vld [vmem:[#allocation3 + $0x30] sm:$0xff]
      %v8474 = vld [vmem:[#allocation3 + $0x38] sm:$0xff]
      %v8475 = vld [vmem:[#allocation3 + $0x40] sm:$0xff]
      %v8476 = vld [vmem:[#allocation3 + $0x48] sm:$0xff]
      %v8477 = vld [vmem:[#allocation3 + $0x50] sm:$0xff]
      %v8478 = vld [vmem:[#allocation3 + $0x60] sm:$0xff]
      %v8479 = vld [vmem:[#allocation3 + $0x68] sm:$0xff]
      %v8480 = vld [vmem:[#allocation3 + $0x70] sm:$0xff]
      %v8481 = vld [vmem:[#allocation3 + $0x78] sm:$0xff]
      %v8482 = vld [vmem:[#allocation3 + $0x80] sm:$0xff]
      %v8483 = vld [vmem:[#allocation3 + $0x90] sm:$0xff]
      %v8484 = vld [vmem:[#allocation3 + $0x98] sm:$0xff]
      %v8485 = vld [vmem:[#allocation3 + $0xa0] sm:$0xff]
      %v8486 = vld [vmem:[#allocation3 + $0xa8] sm:$0xff]
      %v8487 = vld [vmem:[#allocation3 + $0xb0] sm:$0xff]
      %8488 = vst [vmem:[#allocation4] sm:$0xff] %v8468
      %8489 = vst [vmem:[#allocation4 + $0x8] sm:$0xff] %v8469
      %8490 = vst [vmem:[#allocation4 + $0x10] sm:$0xff] %v8470
      %8491 = vst [vmem:[#allocation4 + $0x18] sm:$0xff] %v8471
      %8492 = vst [vmem:[#allocation4 + $0x20] sm:$0xff] %v8472
      %8493 = vst [vmem:[#allocation4 + $0x28] sm:$0xff] %v8473
      %8494 = vst [vmem:[#allocation4 + $0x30] sm:$0xff] %v8474
      %8495 = vst [vmem:[#allocation4 + $0x38] sm:$0xff] %v8475
      %8496 = vst [vmem:[#allocation4 + $0x40] sm:$0xff] %v8476
      %8497 = vst [vmem:[#allocation4 + $0x48] sm:$0xff] %v8477
      %8498 = vst [vmem:[#allocation4 + $0x50] sm:$0xff] %v8478
      %8499 = vst [vmem:[#allocation4 + $0x58] sm:$0xff] %v8479
      %8500 = vst [vmem:[#allocation4 + $0x60] sm:$0xff] %v8480
      %8501 = vst [vmem:[#allocation4 + $0x68] sm:$0xff] %v8481
      %8502 = vst [vmem:[#allocation4 + $0x70] sm:$0xff] %v8482
      %8503 = vst [vmem:[#allocation4 + $0x78] sm:$0xff] %v8483
      %8504 = vst [vmem:[#allocation4 + $0x80] sm:$0xff] %v8484
      %8505 = vst [vmem:[#allocation4 + $0x88] sm:$0xff] %v8485
      %8506 = vst [vmem:[#allocation4 + $0x90] sm:$0xff] %v8486
      %8507 = vst [vmem:[#allocation4 + $0x98] sm:$0xff] %v8487
      %v8508 = vld [vmem:[#allocation3] sm:$0xff]
      %v8509 = vld [vmem:[#allocation3 + $0x8] sm:$0xff]
      %v8510 = vld [vmem:[#allocation3 + $0x10] sm:$0xff]
      %v8511 = vld [vmem:[#allocation3 + $0x18] sm:$0xff]
      %v8512 = vld [vmem:[#allocation3 + $0x20] sm:$0xff]
      %v8513 = vld [vmem:[#allocation3 + $0x28] sm:$0xff]
      %v8514 = vld [vmem:[#allocation3 + $0x30] sm:$0xff]
      %v8515 = vld [vmem:[#allocation3 + $0x38] sm:$0xff]
      %v8516 = vld [vmem:[#allocation3 + $0x40] sm:$0xff]
      %v8517 = vld [vmem:[#allocation3 + $0x48] sm:$0xff]
      %v8518 = vld [vmem:[#allocation3 + $0x50] sm:$0xff]
      %v8519 = vld [vmem:[#allocation3 + $0x58] sm:$0xff]
      %v8520 = vld [vmem:[#allocation3 + $0x60] sm:$0xff]
      %v8521 = vld [vmem:[#allocation3 + $0x68] sm:$0xff]
      %v8522 = vld [vmem:[#allocation3 + $0x70] sm:$0xff]
      %v8523 = vld [vmem:[#allocation3 + $0x78] sm:$0xff]
      %v8524 = vld [vmem:[#allocation3 + $0x80] sm:$0xff]
      %v8525 = vld [vmem:[#allocation3 + $0x88] sm:$0xff]
      %v8526 = vld [vmem:[#allocation3 + $0x90] sm:$0xff]
      %v8527 = vld [vmem:[#allocation3 + $0x98] sm:$0xff]
      %v8528 = vld [vmem:[#allocation3 + $0xa0] sm:$0xff]
      %v8529 = vld [vmem:[#allocation3 + $0xa8] sm:$0xff]
      %v8530 = vld [vmem:[#allocation3 + $0xb0] sm:$0xff]
      %v8531 = vld [vmem:[#allocation3 + $0xb8] sm:$0xff]
      %8556 = vrot.lane.b32.xlu0 %v8508, 127
      %v8557 = vpop.permute.xlu0 %8556
      %8558 = vrot.lane.b32.xlu0 %v8509, 127
      %v8559 = vpop.permute.xlu0 %8558
      %8560 = vrot.lane.b32.xlu0 %v8510, 127
      %v8561 = vpop.permute.xlu0 %8560
      %8562 = vrot.lane.b32.xlu0 %v8511, 127
      %v8563 = vpop.permute.xlu0 %8562
      %8564 = vrot.lane.b32.xlu0 %v8512, 127
      %v8565 = vpop.permute.xlu0 %8564
      %8566 = vrot.lane.b32.xlu0 %v8513, 127
      %v8567 = vpop.permute.xlu0 %8566
      %8568 = vrot.lane.b32.xlu0 %v8514, 127
      %v8569 = vpop.permute.xlu0 %8568
      %8570 = vrot.lane.b32.xlu0 %v8515, 127
      %v8571 = vpop.permute.xlu0 %8570
      %8572 = vrot.lane.b32.xlu0 %v8516, 127
      %v8573 = vpop.permute.xlu0 %8572
      %8574 = vrot.lane.b32.xlu0 %v8517, 127
      %v8575 = vpop.permute.xlu0 %8574
      %8576 = vrot.lane.b32.xlu0 %v8518, 127
      %v8577 = vpop.permute.xlu0 %8576
      %8578 = vrot.lane.b32.xlu0 %v8519, 127
      %v8579 = vpop.permute.xlu0 %8578
      %8580 = vrot.lane.b32.xlu0 %v8520, 127
      %v8581 = vpop.permute.xlu0 %8580
      %8582 = vrot.lane.b32.xlu0 %v8521, 127
      %v8583 = vpop.permute.xlu0 %8582
      %8584 = vrot.lane.b32.xlu0 %v8522, 127
      %v8585 = vpop.permute.xlu0 %8584
      %8586 = vrot.lane.b32.xlu0 %v8523, 127
      %v8587 = vpop.permute.xlu0 %8586
      %8588 = vrot.lane.b32.xlu0 %v8524, 127
      %v8589 = vpop.permute.xlu0 %8588
      %8590 = vrot.lane.b32.xlu0 %v8525, 127
      %v8591 = vpop.permute.xlu0 %8590
      %8592 = vrot.lane.b32.xlu0 %v8526, 127
      %v8593 = vpop.permute.xlu0 %8592
      %8594 = vrot.lane.b32.xlu0 %v8527, 127
      %v8595 = vpop.permute.xlu0 %8594
      %8596 = vrot.lane.b32.xlu0 %v8528, 127
      %v8597 = vpop.permute.xlu0 %8596
      %8598 = vrot.lane.b32.xlu0 %v8529, 127
      %v8599 = vpop.permute.xlu0 %8598
      %8600 = vrot.lane.b32.xlu0 %v8530, 127
      %v8601 = vpop.permute.xlu0 %8600
      %8602 = vrot.lane.b32.xlu0 %v8531, 127
      %v8603 = vpop.permute.xlu0 %8602
      %v8604 = vsel %vm262, %v8557, %v8559
      %v8605 = vsel %vm262, %v8559, %v8561
      %v8606 = vsel %vm262, %v8561, %v8563
      %v8607 = vsel %vm262, %v8563, %v8565
      %v8608 = vsel %vm262, %v8565, %v8567
      %v8609 = vsel %vm262, %v8569, %v8571
      %v8610 = vsel %vm262, %v8571, %v8573
      %v8611 = vsel %vm262, %v8573, %v8575
      %v8612 = vsel %vm262, %v8575, %v8577
      %v8613 = vsel %vm262, %v8577, %v8579
      %v8614 = vsel %vm262, %v8581, %v8583
      %v8615 = vsel %vm262, %v8583, %v8585
      %v8616 = vsel %vm262, %v8585, %v8587
      %v8617 = vsel %vm262, %v8587, %v8589
      %v8618 = vsel %vm262, %v8589, %v8591
      %v8619 = vsel %vm262, %v8593, %v8595
      %v8620 = vsel %vm262, %v8595, %v8597
      %v8621 = vsel %vm262, %v8597, %v8599
      %v8622 = vsel %vm262, %v8599, %v8601
      %v8623 = vsel %vm262, %v8601, %v8603
      %8644 = vst [vmem:[#allocation4 + $0xa0] sm:$0xff] %v8604
      %8645 = vst [vmem:[#allocation4 + $0xa8] sm:$0xff] %v8605
      %8646 = vst [vmem:[#allocation4 + $0xb0] sm:$0xff] %v8606
      %8647 = vst [vmem:[#allocation4 + $0xb8] sm:$0xff] %v8607
      %8648 = vst [vmem:[#allocation4 + $0xc0] sm:$0xff] %v8608
      %8649 = vst [vmem:[#allocation4 + $0xc8] sm:$0xff] %v8609
      %8650 = vst [vmem:[#allocation4 + $0xd0] sm:$0xff] %v8610
      %8651 = vst [vmem:[#allocation4 + $0xd8] sm:$0xff] %v8611
      %8652 = vst [vmem:[#allocation4 + $0xe0] sm:$0xff] %v8612
      %8653 = vst [vmem:[#allocation4 + $0xe8] sm:$0xff] %v8613
      %8654 = vst [vmem:[#allocation4 + $0xf0] sm:$0xff] %v8614
      %8655 = vst [vmem:[#allocation4 + $0xf8] sm:$0xff] %v8615
      %8656 = vst [vmem:[#allocation4 + $0x100] sm:$0xff] %v8616
      %8657 = vst [vmem:[#allocation4 + $0x108] sm:$0xff] %v8617
      %8658 = vst [vmem:[#allocation4 + $0x110] sm:$0xff] %v8618
      %8659 = vst [vmem:[#allocation4 + $0x118] sm:$0xff] %v8619
      %8660 = vst [vmem:[#allocation4 + $0x120] sm:$0xff] %v8620
      %8661 = vst [vmem:[#allocation4 + $0x128] sm:$0xff] %v8621
      %8662 = vst [vmem:[#allocation4 + $0x130] sm:$0xff] %v8622
      %8663 = vst [vmem:[#allocation4 + $0x138] sm:$0xff] %v8623
      %v8664 = vld [vmem:[#allocation3] sm:$0xff]
      %v8665 = vld [vmem:[#allocation3 + $0x8] sm:$0xff]
      %v8666 = vld [vmem:[#allocation3 + $0x10] sm:$0xff]
      %v8667 = vld [vmem:[#allocation3 + $0x18] sm:$0xff]
      %v8668 = vld [vmem:[#allocation3 + $0x20] sm:$0xff]
      %v8669 = vld [vmem:[#allocation3 + $0x28] sm:$0xff]
      %v8670 = vld [vmem:[#allocation3 + $0x30] sm:$0xff]
      %v8671 = vld [vmem:[#allocation3 + $0x38] sm:$0xff]
      %v8672 = vld [vmem:[#allocation3 + $0x40] sm:$0xff]
      %v8673 = vld [vmem:[#allocation3 + $0x48] sm:$0xff]
      %v8674 = vld [vmem:[#allocation3 + $0x50] sm:$0xff]
      %v8675 = vld [vmem:[#allocation3 + $0x58] sm:$0xff]
      %v8676 = vld [vmem:[#allocation3 + $0x60] sm:$0xff]
      %v8677 = vld [vmem:[#allocation3 + $0x68] sm:$0xff]
      %v8678 = vld [vmem:[#allocation3 + $0x70] sm:$0xff]
      %v8679 = vld [vmem:[#allocation3 + $0x78] sm:$0xff]
      %v8680 = vld [vmem:[#allocation3 + $0x80] sm:$0xff]
      %v8681 = vld [vmem:[#allocation3 + $0x88] sm:$0xff]
      %v8682 = vld [vmem:[#allocation3 + $0x90] sm:$0xff]
      %v8683 = vld [vmem:[#allocation3 + $0x98] sm:$0xff]
      %v8684 = vld [vmem:[#allocation3 + $0xa0] sm:$0xff]
      %v8685 = vld [vmem:[#allocation3 + $0xa8] sm:$0xff]
      %v8686 = vld [vmem:[#allocation3 + $0xb0] sm:$0xff]
      %v8687 = vld [vmem:[#allocation3 + $0xb8] sm:$0xff]
      %8712 = vrot.lane.b32.xlu0 %v8664, 126
      %v8713 = vpop.permute.xlu0 %8712
      %8714 = vrot.lane.b32.xlu0 %v8665, 126
      %v8715 = vpop.permute.xlu0 %8714
      %8716 = vrot.lane.b32.xlu0 %v8666, 126
      %v8717 = vpop.permute.xlu0 %8716
      %8718 = vrot.lane.b32.xlu0 %v8667, 126
      %v8719 = vpop.permute.xlu0 %8718
      %8720 = vrot.lane.b32.xlu0 %v8668, 126
      %v8721 = vpop.permute.xlu0 %8720
      %8722 = vrot.lane.b32.xlu0 %v8669, 126
      %v8723 = vpop.permute.xlu0 %8722
      %8724 = vrot.lane.b32.xlu0 %v8670, 126
      %v8725 = vpop.permute.xlu0 %8724
      %8726 = vrot.lane.b32.xlu0 %v8671, 126
      %v8727 = vpop.permute.xlu0 %8726
      %8728 = vrot.lane.b32.xlu0 %v8672, 126
      %v8729 = vpop.permute.xlu0 %8728
      %8730 = vrot.lane.b32.xlu0 %v8673, 126
      %v8731 = vpop.permute.xlu0 %8730
      %8732 = vrot.lane.b32.xlu0 %v8674, 126
      %v8733 = vpop.permute.xlu0 %8732
      %8734 = vrot.lane.b32.xlu0 %v8675, 126
      %v8735 = vpop.permute.xlu0 %8734
      %8736 = vrot.lane.b32.xlu0 %v8676, 126
      %v8737 = vpop.permute.xlu0 %8736
      %8738 = vrot.lane.b32.xlu0 %v8677, 126
      %v8739 = vpop.permute.xlu0 %8738
      %8740 = vrot.lane.b32.xlu0 %v8678, 126
      %v8741 = vpop.permute.xlu0 %8740
      %8742 = vrot.lane.b32.xlu0 %v8679, 126
      %v8743 = vpop.permute.xlu0 %8742
      %8744 = vrot.lane.b32.xlu0 %v8680, 126
      %v8745 = vpop.permute.xlu0 %8744
      %8746 = vrot.lane.b32.xlu0 %v8681, 126
      %v8747 = vpop.permute.xlu0 %8746
      %8748 = vrot.lane.b32.xlu0 %v8682, 126
      %v8749 = vpop.permute.xlu0 %8748
      %8750 = vrot.lane.b32.xlu0 %v8683, 126
      %v8751 = vpop.permute.xlu0 %8750
      %8752 = vrot.lane.b32.xlu0 %v8684, 126
      %v8753 = vpop.permute.xlu0 %8752
      %8754 = vrot.lane.b32.xlu0 %v8685, 126
      %v8755 = vpop.permute.xlu0 %8754
      %8756 = vrot.lane.b32.xlu0 %v8686, 126
      %v8757 = vpop.permute.xlu0 %8756
      %8758 = vrot.lane.b32.xlu0 %v8687, 126
      %v8759 = vpop.permute.xlu0 %8758
      %v8760 = vsel %vm343, %v8713, %v8715
      %v8761 = vsel %vm343, %v8715, %v8717
      %v8762 = vsel %vm343, %v8717, %v8719
      %v8763 = vsel %vm343, %v8719, %v8721
      %v8764 = vsel %vm343, %v8721, %v8723
      %v8765 = vsel %vm343, %v8725, %v8727
      %v8766 = vsel %vm343, %v8727, %v8729
      %v8767 = vsel %vm343, %v8729, %v8731
      %v8768 = vsel %vm343, %v8731, %v8733
      %v8769 = vsel %vm343, %v8733, %v8735
      %v8770 = vsel %vm343, %v8737, %v8739
      %v8771 = vsel %vm343, %v8739, %v8741
      %v8772 = vsel %vm343, %v8741, %v8743
      %v8773 = vsel %vm343, %v8743, %v8745
      %v8774 = vsel %vm343, %v8745, %v8747
      %v8775 = vsel %vm343, %v8749, %v8751
      %v8776 = vsel %vm343, %v8751, %v8753
      %v8777 = vsel %vm343, %v8753, %v8755
      %v8778 = vsel %vm343, %v8755, %v8757
      %v8779 = vsel %vm343, %v8757, %v8759
      %8800 = vst [vmem:[#allocation4 + $0x140] sm:$0xff] %v8760
      %8801 = vst [vmem:[#allocation4 + $0x148] sm:$0xff] %v8761
      %8802 = vst [vmem:[#allocation4 + $0x150] sm:$0xff] %v8762
      %8803 = vst [vmem:[#allocation4 + $0x158] sm:$0xff] %v8763
      %8804 = vst [vmem:[#allocation4 + $0x160] sm:$0xff] %v8764
      %8805 = vst [vmem:[#allocation4 + $0x168] sm:$0xff] %v8765
      %8806 = vst [vmem:[#allocation4 + $0x170] sm:$0xff] %v8766
      %8807 = vst [vmem:[#allocation4 + $0x178] sm:$0xff] %v8767
      %8808 = vst [vmem:[#allocation4 + $0x180] sm:$0xff] %v8768
      %8809 = vst [vmem:[#allocation4 + $0x188] sm:$0xff] %v8769
      %8810 = vst [vmem:[#allocation4 + $0x190] sm:$0xff] %v8770
      %8811 = vst [vmem:[#allocation4 + $0x198] sm:$0xff] %v8771
      %8812 = vst [vmem:[#allocation4 + $0x1a0] sm:$0xff] %v8772
      %8813 = vst [vmem:[#allocation4 + $0x1a8] sm:$0xff] %v8773
      %8814 = vst [vmem:[#allocation4 + $0x1b0] sm:$0xff] %v8774
      %8815 = vst [vmem:[#allocation4 + $0x1b8] sm:$0xff] %v8775
      %8816 = vst [vmem:[#allocation4 + $0x1c0] sm:$0xff] %v8776
      %8817 = vst [vmem:[#allocation4 + $0x1c8] sm:$0xff] %v8777
      %8818 = vst [vmem:[#allocation4 + $0x1d0] sm:$0xff] %v8778
      %8819 = vst [vmem:[#allocation4 + $0x1d8] sm:$0xff] %v8779
      %v8820 = vld [vmem:[#allocation3] sm:$0xff]
      %v8821 = vld [vmem:[#allocation3 + $0x8] sm:$0xff]
      %v8822 = vld [vmem:[#allocation3 + $0x10] sm:$0xff]
      %v8823 = vld [vmem:[#allocation3 + $0x18] sm:$0xff]
      %v8824 = vld [vmem:[#allocation3 + $0x20] sm:$0xff]
      %v8825 = vld [vmem:[#allocation3 + $0x28] sm:$0xff]
      %v8826 = vld [vmem:[#allocation3 + $0x30] sm:$0xff]
      %v8827 = vld [vmem:[#allocation3 + $0x38] sm:$0xff]
      %v8828 = vld [vmem:[#allocation3 + $0x40] sm:$0xff]
      %v8829 = vld [vmem:[#allocation3 + $0x48] sm:$0xff]
      %v8830 = vld [vmem:[#allocation3 + $0x50] sm:$0xff]
      %v8831 = vld [vmem:[#allocation3 + $0x58] sm:$0xff]
      %v8832 = vld [vmem:[#allocation3 + $0x60] sm:$0xff]
      %v8833 = vld [vmem:[#allocation3 + $0x68] sm:$0xff]
      %v8834 = vld [vmem:[#allocation3 + $0x70] sm:$0xff]
      %v8835 = vld [vmem:[#allocation3 + $0x78] sm:$0xff]
      %v8836 = vld [vmem:[#allocation3 + $0x80] sm:$0xff]
      %v8837 = vld [vmem:[#allocation3 + $0x88] sm:$0xff]
      %v8838 = vld [vmem:[#allocation3 + $0x90] sm:$0xff]
      %v8839 = vld [vmem:[#allocation3 + $0x98] sm:$0xff]
      %v8840 = vld [vmem:[#allocation3 + $0xa0] sm:$0xff]
      %v8841 = vld [vmem:[#allocation3 + $0xa8] sm:$0xff]
      %v8842 = vld [vmem:[#allocation3 + $0xb0] sm:$0xff]
      %v8843 = vld [vmem:[#allocation3 + $0xb8] sm:$0xff]
      %8868 = vrot.lane.b32.xlu0 %v8820, 96
      %v8869 = vpop.permute.xlu0 %8868
      %8870 = vrot.lane.b32.xlu0 %v8821, 96
      %v8871 = vpop.permute.xlu0 %8870
      %8872 = vrot.lane.b32.xlu0 %v8822, 96
      %v8873 = vpop.permute.xlu0 %8872
      %8874 = vrot.lane.b32.xlu0 %v8823, 96
      %v8875 = vpop.permute.xlu0 %8874
      %8876 = vrot.lane.b32.xlu0 %v8824, 96
      %v8877 = vpop.permute.xlu0 %8876
      %8878 = vrot.lane.b32.xlu0 %v8825, 96
      %v8879 = vpop.permute.xlu0 %8878
      %8880 = vrot.lane.b32.xlu0 %v8826, 96
      %v8881 = vpop.permute.xlu0 %8880
      %8882 = vrot.lane.b32.xlu0 %v8827, 96
      %v8883 = vpop.permute.xlu0 %8882
      %8884 = vrot.lane.b32.xlu0 %v8828, 96
      %v8885 = vpop.permute.xlu0 %8884
      %8886 = vrot.lane.b32.xlu0 %v8829, 96
      %v8887 = vpop.permute.xlu0 %8886
      %8888 = vrot.lane.b32.xlu0 %v8830, 96
      %v8889 = vpop.permute.xlu0 %8888
      %8890 = vrot.lane.b32.xlu0 %v8831, 96
      %v8891 = vpop.permute.xlu0 %8890
      %8892 = vrot.lane.b32.xlu0 %v8832, 96
      %v8893 = vpop.permute.xlu0 %8892
      %8894 = vrot.lane.b32.xlu0 %v8833, 96
      %v8895 = vpop.permute.xlu0 %8894
      %8896 = vrot.lane.b32.xlu0 %v8834, 96
      %v8897 = vpop.permute.xlu0 %8896
      %8898 = vrot.lane.b32.xlu0 %v8835, 96
      %v8899 = vpop.permute.xlu0 %8898
      %8900 = vrot.lane.b32.xlu0 %v8836, 96
      %v8901 = vpop.permute.xlu0 %8900
      %8902 = vrot.lane.b32.xlu0 %v8837, 96
      %v8903 = vpop.permute.xlu0 %8902
      %8904 = vrot.lane.b32.xlu0 %v8838, 96
      %v8905 = vpop.permute.xlu0 %8904
      %8906 = vrot.lane.b32.xlu0 %v8839, 96
      %v8907 = vpop.permute.xlu0 %8906
      %8908 = vrot.lane.b32.xlu0 %v8840, 96
      %v8909 = vpop.permute.xlu0 %8908
      %8910 = vrot.lane.b32.xlu0 %v8841, 96
      %v8911 = vpop.permute.xlu0 %8910
      %8912 = vrot.lane.b32.xlu0 %v8842, 96
      %v8913 = vpop.permute.xlu0 %8912
      %8914 = vrot.lane.b32.xlu0 %v8843, 96
      %v8915 = vpop.permute.xlu0 %8914
      %v8916 = vsel %vm424, %v8869, %v8871
      %v8917 = vsel %vm424, %v8871, %v8873
      %v8918 = vsel %vm424, %v8873, %v8875
      %v8919 = vsel %vm424, %v8875, %v8877
      %v8920 = vsel %vm424, %v8877, %v8879
      %v8921 = vsel %vm424, %v8881, %v8883
      %v8922 = vsel %vm424, %v8883, %v8885
      %v8923 = vsel %vm424, %v8885, %v8887
      %v8924 = vsel %vm424, %v8887, %v8889
      %v8925 = vsel %vm424, %v8889, %v8891
      %v8926 = vsel %vm424, %v8893, %v8895
      %v8927 = vsel %vm424, %v8895, %v8897
      %v8928 = vsel %vm424, %v8897, %v8899
      %v8929 = vsel %vm424, %v8899, %v8901
      %v8930 = vsel %vm424, %v8901, %v8903
      %v8931 = vsel %vm424, %v8905, %v8907
      %v8932 = vsel %vm424, %v8907, %v8909
      %v8933 = vsel %vm424, %v8909, %v8911
      %v8934 = vsel %vm424, %v8911, %v8913
      %v8935 = vsel %vm424, %v8913, %v8915
      %8956 = vst [vmem:[#allocation4 + $0x1e0] sm:$0xff] %v8916
      %8957 = vst [vmem:[#allocation4 + $0x1e8] sm:$0xff] %v8917
      %8958 = vst [vmem:[#allocation4 + $0x1f0] sm:$0xff] %v8918
      %8959 = vst [vmem:[#allocation4 + $0x1f8] sm:$0xff] %v8919
      %8960 = vst [vmem:[#allocation4 + $0x200] sm:$0xff] %v8920
      %8961 = vst [vmem:[#allocation4 + $0x208] sm:$0xff] %v8921
      %8962 = vst [vmem:[#allocation4 + $0x210] sm:$0xff] %v8922
      %8963 = vst [vmem:[#allocation4 + $0x218] sm:$0xff] %v8923
      %8964 = vst [vmem:[#allocation4 + $0x220] sm:$0xff] %v8924
      %8965 = vst [vmem:[#allocation4 + $0x228] sm:$0xff] %v8925
      %8966 = vst [vmem:[#allocation4 + $0x230] sm:$0xff] %v8926
      %8967 = vst [vmem:[#allocation4 + $0x238] sm:$0xff] %v8927
      %8968 = vst [vmem:[#allocation4 + $0x240] sm:$0xff] %v8928
      %8969 = vst [vmem:[#allocation4 + $0x248] sm:$0xff] %v8929
      %8970 = vst [vmem:[#allocation4 + $0x250] sm:$0xff] %v8930
      %8971 = vst [vmem:[#allocation4 + $0x258] sm:$0xff] %v8931
      %8972 = vst [vmem:[#allocation4 + $0x260] sm:$0xff] %v8932
      %8973 = vst [vmem:[#allocation4 + $0x268] sm:$0xff] %v8933
      %8974 = vst [vmem:[#allocation4 + $0x270] sm:$0xff] %v8934
      %8975 = vst [vmem:[#allocation4 + $0x278] sm:$0xff] %v8935
      %v8976 = vld [vmem:[#allocation3] sm:$0xff]
      %v8977 = vld [vmem:[#allocation3 + $0x8] sm:$0xff]
      %v8978 = vld [vmem:[#allocation3 + $0x10] sm:$0xff]
      %v8979 = vld [vmem:[#allocation3 + $0x18] sm:$0xff]
      %v8980 = vld [vmem:[#allocation3 + $0x20] sm:$0xff]
      %v8981 = vld [vmem:[#allocation3 + $0x28] sm:$0xff]
      %v8982 = vld [vmem:[#allocation3 + $0x30] sm:$0xff]
      %v8983 = vld [vmem:[#allocation3 + $0x38] sm:$0xff]
      %v8984 = vld [vmem:[#allocation3 + $0x40] sm:$0xff]
      %v8985 = vld [vmem:[#allocation3 + $0x48] sm:$0xff]
      %v8986 = vld [vmem:[#allocation3 + $0x50] sm:$0xff]
      %v8987 = vld [vmem:[#allocation3 + $0x58] sm:$0xff]
      %v8988 = vld [vmem:[#allocation3 + $0x60] sm:$0xff]
      %v8989 = vld [vmem:[#allocation3 + $0x68] sm:$0xff]
      %v8990 = vld [vmem:[#allocation3 + $0x70] sm:$0xff]
      %v8991 = vld [vmem:[#allocation3 + $0x78] sm:$0xff]
      %v8992 = vld [vmem:[#allocation3 + $0x80] sm:$0xff]
      %v8993 = vld [vmem:[#allocation3 + $0x88] sm:$0xff]
      %v8994 = vld [vmem:[#allocation3 + $0x90] sm:$0xff]
      %v8995 = vld [vmem:[#allocation3 + $0x98] sm:$0xff]
      %v8996 = vld [vmem:[#allocation3 + $0xa0] sm:$0xff]
      %v8997 = vld [vmem:[#allocation3 + $0xa8] sm:$0xff]
      %v8998 = vld [vmem:[#allocation3 + $0xb0] sm:$0xff]
      %v8999 = vld [vmem:[#allocation3 + $0xb8] sm:$0xff]
      %9024 = vrot.lane.b32.xlu0 %v8976, 95
      %v9025 = vpop.permute.xlu0 %9024
      %9026 = vrot.lane.b32.xlu0 %v8977, 95
      %v9027 = vpop.permute.xlu0 %9026
      %9028 = vrot.lane.b32.xlu0 %v8978, 95
      %v9029 = vpop.permute.xlu0 %9028
      %9030 = vrot.lane.b32.xlu0 %v8979, 95
      %v9031 = vpop.permute.xlu0 %9030
      %9032 = vrot.lane.b32.xlu0 %v8980, 95
      %v9033 = vpop.permute.xlu0 %9032
      %9034 = vrot.lane.b32.xlu0 %v8981, 95
      %v9035 = vpop.permute.xlu0 %9034
      %9036 = vrot.lane.b32.xlu0 %v8982, 95
      %v9037 = vpop.permute.xlu0 %9036
      %9038 = vrot.lane.b32.xlu0 %v8983, 95
      %v9039 = vpop.permute.xlu0 %9038
      %9040 = vrot.lane.b32.xlu0 %v8984, 95
      %v9041 = vpop.permute.xlu0 %9040
      %9042 = vrot.lane.b32.xlu0 %v8985, 95
      %v9043 = vpop.permute.xlu0 %9042
      %9044 = vrot.lane.b32.xlu0 %v8986, 95
      %v9045 = vpop.permute.xlu0 %9044
      %9046 = vrot.lane.b32.xlu0 %v8987, 95
      %v9047 = vpop.permute.xlu0 %9046
      %9048 = vrot.lane.b32.xlu0 %v8988, 95
      %v9049 = vpop.permute.xlu0 %9048
      %9050 = vrot.lane.b32.xlu0 %v8989, 95
      %v9051 = vpop.permute.xlu0 %9050
      %9052 = vrot.lane.b32.xlu0 %v8990, 95
      %v9053 = vpop.permute.xlu0 %9052
      %9054 = vrot.lane.b32.xlu0 %v8991, 95
      %v9055 = vpop.permute.xlu0 %9054
      %9056 = vrot.lane.b32.xlu0 %v8992, 95
      %v9057 = vpop.permute.xlu0 %9056
      %9058 = vrot.lane.b32.xlu0 %v8993, 95
      %v9059 = vpop.permute.xlu0 %9058
      %9060 = vrot.lane.b32.xlu0 %v8994, 95
      %v9061 = vpop.permute.xlu0 %9060
      %9062 = vrot.lane.b32.xlu0 %v8995, 95
      %v9063 = vpop.permute.xlu0 %9062
      %9064 = vrot.lane.b32.xlu0 %v8996, 95
      %v9065 = vpop.permute.xlu0 %9064
      %9066 = vrot.lane.b32.xlu0 %v8997, 95
      %v9067 = vpop.permute.xlu0 %9066
      %9068 = vrot.lane.b32.xlu0 %v8998, 95
      %v9069 = vpop.permute.xlu0 %9068
      %9070 = vrot.lane.b32.xlu0 %v8999, 95
      %v9071 = vpop.permute.xlu0 %9070
      %v9072 = vsel %vm505, %v9025, %v9027
      %v9073 = vsel %vm505, %v9027, %v9029
      %v9074 = vsel %vm505, %v9029, %v9031
      %v9075 = vsel %vm505, %v9031, %v9033
      %v9076 = vsel %vm505, %v9033, %v9035
      %v9077 = vsel %vm505, %v9037, %v9039
      %v9078 = vsel %vm505, %v9039, %v9041
      %v9079 = vsel %vm505, %v9041, %v9043
      %v9080 = vsel %vm505, %v9043, %v9045
      %v9081 = vsel %vm505, %v9045, %v9047
      %v9082 = vsel %vm505, %v9049, %v9051
      %v9083 = vsel %vm505, %v9051, %v9053
      %v9084 = vsel %vm505, %v9053, %v9055
      %v9085 = vsel %vm505, %v9055, %v9057
      %v9086 = vsel %vm505, %v9057, %v9059
      %v9087 = vsel %vm505, %v9061, %v9063
      %v9088 = vsel %vm505, %v9063, %v9065
      %v9089 = vsel %vm505, %v9065, %v9067
      %v9090 = vsel %vm505, %v9067, %v9069
      %v9091 = vsel %vm505, %v9069, %v9071
      %9112 = vst [vmem:[#allocation4 + $0x280] sm:$0xff] %v9072
      %9113 = vst [vmem:[#allocation4 + $0x288] sm:$0xff] %v9073
      %9114 = vst [vmem:[#allocation4 + $0x290] sm:$0xff] %v9074
      %9115 = vst [vmem:[#allocation4 + $0x298] sm:$0xff] %v9075
      %9116 = vst [vmem:[#allocation4 + $0x2a0] sm:$0xff] %v9076
      %9117 = vst [vmem:[#allocation4 + $0x2a8] sm:$0xff] %v9077
      %9118 = vst [vmem:[#allocation4 + $0x2b0] sm:$0xff] %v9078
      %9119 = vst [vmem:[#allocation4 + $0x2b8] sm:$0xff] %v9079
      %9120 = vst [vmem:[#allocation4 + $0x2c0] sm:$0xff] %v9080
      %9121 = vst [vmem:[#allocation4 + $0x2c8] sm:$0xff] %v9081
      %9122 = vst [vmem:[#allocation4 + $0x2d0] sm:$0xff] %v9082
      %9123 = vst [vmem:[#allocation4 + $0x2d8] sm:$0xff] %v9083
      %9124 = vst [vmem:[#allocation4 + $0x2e0] sm:$0xff] %v9084
      %9125 = vst [vmem:[#allocation4 + $0x2e8] sm:$0xff] %v9085
      %9126 = vst [vmem:[#allocation4 + $0x2f0] sm:$0xff] %v9086
      %9127 = vst [vmem:[#allocation4 + $0x2f8] sm:$0xff] %v9087
      %9128 = vst [vmem:[#allocation4 + $0x300] sm:$0xff] %v9088
      %9129 = vst [vmem:[#allocation4 + $0x308] sm:$0xff] %v9089
      %9130 = vst [vmem:[#allocation4 + $0x310] sm:$0xff] %v9090
      %9131 = vst [vmem:[#allocation4 + $0x318] sm:$0xff] %v9091
      %v9132 = vld [vmem:[#allocation3] sm:$0xff]
      %v9133 = vld [vmem:[#allocation3 + $0x8] sm:$0xff]
      %v9134 = vld [vmem:[#allocation3 + $0x10] sm:$0xff]
      %v9135 = vld [vmem:[#allocation3 + $0x18] sm:$0xff]
      %v9136 = vld [vmem:[#allocation3 + $0x20] sm:$0xff]
      %v9137 = vld [vmem:[#allocation3 + $0x28] sm:$0xff]
      %v9138 = vld [vmem:[#allocation3 + $0x30] sm:$0xff]
      %v9139 = vld [vmem:[#allocation3 + $0x38] sm:$0xff]
      %v9140 = vld [vmem:[#allocation3 + $0x40] sm:$0xff]
      %v9141 = vld [vmem:[#allocation3 + $0x48] sm:$0xff]
      %v9142 = vld [vmem:[#allocation3 + $0x50] sm:$0xff]
      %v9143 = vld [vmem:[#allocation3 + $0x58] sm:$0xff]
      %v9144 = vld [vmem:[#allocation3 + $0x60] sm:$0xff]
      %v9145 = vld [vmem:[#allocation3 + $0x68] sm:$0xff]
      %v9146 = vld [vmem:[#allocation3 + $0x70] sm:$0xff]
      %v9147 = vld [vmem:[#allocation3 + $0x78] sm:$0xff]
      %v9148 = vld [vmem:[#allocation3 + $0x80] sm:$0xff]
      %v9149 = vld [vmem:[#allocation3 + $0x88] sm:$0xff]
      %v9150 = vld [vmem:[#allocation3 + $0x90] sm:$0xff]
      %v9151 = vld [vmem:[#allocation3 + $0x98] sm:$0xff]
      %v9152 = vld [vmem:[#allocation3 + $0xa0] sm:$0xff]
      %v9153 = vld [vmem:[#allocation3 + $0xa8] sm:$0xff]
      %v9154 = vld [vmem:[#allocation3 + $0xb0] sm:$0xff]
      %v9155 = vld [vmem:[#allocation3 + $0xb8] sm:$0xff]
      %9180 = vrot.lane.b32.xlu0 %v9132, 94
      %v9181 = vpop.permute.xlu0 %9180
      %9182 = vrot.lane.b32.xlu0 %v9133, 94
      %v9183 = vpop.permute.xlu0 %9182
      %9184 = vrot.lane.b32.xlu0 %v9134, 94
      %v9185 = vpop.permute.xlu0 %9184
      %9186 = vrot.lane.b32.xlu0 %v9135, 94
      %v9187 = vpop.permute.xlu0 %9186
      %9188 = vrot.lane.b32.xlu0 %v9136, 94
      %v9189 = vpop.permute.xlu0 %9188
      %9190 = vrot.lane.b32.xlu0 %v9137, 94
      %v9191 = vpop.permute.xlu0 %9190
      %9192 = vrot.lane.b32.xlu0 %v9138, 94
      %v9193 = vpop.permute.xlu0 %9192
      %9194 = vrot.lane.b32.xlu0 %v9139, 94
      %v9195 = vpop.permute.xlu0 %9194
      %9196 = vrot.lane.b32.xlu0 %v9140, 94
      %v9197 = vpop.permute.xlu0 %9196
      %9198 = vrot.lane.b32.xlu0 %v9141, 94
      %v9199 = vpop.permute.xlu0 %9198
      %9200 = vrot.lane.b32.xlu0 %v9142, 94
      %v9201 = vpop.permute.xlu0 %9200
      %9202 = vrot.lane.b32.xlu0 %v9143, 94
      %v9203 = vpop.permute.xlu0 %9202
      %9204 = vrot.lane.b32.xlu0 %v9144, 94
      %v9205 = vpop.permute.xlu0 %9204
      %9206 = vrot.lane.b32.xlu0 %v9145, 94
      %v9207 = vpop.permute.xlu0 %9206
      %9208 = vrot.lane.b32.xlu0 %v9146, 94
      %v9209 = vpop.permute.xlu0 %9208
      %9210 = vrot.lane.b32.xlu0 %v9147, 94
      %v9211 = vpop.permute.xlu0 %9210
      %9212 = vrot.lane.b32.xlu0 %v9148, 94
      %v9213 = vpop.permute.xlu0 %9212
      %9214 = vrot.lane.b32.xlu0 %v9149, 94
      %v9215 = vpop.permute.xlu0 %9214
      %9216 = vrot.lane.b32.xlu0 %v9150, 94
      %v9217 = vpop.permute.xlu0 %9216
      %9218 = vrot.lane.b32.xlu0 %v9151, 94
      %v9219 = vpop.permute.xlu0 %9218
      %9220 = vrot.lane.b32.xlu0 %v9152, 94
      %v9221 = vpop.permute.xlu0 %9220
      %9222 = vrot.lane.b32.xlu0 %v9153, 94
      %v9223 = vpop.permute.xlu0 %9222
      %9224 = vrot.lane.b32.xlu0 %v9154, 94
      %v9225 = vpop.permute.xlu0 %9224
      %9226 = vrot.lane.b32.xlu0 %v9155, 94
      %v9227 = vpop.permute.xlu0 %9226
      %v9228 = vsel %vm586, %v9181, %v9183
      %v9229 = vsel %vm586, %v9183, %v9185
      %v9230 = vsel %vm586, %v9185, %v9187
      %v9231 = vsel %vm586, %v9187, %v9189
      %v9232 = vsel %vm586, %v9189, %v9191
      %v9233 = vsel %vm586, %v9193, %v9195
      %v9234 = vsel %vm586, %v9195, %v9197
      %v9235 = vsel %vm586, %v9197, %v9199
      %v9236 = vsel %vm586, %v9199, %v9201
      %v9237 = vsel %vm586, %v9201, %v9203
      %v9238 = vsel %vm586, %v9205, %v9207
      %v9239 = vsel %vm586, %v9207, %v9209
      %v9240 = vsel %vm586, %v9209, %v9211
      %v9241 = vsel %vm586, %v9211, %v9213
      %v9242 = vsel %vm586, %v9213, %v9215
      %v9243 = vsel %vm586, %v9217, %v9219
      %v9244 = vsel %vm586, %v9219, %v9221
      %v9245 = vsel %vm586, %v9221, %v9223
      %v9246 = vsel %vm586, %v9223, %v9225
      %v9247 = vsel %vm586, %v9225, %v9227
      %9268 = vst [vmem:[#allocation4 + $0x320] sm:$0xff] %v9228
      %9269 = vst [vmem:[#allocation4 + $0x328] sm:$0xff] %v9229
      %9270 = vst [vmem:[#allocation4 + $0x330] sm:$0xff] %v9230
      %9271 = vst [vmem:[#allocation4 + $0x338] sm:$0xff] %v9231
      %9272 = vst [vmem:[#allocation4 + $0x340] sm:$0xff] %v9232
      %9273 = vst [vmem:[#allocation4 + $0x348] sm:$0xff] %v9233
      %9274 = vst [vmem:[#allocation4 + $0x350] sm:$0xff] %v9234
      %9275 = vst [vmem:[#allocation4 + $0x358] sm:$0xff] %v9235
      %9276 = vst [vmem:[#allocation4 + $0x360] sm:$0xff] %v9236
      %9277 = vst [vmem:[#allocation4 + $0x368] sm:$0xff] %v9237
      %9278 = vst [vmem:[#allocation4 + $0x370] sm:$0xff] %v9238
      %9279 = vst [vmem:[#allocation4 + $0x378] sm:$0xff] %v9239
      %9280 = vst [vmem:[#allocation4 + $0x380] sm:$0xff] %v9240
      %9281 = vst [vmem:[#allocation4 + $0x388] sm:$0xff] %v9241
      %9282 = vst [vmem:[#allocation4 + $0x390] sm:$0xff] %v9242
      %9283 = vst [vmem:[#allocation4 + $0x398] sm:$0xff] %v9243
      %9284 = vst [vmem:[#allocation4 + $0x3a0] sm:$0xff] %v9244
      %9285 = vst [vmem:[#allocation4 + $0x3a8] sm:$0xff] %v9245
      %9286 = vst [vmem:[#allocation4 + $0x3b0] sm:$0xff] %v9246
      %9287 = vst [vmem:[#allocation4 + $0x3b8] sm:$0xff] %v9247
      %v9288 = vld [vmem:[#allocation3] sm:$0xff]
      %v9289 = vld [vmem:[#allocation3 + $0x8] sm:$0xff]
      %v9290 = vld [vmem:[#allocation3 + $0x10] sm:$0xff]
      %v9291 = vld [vmem:[#allocation3 + $0x18] sm:$0xff]
      %v9292 = vld [vmem:[#allocation3 + $0x20] sm:$0xff]
      %v9293 = vld [vmem:[#allocation3 + $0x28] sm:$0xff]
      %v9294 = vld [vmem:[#allocation3 + $0x30] sm:$0xff]
      %v9295 = vld [vmem:[#allocation3 + $0x38] sm:$0xff]
      %v9296 = vld [vmem:[#allocation3 + $0x40] sm:$0xff]
      %v9297 = vld [vmem:[#allocation3 + $0x48] sm:$0xff]
      %v9298 = vld [vmem:[#allocation3 + $0x50] sm:$0xff]
      %v9299 = vld [vmem:[#allocation3 + $0x58] sm:$0xff]
      %v9300 = vld [vmem:[#allocation3 + $0x60] sm:$0xff]
      %v9301 = vld [vmem:[#allocation3 + $0x68] sm:$0xff]
      %v9302 = vld [vmem:[#allocation3 + $0x70] sm:$0xff]
      %v9303 = vld [vmem:[#allocation3 + $0x78] sm:$0xff]
      %v9304 = vld [vmem:[#allocation3 + $0x80] sm:$0xff]
      %v9305 = vld [vmem:[#allocation3 + $0x88] sm:$0xff]
      %v9306 = vld [vmem:[#allocation3 + $0x90] sm:$0xff]
      %v9307 = vld [vmem:[#allocation3 + $0x98] sm:$0xff]
      %v9308 = vld [vmem:[#allocation3 + $0xa0] sm:$0xff]
      %v9309 = vld [vmem:[#allocation3 + $0xa8] sm:$0xff]
      %v9310 = vld [vmem:[#allocation3 + $0xb0] sm:$0xff]
      %v9311 = vld [vmem:[#allocation3 + $0xb8] sm:$0xff]
      %9336 = vrot.lane.b32.xlu0 %v9288, 64
      %v9337 = vpop.permute.xlu0 %9336
      %9338 = vrot.lane.b32.xlu0 %v9289, 64
      %v9339 = vpop.permute.xlu0 %9338
      %9340 = vrot.lane.b32.xlu0 %v9290, 64
      %v9341 = vpop.permute.xlu0 %9340
      %9342 = vrot.lane.b32.xlu0 %v9291, 64
      %v9343 = vpop.permute.xlu0 %9342
      %9344 = vrot.lane.b32.xlu0 %v9292, 64
      %v9345 = vpop.permute.xlu0 %9344
      %9346 = vrot.lane.b32.xlu0 %v9293, 64
      %v9347 = vpop.permute.xlu0 %9346
      %9348 = vrot.lane.b32.xlu0 %v9294, 64
      %v9349 = vpop.permute.xlu0 %9348
      %9350 = vrot.lane.b32.xlu0 %v9295, 64
      %v9351 = vpop.permute.xlu0 %9350
      %9352 = vrot.lane.b32.xlu0 %v9296, 64
      %v9353 = vpop.permute.xlu0 %9352
      %9354 = vrot.lane.b32.xlu0 %v9297, 64
      %v9355 = vpop.permute.xlu0 %9354
      %9356 = vrot.lane.b32.xlu0 %v9298, 64
      %v9357 = vpop.permute.xlu0 %9356
      %9358 = vrot.lane.b32.xlu0 %v9299, 64
      %v9359 = vpop.permute.xlu0 %9358
      %9360 = vrot.lane.b32.xlu0 %v9300, 64
      %v9361 = vpop.permute.xlu0 %9360
      %9362 = vrot.lane.b32.xlu0 %v9301, 64
      %v9363 = vpop.permute.xlu0 %9362
      %9364 = vrot.lane.b32.xlu0 %v9302, 64
      %v9365 = vpop.permute.xlu0 %9364
      %9366 = vrot.lane.b32.xlu0 %v9303, 64
      %v9367 = vpop.permute.xlu0 %9366
      %9368 = vrot.lane.b32.xlu0 %v9304, 64
      %v9369 = vpop.permute.xlu0 %9368
      %9370 = vrot.lane.b32.xlu0 %v9305, 64
      %v9371 = vpop.permute.xlu0 %9370
      %9372 = vrot.lane.b32.xlu0 %v9306, 64
      %v9373 = vpop.permute.xlu0 %9372
      %9374 = vrot.lane.b32.xlu0 %v9307, 64
      %v9375 = vpop.permute.xlu0 %9374
      %9376 = vrot.lane.b32.xlu0 %v9308, 64
      %v9377 = vpop.permute.xlu0 %9376
      %9378 = vrot.lane.b32.xlu0 %v9309, 64
      %v9379 = vpop.permute.xlu0 %9378
      %9380 = vrot.lane.b32.xlu0 %v9310, 64
      %v9381 = vpop.permute.xlu0 %9380
      %9382 = vrot.lane.b32.xlu0 %v9311, 64
      %v9383 = vpop.permute.xlu0 %9382
      %v9384 = vsel %vm203, %v9337, %v9339
      %v9385 = vsel %vm203, %v9339, %v9341
      %v9386 = vsel %vm203, %v9341, %v9343
      %v9387 = vsel %vm203, %v9343, %v9345
      %v9388 = vsel %vm203, %v9345, %v9347
      %v9389 = vsel %vm203, %v9349, %v9351
      %v9390 = vsel %vm203, %v9351, %v9353
      %v9391 = vsel %vm203, %v9353, %v9355
      %v9392 = vsel %vm203, %v9355, %v9357
      %v9393 = vsel %vm203, %v9357, %v9359
      %v9394 = vsel %vm203, %v9361, %v9363
      %v9395 = vsel %vm203, %v9363, %v9365
      %v9396 = vsel %vm203, %v9365, %v9367
      %v9397 = vsel %vm203, %v9367, %v9369
      %v9398 = vsel %vm203, %v9369, %v9371
      %v9399 = vsel %vm203, %v9373, %v9375
      %v9400 = vsel %vm203, %v9375, %v9377
      %v9401 = vsel %vm203, %v9377, %v9379
      %v9402 = vsel %vm203, %v9379, %v9381
      %v9403 = vsel %vm203, %v9381, %v9383
      %9424 = vst [vmem:[#allocation4 + $0x3c0] sm:$0xff] %v9384
      %9425 = vst [vmem:[#allocation4 + $0x3c8] sm:$0xff] %v9385
      %9426 = vst [vmem:[#allocation4 + $0x3d0] sm:$0xff] %v9386
      %9427 = vst [vmem:[#allocation4 + $0x3d8] sm:$0xff] %v9387
      %9428 = vst [vmem:[#allocation4 + $0x3e0] sm:$0xff] %v9388
      %9429 = vst [vmem:[#allocation4 + $0x3e8] sm:$0xff] %v9389
      %9430 = vst [vmem:[#allocation4 + $0x3f0] sm:$0xff] %v9390
      %9431 = vst [vmem:[#allocation4 + $0x3f8] sm:$0xff] %v9391
      %9432 = vst [vmem:[#allocation4 + $0x400] sm:$0xff] %v9392
      %9433 = vst [vmem:[#allocation4 + $0x408] sm:$0xff] %v9393
      %9434 = vst [vmem:[#allocation4 + $0x410] sm:$0xff] %v9394
      %9435 = vst [vmem:[#allocation4 + $0x418] sm:$0xff] %v9395
      %9436 = vst [vmem:[#allocation4 + $0x420] sm:$0xff] %v9396
      %9437 = vst [vmem:[#allocation4 + $0x428] sm:$0xff] %v9397
      %9438 = vst [vmem:[#allocation4 + $0x430] sm:$0xff] %v9398
      %9439 = vst [vmem:[#allocation4 + $0x438] sm:$0xff] %v9399
      %9440 = vst [vmem:[#allocation4 + $0x440] sm:$0xff] %v9400
      %9441 = vst [vmem:[#allocation4 + $0x448] sm:$0xff] %v9401
      %9442 = vst [vmem:[#allocation4 + $0x450] sm:$0xff] %v9402
      %9443 = vst [vmem:[#allocation4 + $0x458] sm:$0xff] %v9403
      %v9444 = vld [vmem:[#allocation3] sm:$0xff]
      %v9445 = vld [vmem:[#allocation3 + $0x8] sm:$0xff]
      %v9446 = vld [vmem:[#allocation3 + $0x10] sm:$0xff]
      %v9447 = vld [vmem:[#allocation3 + $0x18] sm:$0xff]
      %v9448 = vld [vmem:[#allocation3 + $0x20] sm:$0xff]
      %v9449 = vld [vmem:[#allocation3 + $0x28] sm:$0xff]
      %v9450 = vld [vmem:[#allocation3 + $0x30] sm:$0xff]
      %v9451 = vld [vmem:[#allocation3 + $0x38] sm:$0xff]
      %v9452 = vld [vmem:[#allocation3 + $0x40] sm:$0xff]
      %v9453 = vld [vmem:[#allocation3 + $0x48] sm:$0xff]
      %v9454 = vld [vmem:[#allocation3 + $0x50] sm:$0xff]
      %v9455 = vld [vmem:[#allocation3 + $0x58] sm:$0xff]
      %v9456 = vld [vmem:[#allocation3 + $0x60] sm:$0xff]
      %v9457 = vld [vmem:[#allocation3 + $0x68] sm:$0xff]
      %v9458 = vld [vmem:[#allocation3 + $0x70] sm:$0xff]
      %v9459 = vld [vmem:[#allocation3 + $0x78] sm:$0xff]
      %v9460 = vld [vmem:[#allocation3 + $0x80] sm:$0xff]
      %v9461 = vld [vmem:[#allocation3 + $0x88] sm:$0xff]
      %v9462 = vld [vmem:[#allocation3 + $0x90] sm:$0xff]
      %v9463 = vld [vmem:[#allocation3 + $0x98] sm:$0xff]
      %v9464 = vld [vmem:[#allocation3 + $0xa0] sm:$0xff]
      %v9465 = vld [vmem:[#allocation3 + $0xa8] sm:$0xff]
      %v9466 = vld [vmem:[#allocation3 + $0xb0] sm:$0xff]
      %v9467 = vld [vmem:[#allocation3 + $0xb8] sm:$0xff]
      %9492 = vrot.lane.b32.xlu0 %v9444, 63
      %v9493 = vpop.permute.xlu0 %9492
      %9494 = vrot.lane.b32.xlu0 %v9445, 63
      %v9495 = vpop.permute.xlu0 %9494
      %9496 = vrot.lane.b32.xlu0 %v9446, 63
      %v9497 = vpop.permute.xlu0 %9496
      %9498 = vrot.lane.b32.xlu0 %v9447, 63
      %v9499 = vpop.permute.xlu0 %9498
      %9500 = vrot.lane.b32.xlu0 %v9448, 63
      %v9501 = vpop.permute.xlu0 %9500
      %9502 = vrot.lane.b32.xlu0 %v9449, 63
      %v9503 = vpop.permute.xlu0 %9502
      %9504 = vrot.lane.b32.xlu0 %v9450, 63
      %v9505 = vpop.permute.xlu0 %9504
      %9506 = vrot.lane.b32.xlu0 %v9451, 63
      %v9507 = vpop.permute.xlu0 %9506
      %9508 = vrot.lane.b32.xlu0 %v9452, 63
      %v9509 = vpop.permute.xlu0 %9508
      %9510 = vrot.lane.b32.xlu0 %v9453, 63
      %v9511 = vpop.permute.xlu0 %9510
      %9512 = vrot.lane.b32.xlu0 %v9454, 63
      %v9513 = vpop.permute.xlu0 %9512
      %9514 = vrot.lane.b32.xlu0 %v9455, 63
      %v9515 = vpop.permute.xlu0 %9514
      %9516 = vrot.lane.b32.xlu0 %v9456, 63
      %v9517 = vpop.permute.xlu0 %9516
      %9518 = vrot.lane.b32.xlu0 %v9457, 63
      %v9519 = vpop.permute.xlu0 %9518
      %9520 = vrot.lane.b32.xlu0 %v9458, 63
      %v9521 = vpop.permute.xlu0 %9520
      %9522 = vrot.lane.b32.xlu0 %v9459, 63
      %v9523 = vpop.permute.xlu0 %9522
      %9524 = vrot.lane.b32.xlu0 %v9460, 63
      %v9525 = vpop.permute.xlu0 %9524
      %9526 = vrot.lane.b32.xlu0 %v9461, 63
      %v9527 = vpop.permute.xlu0 %9526
      %9528 = vrot.lane.b32.xlu0 %v9462, 63
      %v9529 = vpop.permute.xlu0 %9528
      %9530 = vrot.lane.b32.xlu0 %v9463, 63
      %v9531 = vpop.permute.xlu0 %9530
      %9532 = vrot.lane.b32.xlu0 %v9464, 63
      %v9533 = vpop.permute.xlu0 %9532
      %9534 = vrot.lane.b32.xlu0 %v9465, 63
      %v9535 = vpop.permute.xlu0 %9534
      %9536 = vrot.lane.b32.xlu0 %v9466, 63
      %v9537 = vpop.permute.xlu0 %9536
      %9538 = vrot.lane.b32.xlu0 %v9467, 63
      %v9539 = vpop.permute.xlu0 %9538
      %v9540 = vsel %vm763, %v9493, %v9495
      %v9541 = vsel %vm763, %v9495, %v9497
      %v9542 = vsel %vm763, %v9497, %v9499
      %v9543 = vsel %vm763, %v9499, %v9501
      %v9544 = vsel %vm763, %v9501, %v9503
      %v9545 = vsel %vm763, %v9505, %v9507
      %v9546 = vsel %vm763, %v9507, %v9509
      %v9547 = vsel %vm763, %v9509, %v9511
      %v9548 = vsel %vm763, %v9511, %v9513
      %v9549 = vsel %vm763, %v9513, %v9515
      %v9550 = vsel %vm763, %v9517, %v9519
      %v9551 = vsel %vm763, %v9519, %v9521
      %v9552 = vsel %vm763, %v9521, %v9523
      %v9553 = vsel %vm763, %v9523, %v9525
      %v9554 = vsel %vm763, %v9525, %v9527
      %v9555 = vsel %vm763, %v9529, %v9531
      %v9556 = vsel %vm763, %v9531, %v9533
      %v9557 = vsel %vm763, %v9533, %v9535
      %v9558 = vsel %vm763, %v9535, %v9537
      %v9559 = vsel %vm763, %v9537, %v9539
      %9580 = vst [vmem:[#allocation4 + $0x460] sm:$0xff] %v9540
      %9581 = vst [vmem:[#allocation4 + $0x468] sm:$0xff] %v9541
      %9582 = vst [vmem:[#allocation4 + $0x470] sm:$0xff] %v9542
      %9583 = vst [vmem:[#allocation4 + $0x478] sm:$0xff] %v9543
      %9584 = vst [vmem:[#allocation4 + $0x480] sm:$0xff] %v9544
      %9585 = vst [vmem:[#allocation4 + $0x488] sm:$0xff] %v9545
      %9586 = vst [vmem:[#allocation4 + $0x490] sm:$0xff] %v9546
      %9587 = vst [vmem:[#allocation4 + $0x498] sm:$0xff] %v9547
      %9588 = vst [vmem:[#allocation4 + $0x4a0] sm:$0xff] %v9548
      %9589 = vst [vmem:[#allocation4 + $0x4a8] sm:$0xff] %v9549
      %9590 = vst [vmem:[#allocation4 + $0x4b0] sm:$0xff] %v9550
      %9591 = vst [vmem:[#allocation4 + $0x4b8] sm:$0xff] %v9551
      %9592 = vst [vmem:[#allocation4 + $0x4c0] sm:$0xff] %v9552
      %9593 = vst [vmem:[#allocation4 + $0x4c8] sm:$0xff] %v9553
      %9594 = vst [vmem:[#allocation4 + $0x4d0] sm:$0xff] %v9554
      %9595 = vst [vmem:[#allocation4 + $0x4d8] sm:$0xff] %v9555
      %9596 = vst [vmem:[#allocation4 + $0x4e0] sm:$0xff] %v9556
      %9597 = vst [vmem:[#allocation4 + $0x4e8] sm:$0xff] %v9557
      %9598 = vst [vmem:[#allocation4 + $0x4f0] sm:$0xff] %v9558
      %9599 = vst [vmem:[#allocation4 + $0x4f8] sm:$0xff] %v9559
      %v9600 = vld [vmem:[#allocation3] sm:$0xff]
      %v9601 = vld [vmem:[#allocation3 + $0x8] sm:$0xff]
      %v9602 = vld [vmem:[#allocation3 + $0x10] sm:$0xff]
      %v9603 = vld [vmem:[#allocation3 + $0x18] sm:$0xff]
      %v9604 = vld [vmem:[#allocation3 + $0x20] sm:$0xff]
      %v9605 = vld [vmem:[#allocation3 + $0x28] sm:$0xff]
      %v9606 = vld [vmem:[#allocation3 + $0x30] sm:$0xff]
      %v9607 = vld [vmem:[#allocation3 + $0x38] sm:$0xff]
      %v9608 = vld [vmem:[#allocation3 + $0x40] sm:$0xff]
      %v9609 = vld [vmem:[#allocation3 + $0x48] sm:$0xff]
      %v9610 = vld [vmem:[#allocation3 + $0x50] sm:$0xff]
      %v9611 = vld [vmem:[#allocation3 + $0x58] sm:$0xff]
      %v9612 = vld [vmem:[#allocation3 + $0x60] sm:$0xff]
      %v9613 = vld [vmem:[#allocation3 + $0x68] sm:$0xff]
      %v9614 = vld [vmem:[#allocation3 + $0x70] sm:$0xff]
      %v9615 = vld [vmem:[#allocation3 + $0x78] sm:$0xff]
      %v9616 = vld [vmem:[#allocation3 + $0x80] sm:$0xff]
      %v9617 = vld [vmem:[#allocation3 + $0x88] sm:$0xff]
      %v9618 = vld [vmem:[#allocation3 + $0x90] sm:$0xff]
      %v9619 = vld [vmem:[#allocation3 + $0x98] sm:$0xff]
      %v9620 = vld [vmem:[#allocation3 + $0xa0] sm:$0xff]
      %v9621 = vld [vmem:[#allocation3 + $0xa8] sm:$0xff]
      %v9622 = vld [vmem:[#allocation3 + $0xb0] sm:$0xff]
      %v9623 = vld [vmem:[#allocation3 + $0xb8] sm:$0xff]
      %9648 = vrot.lane.b32.xlu0 %v9600, 62
      %v9649 = vpop.permute.xlu0 %9648
      %9650 = vrot.lane.b32.xlu0 %v9601, 62
      %v9651 = vpop.permute.xlu0 %9650
      %9652 = vrot.lane.b32.xlu0 %v9602, 62
      %v9653 = vpop.permute.xlu0 %9652
      %9654 = vrot.lane.b32.xlu0 %v9603, 62
      %v9655 = vpop.permute.xlu0 %9654
      %9656 = vrot.lane.b32.xlu0 %v9604, 62
      %v9657 = vpop.permute.xlu0 %9656
      %9658 = vrot.lane.b32.xlu0 %v9605, 62
      %v9659 = vpop.permute.xlu0 %9658
      %9660 = vrot.lane.b32.xlu0 %v9606, 62
      %v9661 = vpop.permute.xlu0 %9660
      %9662 = vrot.lane.b32.xlu0 %v9607, 62
      %v9663 = vpop.permute.xlu0 %9662
      %9664 = vrot.lane.b32.xlu0 %v9608, 62
      %v9665 = vpop.permute.xlu0 %9664
      %9666 = vrot.lane.b32.xlu0 %v9609, 62
      %v9667 = vpop.permute.xlu0 %9666
      %9668 = vrot.lane.b32.xlu0 %v9610, 62
      %v9669 = vpop.permute.xlu0 %9668
      %9670 = vrot.lane.b32.xlu0 %v9611, 62
      %v9671 = vpop.permute.xlu0 %9670
      %9672 = vrot.lane.b32.xlu0 %v9612, 62
      %v9673 = vpop.permute.xlu0 %9672
      %9674 = vrot.lane.b32.xlu0 %v9613, 62
      %v9675 = vpop.permute.xlu0 %9674
      %9676 = vrot.lane.b32.xlu0 %v9614, 62
      %v9677 = vpop.permute.xlu0 %9676
      %9678 = vrot.lane.b32.xlu0 %v9615, 62
      %v9679 = vpop.permute.xlu0 %9678
      %9680 = vrot.lane.b32.xlu0 %v9616, 62
      %v9681 = vpop.permute.xlu0 %9680
      %9682 = vrot.lane.b32.xlu0 %v9617, 62
      %v9683 = vpop.permute.xlu0 %9682
      %9684 = vrot.lane.b32.xlu0 %v9618, 62
      %v9685 = vpop.permute.xlu0 %9684
      %9686 = vrot.lane.b32.xlu0 %v9619, 62
      %v9687 = vpop.permute.xlu0 %9686
      %9688 = vrot.lane.b32.xlu0 %v9620, 62
      %v9689 = vpop.permute.xlu0 %9688
      %9690 = vrot.lane.b32.xlu0 %v9621, 62
      %v9691 = vpop.permute.xlu0 %9690
      %9692 = vrot.lane.b32.xlu0 %v9622, 62
      %v9693 = vpop.permute.xlu0 %9692
      %9694 = vrot.lane.b32.xlu0 %v9623, 62
      %v9695 = vpop.permute.xlu0 %9694
      %v9696 = vsel %vm864, %v9649, %v9651
      %v9697 = vsel %vm864, %v9651, %v9653
      %v9698 = vsel %vm864, %v9653, %v9655
      %v9699 = vsel %vm864, %v9655, %v9657
      %v9700 = vsel %vm864, %v9657, %v9659
      %v9701 = vsel %vm864, %v9661, %v9663
      %v9702 = vsel %vm864, %v9663, %v9665
      %v9703 = vsel %vm864, %v9665, %v9667
      %v9704 = vsel %vm864, %v9667, %v9669
      %v9705 = vsel %vm864, %v9669, %v9671
      %v9706 = vsel %vm864, %v9673, %v9675
      %v9707 = vsel %vm864, %v9675, %v9677
      %v9708 = vsel %vm864, %v9677, %v9679
      %v9709 = vsel %vm864, %v9679, %v9681
      %v9710 = vsel %vm864, %v9681, %v9683
      %v9711 = vsel %vm864, %v9685, %v9687
      %v9712 = vsel %vm864, %v9687, %v9689
      %v9713 = vsel %vm864, %v9689, %v9691
      %v9714 = vsel %vm864, %v9691, %v9693
      %v9715 = vsel %vm864, %v9693, %v9695
      %9736 = vst [vmem:[#allocation4 + $0x500] sm:$0xff] %v9696
      %9737 = vst [vmem:[#allocation4 + $0x508] sm:$0xff] %v9697
      %9738 = vst [vmem:[#allocation4 + $0x510] sm:$0xff] %v9698
      %9739 = vst [vmem:[#allocation4 + $0x518] sm:$0xff] %v9699
      %9740 = vst [vmem:[#allocation4 + $0x520] sm:$0xff] %v9700
      %9741 = vst [vmem:[#allocation4 + $0x528] sm:$0xff] %v9701
      %9742 = vst [vmem:[#allocation4 + $0x530] sm:$0xff] %v9702
      %9743 = vst [vmem:[#allocation4 + $0x538] sm:$0xff] %v9703
      %9744 = vst [vmem:[#allocation4 + $0x540] sm:$0xff] %v9704
      %9745 = vst [vmem:[#allocation4 + $0x548] sm:$0xff] %v9705
      %9746 = vst [vmem:[#allocation4 + $0x550] sm:$0xff] %v9706
      %9747 = vst [vmem:[#allocation4 + $0x558] sm:$0xff] %v9707
      %9748 = vst [vmem:[#allocation4 + $0x560] sm:$0xff] %v9708
      %9749 = vst [vmem:[#allocation4 + $0x568] sm:$0xff] %v9709
      %9750 = vst [vmem:[#allocation4 + $0x570] sm:$0xff] %v9710
      %9751 = vst [vmem:[#allocation4 + $0x578] sm:$0xff] %v9711
      %9752 = vst [vmem:[#allocation4 + $0x580] sm:$0xff] %v9712
      %9753 = vst [vmem:[#allocation4 + $0x588] sm:$0xff] %v9713
      %9754 = vst [vmem:[#allocation4 + $0x590] sm:$0xff] %v9714
      %9755 = vst [vmem:[#allocation4 + $0x598] sm:$0xff] %v9715
      %s9756 = scalar_lea.vmem %s1, 480
      %v9757 = vld [vmem:[%s9756] sm:$0xff]
      %v9758 = vld [vmem:[%s9756 + $0x8] sm:$0xff]
      %v9759 = vld [vmem:[%s9756 + $0x10] sm:$0xff]
      %v9760 = vld [vmem:[#allocation4] sm:$0xff]
      %v9761 = vld [vmem:[#allocation4 + $0x8] sm:$0xff]
      %v9762 = vld [vmem:[#allocation4 + $0x10] sm:$0xff]
      %v9763 = vld [vmem:[#allocation4 + $0x18] sm:$0xff]
      %v9764 = vld [vmem:[#allocation4 + $0x20] sm:$0xff]
      %v9765 = vld [vmem:[#allocation4 + $0x28] sm:$0xff]
      %v9766 = vld [vmem:[#allocation4 + $0x30] sm:$0xff]
      %v9767 = vld [vmem:[#allocation4 + $0x38] sm:$0xff]
      %v9768 = vld [vmem:[#allocation4 + $0x40] sm:$0xff]
      %v9769 = vld [vmem:[#allocation4 + $0x48] sm:$0xff]
      %v9770 = vld [vmem:[#allocation4 + $0x50] sm:$0xff]
      %v9771 = vld [vmem:[#allocation4 + $0x58] sm:$0xff]
      %v9772 = vld [vmem:[#allocation4 + $0x60] sm:$0xff]
      %v9773 = vld [vmem:[#allocation4 + $0x68] sm:$0xff]
      %v9774 = vld [vmem:[#allocation4 + $0x70] sm:$0xff]
      %v9775 = vld [vmem:[#allocation4 + $0x78] sm:$0xff]
      %v9776 = vld [vmem:[#allocation4 + $0x80] sm:$0xff]
      %v9777 = vld [vmem:[#allocation4 + $0x88] sm:$0xff]
      %v9778 = vld [vmem:[#allocation4 + $0x90] sm:$0xff]
      %v9779 = vld [vmem:[#allocation4 + $0x98] sm:$0xff]
      %v9780 = vld [vmem:[#allocation4 + $0xa0] sm:$0xff]
      %v9781 = vld [vmem:[#allocation4 + $0xa8] sm:$0xff]
      %v9782 = vld [vmem:[#allocation4 + $0xb0] sm:$0xff]
      %v9783 = vld [vmem:[#allocation4 + $0xb8] sm:$0xff]
      %v9784 = vld [vmem:[#allocation4 + $0xc0] sm:$0xff]
      %v9785 = vld [vmem:[#allocation4 + $0xc8] sm:$0xff]
      %v9786 = vld [vmem:[#allocation4 + $0xd0] sm:$0xff]
      %v9787 = vld [vmem:[#allocation4 + $0xd8] sm:$0xff]
      %v9788 = vld [vmem:[#allocation4 + $0xe0] sm:$0xff]
      %v9789 = vld [vmem:[#allocation4 + $0xe8] sm:$0xff]
      %v9790 = vld [vmem:[#allocation4 + $0xf0] sm:$0xff]
      %v9791 = vld [vmem:[#allocation4 + $0xf8] sm:$0xff]
      %v9792 = vld [vmem:[#allocation4 + $0x100] sm:$0xff]
      %v9793 = vld [vmem:[#allocation4 + $0x108] sm:$0xff]
      %v9794 = vld [vmem:[#allocation4 + $0x110] sm:$0xff]
      %v9795 = vld [vmem:[#allocation4 + $0x118] sm:$0xff]
      %v9796 = vld [vmem:[#allocation4 + $0x120] sm:$0xff]
      %v9797 = vld [vmem:[#allocation4 + $0x128] sm:$0xff]
      %v9798 = vld [vmem:[#allocation4 + $0x130] sm:$0xff]
      %v9799 = vld [vmem:[#allocation4 + $0x138] sm:$0xff]
      %v9800 = vld [vmem:[#allocation4 + $0x140] sm:$0xff]
      %v9801 = vld [vmem:[#allocation4 + $0x148] sm:$0xff]
      %v9802 = vld [vmem:[#allocation4 + $0x150] sm:$0xff]
      %v9803 = vld [vmem:[#allocation4 + $0x158] sm:$0xff]
      %v9804 = vld [vmem:[#allocation4 + $0x160] sm:$0xff]
      %v9805 = vld [vmem:[#allocation4 + $0x168] sm:$0xff]
      %v9806 = vld [vmem:[#allocation4 + $0x170] sm:$0xff]
      %v9807 = vld [vmem:[#allocation4 + $0x178] sm:$0xff]
      %v9808 = vld [vmem:[#allocation4 + $0x180] sm:$0xff]
      %v9809 = vld [vmem:[#allocation4 + $0x188] sm:$0xff]
      %v9810 = vld [vmem:[#allocation4 + $0x190] sm:$0xff]
      %v9811 = vld [vmem:[#allocation4 + $0x198] sm:$0xff]
      %v9812 = vld [vmem:[#allocation4 + $0x1a0] sm:$0xff]
      %v9813 = vld [vmem:[#allocation4 + $0x1a8] sm:$0xff]
      %v9814 = vld [vmem:[#allocation4 + $0x1b0] sm:$0xff]
      %v9815 = vld [vmem:[#allocation4 + $0x1b8] sm:$0xff]
      %v9816 = vld [vmem:[#allocation4 + $0x1c0] sm:$0xff]
      %v9817 = vld [vmem:[#allocation4 + $0x1c8] sm:$0xff]
      %v9818 = vld [vmem:[#allocation4 + $0x1d0] sm:$0xff]
      %v9819 = vld [vmem:[#allocation4 + $0x1d8] sm:$0xff]
      %v9820 = vld [vmem:[#allocation4 + $0x1e0] sm:$0xff]
      %v9821 = vld [vmem:[#allocation4 + $0x1e8] sm:$0xff]
      %v9822 = vld [vmem:[#allocation4 + $0x1f0] sm:$0xff]
      %v9823 = vld [vmem:[#allocation4 + $0x1f8] sm:$0xff]
      %v9824 = vld [vmem:[#allocation4 + $0x200] sm:$0xff]
      %v9825 = vld [vmem:[#allocation4 + $0x208] sm:$0xff]
      %v9826 = vld [vmem:[#allocation4 + $0x210] sm:$0xff]
      %v9827 = vld [vmem:[#allocation4 + $0x218] sm:$0xff]
      %v9828 = vld [vmem:[#allocation4 + $0x220] sm:$0xff]
      %v9829 = vld [vmem:[#allocation4 + $0x228] sm:$0xff]
      %v9830 = vld [vmem:[#allocation4 + $0x230] sm:$0xff]
      %v9831 = vld [vmem:[#allocation4 + $0x238] sm:$0xff]
      %v9832 = vld [vmem:[#allocation4 + $0x240] sm:$0xff]
      %v9833 = vld [vmem:[#allocation4 + $0x248] sm:$0xff]
      %v9834 = vld [vmem:[#allocation4 + $0x250] sm:$0xff]
      %v9835 = vld [vmem:[#allocation4 + $0x258] sm:$0xff]
      %v9836 = vld [vmem:[#allocation4 + $0x260] sm:$0xff]
      %v9837 = vld [vmem:[#allocation4 + $0x268] sm:$0xff]
      %v9838 = vld [vmem:[#allocation4 + $0x270] sm:$0xff]
      %v9839 = vld [vmem:[#allocation4 + $0x278] sm:$0xff]
      %v9840 = vld [vmem:[#allocation4 + $0x280] sm:$0xff]
      %v9841 = vld [vmem:[#allocation4 + $0x288] sm:$0xff]
      %v9842 = vld [vmem:[#allocation4 + $0x290] sm:$0xff]
      %v9843 = vld [vmem:[#allocation4 + $0x298] sm:$0xff]
      %v9844 = vld [vmem:[#allocation4 + $0x2a0] sm:$0xff]
      %v9845 = vld [vmem:[#allocation4 + $0x2a8] sm:$0xff]
      %v9846 = vld [vmem:[#allocation4 + $0x2b0] sm:$0xff]
      %v9847 = vld [vmem:[#allocation4 + $0x2b8] sm:$0xff]
      %v9848 = vld [vmem:[#allocation4 + $0x2c0] sm:$0xff]
      %v9849 = vld [vmem:[#allocation4 + $0x2c8] sm:$0xff]
      %v9850 = vld [vmem:[#allocation4 + $0x2d0] sm:$0xff]
      %v9851 = vld [vmem:[#allocation4 + $0x2d8] sm:$0xff]
      %v9852 = vld [vmem:[#allocation4 + $0x2e0] sm:$0xff]
      %v9853 = vld [vmem:[#allocation4 + $0x2e8] sm:$0xff]
      %v9854 = vld [vmem:[#allocation4 + $0x2f0] sm:$0xff]
      %v9855 = vld [vmem:[#allocation4 + $0x2f8] sm:$0xff]
      %v9856 = vld [vmem:[#allocation4 + $0x300] sm:$0xff]
      %v9857 = vld [vmem:[#allocation4 + $0x308] sm:$0xff]
      %v9858 = vld [vmem:[#allocation4 + $0x310] sm:$0xff]
      %v9859 = vld [vmem:[#allocation4 + $0x318] sm:$0xff]
      %v9860 = vld [vmem:[#allocation4 + $0x320] sm:$0xff]
      %v9861 = vld [vmem:[#allocation4 + $0x328] sm:$0xff]
      %v9862 = vld [vmem:[#allocation4 + $0x330] sm:$0xff]
      %v9863 = vld [vmem:[#allocation4 + $0x338] sm:$0xff]
      %v9864 = vld [vmem:[#allocation4 + $0x340] sm:$0xff]
      %v9865 = vld [vmem:[#allocation4 + $0x348] sm:$0xff]
      %v9866 = vld [vmem:[#allocation4 + $0x350] sm:$0xff]
      %v9867 = vld [vmem:[#allocation4 + $0x358] sm:$0xff]
      %v9868 = vld [vmem:[#allocation4 + $0x360] sm:$0xff]
      %v9869 = vld [vmem:[#allocation4 + $0x368] sm:$0xff]
      %v9870 = vld [vmem:[#allocation4 + $0x370] sm:$0xff]
      %v9871 = vld [vmem:[#allocation4 + $0x378] sm:$0xff]
      %v9872 = vld [vmem:[#allocation4 + $0x380] sm:$0xff]
      %v9873 = vld [vmem:[#allocation4 + $0x388] sm:$0xff]
      %v9874 = vld [vmem:[#allocation4 + $0x390] sm:$0xff]
      %v9875 = vld [vmem:[#allocation4 + $0x398] sm:$0xff]
      %v9876 = vld [vmem:[#allocation4 + $0x3a0] sm:$0xff]
      %v9877 = vld [vmem:[#allocation4 + $0x3a8] sm:$0xff]
      %v9878 = vld [vmem:[#allocation4 + $0x3b0] sm:$0xff]
      %v9879 = vld [vmem:[#allocation4 + $0x3b8] sm:$0xff]
      %v9880 = vld [vmem:[#allocation4 + $0x3c0] sm:$0xff]
      %v9881 = vld [vmem:[#allocation4 + $0x3c8] sm:$0xff]
      %v9882 = vld [vmem:[#allocation4 + $0x3d0] sm:$0xff]
      %v9883 = vld [vmem:[#allocation4 + $0x3d8] sm:$0xff]
      %v9884 = vld [vmem:[#allocation4 + $0x3e0] sm:$0xff]
      %v9885 = vld [vmem:[#allocation4 + $0x3e8] sm:$0xff]
      %v9886 = vld [vmem:[#allocation4 + $0x3f0] sm:$0xff]
      %v9887 = vld [vmem:[#allocation4 + $0x3f8] sm:$0xff]
      %v9888 = vld [vmem:[#allocation4 + $0x400] sm:$0xff]
      %v9889 = vld [vmem:[#allocation4 + $0x408] sm:$0xff]
      %v9890 = vld [vmem:[#allocation4 + $0x410] sm:$0xff]
      %v9891 = vld [vmem:[#allocation4 + $0x418] sm:$0xff]
      %v9892 = vld [vmem:[#allocation4 + $0x420] sm:$0xff]
      %v9893 = vld [vmem:[#allocation4 + $0x428] sm:$0xff]
      %v9894 = vld [vmem:[#allocation4 + $0x430] sm:$0xff]
      %v9895 = vld [vmem:[#allocation4 + $0x438] sm:$0xff]
      %v9896 = vld [vmem:[#allocation4 + $0x440] sm:$0xff]
      %v9897 = vld [vmem:[#allocation4 + $0x448] sm:$0xff]
      %v9898 = vld [vmem:[#allocation4 + $0x450] sm:$0xff]
      %v9899 = vld [vmem:[#allocation4 + $0x458] sm:$0xff]
      %v9900 = vld [vmem:[#allocation4 + $0x460] sm:$0xff]
      %v9901 = vld [vmem:[#allocation4 + $0x468] sm:$0xff]
      %v9902 = vld [vmem:[#allocation4 + $0x470] sm:$0xff]
      %v9903 = vld [vmem:[#allocation4 + $0x478] sm:$0xff]
      %v9904 = vld [vmem:[#allocation4 + $0x480] sm:$0xff]
      %v9905 = vld [vmem:[#allocation4 + $0x488] sm:$0xff]
      %v9906 = vld [vmem:[#allocation4 + $0x490] sm:$0xff]
      %v9907 = vld [vmem:[#allocation4 + $0x498] sm:$0xff]
      %v9908 = vld [vmem:[#allocation4 + $0x4a0] sm:$0xff]
      %v9909 = vld [vmem:[#allocation4 + $0x4a8] sm:$0xff]
      %v9910 = vld [vmem:[#allocation4 + $0x4b0] sm:$0xff]
      %v9911 = vld [vmem:[#allocation4 + $0x4b8] sm:$0xff]
      %v9912 = vld [vmem:[#allocation4 + $0x4c0] sm:$0xff]
      %v9913 = vld [vmem:[#allocation4 + $0x4c8] sm:$0xff]
      %v9914 = vld [vmem:[#allocation4 + $0x4d0] sm:$0xff]
      %v9915 = vld [vmem:[#allocation4 + $0x4d8] sm:$0xff]
      %v9916 = vld [vmem:[#allocation4 + $0x4e0] sm:$0xff]
      %v9917 = vld [vmem:[#allocation4 + $0x4e8] sm:$0xff]
      %v9918 = vld [vmem:[#allocation4 + $0x4f0] sm:$0xff]
      %v9919 = vld [vmem:[#allocation4 + $0x4f8] sm:$0xff]
      %v9920 = vld [vmem:[#allocation4 + $0x500] sm:$0xff]
      %v9921 = vld [vmem:[#allocation4 + $0x508] sm:$0xff]
      %v9922 = vld [vmem:[#allocation4 + $0x510] sm:$0xff]
      %v9923 = vld [vmem:[#allocation4 + $0x518] sm:$0xff]
      %v9924 = vld [vmem:[#allocation4 + $0x520] sm:$0xff]
      %v9925 = vld [vmem:[#allocation4 + $0x528] sm:$0xff]
      %v9926 = vld [vmem:[#allocation4 + $0x530] sm:$0xff]
      %v9927 = vld [vmem:[#allocation4 + $0x538] sm:$0xff]
      %v9928 = vld [vmem:[#allocation4 + $0x540] sm:$0xff]
      %v9929 = vld [vmem:[#allocation4 + $0x548] sm:$0xff]
      %v9930 = vld [vmem:[#allocation4 + $0x550] sm:$0xff]
      %v9931 = vld [vmem:[#allocation4 + $0x558] sm:$0xff]
      %v9932 = vld [vmem:[#allocation4 + $0x560] sm:$0xff]
      %v9933 = vld [vmem:[#allocation4 + $0x568] sm:$0xff]
      %v9934 = vld [vmem:[#allocation4 + $0x570] sm:$0xff]
      %v9935 = vld [vmem:[#allocation4 + $0x578] sm:$0xff]
      %v9936 = vld [vmem:[#allocation4 + $0x580] sm:$0xff]
      %v9937 = vld [vmem:[#allocation4 + $0x588] sm:$0xff]
      %v9938 = vld [vmem:[#allocation4 + $0x590] sm:$0xff]
      %v9939 = vld [vmem:[#allocation4 + $0x598] sm:$0xff]
      %s9940 = scalar_lea.vmem %s2, 160
      %v9941 = vld [vmem:[%s9940] sm:$0xff]
      %9943 = vset.pattern.permute.xlu0 0
      %9944 = vperm.xlu0 %9943, %v9941
      %v9945 = vpop.permute.xlu0 %9944
      %v9948 = vsel %vm1045, %v9759, 0
      %9950 = vmatprep.subr.mxu0 %v9761
      %9951 = vmatpush1.msra.mxu0 %v9760
      %9952 = vmatprep.subr.mxu0 %v9766
      %9953 = vmatpush1.msra.mxu0 %v9765
      %9954 = vmatprep.subr.mxu0 %v9771
      %9955 = vmatpush1.msra.mxu0 %v9770
      %9956 = vmatprep.subr.mxu0 %v9776
      %9957 = vmatpush1.msra.mxu0 %v9775
      %9958 = vmatprep.subr.mxu0 %v9781
      %9959 = vmatpush1.msra.mxu0 %v9780
      %9960 = vmatprep.subr.mxu0 %v9786
      %9961 = vmatpush1.msra.mxu0 %v9785
      %9962 = vmatprep.subr.mxu0 %v9791
      %9963 = vmatpush1.msra.mxu0 %v9790
      %9964 = vmatprep.subr.mxu0 %v9796
      %9965 = vmatpush1.msra.mxu0 %v9795
      %9966 = vmatprep.subr.mxu0 %v9801
      %9967 = vmatpush1.msra.mxu0 %v9800
      %9968 = vmatprep.subr.mxu0 %v9806
      %9969 = vmatpush1.msra.mxu0 %v9805
      %9970 = vmatprep.subr.mxu0 %v9811
      %9971 = vmatpush1.msra.mxu0 %v9810
      %9972 = vmatprep.subr.mxu0 %v9816
      %9973 = vmatpush1.msra.mxu0 %v9815
      %9974 = vmatprep.subr.mxu0 %v9821
      %9975 = vmatpush1.msra.mxu0 %v9820
      %9976 = vmatprep.subr.mxu0 %v9826
      %9977 = vmatpush1.msra.mxu0 %v9825
      %9978 = vmatprep.subr.mxu0 %v9831
      %9979 = vmatpush1.msra.mxu0 %v9830
      %9980 = vmatprep.subr.mxu0 %v9836
      %9981 = vmatpush1.msra.mxu0 %v9835
      %9982 = vmatprep.subr.mxu0 %v9841
      %9983 = vmatpush1.msra.mxu0 %v9840
      %9984 = vmatprep.subr.mxu0 %v9846
      %9985 = vmatpush1.msra.mxu0 %v9845
      %9986 = vmatprep.subr.mxu0 %v9851
      %9987 = vmatpush1.msra.mxu0 %v9850
      %9988 = vmatprep.subr.mxu0 %v9856
      %9989 = vmatpush1.msra.mxu0 %v9855
      %9990 = vmatprep.subr.mxu0 %v9861
      %9991 = vmatpush1.msra.mxu0 %v9860
      %9992 = vmatprep.subr.mxu0 %v9866
      %9993 = vmatpush1.msra.mxu0 %v9865
      %9994 = vmatprep.subr.mxu0 %v9871
      %9995 = vmatpush1.msra.mxu0 %v9870
      %9996 = vmatprep.subr.mxu0 %v9876
      %9997 = vmatpush1.msra.mxu0 %v9875
      %9998 = vmatprep.subr.mxu0 %v9881
      %9999 = vmatpush1.msra.mxu0 %v9880
      %10000 = vmatprep.subr.mxu0 %v9886
      %10001 = vmatpush1.msra.mxu0 %v9885
      %10002 = vmatprep.subr.mxu0 %v9891
      %10003 = vmatpush1.msra.mxu0 %v9890
      %10004 = vmatprep.subr.mxu0 %v9896
      %10005 = vmatpush1.msra.mxu0 %v9895
      %10006 = vmatprep.subr.mxu0 %v9901
      %10007 = vmatpush1.msra.mxu0 %v9900
      %10008 = vmatprep.subr.mxu0 %v9906
      %10009 = vmatpush1.msra.mxu0 %v9905
      %10010 = vmatprep.subr.mxu0 %v9911
      %10011 = vmatpush1.msra.mxu0 %v9910
      %10012 = vmatprep.subr.mxu0 %v9916
      %10013 = vmatpush1.msra.mxu0 %v9915
      %10014 = vmatprep.mubr.f32.mxu0 %v9758
      %10015 = vmatmul.mubr.f32.gmra.mrb[0].mxu0 %v9757
      %v10016 = vpop.f32.mrb[0].mxu0
      %v10017 = vadd.f32 %v9945, %v10016
      %v10018 = vpop.f32.mrb[0].mxu0
      %v10019 = vadd.f32 %v9945, %v10018
      %10020 = vdwg.mxu0
      %10021 = vmatprep.subr.mxu0 %v9921
      %10022 = vmatpush1.msra.mxu0 %v9920
      %10023 = vmatprep.subr.mxu0 %v9926
      %10024 = vmatpush1.msra.mxu0 %v9925
      %10025 = vmatprep.subr.mxu0 %v9931
      %10026 = vmatpush1.msra.mxu0 %v9930
      %10027 = vmatprep.subr.mxu0 %v9936
      %10028 = vmatpush1.msra.mxu0 %v9935
      %10029 = vmatprep.subr.mxu0 0.0
      %10030 = vmatpush1.msra.mxu0 0.0
      %10031 = vmatprep.subr.mxu0 0.0
      %10032 = vmatpush1.msra.mxu0 0.0
      %10033 = vmatprep.subr.mxu0 0.0
      %10034 = vmatpush1.msra.mxu0 0.0
      %10035 = vmatprep.subr.mxu0 0.0
      %10036 = vmatpush1.msra.mxu0 0.0
      %10037 = vmatprep.subr.mxu0 0.0
      %10038 = vmatpush1.msra.mxu0 0.0
      %10039 = vmatprep.subr.mxu0 0.0
      %10040 = vmatpush1.msra.mxu0 0.0
      %10041 = vmatprep.subr.mxu0 0.0
      %10042 = vmatpush1.msra.mxu0 0.0
      %10043 = vmatprep.subr.mxu0 0.0
      %10044 = vmatpush1.msra.mxu0 0.0
      %10045 = vmatprep.subr.mxu0 0.0
      %10046 = vmatpush1.msra.mxu0 0.0
      %10047 = vmatprep.subr.mxu0 0.0
      %10048 = vmatpush1.msra.mxu0 0.0
      %10049 = vmatprep.subr.mxu0 0.0
      %10050 = vmatpush1.msra.mxu0 0.0
      %10051 = vmatprep.subr.mxu0 0.0
      %10052 = vmatpush1.msra.mxu0 0.0
      %10053 = vmatprep.subr.mxu0 0.0
      %10054 = vmatpush1.msra.mxu0 0.0
      %10055 = vmatprep.subr.mxu0 0.0
      %10056 = vmatpush1.msra.mxu0 0.0
      %10057 = vmatprep.subr.mxu0 0.0
      %10058 = vmatpush1.msra.mxu0 0.0
      %10059 = vmatprep.subr.mxu0 0.0
      %10060 = vmatpush1.msra.mxu0 0.0
      %10061 = vmatprep.subr.mxu0 0.0
      %10062 = vmatpush1.msra.mxu0 0.0
      %10063 = vmatprep.subr.mxu0 0.0
      %10064 = vmatpush1.msra.mxu0 0.0
      %10065 = vmatprep.subr.mxu0 0.0
      %10066 = vmatpush1.msra.mxu0 0.0
      %10067 = vmatprep.subr.mxu0 0.0
      %10068 = vmatpush1.msra.mxu0 0.0
      %10069 = vmatprep.subr.mxu0 0.0
      %10070 = vmatpush1.msra.mxu0 0.0
      %10071 = vmatprep.subr.mxu0 0.0
      %10072 = vmatpush1.msra.mxu0 0.0
      %10073 = vmatprep.subr.mxu0 0.0
      %10074 = vmatpush1.msra.mxu0 0.0
      %10075 = vmatprep.subr.mxu0 0.0
      %10076 = vmatpush1.msra.mxu0 0.0
      %10077 = vmatprep.subr.mxu0 0.0
      %10078 = vmatpush1.msra.mxu0 0.0
      %10079 = vmatprep.subr.mxu0 0.0
      %10080 = vmatpush1.msra.mxu0 0.0
      %10081 = vmatprep.subr.mxu0 0.0
      %10082 = vmatpush1.msra.mxu0 0.0
      %10083 = vmatprep.subr.mxu0 0.0
      %10084 = vmatpush1.msra.mxu0 0.0
      %10085 = vmatprep.mubr.f32.mxu0 0.0
      %10086 = vmatmul.mubr.f32.gmra.mrb[0].mxu0 %v9948
      %v10087 = vpop.f32.mrb[0].mxu0
      %v10088 = vadd.f32 %v10017, %v10087
      %v10089 = vpop.f32.mrb[0].mxu0
      %v10090 = vadd.f32 %v10019, %v10089
      %10091 = vdwg.mxu0
      %10092 = vmatprep.subr.mxu0 %v9763
      %10093 = vmatpush1.msra.mxu0 %v9762
      %10094 = vmatprep.subr.mxu0 %v9768
      %10095 = vmatpush1.msra.mxu0 %v9767
      %10096 = vmatprep.subr.mxu0 %v9773
      %10097 = vmatpush1.msra.mxu0 %v9772
      %10098 = vmatprep.subr.mxu0 %v9778
      %10099 = vmatpush1.msra.mxu0 %v9777
      %10100 = vmatprep.subr.mxu0 %v9783
      %10101 = vmatpush1.msra.mxu0 %v9782
      %10102 = vmatprep.subr.mxu0 %v9788
      %10103 = vmatpush1.msra.mxu0 %v9787
      %10104 = vmatprep.subr.mxu0 %v9793
      %10105 = vmatpush1.msra.mxu0 %v9792
      %10106 = vmatprep.subr.mxu0 %v9798
      %10107 = vmatpush1.msra.mxu0 %v9797
      %10108 = vmatprep.subr.mxu0 %v9803
      %10109 = vmatpush1.msra.mxu0 %v9802
      %10110 = vmatprep.subr.mxu0 %v9808
      %10111 = vmatpush1.msra.mxu0 %v9807
      %10112 = vmatprep.subr.mxu0 %v9813
      %10113 = vmatpush1.msra.mxu0 %v9812
      %10114 = vmatprep.subr.mxu0 %v9818
      %10115 = vmatpush1.msra.mxu0 %v9817
      %10116 = vmatprep.subr.mxu0 %v9823
      %10117 = vmatpush1.msra.mxu0 %v9822
      %10118 = vmatprep.subr.mxu0 %v9828
      %10119 = vmatpush1.msra.mxu0 %v9827
      %10120 = vmatprep.subr.mxu0 %v9833
      %10121 = vmatpush1.msra.mxu0 %v9832
      %10122 = vmatprep.subr.mxu0 %v9838
      %10123 = vmatpush1.msra.mxu0 %v9837
      %10124 = vmatprep.subr.mxu0 %v9843
      %10125 = vmatpush1.msra.mxu0 %v9842
      %10126 = vmatprep.subr.mxu0 %v9848
      %10127 = vmatpush1.msra.mxu0 %v9847
      %10128 = vmatprep.subr.mxu0 %v9853
      %10129 = vmatpush1.msra.mxu0 %v9852
      %10130 = vmatprep.subr.mxu0 %v9858
      %10131 = vmatpush1.msra.mxu0 %v9857
      %10132 = vmatprep.subr.mxu0 %v9863
      %10133 = vmatpush1.msra.mxu0 %v9862
      %10134 = vmatprep.subr.mxu0 %v9868
      %10135 = vmatpush1.msra.mxu0 %v9867
      %10136 = vmatprep.subr.mxu0 %v9873
      %10137 = vmatpush1.msra.mxu0 %v9872
      %10138 = vmatprep.subr.mxu0 %v9878
      %10139 = vmatpush1.msra.mxu0 %v9877
      %10140 = vmatprep.subr.mxu0 %v9883
      %10141 = vmatpush1.msra.mxu0 %v9882
      %10142 = vmatprep.subr.mxu0 %v9888
      %10143 = vmatpush1.msra.mxu0 %v9887
      %10144 = vmatprep.subr.mxu0 %v9893
      %10145 = vmatpush1.msra.mxu0 %v9892
      %10146 = vmatprep.subr.mxu0 %v9898
      %10147 = vmatpush1.msra.mxu0 %v9897
      %10148 = vmatprep.subr.mxu0 %v9903
      %10149 = vmatpush1.msra.mxu0 %v9902
      %10150 = vmatprep.subr.mxu0 %v9908
      %10151 = vmatpush1.msra.mxu0 %v9907
      %10152 = vmatprep.subr.mxu0 %v9913
      %10153 = vmatpush1.msra.mxu0 %v9912
      %10154 = vmatprep.subr.mxu0 %v9918
      %10155 = vmatpush1.msra.mxu0 %v9917
      %10156 = vmatprep.mubr.f32.mxu0 %v9758
      %10157 = vmatmul.mubr.f32.gmra.mrb[0].mxu0 %v9757
      %v10158 = vpop.f32.mrb[0].mxu0
      %v10159 = vadd.f32 %v9945, %v10158
      %v10160 = vpop.f32.mrb[0].mxu0
      %v10161 = vadd.f32 %v9945, %v10160
      %10162 = vdwg.mxu0
      %10163 = vmatprep.subr.mxu0 %v9923
      %10164 = vmatpush1.msra.mxu0 %v9922
      %10165 = vmatprep.subr.mxu0 %v9928
      %10166 = vmatpush1.msra.mxu0 %v9927
      %10167 = vmatprep.subr.mxu0 %v9933
      %10168 = vmatpush1.msra.mxu0 %v9932
      %10169 = vmatprep.subr.mxu0 %v9938
      %10170 = vmatpush1.msra.mxu0 %v9937
      %10171 = vmatprep.subr.mxu0 0.0
      %10172 = vmatpush1.msra.mxu0 0.0
      %10173 = vmatprep.subr.mxu0 0.0
      %10174 = vmatpush1.msra.mxu0 0.0
      %10175 = vmatprep.subr.mxu0 0.0
      %10176 = vmatpush1.msra.mxu0 0.0
      %10177 = vmatprep.subr.mxu0 0.0
      %10178 = vmatpush1.msra.mxu0 0.0
      %10179 = vmatprep.subr.mxu0 0.0
      %10180 = vmatpush1.msra.mxu0 0.0
      %10181 = vmatprep.subr.mxu0 0.0
      %10182 = vmatpush1.msra.mxu0 0.0
      %10183 = vmatprep.subr.mxu0 0.0
      %10184 = vmatpush1.msra.mxu0 0.0
      %10185 = vmatprep.subr.mxu0 0.0
      %10186 = vmatpush1.msra.mxu0 0.0
      %10187 = vmatprep.subr.mxu0 0.0
      %10188 = vmatpush1.msra.mxu0 0.0
      %10189 = vmatprep.subr.mxu0 0.0
      %10190 = vmatpush1.msra.mxu0 0.0
      %10191 = vmatprep.subr.mxu0 0.0
      %10192 = vmatpush1.msra.mxu0 0.0
      %10193 = vmatprep.subr.mxu0 0.0
      %10194 = vmatpush1.msra.mxu0 0.0
      %10195 = vmatprep.subr.mxu0 0.0
      %10196 = vmatpush1.msra.mxu0 0.0
      %10197 = vmatprep.subr.mxu0 0.0
      %10198 = vmatpush1.msra.mxu0 0.0
      %10199 = vmatprep.subr.mxu0 0.0
      %10200 = vmatpush1.msra.mxu0 0.0
      %10201 = vmatprep.subr.mxu0 0.0
      %10202 = vmatpush1.msra.mxu0 0.0
      %10203 = vmatprep.subr.mxu0 0.0
      %10204 = vmatpush1.msra.mxu0 0.0
      %10205 = vmatprep.subr.mxu0 0.0
      %10206 = vmatpush1.msra.mxu0 0.0
      %10207 = vmatprep.subr.mxu0 0.0
      %10208 = vmatpush1.msra.mxu0 0.0
      %10209 = vmatprep.subr.mxu0 0.0
      %10210 = vmatpush1.msra.mxu0 0.0
      %10211 = vmatprep.subr.mxu0 0.0
      %10212 = vmatpush1.msra.mxu0 0.0
      %10213 = vmatprep.subr.mxu0 0.0
      %10214 = vmatpush1.msra.mxu0 0.0
      %10215 = vmatprep.subr.mxu0 0.0
      %10216 = vmatpush1.msra.mxu0 0.0
      %10217 = vmatprep.subr.mxu0 0.0
      %10218 = vmatpush1.msra.mxu0 0.0
      %10219 = vmatprep.subr.mxu0 0.0
      %10220 = vmatpush1.msra.mxu0 0.0
      %10221 = vmatprep.subr.mxu0 0.0
      %10222 = vmatpush1.msra.mxu0 0.0
      %10223 = vmatprep.subr.mxu0 0.0
      %10224 = vmatpush1.msra.mxu0 0.0
      %10225 = vmatprep.subr.mxu0 0.0
      %10226 = vmatpush1.msra.mxu0 0.0
      %10227 = vmatprep.mubr.f32.mxu0 0.0
      %10228 = vmatmul.mubr.f32.gmra.mrb[0].mxu0 %v9948
      %v10229 = vpop.f32.mrb[0].mxu0
      %v10230 = vadd.f32 %v10159, %v10229
      %v10231 = vpop.f32.mrb[0].mxu0
      %v10232 = vadd.f32 %v10161, %v10231
      %10233 = vdwg.mxu0
      %10234 = vmatprep.subr.mxu0 0.0
      %10235 = vmatpush1.msra.mxu0 %v9764
      %10236 = vmatprep.subr.mxu0 0.0
      %10237 = vmatpush1.msra.mxu0 %v9769
      %10238 = vmatprep.subr.mxu0 0.0
      %10239 = vmatpush1.msra.mxu0 %v9774
      %10240 = vmatprep.subr.mxu0 0.0
      %10241 = vmatpush1.msra.mxu0 %v9779
      %10242 = vmatprep.subr.mxu0 0.0
      %10243 = vmatpush1.msra.mxu0 %v9784
      %10244 = vmatprep.subr.mxu0 0.0
      %10245 = vmatpush1.msra.mxu0 %v9789
      %10246 = vmatprep.subr.mxu0 0.0
      %10247 = vmatpush1.msra.mxu0 %v9794
      %10248 = vmatprep.subr.mxu0 0.0
      %10249 = vmatpush1.msra.mxu0 %v9799
      %10250 = vmatprep.subr.mxu0 0.0
      %10251 = vmatpush1.msra.mxu0 %v9804
      %10252 = vmatprep.subr.mxu0 0.0
      %10253 = vmatpush1.msra.mxu0 %v9809
      %10254 = vmatprep.subr.mxu0 0.0
      %10255 = vmatpush1.msra.mxu0 %v9814
      %10256 = vmatprep.subr.mxu0 0.0
      %10257 = vmatpush1.msra.mxu0 %v9819
      %10258 = vmatprep.subr.mxu0 0.0
      %10259 = vmatpush1.msra.mxu0 %v9824
      %10260 = vmatprep.subr.mxu0 0.0
      %10261 = vmatpush1.msra.mxu0 %v9829
      %10262 = vmatprep.subr.mxu0 0.0
      %10263 = vmatpush1.msra.mxu0 %v9834
      %10264 = vmatprep.subr.mxu0 0.0
      %10265 = vmatpush1.msra.mxu0 %v9839
      %10266 = vmatprep.subr.mxu0 0.0
      %10267 = vmatpush1.msra.mxu0 %v9844
      %10268 = vmatprep.subr.mxu0 0.0
      %10269 = vmatpush1.msra.mxu0 %v9849
      %10270 = vmatprep.subr.mxu0 0.0
      %10271 = vmatpush1.msra.mxu0 %v9854
      %10272 = vmatprep.subr.mxu0 0.0
      %10273 = vmatpush1.msra.mxu0 %v9859
      %10274 = vmatprep.subr.mxu0 0.0
      %10275 = vmatpush1.msra.mxu0 %v9864
      %10276 = vmatprep.subr.mxu0 0.0
      %10277 = vmatpush1.msra.mxu0 %v9869
      %10278 = vmatprep.subr.mxu0 0.0
      %10279 = vmatpush1.msra.mxu0 %v9874
      %10280 = vmatprep.subr.mxu0 0.0
      %10281 = vmatpush1.msra.mxu0 %v9879
      %10282 = vmatprep.subr.mxu0 0.0
      %10283 = vmatpush1.msra.mxu0 %v9884
      %10284 = vmatprep.subr.mxu0 0.0
      %10285 = vmatpush1.msra.mxu0 %v9889
      %10286 = vmatprep.subr.mxu0 0.0
      %10287 = vmatpush1.msra.mxu0 %v9894
      %10288 = vmatprep.subr.mxu0 0.0
      %10289 = vmatpush1.msra.mxu0 %v9899
      %10290 = vmatprep.subr.mxu0 0.0
      %10291 = vmatpush1.msra.mxu0 %v9904
      %10292 = vmatprep.subr.mxu0 0.0
      %10293 = vmatpush1.msra.mxu0 %v9909
      %10294 = vmatprep.subr.mxu0 0.0
      %10295 = vmatpush1.msra.mxu0 %v9914
      %10296 = vmatprep.subr.mxu0 0.0
      %10297 = vmatpush1.msra.mxu0 %v9919
      %10298 = vmatprep.mubr.f32.mxu0 %v9758
      %10299 = vmatmul.mubr.f32.gmra.mrb[0].mxu0 %v9757
      %v10300 = vpop.f32.mrb[0].mxu0
      %v10301 = vadd.f32 %v9945, %v10300
      %v10302 = vpop.f32.mrb[0].mxu0
      %10303 = vdwg.mxu0
      %10304 = vmatprep.subr.mxu0 0.0
      %10305 = vmatpush1.msra.mxu0 %v9924
      %10306 = vmatprep.subr.mxu0 0.0
      %10307 = vmatpush1.msra.mxu0 %v9929
      %10308 = vmatprep.subr.mxu0 0.0
      %10309 = vmatpush1.msra.mxu0 %v9934
      %10310 = vmatprep.subr.mxu0 0.0
      %10311 = vmatpush1.msra.mxu0 %v9939
      %10312 = vmatprep.subr.mxu0 0.0
      %10313 = vmatpush1.msra.mxu0 0.0
      %10314 = vmatprep.subr.mxu0 0.0
      %10315 = vmatpush1.msra.mxu0 0.0
      %10316 = vmatprep.subr.mxu0 0.0
      %10317 = vmatpush1.msra.mxu0 0.0
      %10318 = vmatprep.subr.mxu0 0.0
      %10319 = vmatpush1.msra.mxu0 0.0
      %10320 = vmatprep.subr.mxu0 0.0
      %10321 = vmatpush1.msra.mxu0 0.0
      %10322 = vmatprep.subr.mxu0 0.0
      %10323 = vmatpush1.msra.mxu0 0.0
      %10324 = vmatprep.subr.mxu0 0.0
      %10325 = vmatpush1.msra.mxu0 0.0
      %10326 = vmatprep.subr.mxu0 0.0
      %10327 = vmatpush1.msra.mxu0 0.0
      %10328 = vmatprep.subr.mxu0 0.0
      %10329 = vmatpush1.msra.mxu0 0.0
      %10330 = vmatprep.subr.mxu0 0.0
      %10331 = vmatpush1.msra.mxu0 0.0
      %10332 = vmatprep.subr.mxu0 0.0
      %10333 = vmatpush1.msra.mxu0 0.0
      %10334 = vmatprep.subr.mxu0 0.0
      %10335 = vmatpush1.msra.mxu0 0.0
      %10336 = vmatprep.subr.mxu0 0.0
      %10337 = vmatpush1.msra.mxu0 0.0
      %10338 = vmatprep.subr.mxu0 0.0
      %10339 = vmatpush1.msra.mxu0 0.0
      %10340 = vmatprep.subr.mxu0 0.0
      %10341 = vmatpush1.msra.mxu0 0.0
      %10342 = vmatprep.subr.mxu0 0.0
      %10343 = vmatpush1.msra.mxu0 0.0
      %10344 = vmatprep.subr.mxu0 0.0
      %10345 = vmatpush1.msra.mxu0 0.0
      %10346 = vmatprep.subr.mxu0 0.0
      %10347 = vmatpush1.msra.mxu0 0.0
      %10348 = vmatprep.subr.mxu0 0.0
      %10349 = vmatpush1.msra.mxu0 0.0
      %10350 = vmatprep.subr.mxu0 0.0
      %10351 = vmatpush1.msra.mxu0 0.0
      %10352 = vmatprep.subr.mxu0 0.0
      %10353 = vmatpush1.msra.mxu0 0.0
      %10354 = vmatprep.subr.mxu0 0.0
      %10355 = vmatpush1.msra.mxu0 0.0
      %10356 = vmatprep.subr.mxu0 0.0
      %10357 = vmatpush1.msra.mxu0 0.0
      %10358 = vmatprep.subr.mxu0 0.0
      %10359 = vmatpush1.msra.mxu0 0.0
      %10360 = vmatprep.subr.mxu0 0.0
      %10361 = vmatpush1.msra.mxu0 0.0
      %10362 = vmatprep.subr.mxu0 0.0
      %10363 = vmatpush1.msra.mxu0 0.0
      %10364 = vmatprep.subr.mxu0 0.0
      %10365 = vmatpush1.msra.mxu0 0.0
      %10366 = vmatprep.subr.mxu0 0.0
      %10367 = vmatpush1.msra.mxu0 0.0
      %10368 = vmatprep.mubr.f32.mxu0 0.0
      %10369 = vmatmul.mubr.f32.gmra.mrb[0].mxu0 %v9948
      %v10370 = vpop.f32.mrb[0].mxu0
      %v10371 = vadd.f32 %v10301, %v10370
      %v10372 = vpop.f32.mrb[0].mxu0
      %10373 = vdwg.mxu0
      %v10374 = vmax.f32 %v10088, 0.0
      %v10375 = vmax.f32 %v10090, 0.0
      %v10376 = vmax.f32 %v10230, 0.0
      %v10377 = vmax.f32 %v10232, 0.0
      %v10378 = vmax.f32 %v10371, 0.0
      %vm10379 = vcmp.lt.s32.totalorder %v175, 20
      %vm10380 = vcmp.lt.s32.totalorder %v176, 20
      %vm10381 = vcmp.lt.s32.totalorder %v177, 20
      %vm10382 = vcmp.lt.s32.totalorder %v178, 20
      %vm10383 = vcmp.lt.s32.totalorder %v179, 20
      %v10384 = vsel %vm10379, 1, 0
      %v10385 = vsel %vm10380, 1, 0
      %v10386 = vsel %vm10381, 1, 0
      %v10387 = vsel %vm10382, 1, 0
      %v10388 = vsel %vm10383, 1, 0
      %vm10389 = vcmp.eq.s32.totalorder %v10384, 1
      %vm10390 = vcmp.eq.s32.totalorder %v10385, 1
      %vm10391 = vcmp.eq.s32.totalorder %v10386, 1
      %vm10392 = vcmp.eq.s32.totalorder %v10387, 1
      %vm10393 = vcmp.eq.s32.totalorder %v10388, 1
      %v10394 = vsel %vm10389, %v10374, 0.0
      %v10395 = vsel %vm10390, %v10375, 0.0
      %v10396 = vsel %vm10391, %v10376, 0.0
      %v10397 = vsel %vm10392, %v10377, 0.0
      %v10398 = vsel %vm10393, %v10378, 0.0
      %v10404 = vcombine.low %v10394, %v10395
      %v10405 = vcombine.low %v10396, %v10397
      %v10407 = vunpack.c.l.s4 1966171168
      %v10408 = vunpack.c.0.s8 %v10407
      %v10409 = vlaneseq
      %v10410 = vshrl.u32 %v10409, 7
      %v10411 = vsub.s32 %v10408, %v10410
      %v10412 = vrot.slane %v10404, %v10411
      %v10414 = vunpack.c.l.s4 1966171168
      %v10415 = vunpack.c.0.s8 %v10414
      %v10416 = vlaneseq
      %v10417 = vshrl.u32 %v10416, 7
      %v10418 = vsub.s32 %v10415, %v10417
      %v10419 = vrot.slane %v10405, %v10418
      %v10421 = vunpack.c.l.s4 1966171168
      %v10422 = vunpack.c.0.s8 %v10421
      %v10423 = vlaneseq
      %v10424 = vshrl.u32 %v10423, 7
      %v10425 = vsub.s32 %v10422, %v10424
      %v10426 = vrot.slane %v10398, %v10425
      %v10427 = vcombine.low %v10412, %v10419
      %v10429 = vunpack.c.l.s4 1966171168
      %v10430 = vunpack.c.0.s8 %v10429
      %v10431 = vlaneseq
      %v10432 = vshrl.u32 %v10431, 7
      %v10433 = vsub.s32 %v10430, %v10432
      %v10434 = vrot.slane %v10427, %v10433
      %v10436 = vunpack.c.l.s4 1966171168
      %v10437 = vunpack.c.0.s8 %v10436
      %v10438 = vlaneseq
      %v10439 = vshrl.u32 %v10438, 7
      %v10440 = vsub.s32 %v10437, %v10439
      %v10441 = vrot.slane %v10426, %v10440
      %v10442 = vcombine.low %v10434, %v10441
      %v10444 = vlaneseq
      %vm10445 = vcmp.ge.s32.totalorder %v10444, 0
      %vm10446 = vcmp.lt.s32.totalorder %v10444, 640
      %vm10447 = vmand %vm10445, %vm10446
      %10448 = vst.msk [vmem:[%s168] sm:$0x1f] %vm10447, %v10442
      %p10449 = scmp.lt.s32.totalorder %s14, 1
      %s10450 = scalar_select %p10449, %s14, 1
      %s10451 = smul.addr %s10450, 5
      %s10452 = scalar_lea.vmem %s3, %s10451
      // Predicated region
      $region33: #{decoder_pallas.1} parent=31 // pred_check
        %p10453 = pneg %p100
      $region34: #{decoder_pallas.1} parent=31 // pred_check_branch
        %10455 = sbr.rel (%p10453) target = $region36
      $region35: #{decoder_pallas.1} parent=31 // pred_region
        _
      $region36: #{decoder_pallas.1} parent=31 // pred_fallthru
        _
    $region32: #{decoder_pallas.1} parent=5 // pred_fallthru
      _
    %p10456 = scmp.le.s32.totalorder 2, %s9
    // Predicated region
    $region37: #{decoder_pallas.1} parent=5 // pred_check
      %p10457 = pneg %p10456
    $region38: #{decoder_pallas.1} parent=5 // pred_check_branch
      %10459 = sbr.rel (%p10457) target = $region40
    $region39: #{decoder_pallas.1} parent=5 // pred_region
      %s10460 = ssub.s32 %s9, 2
      // Predicated region
      $region41: #{decoder_pallas.1} parent=39 // pred_check
        %p10461 = pneg %p106
      $region42: #{decoder_pallas.1} parent=39 // pred_check_branch
        %10463 = sbr.rel (%p10461) target = $region44
      $region43: #{decoder_pallas.1} parent=39 // pred_region
        %p10464 = scmp.lt.s32.totalorder %s15, 1
        %s10465 = scalar_select %p10464, %s15, 1
        %s10466 = smul.addr %s10465, 5
        %s10467 = scalar_lea.vmem %s3, %s10466
      $region44: #{decoder_pallas.1} parent=39 // pred_fallthru
        _
    $region40: #{decoder_pallas.1} parent=5 // pred_fallthru
      _
  $region6: #{decoder_pallas.1} parent=0 // loop_footer
    %s13 = sadd.s32 1, %s9
  $region7: #{decoder_pallas.1} parent=0 // loop_footer_branch
    %8 = sbr.rel target = $region3
  $region8: #{decoder_pallas.1} parent=0 // loop_exit
    _

</llo_original>
